<compile_context>
chip_gen: v6e
topology: v6e:2x2x1
jax: 0.10.0
libtpu: 0.0.40
codegen_flags: <defaults>
</compile_context>

<pallas_src>
import functools

import jax
import jax.numpy as jnp
from jax import lax
from jax.experimental import pallas as pl
from jax.experimental.pallas import tpu as pltpu


# ---------------------------------------------------------------------------
# Kernel
# ---------------------------------------------------------------------------
def convchor_kernel(x_ref, w1_ref, b1_ref, wim_ref, bdw_ref, w2_ref, b2_ref,
                    o_ref, pad_ref, col_ref, *,
                    H, W, f, stride, Ho, Wo, ch_out, TB):
    Hp, Wp = H + 2, W + 2
    HoWo = Ho * Wo
    M = TB * HoWo

    # ---- zero only the 1-px halo of the padded scratch (interior is fully
    #      overwritten below; halo-only zero relieves the scarce store slot) -
    pad_ref[:, 0:1, :, :] = jnp.zeros((TB, 1, Wp, f), jnp.bfloat16)
    pad_ref[:, Hp - 1:Hp, :, :] = jnp.zeros((TB, 1, Wp, f), jnp.bfloat16)
    pad_ref[:, :, 0:1, :] = jnp.zeros((TB, Hp, 1, f), jnp.bfloat16)
    pad_ref[:, :, Wp - 1:Wp, :] = jnp.zeros((TB, Hp, 1, f), jnp.bfloat16)

    # ---- pointwise_conv1 + folded BN1 + ReLU, written into padded scratch --
    # x arrives lane-dense as (cin, H*W); compute y^T = w1 @ x (standard NN
    # matmul), then a cheap in-VMEM f32 transpose to the NHWC activation
    # layout (spatial on sublanes, channels on lanes).
    for b in range(TB):
        xb = x_ref[b].astype(jnp.bfloat16)                       # (cin, H*W)
        y_t = jnp.dot(w1_ref[...], xb,
                      preferred_element_type=jnp.float32)        # (f, H*W)
        y_t = jnp.maximum(y_t + b1_ref[...], 0.0)
        y = jnp.transpose(y_t, (1, 0)).reshape(H, W, f)          # (H, W, f) f32
        pad_ref[b, 1:H + 1, 1:W + 1, :] = y.astype(jnp.bfloat16)

    # ---- im2col: 9 taps -> (TB, Ho, Wo, 9*f) so the grouped conv becomes a
    #      single K = 9*f matmul ------------------------------------------------
    for kh in range(3):
        for kw in range(3):
            t = kh * 3 + kw
            if stride == 1:
                v = pad_ref[:, kh:kh + Ho, kw:kw + Wo, :]
            else:
                # TODO(synk): stride>1 path uses strided value slicing
                # (correct but may relayout); untested at runtime here.
                v = pad_ref[...][:, kh:kh + (Ho - 1) * stride + 1:stride,
                                 kw:kw + (Wo - 1) * stride + 1:stride, :]
            col_ref[:, :, :, t * f:(t + 1) * f] = v

    # ---- grouped 3x3 conv (block-diagonal weight, K = 9*f) + BN2 + ReLU ----
    z = jnp.dot(col_ref[...].reshape(M, 9 * f), wim_ref[...],
                preferred_element_type=jnp.float32)               # (M, f)
    z = jnp.maximum(z + bdw_ref[...], 0.0).astype(jnp.bfloat16)

    # ---- pointwise_conv2 + folded BN3 + ReLU (+ folded *r) ------------------
    # Store transposed per image: (ch_out, Ho*Wo), lane-dense on Ho*Wo, so the
    # wrapper needs only a reshape to NCHW.
    for b in range(TB):
        zb = z[b * HoWo:(b + 1) * HoWo, :]                        # (HoWo, f)
        ob = jnp.dot(zb, w2_ref[...],
                     preferred_element_type=jnp.float32)          # (HoWo, ch_out)
        ob = jnp.maximum(ob + b2_ref[...], 0.0)
        o_ref[b] = jnp.transpose(ob, (1, 0)).astype(o_ref.dtype)  # (ch_out, HoWo)


# ---------------------------------------------------------------------------
# Wrapper
# ---------------------------------------------------------------------------
def convchor_forward(x_nchw, kparams, *, stride):
    (w1f, b1f, wimf, bdwf, w2f, b2f) = kparams
    B, cin, H, W = x_nchw.shape
    f = w1f.shape[0]
    ch_out = w2f.shape[1]
    Ho = (H + 2 - 3) // stride + 1
    Wo = (W + 2 - 3) // stride + 1

    # Free view of NCHW: (B, cin, H*W) — lane-dense input, no HBM transpose.
    x = x_nchw.reshape(B, cin, H * W)
    consts = (w1f, b1f, wimf, bdwf, w2f, b2f)

    # VMEM budget (generation-aware): ~75% of physical capacity.
    try:
        vmem_cap = int(pltpu.get_tpu_info().vmem_capacity_bytes)
    except Exception:
        vmem_cap = 64 * 1024 * 1024
    vmem_limit = (vmem_cap * 3) // 4

    const_bytes = 2 * sum(int(a.size) * a.dtype.itemsize for a in consts)
    per_img = (2 * (cin * H * W * x.dtype.itemsize + ch_out * Ho * Wo * 4)  # in/out (2x buffered)
               + (H + 2) * (W + 2) * f * 2                                   # padded scratch (bf16)
               + Ho * Wo * 9 * f * 2                                         # im2col scratch (bf16)
               + (H * W * f + Ho * Wo * f) * 4)                              # live f32 intermediates
    budget = max(vmem_limit * 6 // 10 - const_bytes, per_img)
    TB = 1
    for c in range(1, B + 1):                                    # largest divisor of B that fits
        if B % c == 0 and c * per_img <= budget:
            TB = c

    kernel = functools.partial(convchor_kernel, H=H, W=W, f=f, stride=stride,
                               Ho=Ho, Wo=Wo, ch_out=ch_out, TB=TB)

    def full_spec(a):
        n = a.ndim
        return pl.BlockSpec(a.shape, lambda i, _n=n: (0,) * _n)

    in_specs = [pl.BlockSpec((TB, cin, H * W), lambda i: (i, 0, 0))]
    in_specs += [full_spec(a) for a in consts]

    cost = pl.CostEstimate(
        flops=int(B * (2 * H * W * cin * f
                       + 2 * Ho * Wo * 9 * f * f
                       + 2 * Ho * Wo * f * ch_out)),
        transcendentals=0,
        bytes_accessed=int(x.size * x.dtype.itemsize
                           + B * Ho * Wo * ch_out * 4
                           + sum(int(a.size) * a.dtype.itemsize for a in consts)))

    out = pl.pallas_call(
        kernel,
        grid=(B // TB,),
        in_specs=in_specs,
        out_specs=pl.BlockSpec((TB, ch_out, Ho * Wo), lambda i: (i, 0, 0)),
        out_shape=jax.ShapeDtypeStruct((B, ch_out, Ho * Wo), jnp.float32),
        scratch_shapes=[pltpu.VMEM((TB, H + 2, W + 2, f), jnp.bfloat16),
                        pltpu.VMEM((TB, Ho, Wo, 9 * f), jnp.bfloat16)],
        compiler_params=pltpu.CompilerParams(
            dimension_semantics=("parallel",),
            vmem_limit_bytes=int(vmem_limit)),
        cost_estimate=cost,
    )(x, *consts)

    # Pure reshape (no transpose) back to NCHW.
    return out.reshape(B, ch_out, Ho, Wo)


# ---------------------------------------------------------------------------
# Parameter construction (mimics the PyTorch module's init) and folding
# ---------------------------------------------------------------------------
def init_convchor_params(key, ch_in, f, ch_out, r):
    assert f % r == 0
    cg = f // r
    k1, k2, k3 = jax.random.split(key, 3)

    def xavier(k, shape, fan_in, fan_out):
        bound = (6.0 / (fan_in + fan_out)) ** 0.5
        return jax.random.uniform(k, shape, jnp.float32, -bound, bound)

    eps = 1e-6
    bn_scale = lambda n: jnp.full((n,), 1.0 / (1.0 + eps) ** 0.5, jnp.float32)
    bn_shift = lambda n: jnp.zeros((n,), jnp.float32)

    return dict(
        w1_t=xavier(k1, (f, ch_in), ch_in, f),           # torch (f, ch_in, 1, 1)
        b1=jnp.zeros((f,), jnp.float32),
        wdw_t=xavier(k2, (f, cg, 3, 3), cg * 9, f * 9),  # torch (f, f//r, 3, 3)
        bdw=jnp.zeros((f,), jnp.float32),
        w2_t=xavier(k3, (ch_out, f), f, ch_out),         # torch (ch_out, f, 1, 1)
        b2=jnp.zeros((ch_out,), jnp.float32),
        s1=bn_scale(f), t1=bn_shift(f),
        s2=bn_scale(f), t2=bn_shift(f),
        s3=bn_scale(ch_out), t3=bn_shift(ch_out),
    )


def fold_kernel_params(raw, r):
    """Fold BN scale/shift, conv biases and the trailing `* r` into the conv
    weights; build the (9f, f) block-diagonal im2col grouped-conv weight;
    cast weights to bf16 (MXU inputs), keep biases in f32."""
    assert r > 0  # ReLU only commutes with a *positive* scale
    w1_t, b1 = raw["w1_t"], raw["b1"]
    wdw_t, bdw = raw["wdw_t"], raw["bdw"]
    w2_t, b2 = raw["w2_t"], raw["b2"]
    s1, t1 = raw["s1"], raw["t1"]
    s2, t2 = raw["s2"], raw["t2"]
    s3, t3 = raw["s3"], raw["t3"]

    f = w1_t.shape[0]
    ch_out = w2_t.shape[0]
    cg = f // r

    # pointwise_conv1: kept in torch layout (f, ch_in) -> y^T = w1 @ x; fold BN1.
    w1f = w1_t * s1[:, None]
    b1f = (b1 * s1 + t1).reshape(f, 1)

    # grouped conv: torch (f, cg, 3, 3) -> block-diagonal dense (3, 3, f, f)
    # -> im2col weight (9*f, f) with row index (kh*3f + kw*f + ci).
    wg = jnp.transpose(wdw_t.reshape(r, cg, cg, 3, 3), (3, 4, 0, 2, 1))  # (3,3,r,ci,co)
    wbd = jnp.zeros((3, 3, f, f), jnp.float32)
    for g in range(r):
        wbd = wbd.at[:, :, g * cg:(g + 1) * cg, g * cg:(g + 1) * cg].set(wg[:, :, g])
    wbd = wbd * s2[None, None, None, :]
    wimf = wbd.reshape(9 * f, f)
    bdwf = (bdw * s2 + t2).reshape(1, f)

    # pointwise_conv2: (ch_out, f) -> (f, ch_out); fold BN3 and the final *r.
    w2f = w2_t.T * (s3 * float(r))[None, :]
    b2f = ((b2 * s3 + t3) * float(r)).reshape(1, ch_out)

    return (w1f.astype(jnp.bfloat16), b1f,
            wimf.astype(jnp.bfloat16), bdwf,
            w2f.astype(jnp.bfloat16), b2f)


# ---------------------------------------------------------------------------
# Pure-JAX reference (unfolded path, f32, lax.conv) for correctness checking
# ---------------------------------------------------------------------------
def ref_forward(x_nchw, raw, *, stride, r):
    w1_t, b1 = raw["w1_t"], raw["b1"]
    wdw_t, bdw = raw["wdw_t"], raw["bdw"]
    w2_t, b2 = raw["w2_t"], raw["b2"]
    s1, t1 = raw["s1"], raw["t1"]
    s2, t2 = raw["s2"], raw["t2"]
    s3, t3 = raw["s3"], raw["t3"]
    f = w1_t.shape[0]
    ch_out = w2_t.shape[0]
    x = jnp.transpose(x_nchw, (0, 2, 3, 1))
    dn = ('NHWC', 'HWIO', 'NHWC')

    y = lax.conv_general_dilated(x, jnp.transpose(w1_t, (1, 0)).reshape(1, 1, -1, f),
                                 (1, 1), 'VALID', dimension_numbers=dn)
    y = jnp.maximum((y + b1) * s1 + t1, 0.0)

    z = lax.conv_general_dilated(y, jnp.transpose(wdw_t, (2, 3, 1, 0)),
                                 (stride, stride), ((1, 1), (1, 1)),
                                 dimension_numbers=dn, feature_group_count=r)
    z = jnp.maximum((z + bdw) * s2 + t2, 0.0)

    o = lax.conv_general_dilated(z, jnp.transpose(w2_t, (1, 0)).reshape(1, 1, f, ch_out),
                                 (1, 1), 'VALID', dimension_numbers=dn)
    o = jnp.maximum((o + b2) * s3 + t3, 0.0) * r
    return jnp.transpose(o, (0, 3, 1, 2))


if __name__ == "__main__":
    B, ch_in, H, W = 2, 4, 16, 16
    f, ch_out, stride, r = 32, 8, 1, 4

    key = jax.random.PRNGKey(0)
    kx, kp = jax.random.split(key)
    x = jax.random.normal(kx, (B, ch_in, H, W), jnp.float32)

    raw = init_convchor_params(kp, ch_in, f, ch_out, r)
    kparams = fold_kernel_params(raw, r)

    out = jax.block_until_ready(convchor_forward(x, kparams, stride=stride))

    ref = ref_forward(x, raw, stride=stride, r=r)
    assert out.shape == ref.shape, (out.shape, ref.shape)
    max_diff = float(jnp.max(jnp.abs(out - ref)))
    # bf16 matmul inputs (f32 accumulation) vs a pure-f32 lax.conv reference.
    if not bool(jnp.allclose(out, ref, rtol=2e-2, atol=2e-2)):
        raise SystemExit(f"mismatch vs reference, max abs diff = {max_diff:e}")
    print("KERNEL_OK")
</pallas_src>

<mosaic_0001>
module attributes {stable_mosaic.version = 11 : i64} {
  func.func @convchor_kernel(%arg0: i32, %arg1: memref<2x4x256xf32, #tpu.memory_space<vmem>>, %arg2: memref<32x4xbf16, #tpu.memory_space<vmem>>, %arg3: memref<32x1xf32, #tpu.memory_space<vmem>>, %arg4: memref<288x32xbf16, #tpu.memory_space<vmem>>, %arg5: memref<1x32xf32, #tpu.memory_space<vmem>>, %arg6: memref<32x8xbf16, #tpu.memory_space<vmem>>, %arg7: memref<1x8xf32, #tpu.memory_space<vmem>>, %arg8: memref<2x8x256xf32, #tpu.memory_space<vmem>>, %arg9: memref<2x18x18x32xbf16, #tpu.memory_space<vmem>>, %arg10: memref<2x16x16x288xbf16, #tpu.memory_space<vmem>>) attributes {dimension_semantics = [#tpu.dimension_semantics<parallel>], iteration_bounds = array<i64: 1>, scalar_prefetch = 0 : i64, scratch_operands = 2 : i64, tpu.core_type = #tpu.core_type<tc>, window_params = [{transform_indices = @transform_0, window_bounds = array<i64: 2, 4, 256>}, {pipeline_mode = #tpu.pipeline_mode<synchronous>, transform_indices = @transform_1, window_bounds = array<i64: 32, 4>}, {pipeline_mode = #tpu.pipeline_mode<synchronous>, transform_indices = @transform_2, window_bounds = array<i64: 32, 1>}, {pipeline_mode = #tpu.pipeline_mode<synchronous>, transform_indices = @transform_3, window_bounds = array<i64: 288, 32>}, {pipeline_mode = #tpu.pipeline_mode<synchronous>, transform_indices = @transform_4, window_bounds = array<i64: 1, 32>}, {pipeline_mode = #tpu.pipeline_mode<synchronous>, transform_indices = @transform_5, window_bounds = array<i64: 32, 8>}, {pipeline_mode = #tpu.pipeline_mode<synchronous>, transform_indices = @transform_6, window_bounds = array<i64: 1, 8>}, {transform_indices = @transform_7, window_bounds = array<i64: 2, 8, 256>}]} {
    %cst = arith.constant 0.000000e+00 : bf16
    %0 = vector.broadcast %cst : bf16 to vector<2x1x18x32xbf16>
    %c0 = arith.constant 0 : index
    %c0_0 = arith.constant 0 : index
    %c0_1 = arith.constant 0 : index
    %c0_2 = arith.constant 0 : index
    %1 = vector.load %arg9[%c0, %c0_0, %c0_1, %c0_2] : memref<2x18x18x32xbf16, #tpu.memory_space<vmem>>, vector<2x1x18x32xbf16>
    tpu.vector_store %arg9[%c0, %c0_0, %c0_1, %c0_2], %0 {strides = array<i32>} : memref<2x18x18x32xbf16, #tpu.memory_space<vmem>>, vector<2x1x18x32xbf16>,
    %cst_3 = arith.constant 0.000000e+00 : bf16
    %2 = vector.broadcast %cst_3 : bf16 to vector<2x1x18x32xbf16>
    %c0_4 = arith.constant 0 : index
    %c17 = arith.constant 17 : index
    %c0_5 = arith.constant 0 : index
    %c0_6 = arith.constant 0 : index
    %3 = vector.load %arg9[%c0_4, %c17, %c0_5, %c0_6] : memref<2x18x18x32xbf16, #tpu.memory_space<vmem>>, vector<2x1x18x32xbf16>
    tpu.vector_store %arg9[%c0_4, %c17, %c0_5, %c0_6], %2 {strides = array<i32>} : memref<2x18x18x32xbf16, #tpu.memory_space<vmem>>, vector<2x1x18x32xbf16>,
    %cst_7 = arith.constant 0.000000e+00 : bf16
    %4 = vector.broadcast %cst_7 : bf16 to vector<2x18x1x32xbf16>
    %c0_8 = arith.constant 0 : index
    %c0_9 = arith.constant 0 : index
    %c0_10 = arith.constant 0 : index
    %c0_11 = arith.constant 0 : index
    %5 = vector.load %arg9[%c0_8, %c0_9, %c0_10, %c0_11] : memref<2x18x18x32xbf16, #tpu.memory_space<vmem>>, vector<2x18x1x32xbf16>
    tpu.vector_store %arg9[%c0_8, %c0_9, %c0_10, %c0_11], %4 {strides = array<i32>} : memref<2x18x18x32xbf16, #tpu.memory_space<vmem>>, vector<2x18x1x32xbf16>,
    %cst_12 = arith.constant 0.000000e+00 : bf16
    %6 = vector.broadcast %cst_12 : bf16 to vector<2x18x1x32xbf16>
    %c0_13 = arith.constant 0 : index
    %c0_14 = arith.constant 0 : index
    %c17_15 = arith.constant 17 : index
    %c0_16 = arith.constant 0 : index
    %7 = vector.load %arg9[%c0_13, %c0_14, %c17_15, %c0_16] : memref<2x18x18x32xbf16, #tpu.memory_space<vmem>>, vector<2x18x1x32xbf16>
    tpu.vector_store %arg9[%c0_13, %c0_14, %c17_15, %c0_16], %6 {strides = array<i32>} : memref<2x18x18x32xbf16, #tpu.memory_space<vmem>>, vector<2x18x1x32xbf16>,
    %c0_17 = arith.constant 0 : index
    %c0_18 = arith.constant 0 : index
    %c0_19 = arith.constant 0 : index
    %8 = vector.load %arg1[%c0_17, %c0_18, %c0_19] : memref<2x4x256xf32, #tpu.memory_space<vmem>>, vector<1x4x256xf32>
    %9 = vector.shape_cast %8 : vector<1x4x256xf32> to vector<4x256xf32>
    %10 = arith.truncf %9 : vector<4x256xf32> to vector<4x256xbf16>
    %c0_20 = arith.constant 0 : index
    %c0_21 = arith.constant 0 : index
    %11 = vector.load %arg2[%c0_20, %c0_21] : memref<32x4xbf16, #tpu.memory_space<vmem>>, vector<32x4xbf16>
    %cst_22 = arith.constant dense<0.000000e+00> : vector<32x256xf32>
    %12 = tpu.matmul %11, %10, %cst_22 {dimension_numbers = #tpu.dot_dimension_numbers<[1], [0], [0], [1], [0, 0, 1, 1], [], []>} : vector<32x4xbf16>, vector<4x256xbf16>, vector<32x256xf32> -> vector<32x256xf32>
    %c0_23 = arith.constant 0 : index
    %c0_24 = arith.constant 0 : index
    %13 = vector.load %arg3[%c0_23, %c0_24] : memref<32x1xf32, #tpu.memory_space<vmem>>, vector<32x1xf32>
    %14 = vector.broadcast %13 : vector<32x1xf32> to vector<32x256xf32>
    %15 = arith.addf %12, %14 : vector<32x256xf32>
    %cst_25 = arith.constant 0.000000e+00 : f32
    %16 = vector.broadcast %cst_25 : f32 to vector<32x256xf32>
    %17 = arith.maximumf %15, %16 : vector<32x256xf32>
    %18 = tpu.transpose %17, [1, 0] : vector<32x256xf32> -> vector<256x32xf32>
    %19 = vector.shape_cast %18 : vector<256x32xf32> to vector<16x16x32xf32>
    %20 = arith.truncf %19 : vector<16x16x32xf32> to vector<16x16x32xbf16>
    %c0_26 = arith.constant 0 : index
    %c1 = arith.constant 1 : index
    %c1_27 = arith.constant 1 : index
    %c0_28 = arith.constant 0 : index
    %21 = vector.load %arg9[%c0_26, %c1, %c1_27, %c0_28] : memref<2x18x18x32xbf16, #tpu.memory_space<vmem>>, vector<1x16x16x32xbf16>
    %22 = vector.shape_cast %21 : vector<1x16x16x32xbf16> to vector<16x16x32xbf16>
    %23 = vector.shape_cast %20 : vector<16x16x32xbf16> to vector<1x16x16x32xbf16>
    tpu.vector_store %arg9[%c0_26, %c1, %c1_27, %c0_28], %23 {strides = array<i32>} : memref<2x18x18x32xbf16, #tpu.memory_space<vmem>>, vector<1x16x16x32xbf16>,
    %c1_29 = arith.constant 1 : index
    %c0_30 = arith.constant 0 : index
    %c0_31 = arith.constant 0 : index
    %24 = vector.load %arg1[%c1_29, %c0_30, %c0_31] : memref<2x4x256xf32, #tpu.memory_space<vmem>>, vector<1x4x256xf32>
    %25 = vector.shape_cast %24 : vector<1x4x256xf32> to vector<4x256xf32>
    %26 = arith.truncf %25 : vector<4x256xf32> to vector<4x256xbf16>
    %c0_32 = arith.constant 0 : index
    %c0_33 = arith.constant 0 : index
    %27 = vector.load %arg2[%c0_32, %c0_33] : memref<32x4xbf16, #tpu.memory_space<vmem>>, vector<32x4xbf16>
    %cst_34 = arith.constant dense<0.000000e+00> : vector<32x256xf32>
    %28 = tpu.matmul %27, %26, %cst_34 {dimension_numbers = #tpu.dot_dimension_numbers<[1], [0], [0], [1], [0, 0, 1, 1], [], []>} : vector<32x4xbf16>, vector<4x256xbf16>, vector<32x256xf32> -> vector<32x256xf32>
    %c0_35 = arith.constant 0 : index
    %c0_36 = arith.constant 0 : index
    %29 = vector.load %arg3[%c0_35, %c0_36] : memref<32x1xf32, #tpu.memory_space<vmem>>, vector<32x1xf32>
    %30 = vector.broadcast %29 : vector<32x1xf32> to vector<32x256xf32>
    %31 = arith.addf %28, %30 : vector<32x256xf32>
    %cst_37 = arith.constant 0.000000e+00 : f32
    %32 = vector.broadcast %cst_37 : f32 to vector<32x256xf32>
    %33 = arith.maximumf %31, %32 : vector<32x256xf32>
    %34 = tpu.transpose %33, [1, 0] : vector<32x256xf32> -> vector<256x32xf32>
    %35 = vector.shape_cast %34 : vector<256x32xf32> to vector<16x16x32xf32>
    %36 = arith.truncf %35 : vector<16x16x32xf32> to vector<16x16x32xbf16>
    %c1_38 = arith.constant 1 : index
    %c1_39 = arith.constant 1 : index
    %c1_40 = arith.constant 1 : index
    %c0_41 = arith.constant 0 : index
    %37 = vector.load %arg9[%c1_38, %c1_39, %c1_40, %c0_41] : memref<2x18x18x32xbf16, #tpu.memory_space<vmem>>, vector<1x16x16x32xbf16>
    %38 = vector.shape_cast %37 : vector<1x16x16x32xbf16> to vector<16x16x32xbf16>
    %39 = vector.shape_cast %36 : vector<16x16x32xbf16> to vector<1x16x16x32xbf16>
    tpu.vector_store %arg9[%c1_38, %c1_39, %c1_40, %c0_41], %39 {strides = array<i32>} : memref<2x18x18x32xbf16, #tpu.memory_space<vmem>>, vector<1x16x16x32xbf16>,
    %c0_42 = arith.constant 0 : index
    %c0_43 = arith.constant 0 : index
    %c0_44 = arith.constant 0 : index
    %c0_45 = arith.constant 0 : index
    %40 = vector.load %arg9[%c0_42, %c0_43, %c0_44, %c0_45] : memref<2x18x18x32xbf16, #tpu.memory_space<vmem>>, vector<2x16x16x32xbf16>
    %c0_46 = arith.constant 0 : index
    %c0_47 = arith.constant 0 : index
    %c0_48 = arith.constant 0 : index
    %c0_49 = arith.constant 0 : index
    %41 = vector.load %arg10[%c0_46, %c0_47, %c0_48, %c0_49] : memref<2x16x16x288xbf16, #tpu.memory_space<vmem>>, vector<2x16x16x32xbf16>
    tpu.vector_store %arg10[%c0_46, %c0_47, %c0_48, %c0_49], %40 {strides = array<i32>} : memref<2x16x16x288xbf16, #tpu.memory_space<vmem>>, vector<2x16x16x32xbf16>,
    %c0_50 = arith.constant 0 : index
    %c0_51 = arith.constant 0 : index
    %c1_52 = arith.constant 1 : index
    %c0_53 = arith.constant 0 : index
    %42 = vector.load %arg9[%c0_50, %c0_51, %c1_52, %c0_53] : memref<2x18x18x32xbf16, #tpu.memory_space<vmem>>, vector<2x16x16x32xbf16>
    %c0_54 = arith.constant 0 : index
    %c0_55 = arith.constant 0 : index
    %c0_56 = arith.constant 0 : index
    %c32 = arith.constant 32 : index
    %43 = vector.load %arg10[%c0_54, %c0_55, %c0_56, %c32] : memref<2x16x16x288xbf16, #tpu.memory_space<vmem>>, vector<2x16x16x32xbf16>
    tpu.vector_store %arg10[%c0_54, %c0_55, %c0_56, %c32], %42 {strides = array<i32>} : memref<2x16x16x288xbf16, #tpu.memory_space<vmem>>, vector<2x16x16x32xbf16>,
    %c0_57 = arith.constant 0 : index
    %c0_58 = arith.constant 0 : index
    %c2 = arith.constant 2 : index
    %c0_59 = arith.constant 0 : index
    %44 = vector.load %arg9[%c0_57, %c0_58, %c2, %c0_59] : memref<2x18x18x32xbf16, #tpu.memory_space<vmem>>, vector<2x16x16x32xbf16>
    %c0_60 = arith.constant 0 : index
    %c0_61 = arith.constant 0 : index
    %c0_62 = arith.constant 0 : index
    %c64 = arith.constant 64 : index
    %45 = vector.load %arg10[%c0_60, %c0_61, %c0_62, %c64] : memref<2x16x16x288xbf16, #tpu.memory_space<vmem>>, vector<2x16x16x32xbf16>
    tpu.vector_store %arg10[%c0_60, %c0_61, %c0_62, %c64], %44 {strides = array<i32>} : memref<2x16x16x288xbf16, #tpu.memory_space<vmem>>, vector<2x16x16x32xbf16>,
    %c0_63 = arith.constant 0 : index
    %c1_64 = arith.constant 1 : index
    %c0_65 = arith.constant 0 : index
    %c0_66 = arith.constant 0 : index
    %46 = vector.load %arg9[%c0_63, %c1_64, %c0_65, %c0_66] : memref<2x18x18x32xbf16, #tpu.memory_space<vmem>>, vector<2x16x16x32xbf16>
    %c0_67 = arith.constant 0 : index
    %c0_68 = arith.constant 0 : index
    %c0_69 = arith.constant 0 : index
    %c96 = arith.constant 96 : index
    %47 = vector.load %arg10[%c0_67, %c0_68, %c0_69, %c96] : memref<2x16x16x288xbf16, #tpu.memory_space<vmem>>, vector<2x16x16x32xbf16>
    tpu.vector_store %arg10[%c0_67, %c0_68, %c0_69, %c96], %46 {strides = array<i32>} : memref<2x16x16x288xbf16, #tpu.memory_space<vmem>>, vector<2x16x16x32xbf16>,
    %c0_70 = arith.constant 0 : index
    %c1_71 = arith.constant 1 : index
    %c1_72 = arith.constant 1 : index
    %c0_73 = arith.constant 0 : index
    %48 = vector.load %arg9[%c0_70, %c1_71, %c1_72, %c0_73] : memref<2x18x18x32xbf16, #tpu.memory_space<vmem>>, vector<2x16x16x32xbf16>
    %c0_74 = arith.constant 0 : index
    %c0_75 = arith.constant 0 : index
    %c0_76 = arith.constant 0 : index
    %c128 = arith.constant 128 : index
    %49 = vector.load %arg10[%c0_74, %c0_75, %c0_76, %c128] : memref<2x16x16x288xbf16, #tpu.memory_space<vmem>>, vector<2x16x16x32xbf16>
    tpu.vector_store %arg10[%c0_74, %c0_75, %c0_76, %c128], %48 {strides = array<i32>} : memref<2x16x16x288xbf16, #tpu.memory_space<vmem>>, vector<2x16x16x32xbf16>,
    %c0_77 = arith.constant 0 : index
    %c1_78 = arith.constant 1 : index
    %c2_79 = arith.constant 2 : index
    %c0_80 = arith.constant 0 : index
    %50 = vector.load %arg9[%c0_77, %c1_78, %c2_79, %c0_80] : memref<2x18x18x32xbf16, #tpu.memory_space<vmem>>, vector<2x16x16x32xbf16>
    %c0_81 = arith.constant 0 : index
    %c0_82 = arith.constant 0 : index
    %c0_83 = arith.constant 0 : index
    %c160 = arith.constant 160 : index
    %51 = vector.load %arg10[%c0_81, %c0_82, %c0_83, %c160] : memref<2x16x16x288xbf16, #tpu.memory_space<vmem>>, vector<2x16x16x32xbf16>
    tpu.vector_store %arg10[%c0_81, %c0_82, %c0_83, %c160], %50 {strides = array<i32>} : memref<2x16x16x288xbf16, #tpu.memory_space<vmem>>, vector<2x16x16x32xbf16>,
    %c0_84 = arith.constant 0 : index
    %c2_85 = arith.constant 2 : index
    %c0_86 = arith.constant 0 : index
    %c0_87 = arith.constant 0 : index
    %52 = vector.load %arg9[%c0_84, %c2_85, %c0_86, %c0_87] : memref<2x18x18x32xbf16, #tpu.memory_space<vmem>>, vector<2x16x16x32xbf16>
    %c0_88 = arith.constant 0 : index
    %c0_89 = arith.constant 0 : index
    %c0_90 = arith.constant 0 : index
    %c192 = arith.constant 192 : index
    %53 = vector.load %arg10[%c0_88, %c0_89, %c0_90, %c192] : memref<2x16x16x288xbf16, #tpu.memory_space<vmem>>, vector<2x16x16x32xbf16>
    tpu.vector_store %arg10[%c0_88, %c0_89, %c0_90, %c192], %52 {strides = array<i32>} : memref<2x16x16x288xbf16, #tpu.memory_space<vmem>>, vector<2x16x16x32xbf16>,
    %c0_91 = arith.constant 0 : index
    %c2_92 = arith.constant 2 : index
    %c1_93 = arith.constant 1 : index
    %c0_94 = arith.constant 0 : index
    %54 = vector.load %arg9[%c0_91, %c2_92, %c1_93, %c0_94] : memref<2x18x18x32xbf16, #tpu.memory_space<vmem>>, vector<2x16x16x32xbf16>
    %c0_95 = arith.constant 0 : index
    %c0_96 = arith.constant 0 : index
    %c0_97 = arith.constant 0 : index
    %c224 = arith.constant 224 : index
    %55 = vector.load %arg10[%c0_95, %c0_96, %c0_97, %c224] : memref<2x16x16x288xbf16, #tpu.memory_space<vmem>>, vector<2x16x16x32xbf16>
    tpu.vector_store %arg10[%c0_95, %c0_96, %c0_97, %c224], %54 {strides = array<i32>} : memref<2x16x16x288xbf16, #tpu.memory_space<vmem>>, vector<2x16x16x32xbf16>,
    %c0_98 = arith.constant 0 : index
    %c2_99 = arith.constant 2 : index
    %c2_100 = arith.constant 2 : index
    %c0_101 = arith.constant 0 : index
    %56 = vector.load %arg9[%c0_98, %c2_99, %c2_100, %c0_101] : memref<2x18x18x32xbf16, #tpu.memory_space<vmem>>, vector<2x16x16x32xbf16>
    %c0_102 = arith.constant 0 : index
    %c0_103 = arith.constant 0 : index
    %c0_104 = arith.constant 0 : index
    %c256 = arith.constant 256 : index
    %57 = vector.load %arg10[%c0_102, %c0_103, %c0_104, %c256] : memref<2x16x16x288xbf16, #tpu.memory_space<vmem>>, vector<2x16x16x32xbf16>
    tpu.vector_store %arg10[%c0_102, %c0_103, %c0_104, %c256], %56 {strides = array<i32>} : memref<2x16x16x288xbf16, #tpu.memory_space<vmem>>, vector<2x16x16x32xbf16>,
    %c0_105 = arith.constant 0 : index
    %c0_106 = arith.constant 0 : index
    %c0_107 = arith.constant 0 : index
    %c0_108 = arith.constant 0 : index
    %58 = vector.load %arg10[%c0_105, %c0_106, %c0_107, %c0_108] : memref<2x16x16x288xbf16, #tpu.memory_space<vmem>>, vector<2x16x16x288xbf16>
    %59 = vector.shape_cast %58 : vector<2x16x16x288xbf16> to vector<512x288xbf16>
    %c0_109 = arith.constant 0 : index
    %c0_110 = arith.constant 0 : index
    %60 = vector.load %arg4[%c0_109, %c0_110] : memref<288x32xbf16, #tpu.memory_space<vmem>>, vector<288x32xbf16>
    %cst_111 = arith.constant dense<0.000000e+00> : vector<512x32xf32>
    %61 = tpu.matmul %59, %60, %cst_111 {dimension_numbers = #tpu.dot_dimension_numbers<[1], [0], [0], [1], [0, 0, 1, 1], [], []>} : vector<512x288xbf16>, vector<288x32xbf16>, vector<512x32xf32> -> vector<512x32xf32>
    %c0_112 = arith.constant 0 : index
    %c0_113 = arith.constant 0 : index
    %62 = vector.load %arg5[%c0_112, %c0_113] : memref<1x32xf32, #tpu.memory_space<vmem>>, vector<1x32xf32>
    %63 = vector.broadcast %62 : vector<1x32xf32> to vector<512x32xf32>
    %64 = arith.addf %61, %63 : vector<512x32xf32>
    %cst_114 = arith.constant 0.000000e+00 : f32
    %65 = vector.broadcast %cst_114 : f32 to vector<512x32xf32>
    %66 = arith.maximumf %64, %65 : vector<512x32xf32>
    %67 = arith.truncf %66 : vector<512x32xf32> to vector<512x32xbf16>
    %68 = vector.extract_strided_slice %67 {offsets = [0, 0], sizes = [256, 32], strides = [1, 1]} : vector<512x32xbf16> to vector<256x32xbf16>
    %c0_115 = arith.constant 0 : index
    %c0_116 = arith.constant 0 : index
    %69 = vector.load %arg6[%c0_115, %c0_116] : memref<32x8xbf16, #tpu.memory_space<vmem>>, vector<32x8xbf16>
    %cst_117 = arith.constant dense<0.000000e+00> : vector<256x8xf32>
    %70 = tpu.matmul %68, %69, %cst_117 {dimension_numbers = #tpu.dot_dimension_numbers<[1], [0], [0], [1], [0, 0, 1, 1], [], []>} : vector<256x32xbf16>, vector<32x8xbf16>, vector<256x8xf32> -> vector<256x8xf32>
    %c0_118 = arith.constant 0 : index
    %c0_119 = arith.constant 0 : index
    %71 = vector.load %arg7[%c0_118, %c0_119] : memref<1x8xf32, #tpu.memory_space<vmem>>, vector<1x8xf32>
    %72 = vector.broadcast %71 : vector<1x8xf32> to vector<256x8xf32>
    %73 = arith.addf %70, %72 : vector<256x8xf32>
    %cst_120 = arith.constant 0.000000e+00 : f32
    %74 = vector.broadcast %cst_120 : f32 to vector<256x8xf32>
    %75 = arith.maximumf %73, %74 : vector<256x8xf32>
    %76 = tpu.transpose %75, [1, 0] : vector<256x8xf32> -> vector<8x256xf32>
    %c0_121 = arith.constant 0 : index
    %c0_122 = arith.constant 0 : index
    %c0_123 = arith.constant 0 : index
    %77 = vector.load %arg8[%c0_121, %c0_122, %c0_123] : memref<2x8x256xf32, #tpu.memory_space<vmem>>, vector<1x8x256xf32>
    %78 = vector.shape_cast %77 : vector<1x8x256xf32> to vector<8x256xf32>
    %79 = vector.shape_cast %76 : vector<8x256xf32> to vector<1x8x256xf32>
    tpu.vector_store %arg8[%c0_121, %c0_122, %c0_123], %79 {strides = array<i32>} : memref<2x8x256xf32, #tpu.memory_space<vmem>>, vector<1x8x256xf32>,
    %80 = vector.extract_strided_slice %67 {offsets = [256, 0], sizes = [256, 32], strides = [1, 1]} : vector<512x32xbf16> to vector<256x32xbf16>
    %c0_124 = arith.constant 0 : index
    %c0_125 = arith.constant 0 : index
    %81 = vector.load %arg6[%c0_124, %c0_125] : memref<32x8xbf16, #tpu.memory_space<vmem>>, vector<32x8xbf16>
    %cst_126 = arith.constant dense<0.000000e+00> : vector<256x8xf32>
    %82 = tpu.matmul %80, %81, %cst_126 {dimension_numbers = #tpu.dot_dimension_numbers<[1], [0], [0], [1], [0, 0, 1, 1], [], []>} : vector<256x32xbf16>, vector<32x8xbf16>, vector<256x8xf32> -> vector<256x8xf32>
    %c0_127 = arith.constant 0 : index
    %c0_128 = arith.constant 0 : index
    %83 = vector.load %arg7[%c0_127, %c0_128] : memref<1x8xf32, #tpu.memory_space<vmem>>, vector<1x8xf32>
    %84 = vector.broadcast %83 : vector<1x8xf32> to vector<256x8xf32>
    %85 = arith.addf %82, %84 : vector<256x8xf32>
    %cst_129 = arith.constant 0.000000e+00 : f32
    %86 = vector.broadcast %cst_129 : f32 to vector<256x8xf32>
    %87 = arith.maximumf %85, %86 : vector<256x8xf32>
    %88 = tpu.transpose %87, [1, 0] : vector<256x8xf32> -> vector<8x256xf32>
    %c1_130 = arith.constant 1 : index
    %c0_131 = arith.constant 0 : index
    %c0_132 = arith.constant 0 : index
    %89 = vector.load %arg8[%c1_130, %c0_131, %c0_132] : memref<2x8x256xf32, #tpu.memory_space<vmem>>, vector<1x8x256xf32>
    %90 = vector.shape_cast %89 : vector<1x8x256xf32> to vector<8x256xf32>
    %91 = vector.shape_cast %88 : vector<8x256xf32> to vector<1x8x256xf32>
    tpu.vector_store %arg8[%c1_130, %c0_131, %c0_132], %91 {strides = array<i32>} : memref<2x8x256xf32, #tpu.memory_space<vmem>>, vector<1x8x256xf32>,
    return
  }
  func.func @transform_0(%arg0: i32) -> (i32, i32, i32) {
    %c0_i32 = arith.constant 0 : i32
    %c0_i32_0 = arith.constant 0 : i32
    %c0_i32_1 = arith.constant 0 : i32
    return %arg0, %c0_i32, %c0_i32_0 : i32, i32, i32
  }
  func.func @transform_1(%arg0: i32) -> (i32, i32) {
    %c0_i32 = arith.constant 0 : i32
    %c0_i32_0 = arith.constant 0 : i32
    %c0_i32_1 = arith.constant 0 : i32
    return %c0_i32, %c0_i32_0 : i32, i32
  }
  func.func @transform_2(%arg0: i32) -> (i32, i32) {
    %c0_i32 = arith.constant 0 : i32
    %c0_i32_0 = arith.constant 0 : i32
    %c0_i32_1 = arith.constant 0 : i32
    return %c0_i32, %c0_i32_0 : i32, i32
  }
  func.func @transform_3(%arg0: i32) -> (i32, i32) {
    %c0_i32 = arith.constant 0 : i32
    %c0_i32_0 = arith.constant 0 : i32
    %c0_i32_1 = arith.constant 0 : i32
    return %c0_i32, %c0_i32_0 : i32, i32
  }
  func.func @transform_4(%arg0: i32) -> (i32, i32) {
    %c0_i32 = arith.constant 0 : i32
    %c0_i32_0 = arith.constant 0 : i32
    %c0_i32_1 = arith.constant 0 : i32
    return %c0_i32, %c0_i32_0 : i32, i32
  }
  func.func @transform_5(%arg0: i32) -> (i32, i32) {
    %c0_i32 = arith.constant 0 : i32
    %c0_i32_0 = arith.constant 0 : i32
    %c0_i32_1 = arith.constant 0 : i32
    return %c0_i32, %c0_i32_0 : i32, i32
  }
  func.func @transform_6(%arg0: i32) -> (i32, i32) {
    %c0_i32 = arith.constant 0 : i32
    %c0_i32_0 = arith.constant 0 : i32
    %c0_i32_1 = arith.constant 0 : i32
    return %c0_i32, %c0_i32_0 : i32, i32
  }
  func.func @transform_7(%arg0: i32) -> (i32, i32, i32) {
    %c0_i32 = arith.constant 0 : i32
    %c0_i32_0 = arith.constant 0 : i32
    %c0_i32_1 = arith.constant 0 : i32
    return %arg0, %c0_i32, %c0_i32_0 : i32, i32, i32
  }
}

</mosaic_0001>

<llo_original>
// kernel: tpu_custom_call.1
$region0: #{tpu_custom_call.1}
  #allocation0 [shape = 'u32[]', space=smem, size = 0x4, offset = 0x4, fixed_abs, tag = 'smem constant byte address 0x4 - core index']
  #allocation1 [shape = 'u32[144,128]{1,0:T(1,128)}', space=vmem, size = 0x12000, scoped, tag = 'internal scratch']
  #allocation2 [shape = 'bf16[2,18,18,32]{3,2,1,0:T(8,128)(2,1)}', space=vmem, size = 0x36000, scoped, tag = 'scratch operand']
  #allocation3 [shape = 'bf16[2,16,16,288]{3,2,1,0:T(8,128)(2,1)}', space=vmem, size = 0x60000, scoped, tag = 'scratch operand']
  %s0 = inlined_call_operand.vmem [shape: f32[2,4,256], index: 0, kind: input, shape index: {}]
  %s1 = inlined_call_operand.vmem [shape: bf16[32,4], index: 1, kind: input, shape index: {}]
  %s2 = inlined_call_operand.vmem [shape: f32[32,1], index: 2, kind: input, shape index: {}]
  %s3 = inlined_call_operand.vmem [shape: bf16[288,32], index: 3, kind: input, shape index: {}]
  %s4 = inlined_call_operand.vmem [shape: f32[1,32], index: 4, kind: input, shape index: {}]
  %s5 = inlined_call_operand.vmem [shape: bf16[32,8], index: 5, kind: input, shape index: {}]
  %s6 = inlined_call_operand.vmem [shape: f32[1,8], index: 6, kind: input, shape index: {}]
  %s7 = inlined_call_operand.hbm [shape: f32[2,8,256], index: 7, kind: output, shape index: {}]
  %s8 = sld [smem:[#allocation0]]
  $region38: #{tpu_custom_call.1} parent=0
    _
  %s10 = ssub.s32 1, %s8
  %s11 = scalar_select 0, %s10, %s8
  $region1: #{tpu_custom_call.1} parent=0
    #allocation4 [shape = 'u8[16384]{0}', space=vmem, size = 0x4000, scoped, tag = 'output window, operand 0, single buffered']
    #allocation5 [shape = 's32[1]{0}', space=sflag, size = 0x4, scoped, tag = 'scoped memory for tpu_custom_call.1']
    %12 = vsyncpa [#allocation5], 0
    // Predicated region
    $region2: #{tpu_custom_call.1} parent=1 // pred_check
      _
    $region3: #{tpu_custom_call.1} parent=1 // pred_check_branch
      %14 = sbr.rel (0) target = $region5
    $region4: #{tpu_custom_call.1} parent=1 // pred_region
      _
    $region5: #{tpu_custom_call.1} parent=1 // pred_fallthru
      _
    // Predicated region
    $region6: #{tpu_custom_call.1} parent=1 // pred_check
      _
    $region7: #{tpu_custom_call.1} parent=1 // pred_check_branch
      %16 = sbr.rel (0) target = $region9
    $region8: #{tpu_custom_call.1} parent=1 // pred_region
      _
    $region9: #{tpu_custom_call.1} parent=1 // pred_fallthru
      _
    // Predicated region
    $region10: #{tpu_custom_call.1} parent=1 // pred_check
      _
    $region11: #{tpu_custom_call.1} parent=1 // pred_check_branch
      %18 = sbr.rel (0) target = $region13
    $region12: #{tpu_custom_call.1} parent=1 // pred_region
      _
    $region13: #{tpu_custom_call.1} parent=1 // pred_fallthru
      _
    // Predicated region
    $region14: #{tpu_custom_call.1} parent=1 // pred_check
      _
    $region15: #{tpu_custom_call.1} parent=1 // pred_check_branch
      %20 = sbr.rel (0) target = $region17
    $region16: #{tpu_custom_call.1} parent=1 // pred_region
      _
    $region17: #{tpu_custom_call.1} parent=1 // pred_fallthru
      _
    // Predicated region
    $region18: #{tpu_custom_call.1} parent=1 // pred_check
      _
    $region19: #{tpu_custom_call.1} parent=1 // pred_check_branch
      %22 = sbr.rel (0) target = $region21
    $region20: #{tpu_custom_call.1} parent=1 // pred_region
      _
    $region21: #{tpu_custom_call.1} parent=1 // pred_fallthru
      _
    // Predicated region
    $region22: #{tpu_custom_call.1} parent=1 // pred_check
      _
    $region23: #{tpu_custom_call.1} parent=1 // pred_check_branch
      %24 = sbr.rel (0) target = $region25
    $region24: #{tpu_custom_call.1} parent=1 // pred_region
      _
    $region25: #{tpu_custom_call.1} parent=1 // pred_fallthru
      _
    // Predicated region
    $region26: #{tpu_custom_call.1} parent=1 // pred_check
      _
    $region27: #{tpu_custom_call.1} parent=1 // pred_check_branch
      %26 = sbr.rel (0) target = $region29
    $region28: #{tpu_custom_call.1} parent=1 // pred_region
      _
    $region29: #{tpu_custom_call.1} parent=1 // pred_fallthru
      _
    %vm28 = vcmask 257024
    %29 = vst.msk [vmem:[#allocation2] sm:$0xf] %vm28, 0
    %30 = vst.msk [vmem:[#allocation2 + $0x4] sm:$0xf] %vm28, 0
    %vm31 = vcmask 253952
    %32 = vst.msk [vmem:[#allocation2 + $0x8] sm:$0x1] %vm31, 0
    %33 = vst.msk [vmem:[#allocation2 + $0xd8] sm:$0xf] %vm28, 0
    %34 = vst.msk [vmem:[#allocation2 + $0xdc] sm:$0xf] %vm28, 0
    %35 = vst.msk [vmem:[#allocation2 + $0xe0] sm:$0x1] %vm31, 0
    %s36 = scalar_lea.vmem [#allocation2], 204
    %37 = vst.msk [vmem:[%s36] sm:$0xf] %vm28, 0
    %38 = vst.msk [vmem:[%s36 + $0x4] sm:$0xf] %vm28, 0
    %39 = vst.msk [vmem:[%s36 + $0x8] sm:$0x1] %vm31, 0
    %40 = vst.msk [vmem:[%s36 + $0xd8] sm:$0xf] %vm28, 0
    %41 = vst.msk [vmem:[%s36 + $0xdc] sm:$0xf] %vm28, 0
    %42 = vst.msk [vmem:[%s36 + $0xe0] sm:$0x1] %vm31, 0
    %vm43 = vcmask 253952
    %vm44 = vsmask.f32 256
    %vm45 = vmand %vm43, %vm44
    %v46 = vld [vmem:[#allocation2] sm:$0x1]
    %v47 = vsel %vm45, 0, %v46
    %48 = vst [vmem:[#allocation2] sm:$0x1] %v47
    %v49 = vld [vmem:[#allocation2 + $0xc] sm:$0x1]
    %v50 = vsel %vm45, 0, %v49
    %51 = vst [vmem:[#allocation2 + $0xc] sm:$0x1] %v50
    %v52 = vld [vmem:[#allocation2 + $0x18] sm:$0x1]
    %v53 = vsel %vm45, 0, %v52
    %54 = vst [vmem:[#allocation2 + $0x18] sm:$0x1] %v53
    %v55 = vld [vmem:[#allocation2 + $0x24] sm:$0x1]
    %v56 = vsel %vm45, 0, %v55
    %57 = vst [vmem:[#allocation2 + $0x24] sm:$0x1] %v56
    %v58 = vld [vmem:[#allocation2 + $0x30] sm:$0x1]
    %v59 = vsel %vm45, 0, %v58
    %60 = vst [vmem:[#allocation2 + $0x30] sm:$0x1] %v59
    %v61 = vld [vmem:[#allocation2 + $0x3c] sm:$0x1]
    %v62 = vsel %vm45, 0, %v61
    %63 = vst [vmem:[#allocation2 + $0x3c] sm:$0x1] %v62
    %v64 = vld [vmem:[#allocation2 + $0x48] sm:$0x1]
    %v65 = vsel %vm45, 0, %v64
    %66 = vst [vmem:[#allocation2 + $0x48] sm:$0x1] %v65
    %v67 = vld [vmem:[#allocation2 + $0x54] sm:$0x1]
    %v68 = vsel %vm45, 0, %v67
    %69 = vst [vmem:[#allocation2 + $0x54] sm:$0x1] %v68
    %v70 = vld [vmem:[#allocation2 + $0x60] sm:$0x1]
    %v71 = vsel %vm45, 0, %v70
    %72 = vst [vmem:[#allocation2 + $0x60] sm:$0x1] %v71
    %v73 = vld [vmem:[#allocation2 + $0x6c] sm:$0x1]
    %v74 = vsel %vm45, 0, %v73
    %75 = vst [vmem:[#allocation2 + $0x6c] sm:$0x1] %v74
    %v76 = vld [vmem:[#allocation2 + $0x78] sm:$0x1]
    %v77 = vsel %vm45, 0, %v76
    %78 = vst [vmem:[#allocation2 + $0x78] sm:$0x1] %v77
    %v79 = vld [vmem:[#allocation2 + $0x84] sm:$0x1]
    %v80 = vsel %vm45, 0, %v79
    %81 = vst [vmem:[#allocation2 + $0x84] sm:$0x1] %v80
    %v82 = vld [vmem:[#allocation2 + $0x90] sm:$0x1]
    %v83 = vsel %vm45, 0, %v82
    %84 = vst [vmem:[#allocation2 + $0x90] sm:$0x1] %v83
    %v85 = vld [vmem:[#allocation2 + $0x9c] sm:$0x1]
    %v86 = vsel %vm45, 0, %v85
    %87 = vst [vmem:[#allocation2 + $0x9c] sm:$0x1] %v86
    %v88 = vld [vmem:[#allocation2 + $0xa8] sm:$0x1]
    %v89 = vsel %vm45, 0, %v88
    %90 = vst [vmem:[#allocation2 + $0xa8] sm:$0x1] %v89
    %v91 = vld [vmem:[#allocation2 + $0xb4] sm:$0x1]
    %v92 = vsel %vm45, 0, %v91
    %93 = vst [vmem:[#allocation2 + $0xb4] sm:$0x1] %v92
    %v94 = vld [vmem:[#allocation2 + $0xc0] sm:$0x1]
    %v95 = vsel %vm45, 0, %v94
    %96 = vst [vmem:[#allocation2 + $0xc0] sm:$0x1] %v95
    %v97 = vld [vmem:[#allocation2 + $0xcc] sm:$0x1]
    %v98 = vsel %vm45, 0, %v97
    %99 = vst [vmem:[#allocation2 + $0xcc] sm:$0x1] %v98
    %v100 = vld [vmem:[#allocation2 + $0xd8] sm:$0x1]
    %v101 = vsel %vm45, 0, %v100
    %102 = vst [vmem:[#allocation2 + $0xd8] sm:$0x1] %v101
    %v103 = vld [vmem:[#allocation2 + $0xe4] sm:$0x1]
    %v104 = vsel %vm45, 0, %v103
    %105 = vst [vmem:[#allocation2 + $0xe4] sm:$0x1] %v104
    %v106 = vld [vmem:[#allocation2 + $0xf0] sm:$0x1]
    %v107 = vsel %vm45, 0, %v106
    %108 = vst [vmem:[#allocation2 + $0xf0] sm:$0x1] %v107
    %v109 = vld [vmem:[#allocation2 + $0xfc] sm:$0x1]
    %v110 = vsel %vm45, 0, %v109
    %111 = vst [vmem:[#allocation2 + $0xfc] sm:$0x1] %v110
    %v112 = vld [vmem:[#allocation2 + $0x108] sm:$0x1]
    %v113 = vsel %vm45, 0, %v112
    %114 = vst [vmem:[#allocation2 + $0x108] sm:$0x1] %v113
    %v115 = vld [vmem:[#allocation2 + $0x114] sm:$0x1]
    %v116 = vsel %vm45, 0, %v115
    %117 = vst [vmem:[#allocation2 + $0x114] sm:$0x1] %v116
    %v118 = vld [vmem:[#allocation2 + $0x120] sm:$0x1]
    %v119 = vsel %vm45, 0, %v118
    %120 = vst [vmem:[#allocation2 + $0x120] sm:$0x1] %v119
    %v121 = vld [vmem:[#allocation2 + $0x12c] sm:$0x1]
    %v122 = vsel %vm45, 0, %v121
    %123 = vst [vmem:[#allocation2 + $0x12c] sm:$0x1] %v122
    %v124 = vld [vmem:[#allocation2 + $0x138] sm:$0x1]
    %v125 = vsel %vm45, 0, %v124
    %126 = vst [vmem:[#allocation2 + $0x138] sm:$0x1] %v125
    %v127 = vld [vmem:[#allocation2 + $0x144] sm:$0x1]
    %v128 = vsel %vm45, 0, %v127
    %129 = vst [vmem:[#allocation2 + $0x144] sm:$0x1] %v128
    %v130 = vld [vmem:[#allocation2 + $0x150] sm:$0x1]
    %v131 = vsel %vm45, 0, %v130
    %132 = vst [vmem:[#allocation2 + $0x150] sm:$0x1] %v131
    %v133 = vld [vmem:[#allocation2 + $0x15c] sm:$0x1]
    %v134 = vsel %vm45, 0, %v133
    %135 = vst [vmem:[#allocation2 + $0x15c] sm:$0x1] %v134
    %v136 = vld [vmem:[#allocation2 + $0x168] sm:$0x1]
    %v137 = vsel %vm45, 0, %v136
    %138 = vst [vmem:[#allocation2 + $0x168] sm:$0x1] %v137
    %v139 = vld [vmem:[#allocation2 + $0x174] sm:$0x1]
    %v140 = vsel %vm45, 0, %v139
    %141 = vst [vmem:[#allocation2 + $0x174] sm:$0x1] %v140
    %v142 = vld [vmem:[#allocation2 + $0x180] sm:$0x1]
    %v143 = vsel %vm45, 0, %v142
    %144 = vst [vmem:[#allocation2 + $0x180] sm:$0x1] %v143
    %v145 = vld [vmem:[#allocation2 + $0x18c] sm:$0x1]
    %v146 = vsel %vm45, 0, %v145
    %147 = vst [vmem:[#allocation2 + $0x18c] sm:$0x1] %v146
    %v148 = vld [vmem:[#allocation2 + $0x198] sm:$0x1]
    %v149 = vsel %vm45, 0, %v148
    %150 = vst [vmem:[#allocation2 + $0x198] sm:$0x1] %v149
    %v151 = vld [vmem:[#allocation2 + $0x1a4] sm:$0x1]
    %v152 = vsel %vm45, 0, %v151
    %153 = vst [vmem:[#allocation2 + $0x1a4] sm:$0x1] %v152
    %vm154 = vsmask.f32 7938
    %vm155 = vmand %vm43, %vm154
    %v156 = vld [vmem:[#allocation2 + $0x8] sm:$0x1]
    %v157 = vsel %vm155, 0, %v156
    %158 = vst [vmem:[#allocation2 + $0x8] sm:$0x1] %v157
    %v159 = vld [vmem:[#allocation2 + $0x14] sm:$0x1]
    %v160 = vsel %vm155, 0, %v159
    %161 = vst [vmem:[#allocation2 + $0x14] sm:$0x1] %v160
    %v162 = vld [vmem:[#allocation2 + $0x20] sm:$0x1]
    %v163 = vsel %vm155, 0, %v162
    %164 = vst [vmem:[#allocation2 + $0x20] sm:$0x1] %v163
    %v165 = vld [vmem:[#allocation2 + $0x2c] sm:$0x1]
    %v166 = vsel %vm155, 0, %v165
    %167 = vst [vmem:[#allocation2 + $0x2c] sm:$0x1] %v166
    %v168 = vld [vmem:[#allocation2 + $0x38] sm:$0x1]
    %v169 = vsel %vm155, 0, %v168
    %170 = vst [vmem:[#allocation2 + $0x38] sm:$0x1] %v169
    %v171 = vld [vmem:[#allocation2 + $0x44] sm:$0x1]
    %v172 = vsel %vm155, 0, %v171
    %173 = vst [vmem:[#allocation2 + $0x44] sm:$0x1] %v172
    %v174 = vld [vmem:[#allocation2 + $0x50] sm:$0x1]
    %v175 = vsel %vm155, 0, %v174
    %176 = vst [vmem:[#allocation2 + $0x50] sm:$0x1] %v175
    %v177 = vld [vmem:[#allocation2 + $0x5c] sm:$0x1]
    %v178 = vsel %vm155, 0, %v177
    %179 = vst [vmem:[#allocation2 + $0x5c] sm:$0x1] %v178
    %v180 = vld [vmem:[#allocation2 + $0x68] sm:$0x1]
    %v181 = vsel %vm155, 0, %v180
    %182 = vst [vmem:[#allocation2 + $0x68] sm:$0x1] %v181
    %v183 = vld [vmem:[#allocation2 + $0x74] sm:$0x1]
    %v184 = vsel %vm155, 0, %v183
    %185 = vst [vmem:[#allocation2 + $0x74] sm:$0x1] %v184
    %v186 = vld [vmem:[#allocation2 + $0x80] sm:$0x1]
    %v187 = vsel %vm155, 0, %v186
    %188 = vst [vmem:[#allocation2 + $0x80] sm:$0x1] %v187
    %v189 = vld [vmem:[#allocation2 + $0x8c] sm:$0x1]
    %v190 = vsel %vm155, 0, %v189
    %191 = vst [vmem:[#allocation2 + $0x8c] sm:$0x1] %v190
    %v192 = vld [vmem:[#allocation2 + $0x98] sm:$0x1]
    %v193 = vsel %vm155, 0, %v192
    %194 = vst [vmem:[#allocation2 + $0x98] sm:$0x1] %v193
    %v195 = vld [vmem:[#allocation2 + $0xa4] sm:$0x1]
    %v196 = vsel %vm155, 0, %v195
    %197 = vst [vmem:[#allocation2 + $0xa4] sm:$0x1] %v196
    %v198 = vld [vmem:[#allocation2 + $0xb0] sm:$0x1]
    %v199 = vsel %vm155, 0, %v198
    %200 = vst [vmem:[#allocation2 + $0xb0] sm:$0x1] %v199
    %v201 = vld [vmem:[#allocation2 + $0xbc] sm:$0x1]
    %v202 = vsel %vm155, 0, %v201
    %203 = vst [vmem:[#allocation2 + $0xbc] sm:$0x1] %v202
    %v204 = vld [vmem:[#allocation2 + $0xc8] sm:$0x1]
    %v205 = vsel %vm155, 0, %v204
    %206 = vst [vmem:[#allocation2 + $0xc8] sm:$0x1] %v205
    %v207 = vld [vmem:[#allocation2 + $0xd4] sm:$0x1]
    %v208 = vsel %vm155, 0, %v207
    %209 = vst [vmem:[#allocation2 + $0xd4] sm:$0x1] %v208
    %v210 = vld [vmem:[#allocation2 + $0xe0] sm:$0x1]
    %v211 = vsel %vm155, 0, %v210
    %212 = vst [vmem:[#allocation2 + $0xe0] sm:$0x1] %v211
    %v213 = vld [vmem:[#allocation2 + $0xec] sm:$0x1]
    %v214 = vsel %vm155, 0, %v213
    %215 = vst [vmem:[#allocation2 + $0xec] sm:$0x1] %v214
    %v216 = vld [vmem:[#allocation2 + $0xf8] sm:$0x1]
    %v217 = vsel %vm155, 0, %v216
    %218 = vst [vmem:[#allocation2 + $0xf8] sm:$0x1] %v217
    %v219 = vld [vmem:[#allocation2 + $0x104] sm:$0x1]
    %v220 = vsel %vm155, 0, %v219
    %221 = vst [vmem:[#allocation2 + $0x104] sm:$0x1] %v220
    %v222 = vld [vmem:[#allocation2 + $0x110] sm:$0x1]
    %v223 = vsel %vm155, 0, %v222
    %224 = vst [vmem:[#allocation2 + $0x110] sm:$0x1] %v223
    %v225 = vld [vmem:[#allocation2 + $0x11c] sm:$0x1]
    %v226 = vsel %vm155, 0, %v225
    %227 = vst [vmem:[#allocation2 + $0x11c] sm:$0x1] %v226
    %v228 = vld [vmem:[#allocation2 + $0x128] sm:$0x1]
    %v229 = vsel %vm155, 0, %v228
    %230 = vst [vmem:[#allocation2 + $0x128] sm:$0x1] %v229
    %v231 = vld [vmem:[#allocation2 + $0x134] sm:$0x1]
    %v232 = vsel %vm155, 0, %v231
    %233 = vst [vmem:[#allocation2 + $0x134] sm:$0x1] %v232
    %v234 = vld [vmem:[#allocation2 + $0x140] sm:$0x1]
    %v235 = vsel %vm155, 0, %v234
    %236 = vst [vmem:[#allocation2 + $0x140] sm:$0x1] %v235
    %v237 = vld [vmem:[#allocation2 + $0x14c] sm:$0x1]
    %v238 = vsel %vm155, 0, %v237
    %239 = vst [vmem:[#allocation2 + $0x14c] sm:$0x1] %v238
    %v240 = vld [vmem:[#allocation2 + $0x158] sm:$0x1]
    %v241 = vsel %vm155, 0, %v240
    %242 = vst [vmem:[#allocation2 + $0x158] sm:$0x1] %v241
    %v243 = vld [vmem:[#allocation2 + $0x164] sm:$0x1]
    %v244 = vsel %vm155, 0, %v243
    %245 = vst [vmem:[#allocation2 + $0x164] sm:$0x1] %v244
    %v246 = vld [vmem:[#allocation2 + $0x170] sm:$0x1]
    %v247 = vsel %vm155, 0, %v246
    %248 = vst [vmem:[#allocation2 + $0x170] sm:$0x1] %v247
    %v249 = vld [vmem:[#allocation2 + $0x17c] sm:$0x1]
    %v250 = vsel %vm155, 0, %v249
    %251 = vst [vmem:[#allocation2 + $0x17c] sm:$0x1] %v250
    %v252 = vld [vmem:[#allocation2 + $0x188] sm:$0x1]
    %v253 = vsel %vm155, 0, %v252
    %254 = vst [vmem:[#allocation2 + $0x188] sm:$0x1] %v253
    %v255 = vld [vmem:[#allocation2 + $0x194] sm:$0x1]
    %v256 = vsel %vm155, 0, %v255
    %257 = vst [vmem:[#allocation2 + $0x194] sm:$0x1] %v256
    %v258 = vld [vmem:[#allocation2 + $0x1a0] sm:$0x1]
    %v259 = vsel %vm155, 0, %v258
    %260 = vst [vmem:[#allocation2 + $0x1a0] sm:$0x1] %v259
    %v261 = vld [vmem:[#allocation2 + $0x1ac] sm:$0x1]
    %v262 = vsel %vm155, 0, %v261
    %263 = vst [vmem:[#allocation2 + $0x1ac] sm:$0x1] %v262
    %v264 = vld [vmem:[%s0] sm:$0xff]
    %v266 = vcombine.high %v264, %v264
    %v268 = vpack.c.bf16 %v264, %v264
    %v269 = vpack.c.bf16 %v266, %v266
    %v270 = vld [vmem:[%s1] sm:$0xf]
    %v271 = vld [vmem:[%s1 + $0x4] sm:$0xf]
    %v272 = vld [vmem:[%s1 + $0x8] sm:$0xf]
    %v273 = vld [vmem:[%s1 + $0xc] sm:$0xf]
    %v274 = vld [vmem:[%s2] sm:$0xff]
    %v275 = vld [vmem:[%s2 + $0x8] sm:$0xff]
    %v276 = vld [vmem:[%s2 + $0x10] sm:$0xff]
    %v277 = vld [vmem:[%s2 + $0x18] sm:$0xff]
    %279 = vset.pattern.permute.xlu0 0
    %280 = vperm.xlu0 %279, %v274
    %v281 = vpop.permute.xlu0 %280
    %284 = vset.pattern.permute.xlu0 0
    %285 = vperm.xlu0 %284, %v275
    %v286 = vpop.permute.xlu0 %285
    %289 = vset.pattern.permute.xlu0 0
    %290 = vperm.xlu0 %289, %v276
    %v291 = vpop.permute.xlu0 %290
    %294 = vset.pattern.permute.xlu0 0
    %295 = vperm.xlu0 %294, %v277
    %v296 = vpop.permute.xlu0 %295
    %v302 = vunpack.c.l.b16 %v270
    %v303 = vunpack.c.l.b16 %v271
    %v304 = vunpack.c.l.b16 %v272
    %v305 = vunpack.c.l.b16 %v273
    %v306 = vpack.c.b16 %v303, %v302
    %v307 = vpack.c.b16 %v305, %v304
    %vm308 = vcmask 31744
    %v310 = vsel %vm308, %v306, 0
    %v313 = vsel %vm308, %v307, 0
    %vm315 = vcmask 1041408
    %v317 = vsel %vm315, %v268, 0
    %v320 = vsel %vm315, %v269, 0
    %322 = vmatprep.subr.bf16.mxu0 0
    %323 = vmatpush1.bf16.msra.mxu0 0
    %324 = vmatprep.subr.bf16.mxu0 0
    %325 = vmatpush1.bf16.msra.mxu0 0
    %326 = vmatprep.subr.bf16.mxu0 0
    %327 = vmatpush1.bf16.msra.mxu0 0
    %328 = vmatprep.subr.bf16.mxu0 0
    %329 = vmatpush1.bf16.msra.mxu0 0
    %330 = vmatprep.subr.bf16.mxu0 0
    %331 = vmatpush1.bf16.msra.mxu0 0
    %332 = vmatprep.subr.bf16.mxu0 0
    %333 = vmatpush1.bf16.msra.mxu0 0
    %334 = vmatprep.subr.bf16.mxu0 0
    %335 = vmatpush1.bf16.msra.mxu0 0
    %336 = vmatprep.subr.bf16.mxu0 %v320
    %337 = vmatpush1.bf16.msra.mxu0 %v317
    %338 = vmatprep.subr.bf16.mxu0 0
    %339 = vmatpush2.bf16.msra.mxu0 0
    %340 = vmatprep.subr.bf16.mxu0 0
    %341 = vmatpush2.bf16.msra.mxu0 0
    %342 = vmatprep.subr.bf16.mxu0 0
    %343 = vmatpush2.bf16.msra.mxu0 0
    %344 = vmatprep.subr.bf16.mxu0 0
    %345 = vmatpush2.bf16.msra.mxu0 0
    %346 = vmatprep.subr.bf16.mxu0 0
    %347 = vmatpush2.bf16.msra.mxu0 0
    %348 = vmatprep.subr.bf16.mxu0 0
    %349 = vmatpush2.bf16.msra.mxu0 0
    %350 = vmatprep.subr.bf16.mxu0 0
    %351 = vmatpush2.bf16.msra.mxu0 0
    %352 = vmatprep.subr.bf16.mxu0 0
    %353 = vmatpush2.bf16.msra.mxu0 0
    %354 = vmatprep.mubr.bf16.mxu0 0
    %355 = vmatmul.mubr.bf16.gmra.mxu0 %v310
    %v356 = vpop.f32.mrf.mxu0
    %v357 = vadd.f32 %v281, %v356
    %v358 = vpop.f32.mrf.mxu0
    %v359 = vadd.f32 %v281, %v358
    %v360 = vpop.f32.mrf.mxu0
    %v361 = vadd.f32 %v286, %v360
    %v362 = vpop.f32.mrf.mxu0
    %v363 = vadd.f32 %v286, %v362
    %364 = vmatprep.mubr.bf16.mxu0 0
    %365 = vmatmul.mubr.bf16.gmra.mxu0 %v313
    %v366 = vpop.f32.mrf.mxu0
    %v367 = vadd.f32 %v291, %v366
    %v368 = vpop.f32.mrf.mxu0
    %v369 = vadd.f32 %v291, %v368
    %v370 = vpop.f32.mrf.mxu0
    %v371 = vadd.f32 %v296, %v370
    %v372 = vpop.f32.mrf.mxu0
    %v373 = vadd.f32 %v296, %v372
    %374 = vdwg.mxu0
    %v375 = vmax.f32 %v357, 0.0
    %v376 = vmax.f32 %v359, 0.0
    %v377 = vmax.f32 %v361, 0.0
    %v378 = vmax.f32 %v363, 0.0
    %v379 = vmax.f32 %v367, 0.0
    %v380 = vmax.f32 %v369, 0.0
    %v381 = vmax.f32 %v371, 0.0
    %v382 = vmax.f32 %v373, 0.0
    %383 = vxpose.xlu0.b32.start [1/16] %v375, 128
    %384 = vxpose.xlu0.b32.cont [2/16] %v377, 128
    %385 = vxpose.xlu0.b32.cont [3/16] %v379, 128
    %386 = vxpose.xlu0.b32.cont [4/16] %v381, 128
    %387 = vxpose.xlu0.b32.cont [5/16] 0.0, 128
    %388 = vxpose.xlu0.b32.cont [6/16] 0.0, 128
    %389 = vxpose.xlu0.b32.cont [7/16] 0.0, 128
    %390 = vxpose.xlu0.b32.cont [8/16] 0.0, 128
    %391 = vxpose.xlu0.b32.cont [9/16] 0.0, 128
    %392 = vxpose.xlu0.b32.cont [10/16] 0.0, 128
    %393 = vxpose.xlu0.b32.cont [11/16] 0.0, 128
    %394 = vxpose.xlu0.b32.cont [12/16] 0.0, 128
    %395 = vxpose.xlu0.b32.cont [13/16] 0.0, 128
    %396 = vxpose.xlu0.b32.cont [14/16] 0.0, 128
    %397 = vxpose.xlu0.b32.cont [15/16] 0.0, 128
    %398 = vxpose.xlu0.b32.end [16/16] 0.0, 128
    %v399 = vpop.trf.xlu0
    %v400 = vpop.trf.xlu0
    %v401 = vpop.trf.xlu0
    %v402 = vpop.trf.xlu0
    %v403 = vpop.trf.xlu0
    %v404 = vpop.trf.xlu0
    %v405 = vpop.trf.xlu0
    %v406 = vpop.trf.xlu0
    %v407 = vpop.trf.xlu0
    %v408 = vpop.trf.xlu0
    %v409 = vpop.trf.xlu0
    %v410 = vpop.trf.xlu0
    %v411 = vpop.trf.xlu0
    %v412 = vpop.trf.xlu0
    %v413 = vpop.trf.xlu0
    %v414 = vpop.trf.xlu0
    %415 = vxpose.xlu0.b32.start [1/16] %v376, 128
    %416 = vxpose.xlu0.b32.cont [2/16] %v378, 128
    %417 = vxpose.xlu0.b32.cont [3/16] %v380, 128
    %418 = vxpose.xlu0.b32.cont [4/16] %v382, 128
    %419 = vxpose.xlu0.b32.cont [5/16] 0.0, 128
    %420 = vxpose.xlu0.b32.cont [6/16] 0.0, 128
    %421 = vxpose.xlu0.b32.cont [7/16] 0.0, 128
    %422 = vxpose.xlu0.b32.cont [8/16] 0.0, 128
    %423 = vxpose.xlu0.b32.cont [9/16] 0.0, 128
    %424 = vxpose.xlu0.b32.cont [10/16] 0.0, 128
    %425 = vxpose.xlu0.b32.cont [11/16] 0.0, 128
    %426 = vxpose.xlu0.b32.cont [12/16] 0.0, 128
    %427 = vxpose.xlu0.b32.cont [13/16] 0.0, 128
    %428 = vxpose.xlu0.b32.cont [14/16] 0.0, 128
    %429 = vxpose.xlu0.b32.cont [15/16] 0.0, 128
    %430 = vxpose.xlu0.b32.end [16/16] 0.0, 128
    %v431 = vpop.trf.xlu0
    %v432 = vpop.trf.xlu0
    %v433 = vpop.trf.xlu0
    %v434 = vpop.trf.xlu0
    %v435 = vpop.trf.xlu0
    %v436 = vpop.trf.xlu0
    %v437 = vpop.trf.xlu0
    %v438 = vpop.trf.xlu0
    %v439 = vpop.trf.xlu0
    %v440 = vpop.trf.xlu0
    %v441 = vpop.trf.xlu0
    %v442 = vpop.trf.xlu0
    %v443 = vpop.trf.xlu0
    %v444 = vpop.trf.xlu0
    %v445 = vpop.trf.xlu0
    %v446 = vpop.trf.xlu0
    %v447 = vpack.c.bf16 %v400, %v399
    %v448 = vpack.c.bf16 %v402, %v401
    %v449 = vpack.c.bf16 %v404, %v403
    %v450 = vpack.c.bf16 %v406, %v405
    %v451 = vpack.c.bf16 %v408, %v407
    %v452 = vpack.c.bf16 %v410, %v409
    %v453 = vpack.c.bf16 %v412, %v411
    %v454 = vpack.c.bf16 %v414, %v413
    %v455 = vpack.c.bf16 %v432, %v431
    %v456 = vpack.c.bf16 %v434, %v433
    %v457 = vpack.c.bf16 %v436, %v435
    %v458 = vpack.c.bf16 %v438, %v437
    %v459 = vpack.c.bf16 %v440, %v439
    %v460 = vpack.c.bf16 %v442, %v441
    %v461 = vpack.c.bf16 %v444, %v443
    %v462 = vpack.c.bf16 %v446, %v445
    %v479 = vunpack.c.l.b16 %v447
    %v480 = vunpack.c.h.b16 %v447
    %v481 = vunpack.c.l.b16 %v448
    %v482 = vunpack.c.h.b16 %v448
    %v483 = vunpack.c.l.b16 %v449
    %v484 = vunpack.c.h.b16 %v449
    %v485 = vunpack.c.l.b16 %v450
    %v486 = vunpack.c.h.b16 %v450
    %v487 = vunpack.c.l.b16 %v451
    %v488 = vunpack.c.h.b16 %v451
    %v489 = vunpack.c.l.b16 %v452
    %v490 = vunpack.c.h.b16 %v452
    %v491 = vunpack.c.l.b16 %v453
    %v492 = vunpack.c.h.b16 %v453
    %v493 = vunpack.c.l.b16 %v454
    %v494 = vunpack.c.h.b16 %v454
    %v495 = vunpack.c.l.b16 %v455
    %v496 = vunpack.c.h.b16 %v455
    %v497 = vunpack.c.l.b16 %v456
    %v498 = vunpack.c.h.b16 %v456
    %v499 = vunpack.c.l.b16 %v457
    %v500 = vunpack.c.h.b16 %v457
    %v501 = vunpack.c.l.b16 %v458
    %v502 = vunpack.c.h.b16 %v458
    %v503 = vunpack.c.l.b16 %v459
    %v504 = vunpack.c.h.b16 %v459
    %v505 = vunpack.c.l.b16 %v460
    %v506 = vunpack.c.h.b16 %v460
    %v507 = vunpack.c.l.b16 %v461
    %v508 = vunpack.c.h.b16 %v461
    %v509 = vunpack.c.l.b16 %v462
    %v510 = vunpack.c.h.b16 %v462
    %v511 = vpack.c.b16 %v479, %v479
    %v512 = vpack.c.b16 %v480, %v480
    %v513 = vpack.c.b16 %v481, %v481
    %v514 = vpack.c.b16 %v482, %v482
    %v515 = vpack.c.b16 %v483, %v483
    %v516 = vpack.c.b16 %v484, %v484
    %v517 = vpack.c.b16 %v485, %v485
    %v518 = vpack.c.b16 %v486, %v486
    %v519 = vpack.c.b16 %v487, %v487
    %v520 = vpack.c.b16 %v488, %v488
    %v521 = vpack.c.b16 %v489, %v489
    %v522 = vpack.c.b16 %v490, %v490
    %v523 = vpack.c.b16 %v491, %v491
    %v524 = vpack.c.b16 %v492, %v492
    %v525 = vpack.c.b16 %v493, %v493
    %v526 = vpack.c.b16 %v494, %v494
    %v527 = vpack.c.b16 %v495, %v495
    %v528 = vpack.c.b16 %v496, %v496
    %v529 = vpack.c.b16 %v497, %v497
    %v530 = vpack.c.b16 %v498, %v498
    %v531 = vpack.c.b16 %v499, %v499
    %v532 = vpack.c.b16 %v500, %v500
    %v533 = vpack.c.b16 %v501, %v501
    %v534 = vpack.c.b16 %v502, %v502
    %v535 = vpack.c.b16 %v503, %v503
    %v536 = vpack.c.b16 %v504, %v504
    %v537 = vpack.c.b16 %v505, %v505
    %v538 = vpack.c.b16 %v506, %v506
    %v539 = vpack.c.b16 %v507, %v507
    %v540 = vpack.c.b16 %v508, %v508
    %v541 = vpack.c.b16 %v509, %v509
    %v542 = vpack.c.b16 %v510, %v510
    %vm543 = vsmask.f32 4368
    %vm544 = vmor %vm44, %vm543
    %v546 = vshrl.u32 %v511, 16
    %v548 = vrot.slane %v546, 7
    %v549 = vshll.u32 %v511, 16
    %v551 = vor.u32 %v548, %v549
    %v552 = vrot.slane %v548, 4
    %v554 = vshrl.u32 %v512, 16
    %v556 = vrot.slane %v554, 7
    %v557 = vshll.u32 %v512, 16
    %v559 = vor.u32 %v556, %v557
    %v560 = vsel %vm544, %v552, %v559
    %v561 = vrot.slane %v556, 4
    %v563 = vshrl.u32 %v513, 16
    %v565 = vrot.slane %v563, 7
    %v566 = vshll.u32 %v513, 16
    %v568 = vor.u32 %v565, %v566
    %v569 = vrot.slane %v565, 4
    %v571 = vshrl.u32 %v514, 16
    %v573 = vrot.slane %v571, 7
    %v574 = vshll.u32 %v514, 16
    %v576 = vor.u32 %v573, %v574
    %v577 = vsel %vm544, %v569, %v576
    %v578 = vrot.slane %v573, 4
    %v580 = vshrl.u32 %v515, 16
    %v582 = vrot.slane %v580, 7
    %v583 = vshll.u32 %v515, 16
    %v585 = vor.u32 %v582, %v583
    %v586 = vrot.slane %v582, 4
    %v588 = vshrl.u32 %v516, 16
    %v590 = vrot.slane %v588, 7
    %v591 = vshll.u32 %v516, 16
    %v593 = vor.u32 %v590, %v591
    %v594 = vsel %vm544, %v586, %v593
    %v595 = vrot.slane %v590, 4
    %v597 = vshrl.u32 %v517, 16
    %v599 = vrot.slane %v597, 7
    %v600 = vshll.u32 %v517, 16
    %v602 = vor.u32 %v599, %v600
    %v603 = vrot.slane %v599, 4
    %v605 = vshrl.u32 %v518, 16
    %v607 = vrot.slane %v605, 7
    %v608 = vshll.u32 %v518, 16
    %v610 = vor.u32 %v607, %v608
    %v611 = vsel %vm544, %v603, %v610
    %v612 = vrot.slane %v607, 4
    %v614 = vshrl.u32 %v519, 16
    %v616 = vrot.slane %v614, 7
    %v617 = vshll.u32 %v519, 16
    %v619 = vor.u32 %v616, %v617
    %v620 = vrot.slane %v616, 4
    %v622 = vshrl.u32 %v520, 16
    %v624 = vrot.slane %v622, 7
    %v625 = vshll.u32 %v520, 16
    %v627 = vor.u32 %v624, %v625
    %v628 = vsel %vm544, %v620, %v627
    %v629 = vrot.slane %v624, 4
    %v631 = vshrl.u32 %v521, 16
    %v633 = vrot.slane %v631, 7
    %v634 = vshll.u32 %v521, 16
    %v636 = vor.u32 %v633, %v634
    %v637 = vrot.slane %v633, 4
    %v639 = vshrl.u32 %v522, 16
    %v641 = vrot.slane %v639, 7
    %v642 = vshll.u32 %v522, 16
    %v644 = vor.u32 %v641, %v642
    %v645 = vsel %vm544, %v637, %v644
    %v646 = vrot.slane %v641, 4
    %v648 = vshrl.u32 %v523, 16
    %v650 = vrot.slane %v648, 7
    %v651 = vshll.u32 %v523, 16
    %v653 = vor.u32 %v650, %v651
    %v654 = vrot.slane %v650, 4
    %v656 = vshrl.u32 %v524, 16
    %v658 = vrot.slane %v656, 7
    %v659 = vshll.u32 %v524, 16
    %v661 = vor.u32 %v658, %v659
    %v662 = vsel %vm544, %v654, %v661
    %v663 = vrot.slane %v658, 4
    %v665 = vshrl.u32 %v525, 16
    %v667 = vrot.slane %v665, 7
    %v668 = vshll.u32 %v525, 16
    %v670 = vor.u32 %v667, %v668
    %v671 = vrot.slane %v667, 4
    %v673 = vshrl.u32 %v526, 16
    %v675 = vrot.slane %v673, 7
    %v676 = vshll.u32 %v526, 16
    %v678 = vor.u32 %v675, %v676
    %v679 = vsel %vm544, %v671, %v678
    %v680 = vrot.slane %v675, 4
    %v682 = vshrl.u32 %v527, 16
    %v684 = vrot.slane %v682, 7
    %v685 = vshll.u32 %v527, 16
    %v687 = vor.u32 %v684, %v685
    %v688 = vrot.slane %v684, 4
    %v690 = vshrl.u32 %v528, 16
    %v692 = vrot.slane %v690, 7
    %v693 = vshll.u32 %v528, 16
    %v695 = vor.u32 %v692, %v693
    %v696 = vsel %vm544, %v688, %v695
    %v697 = vrot.slane %v692, 4
    %v699 = vshrl.u32 %v529, 16
    %v701 = vrot.slane %v699, 7
    %v702 = vshll.u32 %v529, 16
    %v704 = vor.u32 %v701, %v702
    %v705 = vrot.slane %v701, 4
    %v707 = vshrl.u32 %v530, 16
    %v709 = vrot.slane %v707, 7
    %v710 = vshll.u32 %v530, 16
    %v712 = vor.u32 %v709, %v710
    %v713 = vsel %vm544, %v705, %v712
    %v714 = vrot.slane %v709, 4
    %v716 = vshrl.u32 %v531, 16
    %v718 = vrot.slane %v716, 7
    %v719 = vshll.u32 %v531, 16
    %v721 = vor.u32 %v718, %v719
    %v722 = vrot.slane %v718, 4
    %v724 = vshrl.u32 %v532, 16
    %v726 = vrot.slane %v724, 7
    %v727 = vshll.u32 %v532, 16
    %v729 = vor.u32 %v726, %v727
    %v730 = vsel %vm544, %v722, %v729
    %v731 = vrot.slane %v726, 4
    %v733 = vshrl.u32 %v533, 16
    %v735 = vrot.slane %v733, 7
    %v736 = vshll.u32 %v533, 16
    %v738 = vor.u32 %v735, %v736
    %v739 = vrot.slane %v735, 4
    %v741 = vshrl.u32 %v534, 16
    %v743 = vrot.slane %v741, 7
    %v744 = vshll.u32 %v534, 16
    %v746 = vor.u32 %v743, %v744
    %v747 = vsel %vm544, %v739, %v746
    %v748 = vrot.slane %v743, 4
    %v750 = vshrl.u32 %v535, 16
    %v752 = vrot.slane %v750, 7
    %v753 = vshll.u32 %v535, 16
    %v755 = vor.u32 %v752, %v753
    %v756 = vrot.slane %v752, 4
    %v758 = vshrl.u32 %v536, 16
    %v760 = vrot.slane %v758, 7
    %v761 = vshll.u32 %v536, 16
    %v763 = vor.u32 %v760, %v761
    %v764 = vsel %vm544, %v756, %v763
    %v765 = vrot.slane %v760, 4
    %v767 = vshrl.u32 %v537, 16
    %v769 = vrot.slane %v767, 7
    %v770 = vshll.u32 %v537, 16
    %v772 = vor.u32 %v769, %v770
    %v773 = vrot.slane %v769, 4
    %v775 = vshrl.u32 %v538, 16
    %v777 = vrot.slane %v775, 7
    %v778 = vshll.u32 %v538, 16
    %v780 = vor.u32 %v777, %v778
    %v781 = vsel %vm544, %v773, %v780
    %v782 = vrot.slane %v777, 4
    %v784 = vshrl.u32 %v539, 16
    %v786 = vrot.slane %v784, 7
    %v787 = vshll.u32 %v539, 16
    %v789 = vor.u32 %v786, %v787
    %v790 = vrot.slane %v786, 4
    %v792 = vshrl.u32 %v540, 16
    %v794 = vrot.slane %v792, 7
    %v795 = vshll.u32 %v540, 16
    %v797 = vor.u32 %v794, %v795
    %v798 = vsel %vm544, %v790, %v797
    %v799 = vrot.slane %v794, 4
    %v801 = vshrl.u32 %v541, 16
    %v803 = vrot.slane %v801, 7
    %v804 = vshll.u32 %v541, 16
    %v806 = vor.u32 %v803, %v804
    %v807 = vrot.slane %v803, 4
    %v809 = vshrl.u32 %v542, 16
    %v811 = vrot.slane %v809, 7
    %v812 = vshll.u32 %v542, 16
    %v814 = vor.u32 %v811, %v812
    %v815 = vsel %vm544, %v807, %v814
    %v816 = vrot.slane %v811, 4
    %s865 = scalar_lea.vmem [#allocation2], 12
    %vm866 = vcmask 257024
    %vm867 = vmand %vm866, %vm154
    %v868 = vld [vmem:[%s865] sm:$0xf]
    %v869 = vsel %vm867, %v551, %v868
    %870 = vst [vmem:[%s865] sm:$0xf] %v869
    %871 = vst.msk [vmem:[%s865 + $0x4] sm:$0xf] %vm28, %v560
    %v872 = vld [vmem:[%s865 + $0x8] sm:$0x1]
    %v873 = vsel %vm45, %v561, %v872
    %874 = vst [vmem:[%s865 + $0x8] sm:$0x1] %v873
    %v875 = vld [vmem:[%s865 + $0xc] sm:$0xf]
    %v876 = vsel %vm867, %v568, %v875
    %877 = vst [vmem:[%s865 + $0xc] sm:$0xf] %v876
    %878 = vst.msk [vmem:[%s865 + $0x10] sm:$0xf] %vm28, %v577
    %v879 = vld [vmem:[%s865 + $0x14] sm:$0x1]
    %v880 = vsel %vm45, %v578, %v879
    %881 = vst [vmem:[%s865 + $0x14] sm:$0x1] %v880
    %v882 = vld [vmem:[%s865 + $0x18] sm:$0xf]
    %v883 = vsel %vm867, %v585, %v882
    %884 = vst [vmem:[%s865 + $0x18] sm:$0xf] %v883
    %885 = vst.msk [vmem:[%s865 + $0x1c] sm:$0xf] %vm28, %v594
    %v886 = vld [vmem:[%s865 + $0x20] sm:$0x1]
    %v887 = vsel %vm45, %v595, %v886
    %888 = vst [vmem:[%s865 + $0x20] sm:$0x1] %v887
    %v889 = vld [vmem:[%s865 + $0x24] sm:$0xf]
    %v890 = vsel %vm867, %v602, %v889
    %891 = vst [vmem:[%s865 + $0x24] sm:$0xf] %v890
    %892 = vst.msk [vmem:[%s865 + $0x28] sm:$0xf] %vm28, %v611
    %v893 = vld [vmem:[%s865 + $0x2c] sm:$0x1]
    %v894 = vsel %vm45, %v612, %v893
    %895 = vst [vmem:[%s865 + $0x2c] sm:$0x1] %v894
    %v896 = vld [vmem:[%s865 + $0x30] sm:$0xf]
    %v897 = vsel %vm867, %v619, %v896
    %898 = vst [vmem:[%s865 + $0x30] sm:$0xf] %v897
    %899 = vst.msk [vmem:[%s865 + $0x34] sm:$0xf] %vm28, %v628
    %v900 = vld [vmem:[%s865 + $0x38] sm:$0x1]
    %v901 = vsel %vm45, %v629, %v900
    %902 = vst [vmem:[%s865 + $0x38] sm:$0x1] %v901
    %v903 = vld [vmem:[%s865 + $0x3c] sm:$0xf]
    %v904 = vsel %vm867, %v636, %v903
    %905 = vst [vmem:[%s865 + $0x3c] sm:$0xf] %v904
    %906 = vst.msk [vmem:[%s865 + $0x40] sm:$0xf] %vm28, %v645
    %v907 = vld [vmem:[%s865 + $0x44] sm:$0x1]
    %v908 = vsel %vm45, %v646, %v907
    %909 = vst [vmem:[%s865 + $0x44] sm:$0x1] %v908
    %v910 = vld [vmem:[%s865 + $0x48] sm:$0xf]
    %v911 = vsel %vm867, %v653, %v910
    %912 = vst [vmem:[%s865 + $0x48] sm:$0xf] %v911
    %913 = vst.msk [vmem:[%s865 + $0x4c] sm:$0xf] %vm28, %v662
    %v914 = vld [vmem:[%s865 + $0x50] sm:$0x1]
    %v915 = vsel %vm45, %v663, %v914
    %916 = vst [vmem:[%s865 + $0x50] sm:$0x1] %v915
    %v917 = vld [vmem:[%s865 + $0x54] sm:$0xf]
    %v918 = vsel %vm867, %v670, %v917
    %919 = vst [vmem:[%s865 + $0x54] sm:$0xf] %v918
    %920 = vst.msk [vmem:[%s865 + $0x58] sm:$0xf] %vm28, %v679
    %v921 = vld [vmem:[%s865 + $0x5c] sm:$0x1]
    %v922 = vsel %vm45, %v680, %v921
    %923 = vst [vmem:[%s865 + $0x5c] sm:$0x1] %v922
    %v924 = vld [vmem:[%s865 + $0x60] sm:$0xf]
    %v925 = vsel %vm867, %v687, %v924
    %926 = vst [vmem:[%s865 + $0x60] sm:$0xf] %v925
    %927 = vst.msk [vmem:[%s865 + $0x64] sm:$0xf] %vm28, %v696
    %v928 = vld [vmem:[%s865 + $0x68] sm:$0x1]
    %v929 = vsel %vm45, %v697, %v928
    %930 = vst [vmem:[%s865 + $0x68] sm:$0x1] %v929
    %v931 = vld [vmem:[%s865 + $0x6c] sm:$0xf]
    %v932 = vsel %vm867, %v704, %v931
    %933 = vst [vmem:[%s865 + $0x6c] sm:$0xf] %v932
    %934 = vst.msk [vmem:[%s865 + $0x70] sm:$0xf] %vm28, %v713
    %v935 = vld [vmem:[%s865 + $0x74] sm:$0x1]
    %v936 = vsel %vm45, %v714, %v935
    %937 = vst [vmem:[%s865 + $0x74] sm:$0x1] %v936
    %v938 = vld [vmem:[%s865 + $0x78] sm:$0xf]
    %v939 = vsel %vm867, %v721, %v938
    %940 = vst [vmem:[%s865 + $0x78] sm:$0xf] %v939
    %941 = vst.msk [vmem:[%s865 + $0x7c] sm:$0xf] %vm28, %v730
    %v942 = vld [vmem:[%s865 + $0x80] sm:$0x1]
    %v943 = vsel %vm45, %v731, %v942
    %944 = vst [vmem:[%s865 + $0x80] sm:$0x1] %v943
    %v945 = vld [vmem:[%s865 + $0x84] sm:$0xf]
    %v946 = vsel %vm867, %v738, %v945
    %947 = vst [vmem:[%s865 + $0x84] sm:$0xf] %v946
    %948 = vst.msk [vmem:[%s865 + $0x88] sm:$0xf] %vm28, %v747
    %v949 = vld [vmem:[%s865 + $0x8c] sm:$0x1]
    %v950 = vsel %vm45, %v748, %v949
    %951 = vst [vmem:[%s865 + $0x8c] sm:$0x1] %v950
    %v952 = vld [vmem:[%s865 + $0x90] sm:$0xf]
    %v953 = vsel %vm867, %v755, %v952
    %954 = vst [vmem:[%s865 + $0x90] sm:$0xf] %v953
    %955 = vst.msk [vmem:[%s865 + $0x94] sm:$0xf] %vm28, %v764
    %v956 = vld [vmem:[%s865 + $0x98] sm:$0x1]
    %v957 = vsel %vm45, %v765, %v956
    %958 = vst [vmem:[%s865 + $0x98] sm:$0x1] %v957
    %v959 = vld [vmem:[%s865 + $0x9c] sm:$0xf]
    %v960 = vsel %vm867, %v772, %v959
    %961 = vst [vmem:[%s865 + $0x9c] sm:$0xf] %v960
    %962 = vst.msk [vmem:[%s865 + $0xa0] sm:$0xf] %vm28, %v781
    %v963 = vld [vmem:[%s865 + $0xa4] sm:$0x1]
    %v964 = vsel %vm45, %v782, %v963
    %965 = vst [vmem:[%s865 + $0xa4] sm:$0x1] %v964
    %v966 = vld [vmem:[%s865 + $0xa8] sm:$0xf]
    %v967 = vsel %vm867, %v789, %v966
    %968 = vst [vmem:[%s865 + $0xa8] sm:$0xf] %v967
    %969 = vst.msk [vmem:[%s865 + $0xac] sm:$0xf] %vm28, %v798
    %v970 = vld [vmem:[%s865 + $0xb0] sm:$0x1]
    %v971 = vsel %vm45, %v799, %v970
    %972 = vst [vmem:[%s865 + $0xb0] sm:$0x1] %v971
    %v973 = vld [vmem:[%s865 + $0xb4] sm:$0xf]
    %v974 = vsel %vm867, %v806, %v973
    %975 = vst [vmem:[%s865 + $0xb4] sm:$0xf] %v974
    %976 = vst.msk [vmem:[%s865 + $0xb8] sm:$0xf] %vm28, %v815
    %v977 = vld [vmem:[%s865 + $0xbc] sm:$0x1]
    %v978 = vsel %vm45, %v816, %v977
    %979 = vst [vmem:[%s865 + $0xbc] sm:$0x1] %v978
    %s980 = scalar_lea.vmem %s0, 8
    %v981 = vld [vmem:[%s980] sm:$0xff]
    %v983 = vcombine.high %v981, %v981
    %v985 = vpack.c.bf16 %v981, %v981
    %v986 = vpack.c.bf16 %v983, %v983
    %v987 = vld [vmem:[%s1] sm:$0xf]
    %v988 = vld [vmem:[%s1 + $0x4] sm:$0xf]
    %v989 = vld [vmem:[%s1 + $0x8] sm:$0xf]
    %v990 = vld [vmem:[%s1 + $0xc] sm:$0xf]
    %v991 = vld [vmem:[%s2] sm:$0xff]
    %v992 = vld [vmem:[%s2 + $0x8] sm:$0xff]
    %v993 = vld [vmem:[%s2 + $0x10] sm:$0xff]
    %v994 = vld [vmem:[%s2 + $0x18] sm:$0xff]
    %996 = vset.pattern.permute.xlu0 0
    %997 = vperm.xlu0 %996, %v991
    %v998 = vpop.permute.xlu0 %997
    %1001 = vset.pattern.permute.xlu0 0
    %1002 = vperm.xlu0 %1001, %v992
    %v1003 = vpop.permute.xlu0 %1002
    %1006 = vset.pattern.permute.xlu0 0
    %1007 = vperm.xlu0 %1006, %v993
    %v1008 = vpop.permute.xlu0 %1007
    %1011 = vset.pattern.permute.xlu0 0
    %1012 = vperm.xlu0 %1011, %v994
    %v1013 = vpop.permute.xlu0 %1012
    %v1019 = vunpack.c.l.b16 %v987
    %v1020 = vunpack.c.l.b16 %v988
    %v1021 = vunpack.c.l.b16 %v989
    %v1022 = vunpack.c.l.b16 %v990
    %v1023 = vpack.c.b16 %v1020, %v1019
    %v1024 = vpack.c.b16 %v1022, %v1021
    %v1026 = vsel %vm308, %v1023, 0
    %v1029 = vsel %vm308, %v1024, 0
    %v1032 = vsel %vm315, %v985, 0
    %v1035 = vsel %vm315, %v986, 0
    %1037 = vmatprep.subr.bf16.mxu0 0
    %1038 = vmatpush1.bf16.msra.mxu0 0
    %1039 = vmatprep.subr.bf16.mxu0 0
    %1040 = vmatpush1.bf16.msra.mxu0 0
    %1041 = vmatprep.subr.bf16.mxu0 0
    %1042 = vmatpush1.bf16.msra.mxu0 0
    %1043 = vmatprep.subr.bf16.mxu0 0
    %1044 = vmatpush1.bf16.msra.mxu0 0
    %1045 = vmatprep.subr.bf16.mxu0 0
    %1046 = vmatpush1.bf16.msra.mxu0 0
    %1047 = vmatprep.subr.bf16.mxu0 0
    %1048 = vmatpush1.bf16.msra.mxu0 0
    %1049 = vmatprep.subr.bf16.mxu0 0
    %1050 = vmatpush1.bf16.msra.mxu0 0
    %1051 = vmatprep.subr.bf16.mxu0 %v1035
    %1052 = vmatpush1.bf16.msra.mxu0 %v1032
    %1053 = vmatprep.subr.bf16.mxu0 0
    %1054 = vmatpush2.bf16.msra.mxu0 0
    %1055 = vmatprep.subr.bf16.mxu0 0
    %1056 = vmatpush2.bf16.msra.mxu0 0
    %1057 = vmatprep.subr.bf16.mxu0 0
    %1058 = vmatpush2.bf16.msra.mxu0 0
    %1059 = vmatprep.subr.bf16.mxu0 0
    %1060 = vmatpush2.bf16.msra.mxu0 0
    %1061 = vmatprep.subr.bf16.mxu0 0
    %1062 = vmatpush2.bf16.msra.mxu0 0
    %1063 = vmatprep.subr.bf16.mxu0 0
    %1064 = vmatpush2.bf16.msra.mxu0 0
    %1065 = vmatprep.subr.bf16.mxu0 0
    %1066 = vmatpush2.bf16.msra.mxu0 0
    %1067 = vmatprep.subr.bf16.mxu0 0
    %1068 = vmatpush2.bf16.msra.mxu0 0
    %1069 = vmatprep.mubr.bf16.mxu0 0
    %1070 = vmatmul.mubr.bf16.gmra.mxu0 %v1026
    %v1071 = vpop.f32.mrf.mxu0
    %v1072 = vadd.f32 %v998, %v1071
    %v1073 = vpop.f32.mrf.mxu0
    %v1074 = vadd.f32 %v998, %v1073
    %v1075 = vpop.f32.mrf.mxu0
    %v1076 = vadd.f32 %v1003, %v1075
    %v1077 = vpop.f32.mrf.mxu0
    %v1078 = vadd.f32 %v1003, %v1077
    %1079 = vmatprep.mubr.bf16.mxu0 0
    %1080 = vmatmul.mubr.bf16.gmra.mxu0 %v1029
    %v1081 = vpop.f32.mrf.mxu0
    %v1082 = vadd.f32 %v1008, %v1081
    %v1083 = vpop.f32.mrf.mxu0
    %v1084 = vadd.f32 %v1008, %v1083
    %v1085 = vpop.f32.mrf.mxu0
    %v1086 = vadd.f32 %v1013, %v1085
    %v1087 = vpop.f32.mrf.mxu0
    %v1088 = vadd.f32 %v1013, %v1087
    %1089 = vdwg.mxu0
    %v1090 = vmax.f32 %v1072, 0.0
    %v1091 = vmax.f32 %v1074, 0.0
    %v1092 = vmax.f32 %v1076, 0.0
    %v1093 = vmax.f32 %v1078, 0.0
    %v1094 = vmax.f32 %v1082, 0.0
    %v1095 = vmax.f32 %v1084, 0.0
    %v1096 = vmax.f32 %v1086, 0.0
    %v1097 = vmax.f32 %v1088, 0.0
    %1098 = vxpose.xlu0.b32.start [1/16] %v1090, 128
    %1099 = vxpose.xlu0.b32.cont [2/16] %v1092, 128
    %1100 = vxpose.xlu0.b32.cont [3/16] %v1094, 128
    %1101 = vxpose.xlu0.b32.cont [4/16] %v1096, 128
    %1102 = vxpose.xlu0.b32.cont [5/16] 0.0, 128
    %1103 = vxpose.xlu0.b32.cont [6/16] 0.0, 128
    %1104 = vxpose.xlu0.b32.cont [7/16] 0.0, 128
    %1105 = vxpose.xlu0.b32.cont [8/16] 0.0, 128
    %1106 = vxpose.xlu0.b32.cont [9/16] 0.0, 128
    %1107 = vxpose.xlu0.b32.cont [10/16] 0.0, 128
    %1108 = vxpose.xlu0.b32.cont [11/16] 0.0, 128
    %1109 = vxpose.xlu0.b32.cont [12/16] 0.0, 128
    %1110 = vxpose.xlu0.b32.cont [13/16] 0.0, 128
    %1111 = vxpose.xlu0.b32.cont [14/16] 0.0, 128
    %1112 = vxpose.xlu0.b32.cont [15/16] 0.0, 128
    %1113 = vxpose.xlu0.b32.end [16/16] 0.0, 128
    %v1114 = vpop.trf.xlu0
    %v1115 = vpop.trf.xlu0
    %v1116 = vpop.trf.xlu0
    %v1117 = vpop.trf.xlu0
    %v1118 = vpop.trf.xlu0
    %v1119 = vpop.trf.xlu0
    %v1120 = vpop.trf.xlu0
    %v1121 = vpop.trf.xlu0
    %v1122 = vpop.trf.xlu0
    %v1123 = vpop.trf.xlu0
    %v1124 = vpop.trf.xlu0
    %v1125 = vpop.trf.xlu0
    %v1126 = vpop.trf.xlu0
    %v1127 = vpop.trf.xlu0
    %v1128 = vpop.trf.xlu0
    %v1129 = vpop.trf.xlu0
    %1130 = vxpose.xlu0.b32.start [1/16] %v1091, 128
    %1131 = vxpose.xlu0.b32.cont [2/16] %v1093, 128
    %1132 = vxpose.xlu0.b32.cont [3/16] %v1095, 128
    %1133 = vxpose.xlu0.b32.cont [4/16] %v1097, 128
    %1134 = vxpose.xlu0.b32.cont [5/16] 0.0, 128
    %1135 = vxpose.xlu0.b32.cont [6/16] 0.0, 128
    %1136 = vxpose.xlu0.b32.cont [7/16] 0.0, 128
    %1137 = vxpose.xlu0.b32.cont [8/16] 0.0, 128
    %1138 = vxpose.xlu0.b32.cont [9/16] 0.0, 128
    %1139 = vxpose.xlu0.b32.cont [10/16] 0.0, 128
    %1140 = vxpose.xlu0.b32.cont [11/16] 0.0, 128
    %1141 = vxpose.xlu0.b32.cont [12/16] 0.0, 128
    %1142 = vxpose.xlu0.b32.cont [13/16] 0.0, 128
    %1143 = vxpose.xlu0.b32.cont [14/16] 0.0, 128
    %1144 = vxpose.xlu0.b32.cont [15/16] 0.0, 128
    %1145 = vxpose.xlu0.b32.end [16/16] 0.0, 128
    %v1146 = vpop.trf.xlu0
    %v1147 = vpop.trf.xlu0
    %v1148 = vpop.trf.xlu0
    %v1149 = vpop.trf.xlu0
    %v1150 = vpop.trf.xlu0
    %v1151 = vpop.trf.xlu0
    %v1152 = vpop.trf.xlu0
    %v1153 = vpop.trf.xlu0
    %v1154 = vpop.trf.xlu0
    %v1155 = vpop.trf.xlu0
    %v1156 = vpop.trf.xlu0
    %v1157 = vpop.trf.xlu0
    %v1158 = vpop.trf.xlu0
    %v1159 = vpop.trf.xlu0
    %v1160 = vpop.trf.xlu0
    %v1161 = vpop.trf.xlu0
    %v1162 = vpack.c.bf16 %v1115, %v1114
    %v1163 = vpack.c.bf16 %v1117, %v1116
    %v1164 = vpack.c.bf16 %v1119, %v1118
    %v1165 = vpack.c.bf16 %v1121, %v1120
    %v1166 = vpack.c.bf16 %v1123, %v1122
    %v1167 = vpack.c.bf16 %v1125, %v1124
    %v1168 = vpack.c.bf16 %v1127, %v1126
    %v1169 = vpack.c.bf16 %v1129, %v1128
    %v1170 = vpack.c.bf16 %v1147, %v1146
    %v1171 = vpack.c.bf16 %v1149, %v1148
    %v1172 = vpack.c.bf16 %v1151, %v1150
    %v1173 = vpack.c.bf16 %v1153, %v1152
    %v1174 = vpack.c.bf16 %v1155, %v1154
    %v1175 = vpack.c.bf16 %v1157, %v1156
    %v1176 = vpack.c.bf16 %v1159, %v1158
    %v1177 = vpack.c.bf16 %v1161, %v1160
    %v1194 = vunpack.c.l.b16 %v1162
    %v1195 = vunpack.c.h.b16 %v1162
    %v1196 = vunpack.c.l.b16 %v1163
    %v1197 = vunpack.c.h.b16 %v1163
    %v1198 = vunpack.c.l.b16 %v1164
    %v1199 = vunpack.c.h.b16 %v1164
    %v1200 = vunpack.c.l.b16 %v1165
    %v1201 = vunpack.c.h.b16 %v1165
    %v1202 = vunpack.c.l.b16 %v1166
    %v1203 = vunpack.c.h.b16 %v1166
    %v1204 = vunpack.c.l.b16 %v1167
    %v1205 = vunpack.c.h.b16 %v1167
    %v1206 = vunpack.c.l.b16 %v1168
    %v1207 = vunpack.c.h.b16 %v1168
    %v1208 = vunpack.c.l.b16 %v1169
    %v1209 = vunpack.c.h.b16 %v1169
    %v1210 = vunpack.c.l.b16 %v1170
    %v1211 = vunpack.c.h.b16 %v1170
    %v1212 = vunpack.c.l.b16 %v1171
    %v1213 = vunpack.c.h.b16 %v1171
    %v1214 = vunpack.c.l.b16 %v1172
    %v1215 = vunpack.c.h.b16 %v1172
    %v1216 = vunpack.c.l.b16 %v1173
    %v1217 = vunpack.c.h.b16 %v1173
    %v1218 = vunpack.c.l.b16 %v1174
    %v1219 = vunpack.c.h.b16 %v1174
    %v1220 = vunpack.c.l.b16 %v1175
    %v1221 = vunpack.c.h.b16 %v1175
    %v1222 = vunpack.c.l.b16 %v1176
    %v1223 = vunpack.c.h.b16 %v1176
    %v1224 = vunpack.c.l.b16 %v1177
    %v1225 = vunpack.c.h.b16 %v1177
    %v1226 = vpack.c.b16 %v1194, %v1194
    %v1227 = vpack.c.b16 %v1195, %v1195
    %v1228 = vpack.c.b16 %v1196, %v1196
    %v1229 = vpack.c.b16 %v1197, %v1197
    %v1230 = vpack.c.b16 %v1198, %v1198
    %v1231 = vpack.c.b16 %v1199, %v1199
    %v1232 = vpack.c.b16 %v1200, %v1200
    %v1233 = vpack.c.b16 %v1201, %v1201
    %v1234 = vpack.c.b16 %v1202, %v1202
    %v1235 = vpack.c.b16 %v1203, %v1203
    %v1236 = vpack.c.b16 %v1204, %v1204
    %v1237 = vpack.c.b16 %v1205, %v1205
    %v1238 = vpack.c.b16 %v1206, %v1206
    %v1239 = vpack.c.b16 %v1207, %v1207
    %v1240 = vpack.c.b16 %v1208, %v1208
    %v1241 = vpack.c.b16 %v1209, %v1209
    %v1242 = vpack.c.b16 %v1210, %v1210
    %v1243 = vpack.c.b16 %v1211, %v1211
    %v1244 = vpack.c.b16 %v1212, %v1212
    %v1245 = vpack.c.b16 %v1213, %v1213
    %v1246 = vpack.c.b16 %v1214, %v1214
    %v1247 = vpack.c.b16 %v1215, %v1215
    %v1248 = vpack.c.b16 %v1216, %v1216
    %v1249 = vpack.c.b16 %v1217, %v1217
    %v1250 = vpack.c.b16 %v1218, %v1218
    %v1251 = vpack.c.b16 %v1219, %v1219
    %v1252 = vpack.c.b16 %v1220, %v1220
    %v1253 = vpack.c.b16 %v1221, %v1221
    %v1254 = vpack.c.b16 %v1222, %v1222
    %v1255 = vpack.c.b16 %v1223, %v1223
    %v1256 = vpack.c.b16 %v1224, %v1224
    %v1257 = vpack.c.b16 %v1225, %v1225
    %v1259 = vshrl.u32 %v1226, 16
    %v1261 = vrot.slane %v1259, 7
    %v1262 = vshll.u32 %v1226, 16
    %v1264 = vor.u32 %v1261, %v1262
    %v1265 = vrot.slane %v1261, 4
    %v1267 = vshrl.u32 %v1227, 16
    %v1269 = vrot.slane %v1267, 7
    %v1270 = vshll.u32 %v1227, 16
    %v1272 = vor.u32 %v1269, %v1270
    %v1273 = vsel %vm544, %v1265, %v1272
    %v1274 = vrot.slane %v1269, 4
    %v1276 = vshrl.u32 %v1228, 16
    %v1278 = vrot.slane %v1276, 7
    %v1279 = vshll.u32 %v1228, 16
    %v1281 = vor.u32 %v1278, %v1279
    %v1282 = vrot.slane %v1278, 4
    %v1284 = vshrl.u32 %v1229, 16
    %v1286 = vrot.slane %v1284, 7
    %v1287 = vshll.u32 %v1229, 16
    %v1289 = vor.u32 %v1286, %v1287
    %v1290 = vsel %vm544, %v1282, %v1289
    %v1291 = vrot.slane %v1286, 4
    %v1293 = vshrl.u32 %v1230, 16
    %v1295 = vrot.slane %v1293, 7
    %v1296 = vshll.u32 %v1230, 16
    %v1298 = vor.u32 %v1295, %v1296
    %v1299 = vrot.slane %v1295, 4
    %v1301 = vshrl.u32 %v1231, 16
    %v1303 = vrot.slane %v1301, 7
    %v1304 = vshll.u32 %v1231, 16
    %v1306 = vor.u32 %v1303, %v1304
    %v1307 = vsel %vm544, %v1299, %v1306
    %v1308 = vrot.slane %v1303, 4
    %v1310 = vshrl.u32 %v1232, 16
    %v1312 = vrot.slane %v1310, 7
    %v1313 = vshll.u32 %v1232, 16
    %v1315 = vor.u32 %v1312, %v1313
    %v1316 = vrot.slane %v1312, 4
    %v1318 = vshrl.u32 %v1233, 16
    %v1320 = vrot.slane %v1318, 7
    %v1321 = vshll.u32 %v1233, 16
    %v1323 = vor.u32 %v1320, %v1321
    %v1324 = vsel %vm544, %v1316, %v1323
    %v1325 = vrot.slane %v1320, 4
    %v1327 = vshrl.u32 %v1234, 16
    %v1329 = vrot.slane %v1327, 7
    %v1330 = vshll.u32 %v1234, 16
    %v1332 = vor.u32 %v1329, %v1330
    %v1333 = vrot.slane %v1329, 4
    %v1335 = vshrl.u32 %v1235, 16
    %v1337 = vrot.slane %v1335, 7
    %v1338 = vshll.u32 %v1235, 16
    %v1340 = vor.u32 %v1337, %v1338
    %v1341 = vsel %vm544, %v1333, %v1340
    %v1342 = vrot.slane %v1337, 4
    %v1344 = vshrl.u32 %v1236, 16
    %v1346 = vrot.slane %v1344, 7
    %v1347 = vshll.u32 %v1236, 16
    %v1349 = vor.u32 %v1346, %v1347
    %v1350 = vrot.slane %v1346, 4
    %v1352 = vshrl.u32 %v1237, 16
    %v1354 = vrot.slane %v1352, 7
    %v1355 = vshll.u32 %v1237, 16
    %v1357 = vor.u32 %v1354, %v1355
    %v1358 = vsel %vm544, %v1350, %v1357
    %v1359 = vrot.slane %v1354, 4
    %v1361 = vshrl.u32 %v1238, 16
    %v1363 = vrot.slane %v1361, 7
    %v1364 = vshll.u32 %v1238, 16
    %v1366 = vor.u32 %v1363, %v1364
    %v1367 = vrot.slane %v1363, 4
    %v1369 = vshrl.u32 %v1239, 16
    %v1371 = vrot.slane %v1369, 7
    %v1372 = vshll.u32 %v1239, 16
    %v1374 = vor.u32 %v1371, %v1372
    %v1375 = vsel %vm544, %v1367, %v1374
    %v1376 = vrot.slane %v1371, 4
    %v1378 = vshrl.u32 %v1240, 16
    %v1380 = vrot.slane %v1378, 7
    %v1381 = vshll.u32 %v1240, 16
    %v1383 = vor.u32 %v1380, %v1381
    %v1384 = vrot.slane %v1380, 4
    %v1386 = vshrl.u32 %v1241, 16
    %v1388 = vrot.slane %v1386, 7
    %v1389 = vshll.u32 %v1241, 16
    %v1391 = vor.u32 %v1388, %v1389
    %v1392 = vsel %vm544, %v1384, %v1391
    %v1393 = vrot.slane %v1388, 4
    %v1395 = vshrl.u32 %v1242, 16
    %v1397 = vrot.slane %v1395, 7
    %v1398 = vshll.u32 %v1242, 16
    %v1400 = vor.u32 %v1397, %v1398
    %v1401 = vrot.slane %v1397, 4
    %v1403 = vshrl.u32 %v1243, 16
    %v1405 = vrot.slane %v1403, 7
    %v1406 = vshll.u32 %v1243, 16
    %v1408 = vor.u32 %v1405, %v1406
    %v1409 = vsel %vm544, %v1401, %v1408
    %v1410 = vrot.slane %v1405, 4
    %v1412 = vshrl.u32 %v1244, 16
    %v1414 = vrot.slane %v1412, 7
    %v1415 = vshll.u32 %v1244, 16
    %v1417 = vor.u32 %v1414, %v1415
    %v1418 = vrot.slane %v1414, 4
    %v1420 = vshrl.u32 %v1245, 16
    %v1422 = vrot.slane %v1420, 7
    %v1423 = vshll.u32 %v1245, 16
    %v1425 = vor.u32 %v1422, %v1423
    %v1426 = vsel %vm544, %v1418, %v1425
    %v1427 = vrot.slane %v1422, 4
    %v1429 = vshrl.u32 %v1246, 16
    %v1431 = vrot.slane %v1429, 7
    %v1432 = vshll.u32 %v1246, 16
    %v1434 = vor.u32 %v1431, %v1432
    %v1435 = vrot.slane %v1431, 4
    %v1437 = vshrl.u32 %v1247, 16
    %v1439 = vrot.slane %v1437, 7
    %v1440 = vshll.u32 %v1247, 16
    %v1442 = vor.u32 %v1439, %v1440
    %v1443 = vsel %vm544, %v1435, %v1442
    %v1444 = vrot.slane %v1439, 4
    %v1446 = vshrl.u32 %v1248, 16
    %v1448 = vrot.slane %v1446, 7
    %v1449 = vshll.u32 %v1248, 16
    %v1451 = vor.u32 %v1448, %v1449
    %v1452 = vrot.slane %v1448, 4
    %v1454 = vshrl.u32 %v1249, 16
    %v1456 = vrot.slane %v1454, 7
    %v1457 = vshll.u32 %v1249, 16
    %v1459 = vor.u32 %v1456, %v1457
    %v1460 = vsel %vm544, %v1452, %v1459
    %v1461 = vrot.slane %v1456, 4
    %v1463 = vshrl.u32 %v1250, 16
    %v1465 = vrot.slane %v1463, 7
    %v1466 = vshll.u32 %v1250, 16
    %v1468 = vor.u32 %v1465, %v1466
    %v1469 = vrot.slane %v1465, 4
    %v1471 = vshrl.u32 %v1251, 16
    %v1473 = vrot.slane %v1471, 7
    %v1474 = vshll.u32 %v1251, 16
    %v1476 = vor.u32 %v1473, %v1474
    %v1477 = vsel %vm544, %v1469, %v1476
    %v1478 = vrot.slane %v1473, 4
    %v1480 = vshrl.u32 %v1252, 16
    %v1482 = vrot.slane %v1480, 7
    %v1483 = vshll.u32 %v1252, 16
    %v1485 = vor.u32 %v1482, %v1483
    %v1486 = vrot.slane %v1482, 4
    %v1488 = vshrl.u32 %v1253, 16
    %v1490 = vrot.slane %v1488, 7
    %v1491 = vshll.u32 %v1253, 16
    %v1493 = vor.u32 %v1490, %v1491
    %v1494 = vsel %vm544, %v1486, %v1493
    %v1495 = vrot.slane %v1490, 4
    %v1497 = vshrl.u32 %v1254, 16
    %v1499 = vrot.slane %v1497, 7
    %v1500 = vshll.u32 %v1254, 16
    %v1502 = vor.u32 %v1499, %v1500
    %v1503 = vrot.slane %v1499, 4
    %v1505 = vshrl.u32 %v1255, 16
    %v1507 = vrot.slane %v1505, 7
    %v1508 = vshll.u32 %v1255, 16
    %v1510 = vor.u32 %v1507, %v1508
    %v1511 = vsel %vm544, %v1503, %v1510
    %v1512 = vrot.slane %v1507, 4
    %v1514 = vshrl.u32 %v1256, 16
    %v1516 = vrot.slane %v1514, 7
    %v1517 = vshll.u32 %v1256, 16
    %v1519 = vor.u32 %v1516, %v1517
    %v1520 = vrot.slane %v1516, 4
    %v1522 = vshrl.u32 %v1257, 16
    %v1524 = vrot.slane %v1522, 7
    %v1525 = vshll.u32 %v1257, 16
    %v1527 = vor.u32 %v1524, %v1525
    %v1528 = vsel %vm544, %v1520, %v1527
    %v1529 = vrot.slane %v1524, 4
    %s1578 = scalar_lea.vmem [#allocation2], 228
    %v1579 = vld [vmem:[%s1578] sm:$0xf]
    %v1580 = vsel %vm867, %v1264, %v1579
    %1581 = vst [vmem:[%s1578] sm:$0xf] %v1580
    %1582 = vst.msk [vmem:[%s1578 + $0x4] sm:$0xf] %vm28, %v1273
    %v1583 = vld [vmem:[%s1578 + $0x8] sm:$0x1]
    %v1584 = vsel %vm45, %v1274, %v1583
    %1585 = vst [vmem:[%s1578 + $0x8] sm:$0x1] %v1584
    %v1586 = vld [vmem:[%s1578 + $0xc] sm:$0xf]
    %v1587 = vsel %vm867, %v1281, %v1586
    %1588 = vst [vmem:[%s1578 + $0xc] sm:$0xf] %v1587
    %1589 = vst.msk [vmem:[%s1578 + $0x10] sm:$0xf] %vm28, %v1290
    %v1590 = vld [vmem:[%s1578 + $0x14] sm:$0x1]
    %v1591 = vsel %vm45, %v1291, %v1590
    %1592 = vst [vmem:[%s1578 + $0x14] sm:$0x1] %v1591
    %v1593 = vld [vmem:[%s1578 + $0x18] sm:$0xf]
    %v1594 = vsel %vm867, %v1298, %v1593
    %1595 = vst [vmem:[%s1578 + $0x18] sm:$0xf] %v1594
    %1596 = vst.msk [vmem:[%s1578 + $0x1c] sm:$0xf] %vm28, %v1307
    %v1597 = vld [vmem:[%s1578 + $0x20] sm:$0x1]
    %v1598 = vsel %vm45, %v1308, %v1597
    %1599 = vst [vmem:[%s1578 + $0x20] sm:$0x1] %v1598
    %v1600 = vld [vmem:[%s1578 + $0x24] sm:$0xf]
    %v1601 = vsel %vm867, %v1315, %v1600
    %1602 = vst [vmem:[%s1578 + $0x24] sm:$0xf] %v1601
    %1603 = vst.msk [vmem:[%s1578 + $0x28] sm:$0xf] %vm28, %v1324
    %v1604 = vld [vmem:[%s1578 + $0x2c] sm:$0x1]
    %v1605 = vsel %vm45, %v1325, %v1604
    %1606 = vst [vmem:[%s1578 + $0x2c] sm:$0x1] %v1605
    %v1607 = vld [vmem:[%s1578 + $0x30] sm:$0xf]
    %v1608 = vsel %vm867, %v1332, %v1607
    %1609 = vst [vmem:[%s1578 + $0x30] sm:$0xf] %v1608
    %1610 = vst.msk [vmem:[%s1578 + $0x34] sm:$0xf] %vm28, %v1341
    %v1611 = vld [vmem:[%s1578 + $0x38] sm:$0x1]
    %v1612 = vsel %vm45, %v1342, %v1611
    %1613 = vst [vmem:[%s1578 + $0x38] sm:$0x1] %v1612
    %v1614 = vld [vmem:[%s1578 + $0x3c] sm:$0xf]
    %v1615 = vsel %vm867, %v1349, %v1614
    %1616 = vst [vmem:[%s1578 + $0x3c] sm:$0xf] %v1615
    %1617 = vst.msk [vmem:[%s1578 + $0x40] sm:$0xf] %vm28, %v1358
    %v1618 = vld [vmem:[%s1578 + $0x44] sm:$0x1]
    %v1619 = vsel %vm45, %v1359, %v1618
    %1620 = vst [vmem:[%s1578 + $0x44] sm:$0x1] %v1619
    %v1621 = vld [vmem:[%s1578 + $0x48] sm:$0xf]
    %v1622 = vsel %vm867, %v1366, %v1621
    %1623 = vst [vmem:[%s1578 + $0x48] sm:$0xf] %v1622
    %1624 = vst.msk [vmem:[%s1578 + $0x4c] sm:$0xf] %vm28, %v1375
    %v1625 = vld [vmem:[%s1578 + $0x50] sm:$0x1]
    %v1626 = vsel %vm45, %v1376, %v1625
    %1627 = vst [vmem:[%s1578 + $0x50] sm:$0x1] %v1626
    %v1628 = vld [vmem:[%s1578 + $0x54] sm:$0xf]
    %v1629 = vsel %vm867, %v1383, %v1628
    %1630 = vst [vmem:[%s1578 + $0x54] sm:$0xf] %v1629
    %1631 = vst.msk [vmem:[%s1578 + $0x58] sm:$0xf] %vm28, %v1392
    %v1632 = vld [vmem:[%s1578 + $0x5c] sm:$0x1]
    %v1633 = vsel %vm45, %v1393, %v1632
    %1634 = vst [vmem:[%s1578 + $0x5c] sm:$0x1] %v1633
    %v1635 = vld [vmem:[%s1578 + $0x60] sm:$0xf]
    %v1636 = vsel %vm867, %v1400, %v1635
    %1637 = vst [vmem:[%s1578 + $0x60] sm:$0xf] %v1636
    %1638 = vst.msk [vmem:[%s1578 + $0x64] sm:$0xf] %vm28, %v1409
    %v1639 = vld [vmem:[%s1578 + $0x68] sm:$0x1]
    %v1640 = vsel %vm45, %v1410, %v1639
    %1641 = vst [vmem:[%s1578 + $0x68] sm:$0x1] %v1640
    %v1642 = vld [vmem:[%s1578 + $0x6c] sm:$0xf]
    %v1643 = vsel %vm867, %v1417, %v1642
    %1644 = vst [vmem:[%s1578 + $0x6c] sm:$0xf] %v1643
    %1645 = vst.msk [vmem:[%s1578 + $0x70] sm:$0xf] %vm28, %v1426
    %v1646 = vld [vmem:[%s1578 + $0x74] sm:$0x1]
    %v1647 = vsel %vm45, %v1427, %v1646
    %1648 = vst [vmem:[%s1578 + $0x74] sm:$0x1] %v1647
    %v1649 = vld [vmem:[%s1578 + $0x78] sm:$0xf]
    %v1650 = vsel %vm867, %v1434, %v1649
    %1651 = vst [vmem:[%s1578 + $0x78] sm:$0xf] %v1650
    %1652 = vst.msk [vmem:[%s1578 + $0x7c] sm:$0xf] %vm28, %v1443
    %v1653 = vld [vmem:[%s1578 + $0x80] sm:$0x1]
    %v1654 = vsel %vm45, %v1444, %v1653
    %1655 = vst [vmem:[%s1578 + $0x80] sm:$0x1] %v1654
    %v1656 = vld [vmem:[%s1578 + $0x84] sm:$0xf]
    %v1657 = vsel %vm867, %v1451, %v1656
    %1658 = vst [vmem:[%s1578 + $0x84] sm:$0xf] %v1657
    %1659 = vst.msk [vmem:[%s1578 + $0x88] sm:$0xf] %vm28, %v1460
    %v1660 = vld [vmem:[%s1578 + $0x8c] sm:$0x1]
    %v1661 = vsel %vm45, %v1461, %v1660
    %1662 = vst [vmem:[%s1578 + $0x8c] sm:$0x1] %v1661
    %v1663 = vld [vmem:[%s1578 + $0x90] sm:$0xf]
    %v1664 = vsel %vm867, %v1468, %v1663
    %1665 = vst [vmem:[%s1578 + $0x90] sm:$0xf] %v1664
    %1666 = vst.msk [vmem:[%s1578 + $0x94] sm:$0xf] %vm28, %v1477
    %v1667 = vld [vmem:[%s1578 + $0x98] sm:$0x1]
    %v1668 = vsel %vm45, %v1478, %v1667
    %1669 = vst [vmem:[%s1578 + $0x98] sm:$0x1] %v1668
    %v1670 = vld [vmem:[%s1578 + $0x9c] sm:$0xf]
    %v1671 = vsel %vm867, %v1485, %v1670
    %1672 = vst [vmem:[%s1578 + $0x9c] sm:$0xf] %v1671
    %1673 = vst.msk [vmem:[%s1578 + $0xa0] sm:$0xf] %vm28, %v1494
    %v1674 = vld [vmem:[%s1578 + $0xa4] sm:$0x1]
    %v1675 = vsel %vm45, %v1495, %v1674
    %1676 = vst [vmem:[%s1578 + $0xa4] sm:$0x1] %v1675
    %v1677 = vld [vmem:[%s1578 + $0xa8] sm:$0xf]
    %v1678 = vsel %vm867, %v1502, %v1677
    %1679 = vst [vmem:[%s1578 + $0xa8] sm:$0xf] %v1678
    %1680 = vst.msk [vmem:[%s1578 + $0xac] sm:$0xf] %vm28, %v1511
    %v1681 = vld [vmem:[%s1578 + $0xb0] sm:$0x1]
    %v1682 = vsel %vm45, %v1512, %v1681
    %1683 = vst [vmem:[%s1578 + $0xb0] sm:$0x1] %v1682
    %v1684 = vld [vmem:[%s1578 + $0xb4] sm:$0xf]
    %v1685 = vsel %vm867, %v1519, %v1684
    %1686 = vst [vmem:[%s1578 + $0xb4] sm:$0xf] %v1685
    %1687 = vst.msk [vmem:[%s1578 + $0xb8] sm:$0xf] %vm28, %v1528
    %v1688 = vld [vmem:[%s1578 + $0xbc] sm:$0x1]
    %v1689 = vsel %vm45, %v1529, %v1688
    %1690 = vst [vmem:[%s1578 + $0xbc] sm:$0x1] %v1689
    %v1691 = vld [vmem:[#allocation2] sm:$0xf]
    %v1692 = vld [vmem:[#allocation2 + $0x4] sm:$0xf]
    %v1693 = vld [vmem:[#allocation2 + $0xc] sm:$0xf]
    %v1694 = vld [vmem:[#allocation2 + $0x10] sm:$0xf]
    %v1695 = vld [vmem:[#allocation2 + $0x18] sm:$0xf]
    %v1696 = vld [vmem:[#allocation2 + $0x1c] sm:$0xf]
    %v1697 = vld [vmem:[#allocation2 + $0x24] sm:$0xf]
    %v1698 = vld [vmem:[#allocation2 + $0x28] sm:$0xf]
    %v1699 = vld [vmem:[#allocation2 + $0x30] sm:$0xf]
    %v1700 = vld [vmem:[#allocation2 + $0x34] sm:$0xf]
    %v1701 = vld [vmem:[#allocation2 + $0x3c] sm:$0xf]
    %v1702 = vld [vmem:[#allocation2 + $0x40] sm:$0xf]
    %v1703 = vld [vmem:[#allocation2 + $0x48] sm:$0xf]
    %v1704 = vld [vmem:[#allocation2 + $0x4c] sm:$0xf]
    %v1705 = vld [vmem:[#allocation2 + $0x54] sm:$0xf]
    %v1706 = vld [vmem:[#allocation2 + $0x58] sm:$0xf]
    %v1707 = vld [vmem:[#allocation2 + $0x60] sm:$0xf]
    %v1708 = vld [vmem:[#allocation2 + $0x64] sm:$0xf]
    %v1709 = vld [vmem:[#allocation2 + $0x6c] sm:$0xf]
    %v1710 = vld [vmem:[#allocation2 + $0x70] sm:$0xf]
    %v1711 = vld [vmem:[#allocation2 + $0x78] sm:$0xf]
    %v1712 = vld [vmem:[#allocation2 + $0x7c] sm:$0xf]
    %v1713 = vld [vmem:[#allocation2 + $0x84] sm:$0xf]
    %v1714 = vld [vmem:[#allocation2 + $0x88] sm:$0xf]
    %v1715 = vld [vmem:[#allocation2 + $0x90] sm:$0xf]
    %v1716 = vld [vmem:[#allocation2 + $0x94] sm:$0xf]
    %v1717 = vld [vmem:[#allocation2 + $0x9c] sm:$0xf]
    %v1718 = vld [vmem:[#allocation2 + $0xa0] sm:$0xf]
    %v1719 = vld [vmem:[#allocation2 + $0xa8] sm:$0xf]
    %v1720 = vld [vmem:[#allocation2 + $0xac] sm:$0xf]
    %v1721 = vld [vmem:[#allocation2 + $0xb4] sm:$0xf]
    %v1722 = vld [vmem:[#allocation2 + $0xb8] sm:$0xf]
    %v1723 = vld [vmem:[#allocation2 + $0xd8] sm:$0xf]
    %v1724 = vld [vmem:[#allocation2 + $0xdc] sm:$0xf]
    %v1725 = vld [vmem:[#allocation2 + $0xe4] sm:$0xf]
    %v1726 = vld [vmem:[#allocation2 + $0xe8] sm:$0xf]
    %v1727 = vld [vmem:[#allocation2 + $0xf0] sm:$0xf]
    %v1728 = vld [vmem:[#allocation2 + $0xf4] sm:$0xf]
    %v1729 = vld [vmem:[#allocation2 + $0xfc] sm:$0xf]
    %v1730 = vld [vmem:[#allocation2 + $0x100] sm:$0xf]
    %v1731 = vld [vmem:[#allocation2 + $0x108] sm:$0xf]
    %v1732 = vld [vmem:[#allocation2 + $0x10c] sm:$0xf]
    %v1733 = vld [vmem:[#allocation2 + $0x114] sm:$0xf]
    %v1734 = vld [vmem:[#allocation2 + $0x118] sm:$0xf]
    %v1735 = vld [vmem:[#allocation2 + $0x120] sm:$0xf]
    %v1736 = vld [vmem:[#allocation2 + $0x124] sm:$0xf]
    %v1737 = vld [vmem:[#allocation2 + $0x12c] sm:$0xf]
    %v1738 = vld [vmem:[#allocation2 + $0x130] sm:$0xf]
    %v1739 = vld [vmem:[#allocation2 + $0x138] sm:$0xf]
    %v1740 = vld [vmem:[#allocation2 + $0x13c] sm:$0xf]
    %v1741 = vld [vmem:[#allocation2 + $0x144] sm:$0xf]
    %v1742 = vld [vmem:[#allocation2 + $0x148] sm:$0xf]
    %v1743 = vld [vmem:[#allocation2 + $0x150] sm:$0xf]
    %v1744 = vld [vmem:[#allocation2 + $0x154] sm:$0xf]
    %v1745 = vld [vmem:[#allocation2 + $0x15c] sm:$0xf]
    %v1746 = vld [vmem:[#allocation2 + $0x160] sm:$0xf]
    %v1747 = vld [vmem:[#allocation2 + $0x168] sm:$0xf]
    %v1748 = vld [vmem:[#allocation2 + $0x16c] sm:$0xf]
    %v1749 = vld [vmem:[#allocation2 + $0x174] sm:$0xf]
    %v1750 = vld [vmem:[#allocation2 + $0x178] sm:$0xf]
    %v1751 = vld [vmem:[#allocation2 + $0x180] sm:$0xf]
    %v1752 = vld [vmem:[#allocation2 + $0x184] sm:$0xf]
    %v1753 = vld [vmem:[#allocation2 + $0x18c] sm:$0xf]
    %v1754 = vld [vmem:[#allocation2 + $0x190] sm:$0xf]
    %1755 = vst.msk [vmem:[#allocation3] sm:$0xf] %vm28, %v1691
    %1756 = vst.msk [vmem:[#allocation3 + $0xc] sm:$0xf] %vm28, %v1692
    %1757 = vst.msk [vmem:[#allocation3 + $0x18] sm:$0xf] %vm28, %v1693
    %1758 = vst.msk [vmem:[#allocation3 + $0x24] sm:$0xf] %vm28, %v1694
    %1759 = vst.msk [vmem:[#allocation3 + $0x30] sm:$0xf] %vm28, %v1695
    %1760 = vst.msk [vmem:[#allocation3 + $0x3c] sm:$0xf] %vm28, %v1696
    %1761 = vst.msk [vmem:[#allocation3 + $0x48] sm:$0xf] %vm28, %v1697
    %1762 = vst.msk [vmem:[#allocation3 + $0x54] sm:$0xf] %vm28, %v1698
    %1763 = vst.msk [vmem:[#allocation3 + $0x60] sm:$0xf] %vm28, %v1699
    %1764 = vst.msk [vmem:[#allocation3 + $0x6c] sm:$0xf] %vm28, %v1700
    %1765 = vst.msk [vmem:[#allocation3 + $0x78] sm:$0xf] %vm28, %v1701
    %1766 = vst.msk [vmem:[#allocation3 + $0x84] sm:$0xf] %vm28, %v1702
    %1767 = vst.msk [vmem:[#allocation3 + $0x90] sm:$0xf] %vm28, %v1703
    %1768 = vst.msk [vmem:[#allocation3 + $0x9c] sm:$0xf] %vm28, %v1704
    %1769 = vst.msk [vmem:[#allocation3 + $0xa8] sm:$0xf] %vm28, %v1705
    %1770 = vst.msk [vmem:[#allocation3 + $0xb4] sm:$0xf] %vm28, %v1706
    %1771 = vst.msk [vmem:[#allocation3 + $0xc0] sm:$0xf] %vm28, %v1707
    %1772 = vst.msk [vmem:[#allocation3 + $0xcc] sm:$0xf] %vm28, %v1708
    %1773 = vst.msk [vmem:[#allocation3 + $0xd8] sm:$0xf] %vm28, %v1709
    %1774 = vst.msk [vmem:[#allocation3 + $0xe4] sm:$0xf] %vm28, %v1710
    %1775 = vst.msk [vmem:[#allocation3 + $0xf0] sm:$0xf] %vm28, %v1711
    %1776 = vst.msk [vmem:[#allocation3 + $0xfc] sm:$0xf] %vm28, %v1712
    %1777 = vst.msk [vmem:[#allocation3 + $0x108] sm:$0xf] %vm28, %v1713
    %1778 = vst.msk [vmem:[#allocation3 + $0x114] sm:$0xf] %vm28, %v1714
    %1779 = vst.msk [vmem:[#allocation3 + $0x120] sm:$0xf] %vm28, %v1715
    %1780 = vst.msk [vmem:[#allocation3 + $0x12c] sm:$0xf] %vm28, %v1716
    %1781 = vst.msk [vmem:[#allocation3 + $0x138] sm:$0xf] %vm28, %v1717
    %1782 = vst.msk [vmem:[#allocation3 + $0x144] sm:$0xf] %vm28, %v1718
    %1783 = vst.msk [vmem:[#allocation3 + $0x150] sm:$0xf] %vm28, %v1719
    %1784 = vst.msk [vmem:[#allocation3 + $0x15c] sm:$0xf] %vm28, %v1720
    %1785 = vst.msk [vmem:[#allocation3 + $0x168] sm:$0xf] %vm28, %v1721
    %1786 = vst.msk [vmem:[#allocation3 + $0x174] sm:$0xf] %vm28, %v1722
    %1787 = vst.msk [vmem:[#allocation3 + $0x180] sm:$0xf] %vm28, %v1723
    %1788 = vst.msk [vmem:[#allocation3 + $0x18c] sm:$0xf] %vm28, %v1724
    %1789 = vst.msk [vmem:[#allocation3 + $0x198] sm:$0xf] %vm28, %v1725
    %1790 = vst.msk [vmem:[#allocation3 + $0x1a4] sm:$0xf] %vm28, %v1726
    %1791 = vst.msk [vmem:[#allocation3 + $0x1b0] sm:$0xf] %vm28, %v1727
    %1792 = vst.msk [vmem:[#allocation3 + $0x1bc] sm:$0xf] %vm28, %v1728
    %1793 = vst.msk [vmem:[#allocation3 + $0x1c8] sm:$0xf] %vm28, %v1729
    %1794 = vst.msk [vmem:[#allocation3 + $0x1d4] sm:$0xf] %vm28, %v1730
    %1795 = vst.msk [vmem:[#allocation3 + $0x1e0] sm:$0xf] %vm28, %v1731
    %1796 = vst.msk [vmem:[#allocation3 + $0x1ec] sm:$0xf] %vm28, %v1732
    %1797 = vst.msk [vmem:[#allocation3 + $0x1f8] sm:$0xf] %vm28, %v1733
    %1798 = vst.msk [vmem:[#allocation3 + $0x204] sm:$0xf] %vm28, %v1734
    %1799 = vst.msk [vmem:[#allocation3 + $0x210] sm:$0xf] %vm28, %v1735
    %1800 = vst.msk [vmem:[#allocation3 + $0x21c] sm:$0xf] %vm28, %v1736
    %1801 = vst.msk [vmem:[#allocation3 + $0x228] sm:$0xf] %vm28, %v1737
    %1802 = vst.msk [vmem:[#allocation3 + $0x234] sm:$0xf] %vm28, %v1738
    %1803 = vst.msk [vmem:[#allocation3 + $0x240] sm:$0xf] %vm28, %v1739
    %1804 = vst.msk [vmem:[#allocation3 + $0x24c] sm:$0xf] %vm28, %v1740
    %1805 = vst.msk [vmem:[#allocation3 + $0x258] sm:$0xf] %vm28, %v1741
    %1806 = vst.msk [vmem:[#allocation3 + $0x264] sm:$0xf] %vm28, %v1742
    %1807 = vst.msk [vmem:[#allocation3 + $0x270] sm:$0xf] %vm28, %v1743
    %1808 = vst.msk [vmem:[#allocation3 + $0x27c] sm:$0xf] %vm28, %v1744
    %1809 = vst.msk [vmem:[#allocation3 + $0x288] sm:$0xf] %vm28, %v1745
    %1810 = vst.msk [vmem:[#allocation3 + $0x294] sm:$0xf] %vm28, %v1746
    %1811 = vst.msk [vmem:[#allocation3 + $0x2a0] sm:$0xf] %vm28, %v1747
    %1812 = vst.msk [vmem:[#allocation3 + $0x2ac] sm:$0xf] %vm28, %v1748
    %1813 = vst.msk [vmem:[#allocation3 + $0x2b8] sm:$0xf] %vm28, %v1749
    %1814 = vst.msk [vmem:[#allocation3 + $0x2c4] sm:$0xf] %vm28, %v1750
    %1815 = vst.msk [vmem:[#allocation3 + $0x2d0] sm:$0xf] %vm28, %v1751
    %1816 = vst.msk [vmem:[#allocation3 + $0x2dc] sm:$0xf] %vm28, %v1752
    %1817 = vst.msk [vmem:[#allocation3 + $0x2e8] sm:$0xf] %vm28, %v1753
    %1818 = vst.msk [vmem:[#allocation3 + $0x2f4] sm:$0xf] %vm28, %v1754
    %v1819 = vld [vmem:[#allocation2] sm:$0xf]
    %v1820 = vld [vmem:[#allocation2 + $0x4] sm:$0xf]
    %v1821 = vld [vmem:[#allocation2 + $0x8] sm:$0x1]
    %v1822 = vld [vmem:[#allocation2 + $0xc] sm:$0xf]
    %v1823 = vld [vmem:[#allocation2 + $0x10] sm:$0xf]
    %v1824 = vld [vmem:[#allocation2 + $0x14] sm:$0x1]
    %v1825 = vld [vmem:[#allocation2 + $0x18] sm:$0xf]
    %v1826 = vld [vmem:[#allocation2 + $0x1c] sm:$0xf]
    %v1827 = vld [vmem:[#allocation2 + $0x20] sm:$0x1]
    %v1828 = vld [vmem:[#allocation2 + $0x24] sm:$0xf]
    %v1829 = vld [vmem:[#allocation2 + $0x28] sm:$0xf]
    %v1830 = vld [vmem:[#allocation2 + $0x2c] sm:$0x1]
    %v1831 = vld [vmem:[#allocation2 + $0x30] sm:$0xf]
    %v1832 = vld [vmem:[#allocation2 + $0x34] sm:$0xf]
    %v1833 = vld [vmem:[#allocation2 + $0x38] sm:$0x1]
    %v1834 = vld [vmem:[#allocation2 + $0x3c] sm:$0xf]
    %v1835 = vld [vmem:[#allocation2 + $0x40] sm:$0xf]
    %v1836 = vld [vmem:[#allocation2 + $0x44] sm:$0x1]
    %v1837 = vld [vmem:[#allocation2 + $0x48] sm:$0xf]
    %v1838 = vld [vmem:[#allocation2 + $0x4c] sm:$0xf]
    %v1839 = vld [vmem:[#allocation2 + $0x50] sm:$0x1]
    %v1840 = vld [vmem:[#allocation2 + $0x54] sm:$0xf]
    %v1841 = vld [vmem:[#allocation2 + $0x58] sm:$0xf]
    %v1842 = vld [vmem:[#allocation2 + $0x5c] sm:$0x1]
    %v1843 = vld [vmem:[#allocation2 + $0x60] sm:$0xf]
    %v1844 = vld [vmem:[#allocation2 + $0x64] sm:$0xf]
    %v1845 = vld [vmem:[#allocation2 + $0x68] sm:$0x1]
    %v1846 = vld [vmem:[#allocation2 + $0x6c] sm:$0xf]
    %v1847 = vld [vmem:[#allocation2 + $0x70] sm:$0xf]
    %v1848 = vld [vmem:[#allocation2 + $0x74] sm:$0x1]
    %v1849 = vld [vmem:[#allocation2 + $0x78] sm:$0xf]
    %v1850 = vld [vmem:[#allocation2 + $0x7c] sm:$0xf]
    %v1851 = vld [vmem:[#allocation2 + $0x80] sm:$0x1]
    %v1852 = vld [vmem:[#allocation2 + $0x84] sm:$0xf]
    %v1853 = vld [vmem:[#allocation2 + $0x88] sm:$0xf]
    %v1854 = vld [vmem:[#allocation2 + $0x8c] sm:$0x1]
    %v1855 = vld [vmem:[#allocation2 + $0x90] sm:$0xf]
    %v1856 = vld [vmem:[#allocation2 + $0x94] sm:$0xf]
    %v1857 = vld [vmem:[#allocation2 + $0x98] sm:$0x1]
    %v1858 = vld [vmem:[#allocation2 + $0x9c] sm:$0xf]
    %v1859 = vld [vmem:[#allocation2 + $0xa0] sm:$0xf]
    %v1860 = vld [vmem:[#allocation2 + $0xa4] sm:$0x1]
    %v1861 = vld [vmem:[#allocation2 + $0xa8] sm:$0xf]
    %v1862 = vld [vmem:[#allocation2 + $0xac] sm:$0xf]
    %v1863 = vld [vmem:[#allocation2 + $0xb0] sm:$0x1]
    %v1864 = vld [vmem:[#allocation2 + $0xb4] sm:$0xf]
    %v1865 = vld [vmem:[#allocation2 + $0xb8] sm:$0xf]
    %v1866 = vld [vmem:[#allocation2 + $0xbc] sm:$0x1]
    %v1867 = vld [vmem:[#allocation2 + $0xd8] sm:$0xf]
    %v1868 = vld [vmem:[#allocation2 + $0xdc] sm:$0xf]
    %v1869 = vld [vmem:[#allocation2 + $0xe0] sm:$0x1]
    %v1870 = vld [vmem:[#allocation2 + $0xe4] sm:$0xf]
    %v1871 = vld [vmem:[#allocation2 + $0xe8] sm:$0xf]
    %v1872 = vld [vmem:[#allocation2 + $0xec] sm:$0x1]
    %v1873 = vld [vmem:[#allocation2 + $0xf0] sm:$0xf]
    %v1874 = vld [vmem:[#allocation2 + $0xf4] sm:$0xf]
    %v1875 = vld [vmem:[#allocation2 + $0xf8] sm:$0x1]
    %v1876 = vld [vmem:[#allocation2 + $0xfc] sm:$0xf]
    %v1877 = vld [vmem:[#allocation2 + $0x100] sm:$0xf]
    %v1878 = vld [vmem:[#allocation2 + $0x104] sm:$0x1]
    %v1879 = vld [vmem:[#allocation2 + $0x108] sm:$0xf]
    %v1880 = vld [vmem:[#allocation2 + $0x10c] sm:$0xf]
    %v1881 = vld [vmem:[#allocation2 + $0x110] sm:$0x1]
    %v1882 = vld [vmem:[#allocation2 + $0x114] sm:$0xf]
    %v1883 = vld [vmem:[#allocation2 + $0x118] sm:$0xf]
    %v1884 = vld [vmem:[#allocation2 + $0x11c] sm:$0x1]
    %v1885 = vld [vmem:[#allocation2 + $0x120] sm:$0xf]
    %v1886 = vld [vmem:[#allocation2 + $0x124] sm:$0xf]
    %v1887 = vld [vmem:[#allocation2 + $0x128] sm:$0x1]
    %v1888 = vld [vmem:[#allocation2 + $0x12c] sm:$0xf]
    %v1889 = vld [vmem:[#allocation2 + $0x130] sm:$0xf]
    %v1890 = vld [vmem:[#allocation2 + $0x134] sm:$0x1]
    %v1891 = vld [vmem:[#allocation2 + $0x138] sm:$0xf]
    %v1892 = vld [vmem:[#allocation2 + $0x13c] sm:$0xf]
    %v1893 = vld [vmem:[#allocation2 + $0x140] sm:$0x1]
    %v1894 = vld [vmem:[#allocation2 + $0x144] sm:$0xf]
    %v1895 = vld [vmem:[#allocation2 + $0x148] sm:$0xf]
    %v1896 = vld [vmem:[#allocation2 + $0x14c] sm:$0x1]
    %v1897 = vld [vmem:[#allocation2 + $0x150] sm:$0xf]
    %v1898 = vld [vmem:[#allocation2 + $0x154] sm:$0xf]
    %v1899 = vld [vmem:[#allocation2 + $0x158] sm:$0x1]
    %v1900 = vld [vmem:[#allocation2 + $0x15c] sm:$0xf]
    %v1901 = vld [vmem:[#allocation2 + $0x160] sm:$0xf]
    %v1902 = vld [vmem:[#allocation2 + $0x164] sm:$0x1]
    %v1903 = vld [vmem:[#allocation2 + $0x168] sm:$0xf]
    %v1904 = vld [vmem:[#allocation2 + $0x16c] sm:$0xf]
    %v1905 = vld [vmem:[#allocation2 + $0x170] sm:$0x1]
    %v1906 = vld [vmem:[#allocation2 + $0x174] sm:$0xf]
    %v1907 = vld [vmem:[#allocation2 + $0x178] sm:$0xf]
    %v1908 = vld [vmem:[#allocation2 + $0x17c] sm:$0x1]
    %v1909 = vld [vmem:[#allocation2 + $0x180] sm:$0xf]
    %v1910 = vld [vmem:[#allocation2 + $0x184] sm:$0xf]
    %v1911 = vld [vmem:[#allocation2 + $0x188] sm:$0x1]
    %v1912 = vld [vmem:[#allocation2 + $0x18c] sm:$0xf]
    %v1913 = vld [vmem:[#allocation2 + $0x190] sm:$0xf]
    %v1914 = vld [vmem:[#allocation2 + $0x194] sm:$0x1]
    %vm1915 = vsmask.f32 3328
    %vm1916 = vsmask.f32 7440
    %vm1917 = vmor %vm1915, %vm1916
    %v1919 = vshrl.u32 %v1819, 16
    %v1921 = vrot.slane %v1919, 4
    %v1922 = vshll.u32 %v1819, 16
    %v1924 = vrot.slane %v1922, 5
    %v1925 = vor.u32 %v1921, %v1924
    %v1926 = vrot.slane %v1925, 4
    %v1928 = vshll.u32 %v1820, 16
    %v1930 = vrot.slane %v1928, 5
    %v1931 = vsel %vm1917, %v1926, %v1930
    %v1932 = vshrl.u32 %v1820, 16
    %v1934 = vrot.slane %v1932, 4
    %v1935 = vor.u32 %v1934, %v1930
    %v1936 = vrot.slane %v1935, 4
    %v1938 = vshll.u32 %v1821, 16
    %v1940 = vrot.slane %v1938, 5
    %v1941 = vsel %vm1917, %v1936, %v1940
    %v1943 = vshrl.u32 %v1822, 16
    %v1945 = vrot.slane %v1943, 4
    %v1946 = vshll.u32 %v1822, 16
    %v1948 = vrot.slane %v1946, 5
    %v1949 = vor.u32 %v1945, %v1948
    %v1950 = vrot.slane %v1949, 4
    %v1952 = vshll.u32 %v1823, 16
    %v1954 = vrot.slane %v1952, 5
    %v1955 = vsel %vm1917, %v1950, %v1954
    %v1956 = vshrl.u32 %v1823, 16
    %v1958 = vrot.slane %v1956, 4
    %v1959 = vor.u32 %v1958, %v1954
    %v1960 = vrot.slane %v1959, 4
    %v1962 = vshll.u32 %v1824, 16
    %v1964 = vrot.slane %v1962, 5
    %v1965 = vsel %vm1917, %v1960, %v1964
    %v1967 = vshrl.u32 %v1825, 16
    %v1969 = vrot.slane %v1967, 4
    %v1970 = vshll.u32 %v1825, 16
    %v1972 = vrot.slane %v1970, 5
    %v1973 = vor.u32 %v1969, %v1972
    %v1974 = vrot.slane %v1973, 4
    %v1976 = vshll.u32 %v1826, 16
    %v1978 = vrot.slane %v1976, 5
    %v1979 = vsel %vm1917, %v1974, %v1978
    %v1980 = vshrl.u32 %v1826, 16
    %v1982 = vrot.slane %v1980, 4
    %v1983 = vor.u32 %v1982, %v1978
    %v1984 = vrot.slane %v1983, 4
    %v1986 = vshll.u32 %v1827, 16
    %v1988 = vrot.slane %v1986, 5
    %v1989 = vsel %vm1917, %v1984, %v1988
    %v1991 = vshrl.u32 %v1828, 16
    %v1993 = vrot.slane %v1991, 4
    %v1994 = vshll.u32 %v1828, 16
    %v1996 = vrot.slane %v1994, 5
    %v1997 = vor.u32 %v1993, %v1996
    %v1998 = vrot.slane %v1997, 4
    %v2000 = vshll.u32 %v1829, 16
    %v2002 = vrot.slane %v2000, 5
    %v2003 = vsel %vm1917, %v1998, %v2002
    %v2004 = vshrl.u32 %v1829, 16
    %v2006 = vrot.slane %v2004, 4
    %v2007 = vor.u32 %v2006, %v2002
    %v2008 = vrot.slane %v2007, 4
    %v2010 = vshll.u32 %v1830, 16
    %v2012 = vrot.slane %v2010, 5
    %v2013 = vsel %vm1917, %v2008, %v2012
    %v2015 = vshrl.u32 %v1831, 16
    %v2017 = vrot.slane %v2015, 4
    %v2018 = vshll.u32 %v1831, 16
    %v2020 = vrot.slane %v2018, 5
    %v2021 = vor.u32 %v2017, %v2020
    %v2022 = vrot.slane %v2021, 4
    %v2024 = vshll.u32 %v1832, 16
    %v2026 = vrot.slane %v2024, 5
    %v2027 = vsel %vm1917, %v2022, %v2026
    %v2028 = vshrl.u32 %v1832, 16
    %v2030 = vrot.slane %v2028, 4
    %v2031 = vor.u32 %v2030, %v2026
    %v2032 = vrot.slane %v2031, 4
    %v2034 = vshll.u32 %v1833, 16
    %v2036 = vrot.slane %v2034, 5
    %v2037 = vsel %vm1917, %v2032, %v2036
    %v2039 = vshrl.u32 %v1834, 16
    %v2041 = vrot.slane %v2039, 4
    %v2042 = vshll.u32 %v1834, 16
    %v2044 = vrot.slane %v2042, 5
    %v2045 = vor.u32 %v2041, %v2044
    %v2046 = vrot.slane %v2045, 4
    %v2048 = vshll.u32 %v1835, 16
    %v2050 = vrot.slane %v2048, 5
    %v2051 = vsel %vm1917, %v2046, %v2050
    %v2052 = vshrl.u32 %v1835, 16
    %v2054 = vrot.slane %v2052, 4
    %v2055 = vor.u32 %v2054, %v2050
    %v2056 = vrot.slane %v2055, 4
    %v2058 = vshll.u32 %v1836, 16
    %v2060 = vrot.slane %v2058, 5
    %v2061 = vsel %vm1917, %v2056, %v2060
    %v2063 = vshrl.u32 %v1837, 16
    %v2065 = vrot.slane %v2063, 4
    %v2066 = vshll.u32 %v1837, 16
    %v2068 = vrot.slane %v2066, 5
    %v2069 = vor.u32 %v2065, %v2068
    %v2070 = vrot.slane %v2069, 4
    %v2072 = vshll.u32 %v1838, 16
    %v2074 = vrot.slane %v2072, 5
    %v2075 = vsel %vm1917, %v2070, %v2074
    %v2076 = vshrl.u32 %v1838, 16
    %v2078 = vrot.slane %v2076, 4
    %v2079 = vor.u32 %v2078, %v2074
    %v2080 = vrot.slane %v2079, 4
    %v2082 = vshll.u32 %v1839, 16
    %v2084 = vrot.slane %v2082, 5
    %v2085 = vsel %vm1917, %v2080, %v2084
    %v2087 = vshrl.u32 %v1840, 16
    %v2089 = vrot.slane %v2087, 4
    %v2090 = vshll.u32 %v1840, 16
    %v2092 = vrot.slane %v2090, 5
    %v2093 = vor.u32 %v2089, %v2092
    %v2094 = vrot.slane %v2093, 4
    %v2096 = vshll.u32 %v1841, 16
    %v2098 = vrot.slane %v2096, 5
    %v2099 = vsel %vm1917, %v2094, %v2098
    %v2100 = vshrl.u32 %v1841, 16
    %v2102 = vrot.slane %v2100, 4
    %v2103 = vor.u32 %v2102, %v2098
    %v2104 = vrot.slane %v2103, 4
    %v2106 = vshll.u32 %v1842, 16
    %v2108 = vrot.slane %v2106, 5
    %v2109 = vsel %vm1917, %v2104, %v2108
    %v2111 = vshrl.u32 %v1843, 16
    %v2113 = vrot.slane %v2111, 4
    %v2114 = vshll.u32 %v1843, 16
    %v2116 = vrot.slane %v2114, 5
    %v2117 = vor.u32 %v2113, %v2116
    %v2118 = vrot.slane %v2117, 4
    %v2120 = vshll.u32 %v1844, 16
    %v2122 = vrot.slane %v2120, 5
    %v2123 = vsel %vm1917, %v2118, %v2122
    %v2124 = vshrl.u32 %v1844, 16
    %v2126 = vrot.slane %v2124, 4
    %v2127 = vor.u32 %v2126, %v2122
    %v2128 = vrot.slane %v2127, 4
    %v2130 = vshll.u32 %v1845, 16
    %v2132 = vrot.slane %v2130, 5
    %v2133 = vsel %vm1917, %v2128, %v2132
    %v2135 = vshrl.u32 %v1846, 16
    %v2137 = vrot.slane %v2135, 4
    %v2138 = vshll.u32 %v1846, 16
    %v2140 = vrot.slane %v2138, 5
    %v2141 = vor.u32 %v2137, %v2140
    %v2142 = vrot.slane %v2141, 4
    %v2144 = vshll.u32 %v1847, 16
    %v2146 = vrot.slane %v2144, 5
    %v2147 = vsel %vm1917, %v2142, %v2146
    %v2148 = vshrl.u32 %v1847, 16
    %v2150 = vrot.slane %v2148, 4
    %v2151 = vor.u32 %v2150, %v2146
    %v2152 = vrot.slane %v2151, 4
    %v2154 = vshll.u32 %v1848, 16
    %v2156 = vrot.slane %v2154, 5
    %v2157 = vsel %vm1917, %v2152, %v2156
    %v2159 = vshrl.u32 %v1849, 16
    %v2161 = vrot.slane %v2159, 4
    %v2162 = vshll.u32 %v1849, 16
    %v2164 = vrot.slane %v2162, 5
    %v2165 = vor.u32 %v2161, %v2164
    %v2166 = vrot.slane %v2165, 4
    %v2168 = vshll.u32 %v1850, 16
    %v2170 = vrot.slane %v2168, 5
    %v2171 = vsel %vm1917, %v2166, %v2170
    %v2172 = vshrl.u32 %v1850, 16
    %v2174 = vrot.slane %v2172, 4
    %v2175 = vor.u32 %v2174, %v2170
    %v2176 = vrot.slane %v2175, 4
    %v2178 = vshll.u32 %v1851, 16
    %v2180 = vrot.slane %v2178, 5
    %v2181 = vsel %vm1917, %v2176, %v2180
    %v2183 = vshrl.u32 %v1852, 16
    %v2185 = vrot.slane %v2183, 4
    %v2186 = vshll.u32 %v1852, 16
    %v2188 = vrot.slane %v2186, 5
    %v2189 = vor.u32 %v2185, %v2188
    %v2190 = vrot.slane %v2189, 4
    %v2192 = vshll.u32 %v1853, 16
    %v2194 = vrot.slane %v2192, 5
    %v2195 = vsel %vm1917, %v2190, %v2194
    %v2196 = vshrl.u32 %v1853, 16
    %v2198 = vrot.slane %v2196, 4
    %v2199 = vor.u32 %v2198, %v2194
    %v2200 = vrot.slane %v2199, 4
    %v2202 = vshll.u32 %v1854, 16
    %v2204 = vrot.slane %v2202, 5
    %v2205 = vsel %vm1917, %v2200, %v2204
    %v2207 = vshrl.u32 %v1855, 16
    %v2209 = vrot.slane %v2207, 4
    %v2210 = vshll.u32 %v1855, 16
    %v2212 = vrot.slane %v2210, 5
    %v2213 = vor.u32 %v2209, %v2212
    %v2214 = vrot.slane %v2213, 4
    %v2216 = vshll.u32 %v1856, 16
    %v2218 = vrot.slane %v2216, 5
    %v2219 = vsel %vm1917, %v2214, %v2218
    %v2220 = vshrl.u32 %v1856, 16
    %v2222 = vrot.slane %v2220, 4
    %v2223 = vor.u32 %v2222, %v2218
    %v2224 = vrot.slane %v2223, 4
    %v2226 = vshll.u32 %v1857, 16
    %v2228 = vrot.slane %v2226, 5
    %v2229 = vsel %vm1917, %v2224, %v2228
    %v2231 = vshrl.u32 %v1858, 16
    %v2233 = vrot.slane %v2231, 4
    %v2234 = vshll.u32 %v1858, 16
    %v2236 = vrot.slane %v2234, 5
    %v2237 = vor.u32 %v2233, %v2236
    %v2238 = vrot.slane %v2237, 4
    %v2240 = vshll.u32 %v1859, 16
    %v2242 = vrot.slane %v2240, 5
    %v2243 = vsel %vm1917, %v2238, %v2242
    %v2244 = vshrl.u32 %v1859, 16
    %v2246 = vrot.slane %v2244, 4
    %v2247 = vor.u32 %v2246, %v2242
    %v2248 = vrot.slane %v2247, 4
    %v2250 = vshll.u32 %v1860, 16
    %v2252 = vrot.slane %v2250, 5
    %v2253 = vsel %vm1917, %v2248, %v2252
    %v2255 = vshrl.u32 %v1861, 16
    %v2257 = vrot.slane %v2255, 4
    %v2258 = vshll.u32 %v1861, 16
    %v2260 = vrot.slane %v2258, 5
    %v2261 = vor.u32 %v2257, %v2260
    %v2262 = vrot.slane %v2261, 4
    %v2264 = vshll.u32 %v1862, 16
    %v2266 = vrot.slane %v2264, 5
    %v2267 = vsel %vm1917, %v2262, %v2266
    %v2268 = vshrl.u32 %v1862, 16
    %v2270 = vrot.slane %v2268, 4
    %v2271 = vor.u32 %v2270, %v2266
    %v2272 = vrot.slane %v2271, 4
    %v2274 = vshll.u32 %v1863, 16
    %v2276 = vrot.slane %v2274, 5
    %v2277 = vsel %vm1917, %v2272, %v2276
    %v2279 = vshrl.u32 %v1864, 16
    %v2281 = vrot.slane %v2279, 4
    %v2282 = vshll.u32 %v1864, 16
    %v2284 = vrot.slane %v2282, 5
    %v2285 = vor.u32 %v2281, %v2284
    %v2286 = vrot.slane %v2285, 4
    %v2288 = vshll.u32 %v1865, 16
    %v2290 = vrot.slane %v2288, 5
    %v2291 = vsel %vm1917, %v2286, %v2290
    %v2292 = vshrl.u32 %v1865, 16
    %v2294 = vrot.slane %v2292, 4
    %v2295 = vor.u32 %v2294, %v2290
    %v2296 = vrot.slane %v2295, 4
    %v2298 = vshll.u32 %v1866, 16
    %v2300 = vrot.slane %v2298, 5
    %v2301 = vsel %vm1917, %v2296, %v2300
    %v2303 = vshrl.u32 %v1867, 16
    %v2305 = vrot.slane %v2303, 4
    %v2306 = vshll.u32 %v1867, 16
    %v2308 = vrot.slane %v2306, 5
    %v2309 = vor.u32 %v2305, %v2308
    %v2310 = vrot.slane %v2309, 4
    %v2312 = vshll.u32 %v1868, 16
    %v2314 = vrot.slane %v2312, 5
    %v2315 = vsel %vm1917, %v2310, %v2314
    %v2316 = vshrl.u32 %v1868, 16
    %v2318 = vrot.slane %v2316, 4
    %v2319 = vor.u32 %v2318, %v2314
    %v2320 = vrot.slane %v2319, 4
    %v2322 = vshll.u32 %v1869, 16
    %v2324 = vrot.slane %v2322, 5
    %v2325 = vsel %vm1917, %v2320, %v2324
    %v2327 = vshrl.u32 %v1870, 16
    %v2329 = vrot.slane %v2327, 4
    %v2330 = vshll.u32 %v1870, 16
    %v2332 = vrot.slane %v2330, 5
    %v2333 = vor.u32 %v2329, %v2332
    %v2334 = vrot.slane %v2333, 4
    %v2336 = vshll.u32 %v1871, 16
    %v2338 = vrot.slane %v2336, 5
    %v2339 = vsel %vm1917, %v2334, %v2338
    %v2340 = vshrl.u32 %v1871, 16
    %v2342 = vrot.slane %v2340, 4
    %v2343 = vor.u32 %v2342, %v2338
    %v2344 = vrot.slane %v2343, 4
    %v2346 = vshll.u32 %v1872, 16
    %v2348 = vrot.slane %v2346, 5
    %v2349 = vsel %vm1917, %v2344, %v2348
    %v2351 = vshrl.u32 %v1873, 16
    %v2353 = vrot.slane %v2351, 4
    %v2354 = vshll.u32 %v1873, 16
    %v2356 = vrot.slane %v2354, 5
    %v2357 = vor.u32 %v2353, %v2356
    %v2358 = vrot.slane %v2357, 4
    %v2360 = vshll.u32 %v1874, 16
    %v2362 = vrot.slane %v2360, 5
    %v2363 = vsel %vm1917, %v2358, %v2362
    %v2364 = vshrl.u32 %v1874, 16
    %v2366 = vrot.slane %v2364, 4
    %v2367 = vor.u32 %v2366, %v2362
    %v2368 = vrot.slane %v2367, 4
    %v2370 = vshll.u32 %v1875, 16
    %v2372 = vrot.slane %v2370, 5
    %v2373 = vsel %vm1917, %v2368, %v2372
    %v2375 = vshrl.u32 %v1876, 16
    %v2377 = vrot.slane %v2375, 4
    %v2378 = vshll.u32 %v1876, 16
    %v2380 = vrot.slane %v2378, 5
    %v2381 = vor.u32 %v2377, %v2380
    %v2382 = vrot.slane %v2381, 4
    %v2384 = vshll.u32 %v1877, 16
    %v2386 = vrot.slane %v2384, 5
    %v2387 = vsel %vm1917, %v2382, %v2386
    %v2388 = vshrl.u32 %v1877, 16
    %v2390 = vrot.slane %v2388, 4
    %v2391 = vor.u32 %v2390, %v2386
    %v2392 = vrot.slane %v2391, 4
    %v2394 = vshll.u32 %v1878, 16
    %v2396 = vrot.slane %v2394, 5
    %v2397 = vsel %vm1917, %v2392, %v2396
    %v2399 = vshrl.u32 %v1879, 16
    %v2401 = vrot.slane %v2399, 4
    %v2402 = vshll.u32 %v1879, 16
    %v2404 = vrot.slane %v2402, 5
    %v2405 = vor.u32 %v2401, %v2404
    %v2406 = vrot.slane %v2405, 4
    %v2408 = vshll.u32 %v1880, 16
    %v2410 = vrot.slane %v2408, 5
    %v2411 = vsel %vm1917, %v2406, %v2410
    %v2412 = vshrl.u32 %v1880, 16
    %v2414 = vrot.slane %v2412, 4
    %v2415 = vor.u32 %v2414, %v2410
    %v2416 = vrot.slane %v2415, 4
    %v2418 = vshll.u32 %v1881, 16
    %v2420 = vrot.slane %v2418, 5
    %v2421 = vsel %vm1917, %v2416, %v2420
    %v2423 = vshrl.u32 %v1882, 16
    %v2425 = vrot.slane %v2423, 4
    %v2426 = vshll.u32 %v1882, 16
    %v2428 = vrot.slane %v2426, 5
    %v2429 = vor.u32 %v2425, %v2428
    %v2430 = vrot.slane %v2429, 4
    %v2432 = vshll.u32 %v1883, 16
    %v2434 = vrot.slane %v2432, 5
    %v2435 = vsel %vm1917, %v2430, %v2434
    %v2436 = vshrl.u32 %v1883, 16
    %v2438 = vrot.slane %v2436, 4
    %v2439 = vor.u32 %v2438, %v2434
    %v2440 = vrot.slane %v2439, 4
    %v2442 = vshll.u32 %v1884, 16
    %v2444 = vrot.slane %v2442, 5
    %v2445 = vsel %vm1917, %v2440, %v2444
    %v2447 = vshrl.u32 %v1885, 16
    %v2449 = vrot.slane %v2447, 4
    %v2450 = vshll.u32 %v1885, 16
    %v2452 = vrot.slane %v2450, 5
    %v2453 = vor.u32 %v2449, %v2452
    %v2454 = vrot.slane %v2453, 4
    %v2456 = vshll.u32 %v1886, 16
    %v2458 = vrot.slane %v2456, 5
    %v2459 = vsel %vm1917, %v2454, %v2458
    %v2460 = vshrl.u32 %v1886, 16
    %v2462 = vrot.slane %v2460, 4
    %v2463 = vor.u32 %v2462, %v2458
    %v2464 = vrot.slane %v2463, 4
    %v2466 = vshll.u32 %v1887, 16
    %v2468 = vrot.slane %v2466, 5
    %v2469 = vsel %vm1917, %v2464, %v2468
    %v2471 = vshrl.u32 %v1888, 16
    %v2473 = vrot.slane %v2471, 4
    %v2474 = vshll.u32 %v1888, 16
    %v2476 = vrot.slane %v2474, 5
    %v2477 = vor.u32 %v2473, %v2476
    %v2478 = vrot.slane %v2477, 4
    %v2480 = vshll.u32 %v1889, 16
    %v2482 = vrot.slane %v2480, 5
    %v2483 = vsel %vm1917, %v2478, %v2482
    %v2484 = vshrl.u32 %v1889, 16
    %v2486 = vrot.slane %v2484, 4
    %v2487 = vor.u32 %v2486, %v2482
    %v2488 = vrot.slane %v2487, 4
    %v2490 = vshll.u32 %v1890, 16
    %v2492 = vrot.slane %v2490, 5
    %v2493 = vsel %vm1917, %v2488, %v2492
    %v2495 = vshrl.u32 %v1891, 16
    %v2497 = vrot.slane %v2495, 4
    %v2498 = vshll.u32 %v1891, 16
    %v2500 = vrot.slane %v2498, 5
    %v2501 = vor.u32 %v2497, %v2500
    %v2502 = vrot.slane %v2501, 4
    %v2504 = vshll.u32 %v1892, 16
    %v2506 = vrot.slane %v2504, 5
    %v2507 = vsel %vm1917, %v2502, %v2506
    %v2508 = vshrl.u32 %v1892, 16
    %v2510 = vrot.slane %v2508, 4
    %v2511 = vor.u32 %v2510, %v2506
    %v2512 = vrot.slane %v2511, 4
    %v2514 = vshll.u32 %v1893, 16
    %v2516 = vrot.slane %v2514, 5
    %v2517 = vsel %vm1917, %v2512, %v2516
    %v2519 = vshrl.u32 %v1894, 16
    %v2521 = vrot.slane %v2519, 4
    %v2522 = vshll.u32 %v1894, 16
    %v2524 = vrot.slane %v2522, 5
    %v2525 = vor.u32 %v2521, %v2524
    %v2526 = vrot.slane %v2525, 4
    %v2528 = vshll.u32 %v1895, 16
    %v2530 = vrot.slane %v2528, 5
    %v2531 = vsel %vm1917, %v2526, %v2530
    %v2532 = vshrl.u32 %v1895, 16
    %v2534 = vrot.slane %v2532, 4
    %v2535 = vor.u32 %v2534, %v2530
    %v2536 = vrot.slane %v2535, 4
    %v2538 = vshll.u32 %v1896, 16
    %v2540 = vrot.slane %v2538, 5
    %v2541 = vsel %vm1917, %v2536, %v2540
    %v2543 = vshrl.u32 %v1897, 16
    %v2545 = vrot.slane %v2543, 4
    %v2546 = vshll.u32 %v1897, 16
    %v2548 = vrot.slane %v2546, 5
    %v2549 = vor.u32 %v2545, %v2548
    %v2550 = vrot.slane %v2549, 4
    %v2552 = vshll.u32 %v1898, 16
    %v2554 = vrot.slane %v2552, 5
    %v2555 = vsel %vm1917, %v2550, %v2554
    %v2556 = vshrl.u32 %v1898, 16
    %v2558 = vrot.slane %v2556, 4
    %v2559 = vor.u32 %v2558, %v2554
    %v2560 = vrot.slane %v2559, 4
    %v2562 = vshll.u32 %v1899, 16
    %v2564 = vrot.slane %v2562, 5
    %v2565 = vsel %vm1917, %v2560, %v2564
    %v2567 = vshrl.u32 %v1900, 16
    %v2569 = vrot.slane %v2567, 4
    %v2570 = vshll.u32 %v1900, 16
    %v2572 = vrot.slane %v2570, 5
    %v2573 = vor.u32 %v2569, %v2572
    %v2574 = vrot.slane %v2573, 4
    %v2576 = vshll.u32 %v1901, 16
    %v2578 = vrot.slane %v2576, 5
    %v2579 = vsel %vm1917, %v2574, %v2578
    %v2580 = vshrl.u32 %v1901, 16
    %v2582 = vrot.slane %v2580, 4
    %v2583 = vor.u32 %v2582, %v2578
    %v2584 = vrot.slane %v2583, 4
    %v2586 = vshll.u32 %v1902, 16
    %v2588 = vrot.slane %v2586, 5
    %v2589 = vsel %vm1917, %v2584, %v2588
    %v2591 = vshrl.u32 %v1903, 16
    %v2593 = vrot.slane %v2591, 4
    %v2594 = vshll.u32 %v1903, 16
    %v2596 = vrot.slane %v2594, 5
    %v2597 = vor.u32 %v2593, %v2596
    %v2598 = vrot.slane %v2597, 4
    %v2600 = vshll.u32 %v1904, 16
    %v2602 = vrot.slane %v2600, 5
    %v2603 = vsel %vm1917, %v2598, %v2602
    %v2604 = vshrl.u32 %v1904, 16
    %v2606 = vrot.slane %v2604, 4
    %v2607 = vor.u32 %v2606, %v2602
    %v2608 = vrot.slane %v2607, 4
    %v2610 = vshll.u32 %v1905, 16
    %v2612 = vrot.slane %v2610, 5
    %v2613 = vsel %vm1917, %v2608, %v2612
    %v2615 = vshrl.u32 %v1906, 16
    %v2617 = vrot.slane %v2615, 4
    %v2618 = vshll.u32 %v1906, 16
    %v2620 = vrot.slane %v2618, 5
    %v2621 = vor.u32 %v2617, %v2620
    %v2622 = vrot.slane %v2621, 4
    %v2624 = vshll.u32 %v1907, 16
    %v2626 = vrot.slane %v2624, 5
    %v2627 = vsel %vm1917, %v2622, %v2626
    %v2628 = vshrl.u32 %v1907, 16
    %v2630 = vrot.slane %v2628, 4
    %v2631 = vor.u32 %v2630, %v2626
    %v2632 = vrot.slane %v2631, 4
    %v2634 = vshll.u32 %v1908, 16
    %v2636 = vrot.slane %v2634, 5
    %v2637 = vsel %vm1917, %v2632, %v2636
    %v2639 = vshrl.u32 %v1909, 16
    %v2641 = vrot.slane %v2639, 4
    %v2642 = vshll.u32 %v1909, 16
    %v2644 = vrot.slane %v2642, 5
    %v2645 = vor.u32 %v2641, %v2644
    %v2646 = vrot.slane %v2645, 4
    %v2648 = vshll.u32 %v1910, 16
    %v2650 = vrot.slane %v2648, 5
    %v2651 = vsel %vm1917, %v2646, %v2650
    %v2652 = vshrl.u32 %v1910, 16
    %v2654 = vrot.slane %v2652, 4
    %v2655 = vor.u32 %v2654, %v2650
    %v2656 = vrot.slane %v2655, 4
    %v2658 = vshll.u32 %v1911, 16
    %v2660 = vrot.slane %v2658, 5
    %v2661 = vsel %vm1917, %v2656, %v2660
    %v2663 = vshrl.u32 %v1912, 16
    %v2665 = vrot.slane %v2663, 4
    %v2666 = vshll.u32 %v1912, 16
    %v2668 = vrot.slane %v2666, 5
    %v2669 = vor.u32 %v2665, %v2668
    %v2670 = vrot.slane %v2669, 4
    %v2672 = vshll.u32 %v1913, 16
    %v2674 = vrot.slane %v2672, 5
    %v2675 = vsel %vm1917, %v2670, %v2674
    %v2676 = vshrl.u32 %v1913, 16
    %v2678 = vrot.slane %v2676, 4
    %v2679 = vor.u32 %v2678, %v2674
    %v2680 = vrot.slane %v2679, 4
    %v2682 = vshll.u32 %v1914, 16
    %v2684 = vrot.slane %v2682, 5
    %v2685 = vsel %vm1917, %v2680, %v2684
    %2686 = vrot.lane.b32.xlu0 %v1931, 32
    %v2687 = vpop.permute.xlu0 %2686
    %2688 = vrot.lane.b32.xlu0 %v1941, 32
    %v2689 = vpop.permute.xlu0 %2688
    %2690 = vrot.lane.b32.xlu0 %v1955, 32
    %v2691 = vpop.permute.xlu0 %2690
    %2692 = vrot.lane.b32.xlu0 %v1965, 32
    %v2693 = vpop.permute.xlu0 %2692
    %2694 = vrot.lane.b32.xlu0 %v1979, 32
    %v2695 = vpop.permute.xlu0 %2694
    %2696 = vrot.lane.b32.xlu0 %v1989, 32
    %v2697 = vpop.permute.xlu0 %2696
    %2698 = vrot.lane.b32.xlu0 %v2003, 32
    %v2699 = vpop.permute.xlu0 %2698
    %2700 = vrot.lane.b32.xlu0 %v2013, 32
    %v2701 = vpop.permute.xlu0 %2700
    %2702 = vrot.lane.b32.xlu0 %v2027, 32
    %v2703 = vpop.permute.xlu0 %2702
    %2704 = vrot.lane.b32.xlu0 %v2037, 32
    %v2705 = vpop.permute.xlu0 %2704
    %2706 = vrot.lane.b32.xlu0 %v2051, 32
    %v2707 = vpop.permute.xlu0 %2706
    %2708 = vrot.lane.b32.xlu0 %v2061, 32
    %v2709 = vpop.permute.xlu0 %2708
    %2710 = vrot.lane.b32.xlu0 %v2075, 32
    %v2711 = vpop.permute.xlu0 %2710
    %2712 = vrot.lane.b32.xlu0 %v2085, 32
    %v2713 = vpop.permute.xlu0 %2712
    %2714 = vrot.lane.b32.xlu0 %v2099, 32
    %v2715 = vpop.permute.xlu0 %2714
    %2716 = vrot.lane.b32.xlu0 %v2109, 32
    %v2717 = vpop.permute.xlu0 %2716
    %2718 = vrot.lane.b32.xlu0 %v2123, 32
    %v2719 = vpop.permute.xlu0 %2718
    %2720 = vrot.lane.b32.xlu0 %v2133, 32
    %v2721 = vpop.permute.xlu0 %2720
    %2722 = vrot.lane.b32.xlu0 %v2147, 32
    %v2723 = vpop.permute.xlu0 %2722
    %2724 = vrot.lane.b32.xlu0 %v2157, 32
    %v2725 = vpop.permute.xlu0 %2724
    %2726 = vrot.lane.b32.xlu0 %v2171, 32
    %v2727 = vpop.permute.xlu0 %2726
    %2728 = vrot.lane.b32.xlu0 %v2181, 32
    %v2729 = vpop.permute.xlu0 %2728
    %2730 = vrot.lane.b32.xlu0 %v2195, 32
    %v2731 = vpop.permute.xlu0 %2730
    %2732 = vrot.lane.b32.xlu0 %v2205, 32
    %v2733 = vpop.permute.xlu0 %2732
    %2734 = vrot.lane.b32.xlu0 %v2219, 32
    %v2735 = vpop.permute.xlu0 %2734
    %2736 = vrot.lane.b32.xlu0 %v2229, 32
    %v2737 = vpop.permute.xlu0 %2736
    %2738 = vrot.lane.b32.xlu0 %v2243, 32
    %v2739 = vpop.permute.xlu0 %2738
    %2740 = vrot.lane.b32.xlu0 %v2253, 32
    %v2741 = vpop.permute.xlu0 %2740
    %2742 = vrot.lane.b32.xlu0 %v2267, 32
    %v2743 = vpop.permute.xlu0 %2742
    %2744 = vrot.lane.b32.xlu0 %v2277, 32
    %v2745 = vpop.permute.xlu0 %2744
    %2746 = vrot.lane.b32.xlu0 %v2291, 32
    %v2747 = vpop.permute.xlu0 %2746
    %2748 = vrot.lane.b32.xlu0 %v2301, 32
    %v2749 = vpop.permute.xlu0 %2748
    %2750 = vrot.lane.b32.xlu0 %v2315, 32
    %v2751 = vpop.permute.xlu0 %2750
    %2752 = vrot.lane.b32.xlu0 %v2325, 32
    %v2753 = vpop.permute.xlu0 %2752
    %2754 = vrot.lane.b32.xlu0 %v2339, 32
    %v2755 = vpop.permute.xlu0 %2754
    %2756 = vrot.lane.b32.xlu0 %v2349, 32
    %v2757 = vpop.permute.xlu0 %2756
    %2758 = vrot.lane.b32.xlu0 %v2363, 32
    %v2759 = vpop.permute.xlu0 %2758
    %2760 = vrot.lane.b32.xlu0 %v2373, 32
    %v2761 = vpop.permute.xlu0 %2760
    %2762 = vrot.lane.b32.xlu0 %v2387, 32
    %v2763 = vpop.permute.xlu0 %2762
    %2764 = vrot.lane.b32.xlu0 %v2397, 32
    %v2765 = vpop.permute.xlu0 %2764
    %2766 = vrot.lane.b32.xlu0 %v2411, 32
    %v2767 = vpop.permute.xlu0 %2766
    %2768 = vrot.lane.b32.xlu0 %v2421, 32
    %v2769 = vpop.permute.xlu0 %2768
    %2770 = vrot.lane.b32.xlu0 %v2435, 32
    %v2771 = vpop.permute.xlu0 %2770
    %2772 = vrot.lane.b32.xlu0 %v2445, 32
    %v2773 = vpop.permute.xlu0 %2772
    %2774 = vrot.lane.b32.xlu0 %v2459, 32
    %v2775 = vpop.permute.xlu0 %2774
    %2776 = vrot.lane.b32.xlu0 %v2469, 32
    %v2777 = vpop.permute.xlu0 %2776
    %2778 = vrot.lane.b32.xlu0 %v2483, 32
    %v2779 = vpop.permute.xlu0 %2778
    %2780 = vrot.lane.b32.xlu0 %v2493, 32
    %v2781 = vpop.permute.xlu0 %2780
    %2782 = vrot.lane.b32.xlu0 %v2507, 32
    %v2783 = vpop.permute.xlu0 %2782
    %2784 = vrot.lane.b32.xlu0 %v2517, 32
    %v2785 = vpop.permute.xlu0 %2784
    %2786 = vrot.lane.b32.xlu0 %v2531, 32
    %v2787 = vpop.permute.xlu0 %2786
    %2788 = vrot.lane.b32.xlu0 %v2541, 32
    %v2789 = vpop.permute.xlu0 %2788
    %2790 = vrot.lane.b32.xlu0 %v2555, 32
    %v2791 = vpop.permute.xlu0 %2790
    %2792 = vrot.lane.b32.xlu0 %v2565, 32
    %v2793 = vpop.permute.xlu0 %2792
    %2794 = vrot.lane.b32.xlu0 %v2579, 32
    %v2795 = vpop.permute.xlu0 %2794
    %2796 = vrot.lane.b32.xlu0 %v2589, 32
    %v2797 = vpop.permute.xlu0 %2796
    %2798 = vrot.lane.b32.xlu0 %v2603, 32
    %v2799 = vpop.permute.xlu0 %2798
    %2800 = vrot.lane.b32.xlu0 %v2613, 32
    %v2801 = vpop.permute.xlu0 %2800
    %2802 = vrot.lane.b32.xlu0 %v2627, 32
    %v2803 = vpop.permute.xlu0 %2802
    %2804 = vrot.lane.b32.xlu0 %v2637, 32
    %v2805 = vpop.permute.xlu0 %2804
    %2806 = vrot.lane.b32.xlu0 %v2651, 32
    %v2807 = vpop.permute.xlu0 %2806
    %2808 = vrot.lane.b32.xlu0 %v2661, 32
    %v2809 = vpop.permute.xlu0 %2808
    %2810 = vrot.lane.b32.xlu0 %v2675, 32
    %v2811 = vpop.permute.xlu0 %2810
    %2812 = vrot.lane.b32.xlu0 %v2685, 32
    %v2813 = vpop.permute.xlu0 %2812
    %vm2878 = vcmask 519424
    %2879 = vst.msk [vmem:[#allocation3] sm:$0xf] %vm2878, %v2687
    %2880 = vst.msk [vmem:[#allocation3 + $0xc] sm:$0xf] %vm2878, %v2689
    %2881 = vst.msk [vmem:[#allocation3 + $0x18] sm:$0xf] %vm2878, %v2691
    %2882 = vst.msk [vmem:[#allocation3 + $0x24] sm:$0xf] %vm2878, %v2693
    %2883 = vst.msk [vmem:[#allocation3 + $0x30] sm:$0xf] %vm2878, %v2695
    %2884 = vst.msk [vmem:[#allocation3 + $0x3c] sm:$0xf] %vm2878, %v2697
    %2885 = vst.msk [vmem:[#allocation3 + $0x48] sm:$0xf] %vm2878, %v2699
    %2886 = vst.msk [vmem:[#allocation3 + $0x54] sm:$0xf] %vm2878, %v2701
    %2887 = vst.msk [vmem:[#allocation3 + $0x60] sm:$0xf] %vm2878, %v2703
    %2888 = vst.msk [vmem:[#allocation3 + $0x6c] sm:$0xf] %vm2878, %v2705
    %2889 = vst.msk [vmem:[#allocation3 + $0x78] sm:$0xf] %vm2878, %v2707
    %2890 = vst.msk [vmem:[#allocation3 + $0x84] sm:$0xf] %vm2878, %v2709
    %2891 = vst.msk [vmem:[#allocation3 + $0x90] sm:$0xf] %vm2878, %v2711
    %2892 = vst.msk [vmem:[#allocation3 + $0x9c] sm:$0xf] %vm2878, %v2713
    %2893 = vst.msk [vmem:[#allocation3 + $0xa8] sm:$0xf] %vm2878, %v2715
    %2894 = vst.msk [vmem:[#allocation3 + $0xb4] sm:$0xf] %vm2878, %v2717
    %2895 = vst.msk [vmem:[#allocation3 + $0xc0] sm:$0xf] %vm2878, %v2719
    %2896 = vst.msk [vmem:[#allocation3 + $0xcc] sm:$0xf] %vm2878, %v2721
    %2897 = vst.msk [vmem:[#allocation3 + $0xd8] sm:$0xf] %vm2878, %v2723
    %2898 = vst.msk [vmem:[#allocation3 + $0xe4] sm:$0xf] %vm2878, %v2725
    %2899 = vst.msk [vmem:[#allocation3 + $0xf0] sm:$0xf] %vm2878, %v2727
    %2900 = vst.msk [vmem:[#allocation3 + $0xfc] sm:$0xf] %vm2878, %v2729
    %2901 = vst.msk [vmem:[#allocation3 + $0x108] sm:$0xf] %vm2878, %v2731
    %2902 = vst.msk [vmem:[#allocation3 + $0x114] sm:$0xf] %vm2878, %v2733
    %2903 = vst.msk [vmem:[#allocation3 + $0x120] sm:$0xf] %vm2878, %v2735
    %2904 = vst.msk [vmem:[#allocation3 + $0x12c] sm:$0xf] %vm2878, %v2737
    %2905 = vst.msk [vmem:[#allocation3 + $0x138] sm:$0xf] %vm2878, %v2739
    %2906 = vst.msk [vmem:[#allocation3 + $0x144] sm:$0xf] %vm2878, %v2741
    %2907 = vst.msk [vmem:[#allocation3 + $0x150] sm:$0xf] %vm2878, %v2743
    %2908 = vst.msk [vmem:[#allocation3 + $0x15c] sm:$0xf] %vm2878, %v2745
    %2909 = vst.msk [vmem:[#allocation3 + $0x168] sm:$0xf] %vm2878, %v2747
    %2910 = vst.msk [vmem:[#allocation3 + $0x174] sm:$0xf] %vm2878, %v2749
    %2911 = vst.msk [vmem:[#allocation3 + $0x180] sm:$0xf] %vm2878, %v2751
    %2912 = vst.msk [vmem:[#allocation3 + $0x18c] sm:$0xf] %vm2878, %v2753
    %2913 = vst.msk [vmem:[#allocation3 + $0x198] sm:$0xf] %vm2878, %v2755
    %2914 = vst.msk [vmem:[#allocation3 + $0x1a4] sm:$0xf] %vm2878, %v2757
    %2915 = vst.msk [vmem:[#allocation3 + $0x1b0] sm:$0xf] %vm2878, %v2759
    %2916 = vst.msk [vmem:[#allocation3 + $0x1bc] sm:$0xf] %vm2878, %v2761
    %2917 = vst.msk [vmem:[#allocation3 + $0x1c8] sm:$0xf] %vm2878, %v2763
    %2918 = vst.msk [vmem:[#allocation3 + $0x1d4] sm:$0xf] %vm2878, %v2765
    %2919 = vst.msk [vmem:[#allocation3 + $0x1e0] sm:$0xf] %vm2878, %v2767
    %2920 = vst.msk [vmem:[#allocation3 + $0x1ec] sm:$0xf] %vm2878, %v2769
    %2921 = vst.msk [vmem:[#allocation3 + $0x1f8] sm:$0xf] %vm2878, %v2771
    %2922 = vst.msk [vmem:[#allocation3 + $0x204] sm:$0xf] %vm2878, %v2773
    %2923 = vst.msk [vmem:[#allocation3 + $0x210] sm:$0xf] %vm2878, %v2775
    %2924 = vst.msk [vmem:[#allocation3 + $0x21c] sm:$0xf] %vm2878, %v2777
    %2925 = vst.msk [vmem:[#allocation3 + $0x228] sm:$0xf] %vm2878, %v2779
    %2926 = vst.msk [vmem:[#allocation3 + $0x234] sm:$0xf] %vm2878, %v2781
    %2927 = vst.msk [vmem:[#allocation3 + $0x240] sm:$0xf] %vm2878, %v2783
    %2928 = vst.msk [vmem:[#allocation3 + $0x24c] sm:$0xf] %vm2878, %v2785
    %2929 = vst.msk [vmem:[#allocation3 + $0x258] sm:$0xf] %vm2878, %v2787
    %2930 = vst.msk [vmem:[#allocation3 + $0x264] sm:$0xf] %vm2878, %v2789
    %2931 = vst.msk [vmem:[#allocation3 + $0x270] sm:$0xf] %vm2878, %v2791
    %2932 = vst.msk [vmem:[#allocation3 + $0x27c] sm:$0xf] %vm2878, %v2793
    %2933 = vst.msk [vmem:[#allocation3 + $0x288] sm:$0xf] %vm2878, %v2795
    %2934 = vst.msk [vmem:[#allocation3 + $0x294] sm:$0xf] %vm2878, %v2797
    %2935 = vst.msk [vmem:[#allocation3 + $0x2a0] sm:$0xf] %vm2878, %v2799
    %2936 = vst.msk [vmem:[#allocation3 + $0x2ac] sm:$0xf] %vm2878, %v2801
    %2937 = vst.msk [vmem:[#allocation3 + $0x2b8] sm:$0xf] %vm2878, %v2803
    %2938 = vst.msk [vmem:[#allocation3 + $0x2c4] sm:$0xf] %vm2878, %v2805
    %2939 = vst.msk [vmem:[#allocation3 + $0x2d0] sm:$0xf] %vm2878, %v2807
    %2940 = vst.msk [vmem:[#allocation3 + $0x2dc] sm:$0xf] %vm2878, %v2809
    %2941 = vst.msk [vmem:[#allocation3 + $0x2e8] sm:$0xf] %vm2878, %v2811
    %2942 = vst.msk [vmem:[#allocation3 + $0x2f4] sm:$0xf] %vm2878, %v2813
    %v2943 = vld [vmem:[#allocation2] sm:$0xe]
    %v2944 = vld [vmem:[#allocation2 + $0x4] sm:$0xf]
    %v2945 = vld [vmem:[#allocation2 + $0x8] sm:$0x1]
    %v2946 = vld [vmem:[#allocation2 + $0xc] sm:$0xe]
    %v2947 = vld [vmem:[#allocation2 + $0x10] sm:$0xf]
    %v2948 = vld [vmem:[#allocation2 + $0x14] sm:$0x1]
    %v2949 = vld [vmem:[#allocation2 + $0x18] sm:$0xe]
    %v2950 = vld [vmem:[#allocation2 + $0x1c] sm:$0xf]
    %v2951 = vld [vmem:[#allocation2 + $0x20] sm:$0x1]
    %v2952 = vld [vmem:[#allocation2 + $0x24] sm:$0xe]
    %v2953 = vld [vmem:[#allocation2 + $0x28] sm:$0xf]
    %v2954 = vld [vmem:[#allocation2 + $0x2c] sm:$0x1]
    %v2955 = vld [vmem:[#allocation2 + $0x30] sm:$0xe]
    %v2956 = vld [vmem:[#allocation2 + $0x34] sm:$0xf]
    %v2957 = vld [vmem:[#allocation2 + $0x38] sm:$0x1]
    %v2958 = vld [vmem:[#allocation2 + $0x3c] sm:$0xe]
    %v2959 = vld [vmem:[#allocation2 + $0x40] sm:$0xf]
    %v2960 = vld [vmem:[#allocation2 + $0x44] sm:$0x1]
    %v2961 = vld [vmem:[#allocation2 + $0x48] sm:$0xe]
    %v2962 = vld [vmem:[#allocation2 + $0x4c] sm:$0xf]
    %v2963 = vld [vmem:[#allocation2 + $0x50] sm:$0x1]
    %v2964 = vld [vmem:[#allocation2 + $0x54] sm:$0xe]
    %v2965 = vld [vmem:[#allocation2 + $0x58] sm:$0xf]
    %v2966 = vld [vmem:[#allocation2 + $0x5c] sm:$0x1]
    %v2967 = vld [vmem:[#allocation2 + $0x60] sm:$0xe]
    %v2968 = vld [vmem:[#allocation2 + $0x64] sm:$0xf]
    %v2969 = vld [vmem:[#allocation2 + $0x68] sm:$0x1]
    %v2970 = vld [vmem:[#allocation2 + $0x6c] sm:$0xe]
    %v2971 = vld [vmem:[#allocation2 + $0x70] sm:$0xf]
    %v2972 = vld [vmem:[#allocation2 + $0x74] sm:$0x1]
    %v2973 = vld [vmem:[#allocation2 + $0x78] sm:$0xe]
    %v2974 = vld [vmem:[#allocation2 + $0x7c] sm:$0xf]
    %v2975 = vld [vmem:[#allocation2 + $0x80] sm:$0x1]
    %v2976 = vld [vmem:[#allocation2 + $0x84] sm:$0xe]
    %v2977 = vld [vmem:[#allocation2 + $0x88] sm:$0xf]
    %v2978 = vld [vmem:[#allocation2 + $0x8c] sm:$0x1]
    %v2979 = vld [vmem:[#allocation2 + $0x90] sm:$0xe]
    %v2980 = vld [vmem:[#allocation2 + $0x94] sm:$0xf]
    %v2981 = vld [vmem:[#allocation2 + $0x98] sm:$0x1]
    %v2982 = vld [vmem:[#allocation2 + $0x9c] sm:$0xe]
    %v2983 = vld [vmem:[#allocation2 + $0xa0] sm:$0xf]
    %v2984 = vld [vmem:[#allocation2 + $0xa4] sm:$0x1]
    %v2985 = vld [vmem:[#allocation2 + $0xa8] sm:$0xe]
    %v2986 = vld [vmem:[#allocation2 + $0xac] sm:$0xf]
    %v2987 = vld [vmem:[#allocation2 + $0xb0] sm:$0x1]
    %v2988 = vld [vmem:[#allocation2 + $0xb4] sm:$0xe]
    %v2989 = vld [vmem:[#allocation2 + $0xb8] sm:$0xf]
    %v2990 = vld [vmem:[#allocation2 + $0xbc] sm:$0x1]
    %v2991 = vld [vmem:[#allocation2 + $0xd8] sm:$0xe]
    %v2992 = vld [vmem:[#allocation2 + $0xdc] sm:$0xf]
    %v2993 = vld [vmem:[#allocation2 + $0xe0] sm:$0x1]
    %v2994 = vld [vmem:[#allocation2 + $0xe4] sm:$0xe]
    %v2995 = vld [vmem:[#allocation2 + $0xe8] sm:$0xf]
    %v2996 = vld [vmem:[#allocation2 + $0xec] sm:$0x1]
    %v2997 = vld [vmem:[#allocation2 + $0xf0] sm:$0xe]
    %v2998 = vld [vmem:[#allocation2 + $0xf4] sm:$0xf]
    %v2999 = vld [vmem:[#allocation2 + $0xf8] sm:$0x1]
    %v3000 = vld [vmem:[#allocation2 + $0xfc] sm:$0xe]
    %v3001 = vld [vmem:[#allocation2 + $0x100] sm:$0xf]
    %v3002 = vld [vmem:[#allocation2 + $0x104] sm:$0x1]
    %v3003 = vld [vmem:[#allocation2 + $0x108] sm:$0xe]
    %v3004 = vld [vmem:[#allocation2 + $0x10c] sm:$0xf]
    %v3005 = vld [vmem:[#allocation2 + $0x110] sm:$0x1]
    %v3006 = vld [vmem:[#allocation2 + $0x114] sm:$0xe]
    %v3007 = vld [vmem:[#allocation2 + $0x118] sm:$0xf]
    %v3008 = vld [vmem:[#allocation2 + $0x11c] sm:$0x1]
    %v3009 = vld [vmem:[#allocation2 + $0x120] sm:$0xe]
    %v3010 = vld [vmem:[#allocation2 + $0x124] sm:$0xf]
    %v3011 = vld [vmem:[#allocation2 + $0x128] sm:$0x1]
    %v3012 = vld [vmem:[#allocation2 + $0x12c] sm:$0xe]
    %v3013 = vld [vmem:[#allocation2 + $0x130] sm:$0xf]
    %v3014 = vld [vmem:[#allocation2 + $0x134] sm:$0x1]
    %v3015 = vld [vmem:[#allocation2 + $0x138] sm:$0xe]
    %v3016 = vld [vmem:[#allocation2 + $0x13c] sm:$0xf]
    %v3017 = vld [vmem:[#allocation2 + $0x140] sm:$0x1]
    %v3018 = vld [vmem:[#allocation2 + $0x144] sm:$0xe]
    %v3019 = vld [vmem:[#allocation2 + $0x148] sm:$0xf]
    %v3020 = vld [vmem:[#allocation2 + $0x14c] sm:$0x1]
    %v3021 = vld [vmem:[#allocation2 + $0x150] sm:$0xe]
    %v3022 = vld [vmem:[#allocation2 + $0x154] sm:$0xf]
    %v3023 = vld [vmem:[#allocation2 + $0x158] sm:$0x1]
    %v3024 = vld [vmem:[#allocation2 + $0x15c] sm:$0xe]
    %v3025 = vld [vmem:[#allocation2 + $0x160] sm:$0xf]
    %v3026 = vld [vmem:[#allocation2 + $0x164] sm:$0x1]
    %v3027 = vld [vmem:[#allocation2 + $0x168] sm:$0xe]
    %v3028 = vld [vmem:[#allocation2 + $0x16c] sm:$0xf]
    %v3029 = vld [vmem:[#allocation2 + $0x170] sm:$0x1]
    %v3030 = vld [vmem:[#allocation2 + $0x174] sm:$0xe]
    %v3031 = vld [vmem:[#allocation2 + $0x178] sm:$0xf]
    %v3032 = vld [vmem:[#allocation2 + $0x17c] sm:$0x1]
    %v3033 = vld [vmem:[#allocation2 + $0x180] sm:$0xe]
    %v3034 = vld [vmem:[#allocation2 + $0x184] sm:$0xf]
    %v3035 = vld [vmem:[#allocation2 + $0x188] sm:$0x1]
    %v3036 = vld [vmem:[#allocation2 + $0x18c] sm:$0xe]
    %v3037 = vld [vmem:[#allocation2 + $0x190] sm:$0xf]
    %v3038 = vld [vmem:[#allocation2 + $0x194] sm:$0x1]
    %vm3135 = vcmask 1042432
    %vm3136 = vcmask 1046532
    %vm3137 = vmor %vm3135, %vm3136
    %v3138 = vrot.slane %v2943, 5
    %v3139 = vrot.slane %v3138, 4
    %v3140 = vrot.slane %v2944, 5
    %v3141 = vsel %vm3137, %v3139, %v3140
    %v3142 = vrot.slane %v3140, 4
    %v3143 = vrot.slane %v2945, 5
    %v3144 = vsel %vm3137, %v3142, %v3143
    %v3145 = vrot.slane %v2946, 5
    %v3146 = vrot.slane %v3145, 4
    %v3147 = vrot.slane %v2947, 5
    %v3148 = vsel %vm3137, %v3146, %v3147
    %v3149 = vrot.slane %v3147, 4
    %v3150 = vrot.slane %v2948, 5
    %v3151 = vsel %vm3137, %v3149, %v3150
    %v3152 = vrot.slane %v2949, 5
    %v3153 = vrot.slane %v3152, 4
    %v3154 = vrot.slane %v2950, 5
    %v3155 = vsel %vm3137, %v3153, %v3154
    %v3156 = vrot.slane %v3154, 4
    %v3157 = vrot.slane %v2951, 5
    %v3158 = vsel %vm3137, %v3156, %v3157
    %v3159 = vrot.slane %v2952, 5
    %v3160 = vrot.slane %v3159, 4
    %v3161 = vrot.slane %v2953, 5
    %v3162 = vsel %vm3137, %v3160, %v3161
    %v3163 = vrot.slane %v3161, 4
    %v3164 = vrot.slane %v2954, 5
    %v3165 = vsel %vm3137, %v3163, %v3164
    %v3166 = vrot.slane %v2955, 5
    %v3167 = vrot.slane %v3166, 4
    %v3168 = vrot.slane %v2956, 5
    %v3169 = vsel %vm3137, %v3167, %v3168
    %v3170 = vrot.slane %v3168, 4
    %v3171 = vrot.slane %v2957, 5
    %v3172 = vsel %vm3137, %v3170, %v3171
    %v3173 = vrot.slane %v2958, 5
    %v3174 = vrot.slane %v3173, 4
    %v3175 = vrot.slane %v2959, 5
    %v3176 = vsel %vm3137, %v3174, %v3175
    %v3177 = vrot.slane %v3175, 4
    %v3178 = vrot.slane %v2960, 5
    %v3179 = vsel %vm3137, %v3177, %v3178
    %v3180 = vrot.slane %v2961, 5
    %v3181 = vrot.slane %v3180, 4
    %v3182 = vrot.slane %v2962, 5
    %v3183 = vsel %vm3137, %v3181, %v3182
    %v3184 = vrot.slane %v3182, 4
    %v3185 = vrot.slane %v2963, 5
    %v3186 = vsel %vm3137, %v3184, %v3185
    %v3187 = vrot.slane %v2964, 5
    %v3188 = vrot.slane %v3187, 4
    %v3189 = vrot.slane %v2965, 5
    %v3190 = vsel %vm3137, %v3188, %v3189
    %v3191 = vrot.slane %v3189, 4
    %v3192 = vrot.slane %v2966, 5
    %v3193 = vsel %vm3137, %v3191, %v3192
    %v3194 = vrot.slane %v2967, 5
    %v3195 = vrot.slane %v3194, 4
    %v3196 = vrot.slane %v2968, 5
    %v3197 = vsel %vm3137, %v3195, %v3196
    %v3198 = vrot.slane %v3196, 4
    %v3199 = vrot.slane %v2969, 5
    %v3200 = vsel %vm3137, %v3198, %v3199
    %v3201 = vrot.slane %v2970, 5
    %v3202 = vrot.slane %v3201, 4
    %v3203 = vrot.slane %v2971, 5
    %v3204 = vsel %vm3137, %v3202, %v3203
    %v3205 = vrot.slane %v3203, 4
    %v3206 = vrot.slane %v2972, 5
    %v3207 = vsel %vm3137, %v3205, %v3206
    %v3208 = vrot.slane %v2973, 5
    %v3209 = vrot.slane %v3208, 4
    %v3210 = vrot.slane %v2974, 5
    %v3211 = vsel %vm3137, %v3209, %v3210
    %v3212 = vrot.slane %v3210, 4
    %v3213 = vrot.slane %v2975, 5
    %v3214 = vsel %vm3137, %v3212, %v3213
    %v3215 = vrot.slane %v2976, 5
    %v3216 = vrot.slane %v3215, 4
    %v3217 = vrot.slane %v2977, 5
    %v3218 = vsel %vm3137, %v3216, %v3217
    %v3219 = vrot.slane %v3217, 4
    %v3220 = vrot.slane %v2978, 5
    %v3221 = vsel %vm3137, %v3219, %v3220
    %v3222 = vrot.slane %v2979, 5
    %v3223 = vrot.slane %v3222, 4
    %v3224 = vrot.slane %v2980, 5
    %v3225 = vsel %vm3137, %v3223, %v3224
    %v3226 = vrot.slane %v3224, 4
    %v3227 = vrot.slane %v2981, 5
    %v3228 = vsel %vm3137, %v3226, %v3227
    %v3229 = vrot.slane %v2982, 5
    %v3230 = vrot.slane %v3229, 4
    %v3231 = vrot.slane %v2983, 5
    %v3232 = vsel %vm3137, %v3230, %v3231
    %v3233 = vrot.slane %v3231, 4
    %v3234 = vrot.slane %v2984, 5
    %v3235 = vsel %vm3137, %v3233, %v3234
    %v3236 = vrot.slane %v2985, 5
    %v3237 = vrot.slane %v3236, 4
    %v3238 = vrot.slane %v2986, 5
    %v3239 = vsel %vm3137, %v3237, %v3238
    %v3240 = vrot.slane %v3238, 4
    %v3241 = vrot.slane %v2987, 5
    %v3242 = vsel %vm3137, %v3240, %v3241
    %v3243 = vrot.slane %v2988, 5
    %v3244 = vrot.slane %v3243, 4
    %v3245 = vrot.slane %v2989, 5
    %v3246 = vsel %vm3137, %v3244, %v3245
    %v3247 = vrot.slane %v3245, 4
    %v3248 = vrot.slane %v2990, 5
    %v3249 = vsel %vm3137, %v3247, %v3248
    %v3250 = vrot.slane %v2991, 5
    %v3251 = vrot.slane %v3250, 4
    %v3252 = vrot.slane %v2992, 5
    %v3253 = vsel %vm3137, %v3251, %v3252
    %v3254 = vrot.slane %v3252, 4
    %v3255 = vrot.slane %v2993, 5
    %v3256 = vsel %vm3137, %v3254, %v3255
    %v3257 = vrot.slane %v2994, 5
    %v3258 = vrot.slane %v3257, 4
    %v3259 = vrot.slane %v2995, 5
    %v3260 = vsel %vm3137, %v3258, %v3259
    %v3261 = vrot.slane %v3259, 4
    %v3262 = vrot.slane %v2996, 5
    %v3263 = vsel %vm3137, %v3261, %v3262
    %v3264 = vrot.slane %v2997, 5
    %v3265 = vrot.slane %v3264, 4
    %v3266 = vrot.slane %v2998, 5
    %v3267 = vsel %vm3137, %v3265, %v3266
    %v3268 = vrot.slane %v3266, 4
    %v3269 = vrot.slane %v2999, 5
    %v3270 = vsel %vm3137, %v3268, %v3269
    %v3271 = vrot.slane %v3000, 5
    %v3272 = vrot.slane %v3271, 4
    %v3273 = vrot.slane %v3001, 5
    %v3274 = vsel %vm3137, %v3272, %v3273
    %v3275 = vrot.slane %v3273, 4
    %v3276 = vrot.slane %v3002, 5
    %v3277 = vsel %vm3137, %v3275, %v3276
    %v3278 = vrot.slane %v3003, 5
    %v3279 = vrot.slane %v3278, 4
    %v3280 = vrot.slane %v3004, 5
    %v3281 = vsel %vm3137, %v3279, %v3280
    %v3282 = vrot.slane %v3280, 4
    %v3283 = vrot.slane %v3005, 5
    %v3284 = vsel %vm3137, %v3282, %v3283
    %v3285 = vrot.slane %v3006, 5
    %v3286 = vrot.slane %v3285, 4
    %v3287 = vrot.slane %v3007, 5
    %v3288 = vsel %vm3137, %v3286, %v3287
    %v3289 = vrot.slane %v3287, 4
    %v3290 = vrot.slane %v3008, 5
    %v3291 = vsel %vm3137, %v3289, %v3290
    %v3292 = vrot.slane %v3009, 5
    %v3293 = vrot.slane %v3292, 4
    %v3294 = vrot.slane %v3010, 5
    %v3295 = vsel %vm3137, %v3293, %v3294
    %v3296 = vrot.slane %v3294, 4
    %v3297 = vrot.slane %v3011, 5
    %v3298 = vsel %vm3137, %v3296, %v3297
    %v3299 = vrot.slane %v3012, 5
    %v3300 = vrot.slane %v3299, 4
    %v3301 = vrot.slane %v3013, 5
    %v3302 = vsel %vm3137, %v3300, %v3301
    %v3303 = vrot.slane %v3301, 4
    %v3304 = vrot.slane %v3014, 5
    %v3305 = vsel %vm3137, %v3303, %v3304
    %v3306 = vrot.slane %v3015, 5
    %v3307 = vrot.slane %v3306, 4
    %v3308 = vrot.slane %v3016, 5
    %v3309 = vsel %vm3137, %v3307, %v3308
    %v3310 = vrot.slane %v3308, 4
    %v3311 = vrot.slane %v3017, 5
    %v3312 = vsel %vm3137, %v3310, %v3311
    %v3313 = vrot.slane %v3018, 5
    %v3314 = vrot.slane %v3313, 4
    %v3315 = vrot.slane %v3019, 5
    %v3316 = vsel %vm3137, %v3314, %v3315
    %v3317 = vrot.slane %v3315, 4
    %v3318 = vrot.slane %v3020, 5
    %v3319 = vsel %vm3137, %v3317, %v3318
    %v3320 = vrot.slane %v3021, 5
    %v3321 = vrot.slane %v3320, 4
    %v3322 = vrot.slane %v3022, 5
    %v3323 = vsel %vm3137, %v3321, %v3322
    %v3324 = vrot.slane %v3322, 4
    %v3325 = vrot.slane %v3023, 5
    %v3326 = vsel %vm3137, %v3324, %v3325
    %v3327 = vrot.slane %v3024, 5
    %v3328 = vrot.slane %v3327, 4
    %v3329 = vrot.slane %v3025, 5
    %v3330 = vsel %vm3137, %v3328, %v3329
    %v3331 = vrot.slane %v3329, 4
    %v3332 = vrot.slane %v3026, 5
    %v3333 = vsel %vm3137, %v3331, %v3332
    %v3334 = vrot.slane %v3027, 5
    %v3335 = vrot.slane %v3334, 4
    %v3336 = vrot.slane %v3028, 5
    %v3337 = vsel %vm3137, %v3335, %v3336
    %v3338 = vrot.slane %v3336, 4
    %v3339 = vrot.slane %v3029, 5
    %v3340 = vsel %vm3137, %v3338, %v3339
    %v3341 = vrot.slane %v3030, 5
    %v3342 = vrot.slane %v3341, 4
    %v3343 = vrot.slane %v3031, 5
    %v3344 = vsel %vm3137, %v3342, %v3343
    %v3345 = vrot.slane %v3343, 4
    %v3346 = vrot.slane %v3032, 5
    %v3347 = vsel %vm3137, %v3345, %v3346
    %v3348 = vrot.slane %v3033, 5
    %v3349 = vrot.slane %v3348, 4
    %v3350 = vrot.slane %v3034, 5
    %v3351 = vsel %vm3137, %v3349, %v3350
    %v3352 = vrot.slane %v3350, 4
    %v3353 = vrot.slane %v3035, 5
    %v3354 = vsel %vm3137, %v3352, %v3353
    %v3355 = vrot.slane %v3036, 5
    %v3356 = vrot.slane %v3355, 4
    %v3357 = vrot.slane %v3037, 5
    %v3358 = vsel %vm3137, %v3356, %v3357
    %v3359 = vrot.slane %v3357, 4
    %v3360 = vrot.slane %v3038, 5
    %v3361 = vsel %vm3137, %v3359, %v3360
    %3362 = vrot.lane.b32.xlu0 %v3141, 64
    %v3363 = vpop.permute.xlu0 %3362
    %3364 = vrot.lane.b32.xlu0 %v3144, 64
    %v3365 = vpop.permute.xlu0 %3364
    %3366 = vrot.lane.b32.xlu0 %v3148, 64
    %v3367 = vpop.permute.xlu0 %3366
    %3368 = vrot.lane.b32.xlu0 %v3151, 64
    %v3369 = vpop.permute.xlu0 %3368
    %3370 = vrot.lane.b32.xlu0 %v3155, 64
    %v3371 = vpop.permute.xlu0 %3370
    %3372 = vrot.lane.b32.xlu0 %v3158, 64
    %v3373 = vpop.permute.xlu0 %3372
    %3374 = vrot.lane.b32.xlu0 %v3162, 64
    %v3375 = vpop.permute.xlu0 %3374
    %3376 = vrot.lane.b32.xlu0 %v3165, 64
    %v3377 = vpop.permute.xlu0 %3376
    %3378 = vrot.lane.b32.xlu0 %v3169, 64
    %v3379 = vpop.permute.xlu0 %3378
    %3380 = vrot.lane.b32.xlu0 %v3172, 64
    %v3381 = vpop.permute.xlu0 %3380
    %3382 = vrot.lane.b32.xlu0 %v3176, 64
    %v3383 = vpop.permute.xlu0 %3382
    %3384 = vrot.lane.b32.xlu0 %v3179, 64
    %v3385 = vpop.permute.xlu0 %3384
    %3386 = vrot.lane.b32.xlu0 %v3183, 64
    %v3387 = vpop.permute.xlu0 %3386
    %3388 = vrot.lane.b32.xlu0 %v3186, 64
    %v3389 = vpop.permute.xlu0 %3388
    %3390 = vrot.lane.b32.xlu0 %v3190, 64
    %v3391 = vpop.permute.xlu0 %3390
    %3392 = vrot.lane.b32.xlu0 %v3193, 64
    %v3393 = vpop.permute.xlu0 %3392
    %3394 = vrot.lane.b32.xlu0 %v3197, 64
    %v3395 = vpop.permute.xlu0 %3394
    %3396 = vrot.lane.b32.xlu0 %v3200, 64
    %v3397 = vpop.permute.xlu0 %3396
    %3398 = vrot.lane.b32.xlu0 %v3204, 64
    %v3399 = vpop.permute.xlu0 %3398
    %3400 = vrot.lane.b32.xlu0 %v3207, 64
    %v3401 = vpop.permute.xlu0 %3400
    %3402 = vrot.lane.b32.xlu0 %v3211, 64
    %v3403 = vpop.permute.xlu0 %3402
    %3404 = vrot.lane.b32.xlu0 %v3214, 64
    %v3405 = vpop.permute.xlu0 %3404
    %3406 = vrot.lane.b32.xlu0 %v3218, 64
    %v3407 = vpop.permute.xlu0 %3406
    %3408 = vrot.lane.b32.xlu0 %v3221, 64
    %v3409 = vpop.permute.xlu0 %3408
    %3410 = vrot.lane.b32.xlu0 %v3225, 64
    %v3411 = vpop.permute.xlu0 %3410
    %3412 = vrot.lane.b32.xlu0 %v3228, 64
    %v3413 = vpop.permute.xlu0 %3412
    %3414 = vrot.lane.b32.xlu0 %v3232, 64
    %v3415 = vpop.permute.xlu0 %3414
    %3416 = vrot.lane.b32.xlu0 %v3235, 64
    %v3417 = vpop.permute.xlu0 %3416
    %3418 = vrot.lane.b32.xlu0 %v3239, 64
    %v3419 = vpop.permute.xlu0 %3418
    %3420 = vrot.lane.b32.xlu0 %v3242, 64
    %v3421 = vpop.permute.xlu0 %3420
    %3422 = vrot.lane.b32.xlu0 %v3246, 64
    %v3423 = vpop.permute.xlu0 %3422
    %3424 = vrot.lane.b32.xlu0 %v3249, 64
    %v3425 = vpop.permute.xlu0 %3424
    %3426 = vrot.lane.b32.xlu0 %v3253, 64
    %v3427 = vpop.permute.xlu0 %3426
    %3428 = vrot.lane.b32.xlu0 %v3256, 64
    %v3429 = vpop.permute.xlu0 %3428
    %3430 = vrot.lane.b32.xlu0 %v3260, 64
    %v3431 = vpop.permute.xlu0 %3430
    %3432 = vrot.lane.b32.xlu0 %v3263, 64
    %v3433 = vpop.permute.xlu0 %3432
    %3434 = vrot.lane.b32.xlu0 %v3267, 64
    %v3435 = vpop.permute.xlu0 %3434
    %3436 = vrot.lane.b32.xlu0 %v3270, 64
    %v3437 = vpop.permute.xlu0 %3436
    %3438 = vrot.lane.b32.xlu0 %v3274, 64
    %v3439 = vpop.permute.xlu0 %3438
    %3440 = vrot.lane.b32.xlu0 %v3277, 64
    %v3441 = vpop.permute.xlu0 %3440
    %3442 = vrot.lane.b32.xlu0 %v3281, 64
    %v3443 = vpop.permute.xlu0 %3442
    %3444 = vrot.lane.b32.xlu0 %v3284, 64
    %v3445 = vpop.permute.xlu0 %3444
    %3446 = vrot.lane.b32.xlu0 %v3288, 64
    %v3447 = vpop.permute.xlu0 %3446
    %3448 = vrot.lane.b32.xlu0 %v3291, 64
    %v3449 = vpop.permute.xlu0 %3448
    %3450 = vrot.lane.b32.xlu0 %v3295, 64
    %v3451 = vpop.permute.xlu0 %3450
    %3452 = vrot.lane.b32.xlu0 %v3298, 64
    %v3453 = vpop.permute.xlu0 %3452
    %3454 = vrot.lane.b32.xlu0 %v3302, 64
    %v3455 = vpop.permute.xlu0 %3454
    %3456 = vrot.lane.b32.xlu0 %v3305, 64
    %v3457 = vpop.permute.xlu0 %3456
    %3458 = vrot.lane.b32.xlu0 %v3309, 64
    %v3459 = vpop.permute.xlu0 %3458
    %3460 = vrot.lane.b32.xlu0 %v3312, 64
    %v3461 = vpop.permute.xlu0 %3460
    %3462 = vrot.lane.b32.xlu0 %v3316, 64
    %v3463 = vpop.permute.xlu0 %3462
    %3464 = vrot.lane.b32.xlu0 %v3319, 64
    %v3465 = vpop.permute.xlu0 %3464
    %3466 = vrot.lane.b32.xlu0 %v3323, 64
    %v3467 = vpop.permute.xlu0 %3466
    %3468 = vrot.lane.b32.xlu0 %v3326, 64
    %v3469 = vpop.permute.xlu0 %3468
    %3470 = vrot.lane.b32.xlu0 %v3330, 64
    %v3471 = vpop.permute.xlu0 %3470
    %3472 = vrot.lane.b32.xlu0 %v3333, 64
    %v3473 = vpop.permute.xlu0 %3472
    %3474 = vrot.lane.b32.xlu0 %v3337, 64
    %v3475 = vpop.permute.xlu0 %3474
    %3476 = vrot.lane.b32.xlu0 %v3340, 64
    %v3477 = vpop.permute.xlu0 %3476
    %3478 = vrot.lane.b32.xlu0 %v3344, 64
    %v3479 = vpop.permute.xlu0 %3478
    %3480 = vrot.lane.b32.xlu0 %v3347, 64
    %v3481 = vpop.permute.xlu0 %3480
    %3482 = vrot.lane.b32.xlu0 %v3351, 64
    %v3483 = vpop.permute.xlu0 %3482
    %3484 = vrot.lane.b32.xlu0 %v3354, 64
    %v3485 = vpop.permute.xlu0 %3484
    %3486 = vrot.lane.b32.xlu0 %v3358, 64
    %v3487 = vpop.permute.xlu0 %3486
    %3488 = vrot.lane.b32.xlu0 %v3361, 64
    %v3489 = vpop.permute.xlu0 %3488
    %vm3554 = vcmask 781824
    %3555 = vst.msk [vmem:[#allocation3] sm:$0xf] %vm3554, %v3363
    %3556 = vst.msk [vmem:[#allocation3 + $0xc] sm:$0xf] %vm3554, %v3365
    %3557 = vst.msk [vmem:[#allocation3 + $0x18] sm:$0xf] %vm3554, %v3367
    %3558 = vst.msk [vmem:[#allocation3 + $0x24] sm:$0xf] %vm3554, %v3369
    %3559 = vst.msk [vmem:[#allocation3 + $0x30] sm:$0xf] %vm3554, %v3371
    %3560 = vst.msk [vmem:[#allocation3 + $0x3c] sm:$0xf] %vm3554, %v3373
    %3561 = vst.msk [vmem:[#allocation3 + $0x48] sm:$0xf] %vm3554, %v3375
    %3562 = vst.msk [vmem:[#allocation3 + $0x54] sm:$0xf] %vm3554, %v3377
    %3563 = vst.msk [vmem:[#allocation3 + $0x60] sm:$0xf] %vm3554, %v3379
    %3564 = vst.msk [vmem:[#allocation3 + $0x6c] sm:$0xf] %vm3554, %v3381
    %3565 = vst.msk [vmem:[#allocation3 + $0x78] sm:$0xf] %vm3554, %v3383
    %3566 = vst.msk [vmem:[#allocation3 + $0x84] sm:$0xf] %vm3554, %v3385
    %3567 = vst.msk [vmem:[#allocation3 + $0x90] sm:$0xf] %vm3554, %v3387
    %3568 = vst.msk [vmem:[#allocation3 + $0x9c] sm:$0xf] %vm3554, %v3389
    %3569 = vst.msk [vmem:[#allocation3 + $0xa8] sm:$0xf] %vm3554, %v3391
    %3570 = vst.msk [vmem:[#allocation3 + $0xb4] sm:$0xf] %vm3554, %v3393
    %3571 = vst.msk [vmem:[#allocation3 + $0xc0] sm:$0xf] %vm3554, %v3395
    %3572 = vst.msk [vmem:[#allocation3 + $0xcc] sm:$0xf] %vm3554, %v3397
    %3573 = vst.msk [vmem:[#allocation3 + $0xd8] sm:$0xf] %vm3554, %v3399
    %3574 = vst.msk [vmem:[#allocation3 + $0xe4] sm:$0xf] %vm3554, %v3401
    %3575 = vst.msk [vmem:[#allocation3 + $0xf0] sm:$0xf] %vm3554, %v3403
    %3576 = vst.msk [vmem:[#allocation3 + $0xfc] sm:$0xf] %vm3554, %v3405
    %3577 = vst.msk [vmem:[#allocation3 + $0x108] sm:$0xf] %vm3554, %v3407
    %3578 = vst.msk [vmem:[#allocation3 + $0x114] sm:$0xf] %vm3554, %v3409
    %3579 = vst.msk [vmem:[#allocation3 + $0x120] sm:$0xf] %vm3554, %v3411
    %3580 = vst.msk [vmem:[#allocation3 + $0x12c] sm:$0xf] %vm3554, %v3413
    %3581 = vst.msk [vmem:[#allocation3 + $0x138] sm:$0xf] %vm3554, %v3415
    %3582 = vst.msk [vmem:[#allocation3 + $0x144] sm:$0xf] %vm3554, %v3417
    %3583 = vst.msk [vmem:[#allocation3 + $0x150] sm:$0xf] %vm3554, %v3419
    %3584 = vst.msk [vmem:[#allocation3 + $0x15c] sm:$0xf] %vm3554, %v3421
    %3585 = vst.msk [vmem:[#allocation3 + $0x168] sm:$0xf] %vm3554, %v3423
    %3586 = vst.msk [vmem:[#allocation3 + $0x174] sm:$0xf] %vm3554, %v3425
    %3587 = vst.msk [vmem:[#allocation3 + $0x180] sm:$0xf] %vm3554, %v3427
    %3588 = vst.msk [vmem:[#allocation3 + $0x18c] sm:$0xf] %vm3554, %v3429
    %3589 = vst.msk [vmem:[#allocation3 + $0x198] sm:$0xf] %vm3554, %v3431
    %3590 = vst.msk [vmem:[#allocation3 + $0x1a4] sm:$0xf] %vm3554, %v3433
    %3591 = vst.msk [vmem:[#allocation3 + $0x1b0] sm:$0xf] %vm3554, %v3435
    %3592 = vst.msk [vmem:[#allocation3 + $0x1bc] sm:$0xf] %vm3554, %v3437
    %3593 = vst.msk [vmem:[#allocation3 + $0x1c8] sm:$0xf] %vm3554, %v3439
    %3594 = vst.msk [vmem:[#allocation3 + $0x1d4] sm:$0xf] %vm3554, %v3441
    %3595 = vst.msk [vmem:[#allocation3 + $0x1e0] sm:$0xf] %vm3554, %v3443
    %3596 = vst.msk [vmem:[#allocation3 + $0x1ec] sm:$0xf] %vm3554, %v3445
    %3597 = vst.msk [vmem:[#allocation3 + $0x1f8] sm:$0xf] %vm3554, %v3447
    %3598 = vst.msk [vmem:[#allocation3 + $0x204] sm:$0xf] %vm3554, %v3449
    %3599 = vst.msk [vmem:[#allocation3 + $0x210] sm:$0xf] %vm3554, %v3451
    %3600 = vst.msk [vmem:[#allocation3 + $0x21c] sm:$0xf] %vm3554, %v3453
    %3601 = vst.msk [vmem:[#allocation3 + $0x228] sm:$0xf] %vm3554, %v3455
    %3602 = vst.msk [vmem:[#allocation3 + $0x234] sm:$0xf] %vm3554, %v3457
    %3603 = vst.msk [vmem:[#allocation3 + $0x240] sm:$0xf] %vm3554, %v3459
    %3604 = vst.msk [vmem:[#allocation3 + $0x24c] sm:$0xf] %vm3554, %v3461
    %3605 = vst.msk [vmem:[#allocation3 + $0x258] sm:$0xf] %vm3554, %v3463
    %3606 = vst.msk [vmem:[#allocation3 + $0x264] sm:$0xf] %vm3554, %v3465
    %3607 = vst.msk [vmem:[#allocation3 + $0x270] sm:$0xf] %vm3554, %v3467
    %3608 = vst.msk [vmem:[#allocation3 + $0x27c] sm:$0xf] %vm3554, %v3469
    %3609 = vst.msk [vmem:[#allocation3 + $0x288] sm:$0xf] %vm3554, %v3471
    %3610 = vst.msk [vmem:[#allocation3 + $0x294] sm:$0xf] %vm3554, %v3473
    %3611 = vst.msk [vmem:[#allocation3 + $0x2a0] sm:$0xf] %vm3554, %v3475
    %3612 = vst.msk [vmem:[#allocation3 + $0x2ac] sm:$0xf] %vm3554, %v3477
    %3613 = vst.msk [vmem:[#allocation3 + $0x2b8] sm:$0xf] %vm3554, %v3479
    %3614 = vst.msk [vmem:[#allocation3 + $0x2c4] sm:$0xf] %vm3554, %v3481
    %3615 = vst.msk [vmem:[#allocation3 + $0x2d0] sm:$0xf] %vm3554, %v3483
    %3616 = vst.msk [vmem:[#allocation3 + $0x2dc] sm:$0xf] %vm3554, %v3485
    %3617 = vst.msk [vmem:[#allocation3 + $0x2e8] sm:$0xf] %vm3554, %v3487
    %3618 = vst.msk [vmem:[#allocation3 + $0x2f4] sm:$0xf] %vm3554, %v3489
    %v3619 = vld [vmem:[%s865] sm:$0xf]
    %v3620 = vld [vmem:[%s865 + $0x4] sm:$0xf]
    %v3621 = vld [vmem:[%s865 + $0xc] sm:$0xf]
    %v3622 = vld [vmem:[%s865 + $0x10] sm:$0xf]
    %v3623 = vld [vmem:[%s865 + $0x18] sm:$0xf]
    %v3624 = vld [vmem:[%s865 + $0x1c] sm:$0xf]
    %v3625 = vld [vmem:[%s865 + $0x24] sm:$0xf]
    %v3626 = vld [vmem:[%s865 + $0x28] sm:$0xf]
    %v3627 = vld [vmem:[%s865 + $0x30] sm:$0xf]
    %v3628 = vld [vmem:[%s865 + $0x34] sm:$0xf]
    %v3629 = vld [vmem:[%s865 + $0x3c] sm:$0xf]
    %v3630 = vld [vmem:[%s865 + $0x40] sm:$0xf]
    %v3631 = vld [vmem:[%s865 + $0x48] sm:$0xf]
    %v3632 = vld [vmem:[%s865 + $0x4c] sm:$0xf]
    %v3633 = vld [vmem:[%s865 + $0x54] sm:$0xf]
    %v3634 = vld [vmem:[%s865 + $0x58] sm:$0xf]
    %v3635 = vld [vmem:[%s865 + $0x60] sm:$0xf]
    %v3636 = vld [vmem:[%s865 + $0x64] sm:$0xf]
    %v3637 = vld [vmem:[%s865 + $0x6c] sm:$0xf]
    %v3638 = vld [vmem:[%s865 + $0x70] sm:$0xf]
    %v3639 = vld [vmem:[%s865 + $0x78] sm:$0xf]
    %v3640 = vld [vmem:[%s865 + $0x7c] sm:$0xf]
    %v3641 = vld [vmem:[%s865 + $0x84] sm:$0xf]
    %v3642 = vld [vmem:[%s865 + $0x88] sm:$0xf]
    %v3643 = vld [vmem:[%s865 + $0x90] sm:$0xf]
    %v3644 = vld [vmem:[%s865 + $0x94] sm:$0xf]
    %v3645 = vld [vmem:[%s865 + $0x9c] sm:$0xf]
    %v3646 = vld [vmem:[%s865 + $0xa0] sm:$0xf]
    %v3647 = vld [vmem:[%s865 + $0xa8] sm:$0xf]
    %v3648 = vld [vmem:[%s865 + $0xac] sm:$0xf]
    %v3649 = vld [vmem:[%s865 + $0xb4] sm:$0xf]
    %v3650 = vld [vmem:[%s865 + $0xb8] sm:$0xf]
    %v3651 = vld [vmem:[%s865 + $0xd8] sm:$0xf]
    %v3652 = vld [vmem:[%s865 + $0xdc] sm:$0xf]
    %v3653 = vld [vmem:[%s865 + $0xe4] sm:$0xf]
    %v3654 = vld [vmem:[%s865 + $0xe8] sm:$0xf]
    %v3655 = vld [vmem:[%s865 + $0xf0] sm:$0xf]
    %v3656 = vld [vmem:[%s865 + $0xf4] sm:$0xf]
    %v3657 = vld [vmem:[%s865 + $0xfc] sm:$0xf]
    %v3658 = vld [vmem:[%s865 + $0x100] sm:$0xf]
    %v3659 = vld [vmem:[%s865 + $0x108] sm:$0xf]
    %v3660 = vld [vmem:[%s865 + $0x10c] sm:$0xf]
    %v3661 = vld [vmem:[%s865 + $0x114] sm:$0xf]
    %v3662 = vld [vmem:[%s865 + $0x118] sm:$0xf]
    %v3663 = vld [vmem:[%s865 + $0x120] sm:$0xf]
    %v3664 = vld [vmem:[%s865 + $0x124] sm:$0xf]
    %v3665 = vld [vmem:[%s865 + $0x12c] sm:$0xf]
    %v3666 = vld [vmem:[%s865 + $0x130] sm:$0xf]
    %v3667 = vld [vmem:[%s865 + $0x138] sm:$0xf]
    %v3668 = vld [vmem:[%s865 + $0x13c] sm:$0xf]
    %v3669 = vld [vmem:[%s865 + $0x144] sm:$0xf]
    %v3670 = vld [vmem:[%s865 + $0x148] sm:$0xf]
    %v3671 = vld [vmem:[%s865 + $0x150] sm:$0xf]
    %v3672 = vld [vmem:[%s865 + $0x154] sm:$0xf]
    %v3673 = vld [vmem:[%s865 + $0x15c] sm:$0xf]
    %v3674 = vld [vmem:[%s865 + $0x160] sm:$0xf]
    %v3675 = vld [vmem:[%s865 + $0x168] sm:$0xf]
    %v3676 = vld [vmem:[%s865 + $0x16c] sm:$0xf]
    %v3677 = vld [vmem:[%s865 + $0x174] sm:$0xf]
    %v3678 = vld [vmem:[%s865 + $0x178] sm:$0xf]
    %v3679 = vld [vmem:[%s865 + $0x180] sm:$0xf]
    %v3680 = vld [vmem:[%s865 + $0x184] sm:$0xf]
    %v3681 = vld [vmem:[%s865 + $0x18c] sm:$0xf]
    %v3682 = vld [vmem:[%s865 + $0x190] sm:$0xf]
    %3747 = vrot.lane.b32.xlu0 %v3619, 96
    %v3748 = vpop.permute.xlu0 %3747
    %3749 = vrot.lane.b32.xlu0 %v3620, 96
    %v3750 = vpop.permute.xlu0 %3749
    %3751 = vrot.lane.b32.xlu0 %v3621, 96
    %v3752 = vpop.permute.xlu0 %3751
    %3753 = vrot.lane.b32.xlu0 %v3622, 96
    %v3754 = vpop.permute.xlu0 %3753
    %3755 = vrot.lane.b32.xlu0 %v3623, 96
    %v3756 = vpop.permute.xlu0 %3755
    %3757 = vrot.lane.b32.xlu0 %v3624, 96
    %v3758 = vpop.permute.xlu0 %3757
    %3759 = vrot.lane.b32.xlu0 %v3625, 96
    %v3760 = vpop.permute.xlu0 %3759
    %3761 = vrot.lane.b32.xlu0 %v3626, 96
    %v3762 = vpop.permute.xlu0 %3761
    %3763 = vrot.lane.b32.xlu0 %v3627, 96
    %v3764 = vpop.permute.xlu0 %3763
    %3765 = vrot.lane.b32.xlu0 %v3628, 96
    %v3766 = vpop.permute.xlu0 %3765
    %3767 = vrot.lane.b32.xlu0 %v3629, 96
    %v3768 = vpop.permute.xlu0 %3767
    %3769 = vrot.lane.b32.xlu0 %v3630, 96
    %v3770 = vpop.permute.xlu0 %3769
    %3771 = vrot.lane.b32.xlu0 %v3631, 96
    %v3772 = vpop.permute.xlu0 %3771
    %3773 = vrot.lane.b32.xlu0 %v3632, 96
    %v3774 = vpop.permute.xlu0 %3773
    %3775 = vrot.lane.b32.xlu0 %v3633, 96
    %v3776 = vpop.permute.xlu0 %3775
    %3777 = vrot.lane.b32.xlu0 %v3634, 96
    %v3778 = vpop.permute.xlu0 %3777
    %3779 = vrot.lane.b32.xlu0 %v3635, 96
    %v3780 = vpop.permute.xlu0 %3779
    %3781 = vrot.lane.b32.xlu0 %v3636, 96
    %v3782 = vpop.permute.xlu0 %3781
    %3783 = vrot.lane.b32.xlu0 %v3637, 96
    %v3784 = vpop.permute.xlu0 %3783
    %3785 = vrot.lane.b32.xlu0 %v3638, 96
    %v3786 = vpop.permute.xlu0 %3785
    %3787 = vrot.lane.b32.xlu0 %v3639, 96
    %v3788 = vpop.permute.xlu0 %3787
    %3789 = vrot.lane.b32.xlu0 %v3640, 96
    %v3790 = vpop.permute.xlu0 %3789
    %3791 = vrot.lane.b32.xlu0 %v3641, 96
    %v3792 = vpop.permute.xlu0 %3791
    %3793 = vrot.lane.b32.xlu0 %v3642, 96
    %v3794 = vpop.permute.xlu0 %3793
    %3795 = vrot.lane.b32.xlu0 %v3643, 96
    %v3796 = vpop.permute.xlu0 %3795
    %3797 = vrot.lane.b32.xlu0 %v3644, 96
    %v3798 = vpop.permute.xlu0 %3797
    %3799 = vrot.lane.b32.xlu0 %v3645, 96
    %v3800 = vpop.permute.xlu0 %3799
    %3801 = vrot.lane.b32.xlu0 %v3646, 96
    %v3802 = vpop.permute.xlu0 %3801
    %3803 = vrot.lane.b32.xlu0 %v3647, 96
    %v3804 = vpop.permute.xlu0 %3803
    %3805 = vrot.lane.b32.xlu0 %v3648, 96
    %v3806 = vpop.permute.xlu0 %3805
    %3807 = vrot.lane.b32.xlu0 %v3649, 96
    %v3808 = vpop.permute.xlu0 %3807
    %3809 = vrot.lane.b32.xlu0 %v3650, 96
    %v3810 = vpop.permute.xlu0 %3809
    %3811 = vrot.lane.b32.xlu0 %v3651, 96
    %v3812 = vpop.permute.xlu0 %3811
    %3813 = vrot.lane.b32.xlu0 %v3652, 96
    %v3814 = vpop.permute.xlu0 %3813
    %3815 = vrot.lane.b32.xlu0 %v3653, 96
    %v3816 = vpop.permute.xlu0 %3815
    %3817 = vrot.lane.b32.xlu0 %v3654, 96
    %v3818 = vpop.permute.xlu0 %3817
    %3819 = vrot.lane.b32.xlu0 %v3655, 96
    %v3820 = vpop.permute.xlu0 %3819
    %3821 = vrot.lane.b32.xlu0 %v3656, 96
    %v3822 = vpop.permute.xlu0 %3821
    %3823 = vrot.lane.b32.xlu0 %v3657, 96
    %v3824 = vpop.permute.xlu0 %3823
    %3825 = vrot.lane.b32.xlu0 %v3658, 96
    %v3826 = vpop.permute.xlu0 %3825
    %3827 = vrot.lane.b32.xlu0 %v3659, 96
    %v3828 = vpop.permute.xlu0 %3827
    %3829 = vrot.lane.b32.xlu0 %v3660, 96
    %v3830 = vpop.permute.xlu0 %3829
    %3831 = vrot.lane.b32.xlu0 %v3661, 96
    %v3832 = vpop.permute.xlu0 %3831
    %3833 = vrot.lane.b32.xlu0 %v3662, 96
    %v3834 = vpop.permute.xlu0 %3833
    %3835 = vrot.lane.b32.xlu0 %v3663, 96
    %v3836 = vpop.permute.xlu0 %3835
    %3837 = vrot.lane.b32.xlu0 %v3664, 96
    %v3838 = vpop.permute.xlu0 %3837
    %3839 = vrot.lane.b32.xlu0 %v3665, 96
    %v3840 = vpop.permute.xlu0 %3839
    %3841 = vrot.lane.b32.xlu0 %v3666, 96
    %v3842 = vpop.permute.xlu0 %3841
    %3843 = vrot.lane.b32.xlu0 %v3667, 96
    %v3844 = vpop.permute.xlu0 %3843
    %3845 = vrot.lane.b32.xlu0 %v3668, 96
    %v3846 = vpop.permute.xlu0 %3845
    %3847 = vrot.lane.b32.xlu0 %v3669, 96
    %v3848 = vpop.permute.xlu0 %3847
    %3849 = vrot.lane.b32.xlu0 %v3670, 96
    %v3850 = vpop.permute.xlu0 %3849
    %3851 = vrot.lane.b32.xlu0 %v3671, 96
    %v3852 = vpop.permute.xlu0 %3851
    %3853 = vrot.lane.b32.xlu0 %v3672, 96
    %v3854 = vpop.permute.xlu0 %3853
    %3855 = vrot.lane.b32.xlu0 %v3673, 96
    %v3856 = vpop.permute.xlu0 %3855
    %3857 = vrot.lane.b32.xlu0 %v3674, 96
    %v3858 = vpop.permute.xlu0 %3857
    %3859 = vrot.lane.b32.xlu0 %v3675, 96
    %v3860 = vpop.permute.xlu0 %3859
    %3861 = vrot.lane.b32.xlu0 %v3676, 96
    %v3862 = vpop.permute.xlu0 %3861
    %3863 = vrot.lane.b32.xlu0 %v3677, 96
    %v3864 = vpop.permute.xlu0 %3863
    %3865 = vrot.lane.b32.xlu0 %v3678, 96
    %v3866 = vpop.permute.xlu0 %3865
    %3867 = vrot.lane.b32.xlu0 %v3679, 96
    %v3868 = vpop.permute.xlu0 %3867
    %3869 = vrot.lane.b32.xlu0 %v3680, 96
    %v3870 = vpop.permute.xlu0 %3869
    %3871 = vrot.lane.b32.xlu0 %v3681, 96
    %v3872 = vpop.permute.xlu0 %3871
    %3873 = vrot.lane.b32.xlu0 %v3682, 96
    %v3874 = vpop.permute.xlu0 %3873
    %vm3939 = vcmask 1044224
    %3940 = vst.msk [vmem:[#allocation3] sm:$0xf] %vm3939, %v3748
    %3941 = vst.msk [vmem:[#allocation3 + $0xc] sm:$0xf] %vm3939, %v3750
    %3942 = vst.msk [vmem:[#allocation3 + $0x18] sm:$0xf] %vm3939, %v3752
    %3943 = vst.msk [vmem:[#allocation3 + $0x24] sm:$0xf] %vm3939, %v3754
    %3944 = vst.msk [vmem:[#allocation3 + $0x30] sm:$0xf] %vm3939, %v3756
    %3945 = vst.msk [vmem:[#allocation3 + $0x3c] sm:$0xf] %vm3939, %v3758
    %3946 = vst.msk [vmem:[#allocation3 + $0x48] sm:$0xf] %vm3939, %v3760
    %3947 = vst.msk [vmem:[#allocation3 + $0x54] sm:$0xf] %vm3939, %v3762
    %3948 = vst.msk [vmem:[#allocation3 + $0x60] sm:$0xf] %vm3939, %v3764
    %3949 = vst.msk [vmem:[#allocation3 + $0x6c] sm:$0xf] %vm3939, %v3766
    %3950 = vst.msk [vmem:[#allocation3 + $0x78] sm:$0xf] %vm3939, %v3768
    %3951 = vst.msk [vmem:[#allocation3 + $0x84] sm:$0xf] %vm3939, %v3770
    %3952 = vst.msk [vmem:[#allocation3 + $0x90] sm:$0xf] %vm3939, %v3772
    %3953 = vst.msk [vmem:[#allocation3 + $0x9c] sm:$0xf] %vm3939, %v3774
    %3954 = vst.msk [vmem:[#allocation3 + $0xa8] sm:$0xf] %vm3939, %v3776
    %3955 = vst.msk [vmem:[#allocation3 + $0xb4] sm:$0xf] %vm3939, %v3778
    %3956 = vst.msk [vmem:[#allocation3 + $0xc0] sm:$0xf] %vm3939, %v3780
    %3957 = vst.msk [vmem:[#allocation3 + $0xcc] sm:$0xf] %vm3939, %v3782
    %3958 = vst.msk [vmem:[#allocation3 + $0xd8] sm:$0xf] %vm3939, %v3784
    %3959 = vst.msk [vmem:[#allocation3 + $0xe4] sm:$0xf] %vm3939, %v3786
    %3960 = vst.msk [vmem:[#allocation3 + $0xf0] sm:$0xf] %vm3939, %v3788
    %3961 = vst.msk [vmem:[#allocation3 + $0xfc] sm:$0xf] %vm3939, %v3790
    %3962 = vst.msk [vmem:[#allocation3 + $0x108] sm:$0xf] %vm3939, %v3792
    %3963 = vst.msk [vmem:[#allocation3 + $0x114] sm:$0xf] %vm3939, %v3794
    %3964 = vst.msk [vmem:[#allocation3 + $0x120] sm:$0xf] %vm3939, %v3796
    %3965 = vst.msk [vmem:[#allocation3 + $0x12c] sm:$0xf] %vm3939, %v3798
    %3966 = vst.msk [vmem:[#allocation3 + $0x138] sm:$0xf] %vm3939, %v3800
    %3967 = vst.msk [vmem:[#allocation3 + $0x144] sm:$0xf] %vm3939, %v3802
    %3968 = vst.msk [vmem:[#allocation3 + $0x150] sm:$0xf] %vm3939, %v3804
    %3969 = vst.msk [vmem:[#allocation3 + $0x15c] sm:$0xf] %vm3939, %v3806
    %3970 = vst.msk [vmem:[#allocation3 + $0x168] sm:$0xf] %vm3939, %v3808
    %3971 = vst.msk [vmem:[#allocation3 + $0x174] sm:$0xf] %vm3939, %v3810
    %3972 = vst.msk [vmem:[#allocation3 + $0x180] sm:$0xf] %vm3939, %v3812
    %3973 = vst.msk [vmem:[#allocation3 + $0x18c] sm:$0xf] %vm3939, %v3814
    %3974 = vst.msk [vmem:[#allocation3 + $0x198] sm:$0xf] %vm3939, %v3816
    %3975 = vst.msk [vmem:[#allocation3 + $0x1a4] sm:$0xf] %vm3939, %v3818
    %3976 = vst.msk [vmem:[#allocation3 + $0x1b0] sm:$0xf] %vm3939, %v3820
    %3977 = vst.msk [vmem:[#allocation3 + $0x1bc] sm:$0xf] %vm3939, %v3822
    %3978 = vst.msk [vmem:[#allocation3 + $0x1c8] sm:$0xf] %vm3939, %v3824
    %3979 = vst.msk [vmem:[#allocation3 + $0x1d4] sm:$0xf] %vm3939, %v3826
    %3980 = vst.msk [vmem:[#allocation3 + $0x1e0] sm:$0xf] %vm3939, %v3828
    %3981 = vst.msk [vmem:[#allocation3 + $0x1ec] sm:$0xf] %vm3939, %v3830
    %3982 = vst.msk [vmem:[#allocation3 + $0x1f8] sm:$0xf] %vm3939, %v3832
    %3983 = vst.msk [vmem:[#allocation3 + $0x204] sm:$0xf] %vm3939, %v3834
    %3984 = vst.msk [vmem:[#allocation3 + $0x210] sm:$0xf] %vm3939, %v3836
    %3985 = vst.msk [vmem:[#allocation3 + $0x21c] sm:$0xf] %vm3939, %v3838
    %3986 = vst.msk [vmem:[#allocation3 + $0x228] sm:$0xf] %vm3939, %v3840
    %3987 = vst.msk [vmem:[#allocation3 + $0x234] sm:$0xf] %vm3939, %v3842
    %3988 = vst.msk [vmem:[#allocation3 + $0x240] sm:$0xf] %vm3939, %v3844
    %3989 = vst.msk [vmem:[#allocation3 + $0x24c] sm:$0xf] %vm3939, %v3846
    %3990 = vst.msk [vmem:[#allocation3 + $0x258] sm:$0xf] %vm3939, %v3848
    %3991 = vst.msk [vmem:[#allocation3 + $0x264] sm:$0xf] %vm3939, %v3850
    %3992 = vst.msk [vmem:[#allocation3 + $0x270] sm:$0xf] %vm3939, %v3852
    %3993 = vst.msk [vmem:[#allocation3 + $0x27c] sm:$0xf] %vm3939, %v3854
    %3994 = vst.msk [vmem:[#allocation3 + $0x288] sm:$0xf] %vm3939, %v3856
    %3995 = vst.msk [vmem:[#allocation3 + $0x294] sm:$0xf] %vm3939, %v3858
    %3996 = vst.msk [vmem:[#allocation3 + $0x2a0] sm:$0xf] %vm3939, %v3860
    %3997 = vst.msk [vmem:[#allocation3 + $0x2ac] sm:$0xf] %vm3939, %v3862
    %3998 = vst.msk [vmem:[#allocation3 + $0x2b8] sm:$0xf] %vm3939, %v3864
    %3999 = vst.msk [vmem:[#allocation3 + $0x2c4] sm:$0xf] %vm3939, %v3866
    %4000 = vst.msk [vmem:[#allocation3 + $0x2d0] sm:$0xf] %vm3939, %v3868
    %4001 = vst.msk [vmem:[#allocation3 + $0x2dc] sm:$0xf] %vm3939, %v3870
    %4002 = vst.msk [vmem:[#allocation3 + $0x2e8] sm:$0xf] %vm3939, %v3872
    %4003 = vst.msk [vmem:[#allocation3 + $0x2f4] sm:$0xf] %vm3939, %v3874
    %v4004 = vld [vmem:[%s865] sm:$0xf]
    %v4005 = vld [vmem:[%s865 + $0x4] sm:$0xf]
    %v4006 = vld [vmem:[%s865 + $0x8] sm:$0x1]
    %v4007 = vld [vmem:[%s865 + $0xc] sm:$0xf]
    %v4008 = vld [vmem:[%s865 + $0x10] sm:$0xf]
    %v4009 = vld [vmem:[%s865 + $0x14] sm:$0x1]
    %v4010 = vld [vmem:[%s865 + $0x18] sm:$0xf]
    %v4011 = vld [vmem:[%s865 + $0x1c] sm:$0xf]
    %v4012 = vld [vmem:[%s865 + $0x20] sm:$0x1]
    %v4013 = vld [vmem:[%s865 + $0x24] sm:$0xf]
    %v4014 = vld [vmem:[%s865 + $0x28] sm:$0xf]
    %v4015 = vld [vmem:[%s865 + $0x2c] sm:$0x1]
    %v4016 = vld [vmem:[%s865 + $0x30] sm:$0xf]
    %v4017 = vld [vmem:[%s865 + $0x34] sm:$0xf]
    %v4018 = vld [vmem:[%s865 + $0x38] sm:$0x1]
    %v4019 = vld [vmem:[%s865 + $0x3c] sm:$0xf]
    %v4020 = vld [vmem:[%s865 + $0x40] sm:$0xf]
    %v4021 = vld [vmem:[%s865 + $0x44] sm:$0x1]
    %v4022 = vld [vmem:[%s865 + $0x48] sm:$0xf]
    %v4023 = vld [vmem:[%s865 + $0x4c] sm:$0xf]
    %v4024 = vld [vmem:[%s865 + $0x50] sm:$0x1]
    %v4025 = vld [vmem:[%s865 + $0x54] sm:$0xf]
    %v4026 = vld [vmem:[%s865 + $0x58] sm:$0xf]
    %v4027 = vld [vmem:[%s865 + $0x5c] sm:$0x1]
    %v4028 = vld [vmem:[%s865 + $0x60] sm:$0xf]
    %v4029 = vld [vmem:[%s865 + $0x64] sm:$0xf]
    %v4030 = vld [vmem:[%s865 + $0x68] sm:$0x1]
    %v4031 = vld [vmem:[%s865 + $0x6c] sm:$0xf]
    %v4032 = vld [vmem:[%s865 + $0x70] sm:$0xf]
    %v4033 = vld [vmem:[%s865 + $0x74] sm:$0x1]
    %v4034 = vld [vmem:[%s865 + $0x78] sm:$0xf]
    %v4035 = vld [vmem:[%s865 + $0x7c] sm:$0xf]
    %v4036 = vld [vmem:[%s865 + $0x80] sm:$0x1]
    %v4037 = vld [vmem:[%s865 + $0x84] sm:$0xf]
    %v4038 = vld [vmem:[%s865 + $0x88] sm:$0xf]
    %v4039 = vld [vmem:[%s865 + $0x8c] sm:$0x1]
    %v4040 = vld [vmem:[%s865 + $0x90] sm:$0xf]
    %v4041 = vld [vmem:[%s865 + $0x94] sm:$0xf]
    %v4042 = vld [vmem:[%s865 + $0x98] sm:$0x1]
    %v4043 = vld [vmem:[%s865 + $0x9c] sm:$0xf]
    %v4044 = vld [vmem:[%s865 + $0xa0] sm:$0xf]
    %v4045 = vld [vmem:[%s865 + $0xa4] sm:$0x1]
    %v4046 = vld [vmem:[%s865 + $0xa8] sm:$0xf]
    %v4047 = vld [vmem:[%s865 + $0xac] sm:$0xf]
    %v4048 = vld [vmem:[%s865 + $0xb0] sm:$0x1]
    %v4049 = vld [vmem:[%s865 + $0xb4] sm:$0xf]
    %v4050 = vld [vmem:[%s865 + $0xb8] sm:$0xf]
    %v4051 = vld [vmem:[%s865 + $0xbc] sm:$0x1]
    %v4052 = vld [vmem:[%s865 + $0xd8] sm:$0xf]
    %v4053 = vld [vmem:[%s865 + $0xdc] sm:$0xf]
    %v4054 = vld [vmem:[%s865 + $0xe0] sm:$0x1]
    %v4055 = vld [vmem:[%s865 + $0xe4] sm:$0xf]
    %v4056 = vld [vmem:[%s865 + $0xe8] sm:$0xf]
    %v4057 = vld [vmem:[%s865 + $0xec] sm:$0x1]
    %v4058 = vld [vmem:[%s865 + $0xf0] sm:$0xf]
    %v4059 = vld [vmem:[%s865 + $0xf4] sm:$0xf]
    %v4060 = vld [vmem:[%s865 + $0xf8] sm:$0x1]
    %v4061 = vld [vmem:[%s865 + $0xfc] sm:$0xf]
    %v4062 = vld [vmem:[%s865 + $0x100] sm:$0xf]
    %v4063 = vld [vmem:[%s865 + $0x104] sm:$0x1]
    %v4064 = vld [vmem:[%s865 + $0x108] sm:$0xf]
    %v4065 = vld [vmem:[%s865 + $0x10c] sm:$0xf]
    %v4066 = vld [vmem:[%s865 + $0x110] sm:$0x1]
    %v4067 = vld [vmem:[%s865 + $0x114] sm:$0xf]
    %v4068 = vld [vmem:[%s865 + $0x118] sm:$0xf]
    %v4069 = vld [vmem:[%s865 + $0x11c] sm:$0x1]
    %v4070 = vld [vmem:[%s865 + $0x120] sm:$0xf]
    %v4071 = vld [vmem:[%s865 + $0x124] sm:$0xf]
    %v4072 = vld [vmem:[%s865 + $0x128] sm:$0x1]
    %v4073 = vld [vmem:[%s865 + $0x12c] sm:$0xf]
    %v4074 = vld [vmem:[%s865 + $0x130] sm:$0xf]
    %v4075 = vld [vmem:[%s865 + $0x134] sm:$0x1]
    %v4076 = vld [vmem:[%s865 + $0x138] sm:$0xf]
    %v4077 = vld [vmem:[%s865 + $0x13c] sm:$0xf]
    %v4078 = vld [vmem:[%s865 + $0x140] sm:$0x1]
    %v4079 = vld [vmem:[%s865 + $0x144] sm:$0xf]
    %v4080 = vld [vmem:[%s865 + $0x148] sm:$0xf]
    %v4081 = vld [vmem:[%s865 + $0x14c] sm:$0x1]
    %v4082 = vld [vmem:[%s865 + $0x150] sm:$0xf]
    %v4083 = vld [vmem:[%s865 + $0x154] sm:$0xf]
    %v4084 = vld [vmem:[%s865 + $0x158] sm:$0x1]
    %v4085 = vld [vmem:[%s865 + $0x15c] sm:$0xf]
    %v4086 = vld [vmem:[%s865 + $0x160] sm:$0xf]
    %v4087 = vld [vmem:[%s865 + $0x164] sm:$0x1]
    %v4088 = vld [vmem:[%s865 + $0x168] sm:$0xf]
    %v4089 = vld [vmem:[%s865 + $0x16c] sm:$0xf]
    %v4090 = vld [vmem:[%s865 + $0x170] sm:$0x1]
    %v4091 = vld [vmem:[%s865 + $0x174] sm:$0xf]
    %v4092 = vld [vmem:[%s865 + $0x178] sm:$0xf]
    %v4093 = vld [vmem:[%s865 + $0x17c] sm:$0x1]
    %v4094 = vld [vmem:[%s865 + $0x180] sm:$0xf]
    %v4095 = vld [vmem:[%s865 + $0x184] sm:$0xf]
    %v4096 = vld [vmem:[%s865 + $0x188] sm:$0x1]
    %v4097 = vld [vmem:[%s865 + $0x18c] sm:$0xf]
    %v4098 = vld [vmem:[%s865 + $0x190] sm:$0xf]
    %v4099 = vld [vmem:[%s865 + $0x194] sm:$0x1]
    %v4101 = vshrl.u32 %v4004, 16
    %v4103 = vrot.slane %v4101, 4
    %v4104 = vshll.u32 %v4004, 16
    %v4106 = vrot.slane %v4104, 5
    %v4107 = vor.u32 %v4103, %v4106
    %v4108 = vrot.slane %v4107, 4
    %v4110 = vshll.u32 %v4005, 16
    %v4112 = vrot.slane %v4110, 5
    %v4113 = vsel %vm1917, %v4108, %v4112
    %v4114 = vshrl.u32 %v4005, 16
    %v4116 = vrot.slane %v4114, 4
    %v4117 = vor.u32 %v4116, %v4112
    %v4118 = vrot.slane %v4117, 4
    %v4120 = vshll.u32 %v4006, 16
    %v4122 = vrot.slane %v4120, 5
    %v4123 = vsel %vm1917, %v4118, %v4122
    %v4125 = vshrl.u32 %v4007, 16
    %v4127 = vrot.slane %v4125, 4
    %v4128 = vshll.u32 %v4007, 16
    %v4130 = vrot.slane %v4128, 5
    %v4131 = vor.u32 %v4127, %v4130
    %v4132 = vrot.slane %v4131, 4
    %v4134 = vshll.u32 %v4008, 16
    %v4136 = vrot.slane %v4134, 5
    %v4137 = vsel %vm1917, %v4132, %v4136
    %v4138 = vshrl.u32 %v4008, 16
    %v4140 = vrot.slane %v4138, 4
    %v4141 = vor.u32 %v4140, %v4136
    %v4142 = vrot.slane %v4141, 4
    %v4144 = vshll.u32 %v4009, 16
    %v4146 = vrot.slane %v4144, 5
    %v4147 = vsel %vm1917, %v4142, %v4146
    %v4149 = vshrl.u32 %v4010, 16
    %v4151 = vrot.slane %v4149, 4
    %v4152 = vshll.u32 %v4010, 16
    %v4154 = vrot.slane %v4152, 5
    %v4155 = vor.u32 %v4151, %v4154
    %v4156 = vrot.slane %v4155, 4
    %v4158 = vshll.u32 %v4011, 16
    %v4160 = vrot.slane %v4158, 5
    %v4161 = vsel %vm1917, %v4156, %v4160
    %v4162 = vshrl.u32 %v4011, 16
    %v4164 = vrot.slane %v4162, 4
    %v4165 = vor.u32 %v4164, %v4160
    %v4166 = vrot.slane %v4165, 4
    %v4168 = vshll.u32 %v4012, 16
    %v4170 = vrot.slane %v4168, 5
    %v4171 = vsel %vm1917, %v4166, %v4170
    %v4173 = vshrl.u32 %v4013, 16
    %v4175 = vrot.slane %v4173, 4
    %v4176 = vshll.u32 %v4013, 16
    %v4178 = vrot.slane %v4176, 5
    %v4179 = vor.u32 %v4175, %v4178
    %v4180 = vrot.slane %v4179, 4
    %v4182 = vshll.u32 %v4014, 16
    %v4184 = vrot.slane %v4182, 5
    %v4185 = vsel %vm1917, %v4180, %v4184
    %v4186 = vshrl.u32 %v4014, 16
    %v4188 = vrot.slane %v4186, 4
    %v4189 = vor.u32 %v4188, %v4184
    %v4190 = vrot.slane %v4189, 4
    %v4192 = vshll.u32 %v4015, 16
    %v4194 = vrot.slane %v4192, 5
    %v4195 = vsel %vm1917, %v4190, %v4194
    %v4197 = vshrl.u32 %v4016, 16
    %v4199 = vrot.slane %v4197, 4
    %v4200 = vshll.u32 %v4016, 16
    %v4202 = vrot.slane %v4200, 5
    %v4203 = vor.u32 %v4199, %v4202
    %v4204 = vrot.slane %v4203, 4
    %v4206 = vshll.u32 %v4017, 16
    %v4208 = vrot.slane %v4206, 5
    %v4209 = vsel %vm1917, %v4204, %v4208
    %v4210 = vshrl.u32 %v4017, 16
    %v4212 = vrot.slane %v4210, 4
    %v4213 = vor.u32 %v4212, %v4208
    %v4214 = vrot.slane %v4213, 4
    %v4216 = vshll.u32 %v4018, 16
    %v4218 = vrot.slane %v4216, 5
    %v4219 = vsel %vm1917, %v4214, %v4218
    %v4221 = vshrl.u32 %v4019, 16
    %v4223 = vrot.slane %v4221, 4
    %v4224 = vshll.u32 %v4019, 16
    %v4226 = vrot.slane %v4224, 5
    %v4227 = vor.u32 %v4223, %v4226
    %v4228 = vrot.slane %v4227, 4
    %v4230 = vshll.u32 %v4020, 16
    %v4232 = vrot.slane %v4230, 5
    %v4233 = vsel %vm1917, %v4228, %v4232
    %v4234 = vshrl.u32 %v4020, 16
    %v4236 = vrot.slane %v4234, 4
    %v4237 = vor.u32 %v4236, %v4232
    %v4238 = vrot.slane %v4237, 4
    %v4240 = vshll.u32 %v4021, 16
    %v4242 = vrot.slane %v4240, 5
    %v4243 = vsel %vm1917, %v4238, %v4242
    %v4245 = vshrl.u32 %v4022, 16
    %v4247 = vrot.slane %v4245, 4
    %v4248 = vshll.u32 %v4022, 16
    %v4250 = vrot.slane %v4248, 5
    %v4251 = vor.u32 %v4247, %v4250
    %v4252 = vrot.slane %v4251, 4
    %v4254 = vshll.u32 %v4023, 16
    %v4256 = vrot.slane %v4254, 5
    %v4257 = vsel %vm1917, %v4252, %v4256
    %v4258 = vshrl.u32 %v4023, 16
    %v4260 = vrot.slane %v4258, 4
    %v4261 = vor.u32 %v4260, %v4256
    %v4262 = vrot.slane %v4261, 4
    %v4264 = vshll.u32 %v4024, 16
    %v4266 = vrot.slane %v4264, 5
    %v4267 = vsel %vm1917, %v4262, %v4266
    %v4269 = vshrl.u32 %v4025, 16
    %v4271 = vrot.slane %v4269, 4
    %v4272 = vshll.u32 %v4025, 16
    %v4274 = vrot.slane %v4272, 5
    %v4275 = vor.u32 %v4271, %v4274
    %v4276 = vrot.slane %v4275, 4
    %v4278 = vshll.u32 %v4026, 16
    %v4280 = vrot.slane %v4278, 5
    %v4281 = vsel %vm1917, %v4276, %v4280
    %v4282 = vshrl.u32 %v4026, 16
    %v4284 = vrot.slane %v4282, 4
    %v4285 = vor.u32 %v4284, %v4280
    %v4286 = vrot.slane %v4285, 4
    %v4288 = vshll.u32 %v4027, 16
    %v4290 = vrot.slane %v4288, 5
    %v4291 = vsel %vm1917, %v4286, %v4290
    %v4293 = vshrl.u32 %v4028, 16
    %v4295 = vrot.slane %v4293, 4
    %v4296 = vshll.u32 %v4028, 16
    %v4298 = vrot.slane %v4296, 5
    %v4299 = vor.u32 %v4295, %v4298
    %v4300 = vrot.slane %v4299, 4
    %v4302 = vshll.u32 %v4029, 16
    %v4304 = vrot.slane %v4302, 5
    %v4305 = vsel %vm1917, %v4300, %v4304
    %v4306 = vshrl.u32 %v4029, 16
    %v4308 = vrot.slane %v4306, 4
    %v4309 = vor.u32 %v4308, %v4304
    %v4310 = vrot.slane %v4309, 4
    %v4312 = vshll.u32 %v4030, 16
    %v4314 = vrot.slane %v4312, 5
    %v4315 = vsel %vm1917, %v4310, %v4314
    %v4317 = vshrl.u32 %v4031, 16
    %v4319 = vrot.slane %v4317, 4
    %v4320 = vshll.u32 %v4031, 16
    %v4322 = vrot.slane %v4320, 5
    %v4323 = vor.u32 %v4319, %v4322
    %v4324 = vrot.slane %v4323, 4
    %v4326 = vshll.u32 %v4032, 16
    %v4328 = vrot.slane %v4326, 5
    %v4329 = vsel %vm1917, %v4324, %v4328
    %v4330 = vshrl.u32 %v4032, 16
    %v4332 = vrot.slane %v4330, 4
    %v4333 = vor.u32 %v4332, %v4328
    %v4334 = vrot.slane %v4333, 4
    %v4336 = vshll.u32 %v4033, 16
    %v4338 = vrot.slane %v4336, 5
    %v4339 = vsel %vm1917, %v4334, %v4338
    %v4341 = vshrl.u32 %v4034, 16
    %v4343 = vrot.slane %v4341, 4
    %v4344 = vshll.u32 %v4034, 16
    %v4346 = vrot.slane %v4344, 5
    %v4347 = vor.u32 %v4343, %v4346
    %v4348 = vrot.slane %v4347, 4
    %v4350 = vshll.u32 %v4035, 16
    %v4352 = vrot.slane %v4350, 5
    %v4353 = vsel %vm1917, %v4348, %v4352
    %v4354 = vshrl.u32 %v4035, 16
    %v4356 = vrot.slane %v4354, 4
    %v4357 = vor.u32 %v4356, %v4352
    %v4358 = vrot.slane %v4357, 4
    %v4360 = vshll.u32 %v4036, 16
    %v4362 = vrot.slane %v4360, 5
    %v4363 = vsel %vm1917, %v4358, %v4362
    %v4365 = vshrl.u32 %v4037, 16
    %v4367 = vrot.slane %v4365, 4
    %v4368 = vshll.u32 %v4037, 16
    %v4370 = vrot.slane %v4368, 5
    %v4371 = vor.u32 %v4367, %v4370
    %v4372 = vrot.slane %v4371, 4
    %v4374 = vshll.u32 %v4038, 16
    %v4376 = vrot.slane %v4374, 5
    %v4377 = vsel %vm1917, %v4372, %v4376
    %v4378 = vshrl.u32 %v4038, 16
    %v4380 = vrot.slane %v4378, 4
    %v4381 = vor.u32 %v4380, %v4376
    %v4382 = vrot.slane %v4381, 4
    %v4384 = vshll.u32 %v4039, 16
    %v4386 = vrot.slane %v4384, 5
    %v4387 = vsel %vm1917, %v4382, %v4386
    %v4389 = vshrl.u32 %v4040, 16
    %v4391 = vrot.slane %v4389, 4
    %v4392 = vshll.u32 %v4040, 16
    %v4394 = vrot.slane %v4392, 5
    %v4395 = vor.u32 %v4391, %v4394
    %v4396 = vrot.slane %v4395, 4
    %v4398 = vshll.u32 %v4041, 16
    %v4400 = vrot.slane %v4398, 5
    %v4401 = vsel %vm1917, %v4396, %v4400
    %v4402 = vshrl.u32 %v4041, 16
    %v4404 = vrot.slane %v4402, 4
    %v4405 = vor.u32 %v4404, %v4400
    %v4406 = vrot.slane %v4405, 4
    %v4408 = vshll.u32 %v4042, 16
    %v4410 = vrot.slane %v4408, 5
    %v4411 = vsel %vm1917, %v4406, %v4410
    %v4413 = vshrl.u32 %v4043, 16
    %v4415 = vrot.slane %v4413, 4
    %v4416 = vshll.u32 %v4043, 16
    %v4418 = vrot.slane %v4416, 5
    %v4419 = vor.u32 %v4415, %v4418
    %v4420 = vrot.slane %v4419, 4
    %v4422 = vshll.u32 %v4044, 16
    %v4424 = vrot.slane %v4422, 5
    %v4425 = vsel %vm1917, %v4420, %v4424
    %v4426 = vshrl.u32 %v4044, 16
    %v4428 = vrot.slane %v4426, 4
    %v4429 = vor.u32 %v4428, %v4424
    %v4430 = vrot.slane %v4429, 4
    %v4432 = vshll.u32 %v4045, 16
    %v4434 = vrot.slane %v4432, 5
    %v4435 = vsel %vm1917, %v4430, %v4434
    %v4437 = vshrl.u32 %v4046, 16
    %v4439 = vrot.slane %v4437, 4
    %v4440 = vshll.u32 %v4046, 16
    %v4442 = vrot.slane %v4440, 5
    %v4443 = vor.u32 %v4439, %v4442
    %v4444 = vrot.slane %v4443, 4
    %v4446 = vshll.u32 %v4047, 16
    %v4448 = vrot.slane %v4446, 5
    %v4449 = vsel %vm1917, %v4444, %v4448
    %v4450 = vshrl.u32 %v4047, 16
    %v4452 = vrot.slane %v4450, 4
    %v4453 = vor.u32 %v4452, %v4448
    %v4454 = vrot.slane %v4453, 4
    %v4456 = vshll.u32 %v4048, 16
    %v4458 = vrot.slane %v4456, 5
    %v4459 = vsel %vm1917, %v4454, %v4458
    %v4461 = vshrl.u32 %v4049, 16
    %v4463 = vrot.slane %v4461, 4
    %v4464 = vshll.u32 %v4049, 16
    %v4466 = vrot.slane %v4464, 5
    %v4467 = vor.u32 %v4463, %v4466
    %v4468 = vrot.slane %v4467, 4
    %v4470 = vshll.u32 %v4050, 16
    %v4472 = vrot.slane %v4470, 5
    %v4473 = vsel %vm1917, %v4468, %v4472
    %v4474 = vshrl.u32 %v4050, 16
    %v4476 = vrot.slane %v4474, 4
    %v4477 = vor.u32 %v4476, %v4472
    %v4478 = vrot.slane %v4477, 4
    %v4480 = vshll.u32 %v4051, 16
    %v4482 = vrot.slane %v4480, 5
    %v4483 = vsel %vm1917, %v4478, %v4482
    %v4485 = vshrl.u32 %v4052, 16
    %v4487 = vrot.slane %v4485, 4
    %v4488 = vshll.u32 %v4052, 16
    %v4490 = vrot.slane %v4488, 5
    %v4491 = vor.u32 %v4487, %v4490
    %v4492 = vrot.slane %v4491, 4
    %v4494 = vshll.u32 %v4053, 16
    %v4496 = vrot.slane %v4494, 5
    %v4497 = vsel %vm1917, %v4492, %v4496
    %v4498 = vshrl.u32 %v4053, 16
    %v4500 = vrot.slane %v4498, 4
    %v4501 = vor.u32 %v4500, %v4496
    %v4502 = vrot.slane %v4501, 4
    %v4504 = vshll.u32 %v4054, 16
    %v4506 = vrot.slane %v4504, 5
    %v4507 = vsel %vm1917, %v4502, %v4506
    %v4509 = vshrl.u32 %v4055, 16
    %v4511 = vrot.slane %v4509, 4
    %v4512 = vshll.u32 %v4055, 16
    %v4514 = vrot.slane %v4512, 5
    %v4515 = vor.u32 %v4511, %v4514
    %v4516 = vrot.slane %v4515, 4
    %v4518 = vshll.u32 %v4056, 16
    %v4520 = vrot.slane %v4518, 5
    %v4521 = vsel %vm1917, %v4516, %v4520
    %v4522 = vshrl.u32 %v4056, 16
    %v4524 = vrot.slane %v4522, 4
    %v4525 = vor.u32 %v4524, %v4520
    %v4526 = vrot.slane %v4525, 4
    %v4528 = vshll.u32 %v4057, 16
    %v4530 = vrot.slane %v4528, 5
    %v4531 = vsel %vm1917, %v4526, %v4530
    %v4533 = vshrl.u32 %v4058, 16
    %v4535 = vrot.slane %v4533, 4
    %v4536 = vshll.u32 %v4058, 16
    %v4538 = vrot.slane %v4536, 5
    %v4539 = vor.u32 %v4535, %v4538
    %v4540 = vrot.slane %v4539, 4
    %v4542 = vshll.u32 %v4059, 16
    %v4544 = vrot.slane %v4542, 5
    %v4545 = vsel %vm1917, %v4540, %v4544
    %v4546 = vshrl.u32 %v4059, 16
    %v4548 = vrot.slane %v4546, 4
    %v4549 = vor.u32 %v4548, %v4544
    %v4550 = vrot.slane %v4549, 4
    %v4552 = vshll.u32 %v4060, 16
    %v4554 = vrot.slane %v4552, 5
    %v4555 = vsel %vm1917, %v4550, %v4554
    %v4557 = vshrl.u32 %v4061, 16
    %v4559 = vrot.slane %v4557, 4
    %v4560 = vshll.u32 %v4061, 16
    %v4562 = vrot.slane %v4560, 5
    %v4563 = vor.u32 %v4559, %v4562
    %v4564 = vrot.slane %v4563, 4
    %v4566 = vshll.u32 %v4062, 16
    %v4568 = vrot.slane %v4566, 5
    %v4569 = vsel %vm1917, %v4564, %v4568
    %v4570 = vshrl.u32 %v4062, 16
    %v4572 = vrot.slane %v4570, 4
    %v4573 = vor.u32 %v4572, %v4568
    %v4574 = vrot.slane %v4573, 4
    %v4576 = vshll.u32 %v4063, 16
    %v4578 = vrot.slane %v4576, 5
    %v4579 = vsel %vm1917, %v4574, %v4578
    %v4581 = vshrl.u32 %v4064, 16
    %v4583 = vrot.slane %v4581, 4
    %v4584 = vshll.u32 %v4064, 16
    %v4586 = vrot.slane %v4584, 5
    %v4587 = vor.u32 %v4583, %v4586
    %v4588 = vrot.slane %v4587, 4
    %v4590 = vshll.u32 %v4065, 16
    %v4592 = vrot.slane %v4590, 5
    %v4593 = vsel %vm1917, %v4588, %v4592
    %v4594 = vshrl.u32 %v4065, 16
    %v4596 = vrot.slane %v4594, 4
    %v4597 = vor.u32 %v4596, %v4592
    %v4598 = vrot.slane %v4597, 4
    %v4600 = vshll.u32 %v4066, 16
    %v4602 = vrot.slane %v4600, 5
    %v4603 = vsel %vm1917, %v4598, %v4602
    %v4605 = vshrl.u32 %v4067, 16
    %v4607 = vrot.slane %v4605, 4
    %v4608 = vshll.u32 %v4067, 16
    %v4610 = vrot.slane %v4608, 5
    %v4611 = vor.u32 %v4607, %v4610
    %v4612 = vrot.slane %v4611, 4
    %v4614 = vshll.u32 %v4068, 16
    %v4616 = vrot.slane %v4614, 5
    %v4617 = vsel %vm1917, %v4612, %v4616
    %v4618 = vshrl.u32 %v4068, 16
    %v4620 = vrot.slane %v4618, 4
    %v4621 = vor.u32 %v4620, %v4616
    %v4622 = vrot.slane %v4621, 4
    %v4624 = vshll.u32 %v4069, 16
    %v4626 = vrot.slane %v4624, 5
    %v4627 = vsel %vm1917, %v4622, %v4626
    %v4629 = vshrl.u32 %v4070, 16
    %v4631 = vrot.slane %v4629, 4
    %v4632 = vshll.u32 %v4070, 16
    %v4634 = vrot.slane %v4632, 5
    %v4635 = vor.u32 %v4631, %v4634
    %v4636 = vrot.slane %v4635, 4
    %v4638 = vshll.u32 %v4071, 16
    %v4640 = vrot.slane %v4638, 5
    %v4641 = vsel %vm1917, %v4636, %v4640
    %v4642 = vshrl.u32 %v4071, 16
    %v4644 = vrot.slane %v4642, 4
    %v4645 = vor.u32 %v4644, %v4640
    %v4646 = vrot.slane %v4645, 4
    %v4648 = vshll.u32 %v4072, 16
    %v4650 = vrot.slane %v4648, 5
    %v4651 = vsel %vm1917, %v4646, %v4650
    %v4653 = vshrl.u32 %v4073, 16
    %v4655 = vrot.slane %v4653, 4
    %v4656 = vshll.u32 %v4073, 16
    %v4658 = vrot.slane %v4656, 5
    %v4659 = vor.u32 %v4655, %v4658
    %v4660 = vrot.slane %v4659, 4
    %v4662 = vshll.u32 %v4074, 16
    %v4664 = vrot.slane %v4662, 5
    %v4665 = vsel %vm1917, %v4660, %v4664
    %v4666 = vshrl.u32 %v4074, 16
    %v4668 = vrot.slane %v4666, 4
    %v4669 = vor.u32 %v4668, %v4664
    %v4670 = vrot.slane %v4669, 4
    %v4672 = vshll.u32 %v4075, 16
    %v4674 = vrot.slane %v4672, 5
    %v4675 = vsel %vm1917, %v4670, %v4674
    %v4677 = vshrl.u32 %v4076, 16
    %v4679 = vrot.slane %v4677, 4
    %v4680 = vshll.u32 %v4076, 16
    %v4682 = vrot.slane %v4680, 5
    %v4683 = vor.u32 %v4679, %v4682
    %v4684 = vrot.slane %v4683, 4
    %v4686 = vshll.u32 %v4077, 16
    %v4688 = vrot.slane %v4686, 5
    %v4689 = vsel %vm1917, %v4684, %v4688
    %v4690 = vshrl.u32 %v4077, 16
    %v4692 = vrot.slane %v4690, 4
    %v4693 = vor.u32 %v4692, %v4688
    %v4694 = vrot.slane %v4693, 4
    %v4696 = vshll.u32 %v4078, 16
    %v4698 = vrot.slane %v4696, 5
    %v4699 = vsel %vm1917, %v4694, %v4698
    %v4701 = vshrl.u32 %v4079, 16
    %v4703 = vrot.slane %v4701, 4
    %v4704 = vshll.u32 %v4079, 16
    %v4706 = vrot.slane %v4704, 5
    %v4707 = vor.u32 %v4703, %v4706
    %v4708 = vrot.slane %v4707, 4
    %v4710 = vshll.u32 %v4080, 16
    %v4712 = vrot.slane %v4710, 5
    %v4713 = vsel %vm1917, %v4708, %v4712
    %v4714 = vshrl.u32 %v4080, 16
    %v4716 = vrot.slane %v4714, 4
    %v4717 = vor.u32 %v4716, %v4712
    %v4718 = vrot.slane %v4717, 4
    %v4720 = vshll.u32 %v4081, 16
    %v4722 = vrot.slane %v4720, 5
    %v4723 = vsel %vm1917, %v4718, %v4722
    %v4725 = vshrl.u32 %v4082, 16
    %v4727 = vrot.slane %v4725, 4
    %v4728 = vshll.u32 %v4082, 16
    %v4730 = vrot.slane %v4728, 5
    %v4731 = vor.u32 %v4727, %v4730
    %v4732 = vrot.slane %v4731, 4
    %v4734 = vshll.u32 %v4083, 16
    %v4736 = vrot.slane %v4734, 5
    %v4737 = vsel %vm1917, %v4732, %v4736
    %v4738 = vshrl.u32 %v4083, 16
    %v4740 = vrot.slane %v4738, 4
    %v4741 = vor.u32 %v4740, %v4736
    %v4742 = vrot.slane %v4741, 4
    %v4744 = vshll.u32 %v4084, 16
    %v4746 = vrot.slane %v4744, 5
    %v4747 = vsel %vm1917, %v4742, %v4746
    %v4749 = vshrl.u32 %v4085, 16
    %v4751 = vrot.slane %v4749, 4
    %v4752 = vshll.u32 %v4085, 16
    %v4754 = vrot.slane %v4752, 5
    %v4755 = vor.u32 %v4751, %v4754
    %v4756 = vrot.slane %v4755, 4
    %v4758 = vshll.u32 %v4086, 16
    %v4760 = vrot.slane %v4758, 5
    %v4761 = vsel %vm1917, %v4756, %v4760
    %v4762 = vshrl.u32 %v4086, 16
    %v4764 = vrot.slane %v4762, 4
    %v4765 = vor.u32 %v4764, %v4760
    %v4766 = vrot.slane %v4765, 4
    %v4768 = vshll.u32 %v4087, 16
    %v4770 = vrot.slane %v4768, 5
    %v4771 = vsel %vm1917, %v4766, %v4770
    %v4773 = vshrl.u32 %v4088, 16
    %v4775 = vrot.slane %v4773, 4
    %v4776 = vshll.u32 %v4088, 16
    %v4778 = vrot.slane %v4776, 5
    %v4779 = vor.u32 %v4775, %v4778
    %v4780 = vrot.slane %v4779, 4
    %v4782 = vshll.u32 %v4089, 16
    %v4784 = vrot.slane %v4782, 5
    %v4785 = vsel %vm1917, %v4780, %v4784
    %v4786 = vshrl.u32 %v4089, 16
    %v4788 = vrot.slane %v4786, 4
    %v4789 = vor.u32 %v4788, %v4784
    %v4790 = vrot.slane %v4789, 4
    %v4792 = vshll.u32 %v4090, 16
    %v4794 = vrot.slane %v4792, 5
    %v4795 = vsel %vm1917, %v4790, %v4794
    %v4797 = vshrl.u32 %v4091, 16
    %v4799 = vrot.slane %v4797, 4
    %v4800 = vshll.u32 %v4091, 16
    %v4802 = vrot.slane %v4800, 5
    %v4803 = vor.u32 %v4799, %v4802
    %v4804 = vrot.slane %v4803, 4
    %v4806 = vshll.u32 %v4092, 16
    %v4808 = vrot.slane %v4806, 5
    %v4809 = vsel %vm1917, %v4804, %v4808
    %v4810 = vshrl.u32 %v4092, 16
    %v4812 = vrot.slane %v4810, 4
    %v4813 = vor.u32 %v4812, %v4808
    %v4814 = vrot.slane %v4813, 4
    %v4816 = vshll.u32 %v4093, 16
    %v4818 = vrot.slane %v4816, 5
    %v4819 = vsel %vm1917, %v4814, %v4818
    %v4821 = vshrl.u32 %v4094, 16
    %v4823 = vrot.slane %v4821, 4
    %v4824 = vshll.u32 %v4094, 16
    %v4826 = vrot.slane %v4824, 5
    %v4827 = vor.u32 %v4823, %v4826
    %v4828 = vrot.slane %v4827, 4
    %v4830 = vshll.u32 %v4095, 16
    %v4832 = vrot.slane %v4830, 5
    %v4833 = vsel %vm1917, %v4828, %v4832
    %v4834 = vshrl.u32 %v4095, 16
    %v4836 = vrot.slane %v4834, 4
    %v4837 = vor.u32 %v4836, %v4832
    %v4838 = vrot.slane %v4837, 4
    %v4840 = vshll.u32 %v4096, 16
    %v4842 = vrot.slane %v4840, 5
    %v4843 = vsel %vm1917, %v4838, %v4842
    %v4845 = vshrl.u32 %v4097, 16
    %v4847 = vrot.slane %v4845, 4
    %v4848 = vshll.u32 %v4097, 16
    %v4850 = vrot.slane %v4848, 5
    %v4851 = vor.u32 %v4847, %v4850
    %v4852 = vrot.slane %v4851, 4
    %v4854 = vshll.u32 %v4098, 16
    %v4856 = vrot.slane %v4854, 5
    %v4857 = vsel %vm1917, %v4852, %v4856
    %v4858 = vshrl.u32 %v4098, 16
    %v4860 = vrot.slane %v4858, 4
    %v4861 = vor.u32 %v4860, %v4856
    %v4862 = vrot.slane %v4861, 4
    %v4864 = vshll.u32 %v4099, 16
    %v4866 = vrot.slane %v4864, 5
    %v4867 = vsel %vm1917, %v4862, %v4866
    %4932 = vst.msk [vmem:[#allocation3 + $0x4] sm:$0xf] %vm28, %v4113
    %4933 = vst.msk [vmem:[#allocation3 + $0x10] sm:$0xf] %vm28, %v4123
    %4934 = vst.msk [vmem:[#allocation3 + $0x1c] sm:$0xf] %vm28, %v4137
    %4935 = vst.msk [vmem:[#allocation3 + $0x28] sm:$0xf] %vm28, %v4147
    %4936 = vst.msk [vmem:[#allocation3 + $0x34] sm:$0xf] %vm28, %v4161
    %4937 = vst.msk [vmem:[#allocation3 + $0x40] sm:$0xf] %vm28, %v4171
    %4938 = vst.msk [vmem:[#allocation3 + $0x4c] sm:$0xf] %vm28, %v4185
    %4939 = vst.msk [vmem:[#allocation3 + $0x58] sm:$0xf] %vm28, %v4195
    %4940 = vst.msk [vmem:[#allocation3 + $0x64] sm:$0xf] %vm28, %v4209
    %4941 = vst.msk [vmem:[#allocation3 + $0x70] sm:$0xf] %vm28, %v4219
    %4942 = vst.msk [vmem:[#allocation3 + $0x7c] sm:$0xf] %vm28, %v4233
    %4943 = vst.msk [vmem:[#allocation3 + $0x88] sm:$0xf] %vm28, %v4243
    %4944 = vst.msk [vmem:[#allocation3 + $0x94] sm:$0xf] %vm28, %v4257
    %4945 = vst.msk [vmem:[#allocation3 + $0xa0] sm:$0xf] %vm28, %v4267
    %4946 = vst.msk [vmem:[#allocation3 + $0xac] sm:$0xf] %vm28, %v4281
    %4947 = vst.msk [vmem:[#allocation3 + $0xb8] sm:$0xf] %vm28, %v4291
    %4948 = vst.msk [vmem:[#allocation3 + $0xc4] sm:$0xf] %vm28, %v4305
    %4949 = vst.msk [vmem:[#allocation3 + $0xd0] sm:$0xf] %vm28, %v4315
    %4950 = vst.msk [vmem:[#allocation3 + $0xdc] sm:$0xf] %vm28, %v4329
    %4951 = vst.msk [vmem:[#allocation3 + $0xe8] sm:$0xf] %vm28, %v4339
    %4952 = vst.msk [vmem:[#allocation3 + $0xf4] sm:$0xf] %vm28, %v4353
    %4953 = vst.msk [vmem:[#allocation3 + $0x100] sm:$0xf] %vm28, %v4363
    %4954 = vst.msk [vmem:[#allocation3 + $0x10c] sm:$0xf] %vm28, %v4377
    %4955 = vst.msk [vmem:[#allocation3 + $0x118] sm:$0xf] %vm28, %v4387
    %4956 = vst.msk [vmem:[#allocation3 + $0x124] sm:$0xf] %vm28, %v4401
    %4957 = vst.msk [vmem:[#allocation3 + $0x130] sm:$0xf] %vm28, %v4411
    %4958 = vst.msk [vmem:[#allocation3 + $0x13c] sm:$0xf] %vm28, %v4425
    %4959 = vst.msk [vmem:[#allocation3 + $0x148] sm:$0xf] %vm28, %v4435
    %4960 = vst.msk [vmem:[#allocation3 + $0x154] sm:$0xf] %vm28, %v4449
    %4961 = vst.msk [vmem:[#allocation3 + $0x160] sm:$0xf] %vm28, %v4459
    %4962 = vst.msk [vmem:[#allocation3 + $0x16c] sm:$0xf] %vm28, %v4473
    %4963 = vst.msk [vmem:[#allocation3 + $0x178] sm:$0xf] %vm28, %v4483
    %4964 = vst.msk [vmem:[#allocation3 + $0x184] sm:$0xf] %vm28, %v4497
    %4965 = vst.msk [vmem:[#allocation3 + $0x190] sm:$0xf] %vm28, %v4507
    %4966 = vst.msk [vmem:[#allocation3 + $0x19c] sm:$0xf] %vm28, %v4521
    %4967 = vst.msk [vmem:[#allocation3 + $0x1a8] sm:$0xf] %vm28, %v4531
    %4968 = vst.msk [vmem:[#allocation3 + $0x1b4] sm:$0xf] %vm28, %v4545
    %4969 = vst.msk [vmem:[#allocation3 + $0x1c0] sm:$0xf] %vm28, %v4555
    %4970 = vst.msk [vmem:[#allocation3 + $0x1cc] sm:$0xf] %vm28, %v4569
    %4971 = vst.msk [vmem:[#allocation3 + $0x1d8] sm:$0xf] %vm28, %v4579
    %4972 = vst.msk [vmem:[#allocation3 + $0x1e4] sm:$0xf] %vm28, %v4593
    %4973 = vst.msk [vmem:[#allocation3 + $0x1f0] sm:$0xf] %vm28, %v4603
    %4974 = vst.msk [vmem:[#allocation3 + $0x1fc] sm:$0xf] %vm28, %v4617
    %4975 = vst.msk [vmem:[#allocation3 + $0x208] sm:$0xf] %vm28, %v4627
    %4976 = vst.msk [vmem:[#allocation3 + $0x214] sm:$0xf] %vm28, %v4641
    %4977 = vst.msk [vmem:[#allocation3 + $0x220] sm:$0xf] %vm28, %v4651
    %4978 = vst.msk [vmem:[#allocation3 + $0x22c] sm:$0xf] %vm28, %v4665
    %4979 = vst.msk [vmem:[#allocation3 + $0x238] sm:$0xf] %vm28, %v4675
    %4980 = vst.msk [vmem:[#allocation3 + $0x244] sm:$0xf] %vm28, %v4689
    %4981 = vst.msk [vmem:[#allocation3 + $0x250] sm:$0xf] %vm28, %v4699
    %4982 = vst.msk [vmem:[#allocation3 + $0x25c] sm:$0xf] %vm28, %v4713
    %4983 = vst.msk [vmem:[#allocation3 + $0x268] sm:$0xf] %vm28, %v4723
    %4984 = vst.msk [vmem:[#allocation3 + $0x274] sm:$0xf] %vm28, %v4737
    %4985 = vst.msk [vmem:[#allocation3 + $0x280] sm:$0xf] %vm28, %v4747
    %4986 = vst.msk [vmem:[#allocation3 + $0x28c] sm:$0xf] %vm28, %v4761
    %4987 = vst.msk [vmem:[#allocation3 + $0x298] sm:$0xf] %vm28, %v4771
    %4988 = vst.msk [vmem:[#allocation3 + $0x2a4] sm:$0xf] %vm28, %v4785
    %4989 = vst.msk [vmem:[#allocation3 + $0x2b0] sm:$0xf] %vm28, %v4795
    %4990 = vst.msk [vmem:[#allocation3 + $0x2bc] sm:$0xf] %vm28, %v4809
    %4991 = vst.msk [vmem:[#allocation3 + $0x2c8] sm:$0xf] %vm28, %v4819
    %4992 = vst.msk [vmem:[#allocation3 + $0x2d4] sm:$0xf] %vm28, %v4833
    %4993 = vst.msk [vmem:[#allocation3 + $0x2e0] sm:$0xf] %vm28, %v4843
    %4994 = vst.msk [vmem:[#allocation3 + $0x2ec] sm:$0xf] %vm28, %v4857
    %4995 = vst.msk [vmem:[#allocation3 + $0x2f8] sm:$0xf] %vm28, %v4867
    %v4996 = vld [vmem:[%s865] sm:$0xe]
    %v4997 = vld [vmem:[%s865 + $0x4] sm:$0xf]
    %v4998 = vld [vmem:[%s865 + $0x8] sm:$0x1]
    %v4999 = vld [vmem:[%s865 + $0xc] sm:$0xe]
    %v5000 = vld [vmem:[%s865 + $0x10] sm:$0xf]
    %v5001 = vld [vmem:[%s865 + $0x14] sm:$0x1]
    %v5002 = vld [vmem:[%s865 + $0x18] sm:$0xe]
    %v5003 = vld [vmem:[%s865 + $0x1c] sm:$0xf]
    %v5004 = vld [vmem:[%s865 + $0x20] sm:$0x1]
    %v5005 = vld [vmem:[%s865 + $0x24] sm:$0xe]
    %v5006 = vld [vmem:[%s865 + $0x28] sm:$0xf]
    %v5007 = vld [vmem:[%s865 + $0x2c] sm:$0x1]
    %v5008 = vld [vmem:[%s865 + $0x30] sm:$0xe]
    %v5009 = vld [vmem:[%s865 + $0x34] sm:$0xf]
    %v5010 = vld [vmem:[%s865 + $0x38] sm:$0x1]
    %v5011 = vld [vmem:[%s865 + $0x3c] sm:$0xe]
    %v5012 = vld [vmem:[%s865 + $0x40] sm:$0xf]
    %v5013 = vld [vmem:[%s865 + $0x44] sm:$0x1]
    %v5014 = vld [vmem:[%s865 + $0x48] sm:$0xe]
    %v5015 = vld [vmem:[%s865 + $0x4c] sm:$0xf]
    %v5016 = vld [vmem:[%s865 + $0x50] sm:$0x1]
    %v5017 = vld [vmem:[%s865 + $0x54] sm:$0xe]
    %v5018 = vld [vmem:[%s865 + $0x58] sm:$0xf]
    %v5019 = vld [vmem:[%s865 + $0x5c] sm:$0x1]
    %v5020 = vld [vmem:[%s865 + $0x60] sm:$0xe]
    %v5021 = vld [vmem:[%s865 + $0x64] sm:$0xf]
    %v5022 = vld [vmem:[%s865 + $0x68] sm:$0x1]
    %v5023 = vld [vmem:[%s865 + $0x6c] sm:$0xe]
    %v5024 = vld [vmem:[%s865 + $0x70] sm:$0xf]
    %v5025 = vld [vmem:[%s865 + $0x74] sm:$0x1]
    %v5026 = vld [vmem:[%s865 + $0x78] sm:$0xe]
    %v5027 = vld [vmem:[%s865 + $0x7c] sm:$0xf]
    %v5028 = vld [vmem:[%s865 + $0x80] sm:$0x1]
    %v5029 = vld [vmem:[%s865 + $0x84] sm:$0xe]
    %v5030 = vld [vmem:[%s865 + $0x88] sm:$0xf]
    %v5031 = vld [vmem:[%s865 + $0x8c] sm:$0x1]
    %v5032 = vld [vmem:[%s865 + $0x90] sm:$0xe]
    %v5033 = vld [vmem:[%s865 + $0x94] sm:$0xf]
    %v5034 = vld [vmem:[%s865 + $0x98] sm:$0x1]
    %v5035 = vld [vmem:[%s865 + $0x9c] sm:$0xe]
    %v5036 = vld [vmem:[%s865 + $0xa0] sm:$0xf]
    %v5037 = vld [vmem:[%s865 + $0xa4] sm:$0x1]
    %v5038 = vld [vmem:[%s865 + $0xa8] sm:$0xe]
    %v5039 = vld [vmem:[%s865 + $0xac] sm:$0xf]
    %v5040 = vld [vmem:[%s865 + $0xb0] sm:$0x1]
    %v5041 = vld [vmem:[%s865 + $0xb4] sm:$0xe]
    %v5042 = vld [vmem:[%s865 + $0xb8] sm:$0xf]
    %v5043 = vld [vmem:[%s865 + $0xbc] sm:$0x1]
    %v5044 = vld [vmem:[%s865 + $0xd8] sm:$0xe]
    %v5045 = vld [vmem:[%s865 + $0xdc] sm:$0xf]
    %v5046 = vld [vmem:[%s865 + $0xe0] sm:$0x1]
    %v5047 = vld [vmem:[%s865 + $0xe4] sm:$0xe]
    %v5048 = vld [vmem:[%s865 + $0xe8] sm:$0xf]
    %v5049 = vld [vmem:[%s865 + $0xec] sm:$0x1]
    %v5050 = vld [vmem:[%s865 + $0xf0] sm:$0xe]
    %v5051 = vld [vmem:[%s865 + $0xf4] sm:$0xf]
    %v5052 = vld [vmem:[%s865 + $0xf8] sm:$0x1]
    %v5053 = vld [vmem:[%s865 + $0xfc] sm:$0xe]
    %v5054 = vld [vmem:[%s865 + $0x100] sm:$0xf]
    %v5055 = vld [vmem:[%s865 + $0x104] sm:$0x1]
    %v5056 = vld [vmem:[%s865 + $0x108] sm:$0xe]
    %v5057 = vld [vmem:[%s865 + $0x10c] sm:$0xf]
    %v5058 = vld [vmem:[%s865 + $0x110] sm:$0x1]
    %v5059 = vld [vmem:[%s865 + $0x114] sm:$0xe]
    %v5060 = vld [vmem:[%s865 + $0x118] sm:$0xf]
    %v5061 = vld [vmem:[%s865 + $0x11c] sm:$0x1]
    %v5062 = vld [vmem:[%s865 + $0x120] sm:$0xe]
    %v5063 = vld [vmem:[%s865 + $0x124] sm:$0xf]
    %v5064 = vld [vmem:[%s865 + $0x128] sm:$0x1]
    %v5065 = vld [vmem:[%s865 + $0x12c] sm:$0xe]
    %v5066 = vld [vmem:[%s865 + $0x130] sm:$0xf]
    %v5067 = vld [vmem:[%s865 + $0x134] sm:$0x1]
    %v5068 = vld [vmem:[%s865 + $0x138] sm:$0xe]
    %v5069 = vld [vmem:[%s865 + $0x13c] sm:$0xf]
    %v5070 = vld [vmem:[%s865 + $0x140] sm:$0x1]
    %v5071 = vld [vmem:[%s865 + $0x144] sm:$0xe]
    %v5072 = vld [vmem:[%s865 + $0x148] sm:$0xf]
    %v5073 = vld [vmem:[%s865 + $0x14c] sm:$0x1]
    %v5074 = vld [vmem:[%s865 + $0x150] sm:$0xe]
    %v5075 = vld [vmem:[%s865 + $0x154] sm:$0xf]
    %v5076 = vld [vmem:[%s865 + $0x158] sm:$0x1]
    %v5077 = vld [vmem:[%s865 + $0x15c] sm:$0xe]
    %v5078 = vld [vmem:[%s865 + $0x160] sm:$0xf]
    %v5079 = vld [vmem:[%s865 + $0x164] sm:$0x1]
    %v5080 = vld [vmem:[%s865 + $0x168] sm:$0xe]
    %v5081 = vld [vmem:[%s865 + $0x16c] sm:$0xf]
    %v5082 = vld [vmem:[%s865 + $0x170] sm:$0x1]
    %v5083 = vld [vmem:[%s865 + $0x174] sm:$0xe]
    %v5084 = vld [vmem:[%s865 + $0x178] sm:$0xf]
    %v5085 = vld [vmem:[%s865 + $0x17c] sm:$0x1]
    %v5086 = vld [vmem:[%s865 + $0x180] sm:$0xe]
    %v5087 = vld [vmem:[%s865 + $0x184] sm:$0xf]
    %v5088 = vld [vmem:[%s865 + $0x188] sm:$0x1]
    %v5089 = vld [vmem:[%s865 + $0x18c] sm:$0xe]
    %v5090 = vld [vmem:[%s865 + $0x190] sm:$0xf]
    %v5091 = vld [vmem:[%s865 + $0x194] sm:$0x1]
    %v5188 = vrot.slane %v4996, 5
    %v5189 = vrot.slane %v5188, 4
    %v5190 = vrot.slane %v4997, 5
    %v5191 = vsel %vm3137, %v5189, %v5190
    %v5192 = vrot.slane %v5190, 4
    %v5193 = vrot.slane %v4998, 5
    %v5194 = vsel %vm3137, %v5192, %v5193
    %v5195 = vrot.slane %v4999, 5
    %v5196 = vrot.slane %v5195, 4
    %v5197 = vrot.slane %v5000, 5
    %v5198 = vsel %vm3137, %v5196, %v5197
    %v5199 = vrot.slane %v5197, 4
    %v5200 = vrot.slane %v5001, 5
    %v5201 = vsel %vm3137, %v5199, %v5200
    %v5202 = vrot.slane %v5002, 5
    %v5203 = vrot.slane %v5202, 4
    %v5204 = vrot.slane %v5003, 5
    %v5205 = vsel %vm3137, %v5203, %v5204
    %v5206 = vrot.slane %v5204, 4
    %v5207 = vrot.slane %v5004, 5
    %v5208 = vsel %vm3137, %v5206, %v5207
    %v5209 = vrot.slane %v5005, 5
    %v5210 = vrot.slane %v5209, 4
    %v5211 = vrot.slane %v5006, 5
    %v5212 = vsel %vm3137, %v5210, %v5211
    %v5213 = vrot.slane %v5211, 4
    %v5214 = vrot.slane %v5007, 5
    %v5215 = vsel %vm3137, %v5213, %v5214
    %v5216 = vrot.slane %v5008, 5
    %v5217 = vrot.slane %v5216, 4
    %v5218 = vrot.slane %v5009, 5
    %v5219 = vsel %vm3137, %v5217, %v5218
    %v5220 = vrot.slane %v5218, 4
    %v5221 = vrot.slane %v5010, 5
    %v5222 = vsel %vm3137, %v5220, %v5221
    %v5223 = vrot.slane %v5011, 5
    %v5224 = vrot.slane %v5223, 4
    %v5225 = vrot.slane %v5012, 5
    %v5226 = vsel %vm3137, %v5224, %v5225
    %v5227 = vrot.slane %v5225, 4
    %v5228 = vrot.slane %v5013, 5
    %v5229 = vsel %vm3137, %v5227, %v5228
    %v5230 = vrot.slane %v5014, 5
    %v5231 = vrot.slane %v5230, 4
    %v5232 = vrot.slane %v5015, 5
    %v5233 = vsel %vm3137, %v5231, %v5232
    %v5234 = vrot.slane %v5232, 4
    %v5235 = vrot.slane %v5016, 5
    %v5236 = vsel %vm3137, %v5234, %v5235
    %v5237 = vrot.slane %v5017, 5
    %v5238 = vrot.slane %v5237, 4
    %v5239 = vrot.slane %v5018, 5
    %v5240 = vsel %vm3137, %v5238, %v5239
    %v5241 = vrot.slane %v5239, 4
    %v5242 = vrot.slane %v5019, 5
    %v5243 = vsel %vm3137, %v5241, %v5242
    %v5244 = vrot.slane %v5020, 5
    %v5245 = vrot.slane %v5244, 4
    %v5246 = vrot.slane %v5021, 5
    %v5247 = vsel %vm3137, %v5245, %v5246
    %v5248 = vrot.slane %v5246, 4
    %v5249 = vrot.slane %v5022, 5
    %v5250 = vsel %vm3137, %v5248, %v5249
    %v5251 = vrot.slane %v5023, 5
    %v5252 = vrot.slane %v5251, 4
    %v5253 = vrot.slane %v5024, 5
    %v5254 = vsel %vm3137, %v5252, %v5253
    %v5255 = vrot.slane %v5253, 4
    %v5256 = vrot.slane %v5025, 5
    %v5257 = vsel %vm3137, %v5255, %v5256
    %v5258 = vrot.slane %v5026, 5
    %v5259 = vrot.slane %v5258, 4
    %v5260 = vrot.slane %v5027, 5
    %v5261 = vsel %vm3137, %v5259, %v5260
    %v5262 = vrot.slane %v5260, 4
    %v5263 = vrot.slane %v5028, 5
    %v5264 = vsel %vm3137, %v5262, %v5263
    %v5265 = vrot.slane %v5029, 5
    %v5266 = vrot.slane %v5265, 4
    %v5267 = vrot.slane %v5030, 5
    %v5268 = vsel %vm3137, %v5266, %v5267
    %v5269 = vrot.slane %v5267, 4
    %v5270 = vrot.slane %v5031, 5
    %v5271 = vsel %vm3137, %v5269, %v5270
    %v5272 = vrot.slane %v5032, 5
    %v5273 = vrot.slane %v5272, 4
    %v5274 = vrot.slane %v5033, 5
    %v5275 = vsel %vm3137, %v5273, %v5274
    %v5276 = vrot.slane %v5274, 4
    %v5277 = vrot.slane %v5034, 5
    %v5278 = vsel %vm3137, %v5276, %v5277
    %v5279 = vrot.slane %v5035, 5
    %v5280 = vrot.slane %v5279, 4
    %v5281 = vrot.slane %v5036, 5
    %v5282 = vsel %vm3137, %v5280, %v5281
    %v5283 = vrot.slane %v5281, 4
    %v5284 = vrot.slane %v5037, 5
    %v5285 = vsel %vm3137, %v5283, %v5284
    %v5286 = vrot.slane %v5038, 5
    %v5287 = vrot.slane %v5286, 4
    %v5288 = vrot.slane %v5039, 5
    %v5289 = vsel %vm3137, %v5287, %v5288
    %v5290 = vrot.slane %v5288, 4
    %v5291 = vrot.slane %v5040, 5
    %v5292 = vsel %vm3137, %v5290, %v5291
    %v5293 = vrot.slane %v5041, 5
    %v5294 = vrot.slane %v5293, 4
    %v5295 = vrot.slane %v5042, 5
    %v5296 = vsel %vm3137, %v5294, %v5295
    %v5297 = vrot.slane %v5295, 4
    %v5298 = vrot.slane %v5043, 5
    %v5299 = vsel %vm3137, %v5297, %v5298
    %v5300 = vrot.slane %v5044, 5
    %v5301 = vrot.slane %v5300, 4
    %v5302 = vrot.slane %v5045, 5
    %v5303 = vsel %vm3137, %v5301, %v5302
    %v5304 = vrot.slane %v5302, 4
    %v5305 = vrot.slane %v5046, 5
    %v5306 = vsel %vm3137, %v5304, %v5305
    %v5307 = vrot.slane %v5047, 5
    %v5308 = vrot.slane %v5307, 4
    %v5309 = vrot.slane %v5048, 5
    %v5310 = vsel %vm3137, %v5308, %v5309
    %v5311 = vrot.slane %v5309, 4
    %v5312 = vrot.slane %v5049, 5
    %v5313 = vsel %vm3137, %v5311, %v5312
    %v5314 = vrot.slane %v5050, 5
    %v5315 = vrot.slane %v5314, 4
    %v5316 = vrot.slane %v5051, 5
    %v5317 = vsel %vm3137, %v5315, %v5316
    %v5318 = vrot.slane %v5316, 4
    %v5319 = vrot.slane %v5052, 5
    %v5320 = vsel %vm3137, %v5318, %v5319
    %v5321 = vrot.slane %v5053, 5
    %v5322 = vrot.slane %v5321, 4
    %v5323 = vrot.slane %v5054, 5
    %v5324 = vsel %vm3137, %v5322, %v5323
    %v5325 = vrot.slane %v5323, 4
    %v5326 = vrot.slane %v5055, 5
    %v5327 = vsel %vm3137, %v5325, %v5326
    %v5328 = vrot.slane %v5056, 5
    %v5329 = vrot.slane %v5328, 4
    %v5330 = vrot.slane %v5057, 5
    %v5331 = vsel %vm3137, %v5329, %v5330
    %v5332 = vrot.slane %v5330, 4
    %v5333 = vrot.slane %v5058, 5
    %v5334 = vsel %vm3137, %v5332, %v5333
    %v5335 = vrot.slane %v5059, 5
    %v5336 = vrot.slane %v5335, 4
    %v5337 = vrot.slane %v5060, 5
    %v5338 = vsel %vm3137, %v5336, %v5337
    %v5339 = vrot.slane %v5337, 4
    %v5340 = vrot.slane %v5061, 5
    %v5341 = vsel %vm3137, %v5339, %v5340
    %v5342 = vrot.slane %v5062, 5
    %v5343 = vrot.slane %v5342, 4
    %v5344 = vrot.slane %v5063, 5
    %v5345 = vsel %vm3137, %v5343, %v5344
    %v5346 = vrot.slane %v5344, 4
    %v5347 = vrot.slane %v5064, 5
    %v5348 = vsel %vm3137, %v5346, %v5347
    %v5349 = vrot.slane %v5065, 5
    %v5350 = vrot.slane %v5349, 4
    %v5351 = vrot.slane %v5066, 5
    %v5352 = vsel %vm3137, %v5350, %v5351
    %v5353 = vrot.slane %v5351, 4
    %v5354 = vrot.slane %v5067, 5
    %v5355 = vsel %vm3137, %v5353, %v5354
    %v5356 = vrot.slane %v5068, 5
    %v5357 = vrot.slane %v5356, 4
    %v5358 = vrot.slane %v5069, 5
    %v5359 = vsel %vm3137, %v5357, %v5358
    %v5360 = vrot.slane %v5358, 4
    %v5361 = vrot.slane %v5070, 5
    %v5362 = vsel %vm3137, %v5360, %v5361
    %v5363 = vrot.slane %v5071, 5
    %v5364 = vrot.slane %v5363, 4
    %v5365 = vrot.slane %v5072, 5
    %v5366 = vsel %vm3137, %v5364, %v5365
    %v5367 = vrot.slane %v5365, 4
    %v5368 = vrot.slane %v5073, 5
    %v5369 = vsel %vm3137, %v5367, %v5368
    %v5370 = vrot.slane %v5074, 5
    %v5371 = vrot.slane %v5370, 4
    %v5372 = vrot.slane %v5075, 5
    %v5373 = vsel %vm3137, %v5371, %v5372
    %v5374 = vrot.slane %v5372, 4
    %v5375 = vrot.slane %v5076, 5
    %v5376 = vsel %vm3137, %v5374, %v5375
    %v5377 = vrot.slane %v5077, 5
    %v5378 = vrot.slane %v5377, 4
    %v5379 = vrot.slane %v5078, 5
    %v5380 = vsel %vm3137, %v5378, %v5379
    %v5381 = vrot.slane %v5379, 4
    %v5382 = vrot.slane %v5079, 5
    %v5383 = vsel %vm3137, %v5381, %v5382
    %v5384 = vrot.slane %v5080, 5
    %v5385 = vrot.slane %v5384, 4
    %v5386 = vrot.slane %v5081, 5
    %v5387 = vsel %vm3137, %v5385, %v5386
    %v5388 = vrot.slane %v5386, 4
    %v5389 = vrot.slane %v5082, 5
    %v5390 = vsel %vm3137, %v5388, %v5389
    %v5391 = vrot.slane %v5083, 5
    %v5392 = vrot.slane %v5391, 4
    %v5393 = vrot.slane %v5084, 5
    %v5394 = vsel %vm3137, %v5392, %v5393
    %v5395 = vrot.slane %v5393, 4
    %v5396 = vrot.slane %v5085, 5
    %v5397 = vsel %vm3137, %v5395, %v5396
    %v5398 = vrot.slane %v5086, 5
    %v5399 = vrot.slane %v5398, 4
    %v5400 = vrot.slane %v5087, 5
    %v5401 = vsel %vm3137, %v5399, %v5400
    %v5402 = vrot.slane %v5400, 4
    %v5403 = vrot.slane %v5088, 5
    %v5404 = vsel %vm3137, %v5402, %v5403
    %v5405 = vrot.slane %v5089, 5
    %v5406 = vrot.slane %v5405, 4
    %v5407 = vrot.slane %v5090, 5
    %v5408 = vsel %vm3137, %v5406, %v5407
    %v5409 = vrot.slane %v5407, 4
    %v5410 = vrot.slane %v5091, 5
    %v5411 = vsel %vm3137, %v5409, %v5410
    %5412 = vrot.lane.b32.xlu0 %v5191, 32
    %v5413 = vpop.permute.xlu0 %5412
    %5414 = vrot.lane.b32.xlu0 %v5194, 32
    %v5415 = vpop.permute.xlu0 %5414
    %5416 = vrot.lane.b32.xlu0 %v5198, 32
    %v5417 = vpop.permute.xlu0 %5416
    %5418 = vrot.lane.b32.xlu0 %v5201, 32
    %v5419 = vpop.permute.xlu0 %5418
    %5420 = vrot.lane.b32.xlu0 %v5205, 32
    %v5421 = vpop.permute.xlu0 %5420
    %5422 = vrot.lane.b32.xlu0 %v5208, 32
    %v5423 = vpop.permute.xlu0 %5422
    %5424 = vrot.lane.b32.xlu0 %v5212, 32
    %v5425 = vpop.permute.xlu0 %5424
    %5426 = vrot.lane.b32.xlu0 %v5215, 32
    %v5427 = vpop.permute.xlu0 %5426
    %5428 = vrot.lane.b32.xlu0 %v5219, 32
    %v5429 = vpop.permute.xlu0 %5428
    %5430 = vrot.lane.b32.xlu0 %v5222, 32
    %v5431 = vpop.permute.xlu0 %5430
    %5432 = vrot.lane.b32.xlu0 %v5226, 32
    %v5433 = vpop.permute.xlu0 %5432
    %5434 = vrot.lane.b32.xlu0 %v5229, 32
    %v5435 = vpop.permute.xlu0 %5434
    %5436 = vrot.lane.b32.xlu0 %v5233, 32
    %v5437 = vpop.permute.xlu0 %5436
    %5438 = vrot.lane.b32.xlu0 %v5236, 32
    %v5439 = vpop.permute.xlu0 %5438
    %5440 = vrot.lane.b32.xlu0 %v5240, 32
    %v5441 = vpop.permute.xlu0 %5440
    %5442 = vrot.lane.b32.xlu0 %v5243, 32
    %v5443 = vpop.permute.xlu0 %5442
    %5444 = vrot.lane.b32.xlu0 %v5247, 32
    %v5445 = vpop.permute.xlu0 %5444
    %5446 = vrot.lane.b32.xlu0 %v5250, 32
    %v5447 = vpop.permute.xlu0 %5446
    %5448 = vrot.lane.b32.xlu0 %v5254, 32
    %v5449 = vpop.permute.xlu0 %5448
    %5450 = vrot.lane.b32.xlu0 %v5257, 32
    %v5451 = vpop.permute.xlu0 %5450
    %5452 = vrot.lane.b32.xlu0 %v5261, 32
    %v5453 = vpop.permute.xlu0 %5452
    %5454 = vrot.lane.b32.xlu0 %v5264, 32
    %v5455 = vpop.permute.xlu0 %5454
    %5456 = vrot.lane.b32.xlu0 %v5268, 32
    %v5457 = vpop.permute.xlu0 %5456
    %5458 = vrot.lane.b32.xlu0 %v5271, 32
    %v5459 = vpop.permute.xlu0 %5458
    %5460 = vrot.lane.b32.xlu0 %v5275, 32
    %v5461 = vpop.permute.xlu0 %5460
    %5462 = vrot.lane.b32.xlu0 %v5278, 32
    %v5463 = vpop.permute.xlu0 %5462
    %5464 = vrot.lane.b32.xlu0 %v5282, 32
    %v5465 = vpop.permute.xlu0 %5464
    %5466 = vrot.lane.b32.xlu0 %v5285, 32
    %v5467 = vpop.permute.xlu0 %5466
    %5468 = vrot.lane.b32.xlu0 %v5289, 32
    %v5469 = vpop.permute.xlu0 %5468
    %5470 = vrot.lane.b32.xlu0 %v5292, 32
    %v5471 = vpop.permute.xlu0 %5470
    %5472 = vrot.lane.b32.xlu0 %v5296, 32
    %v5473 = vpop.permute.xlu0 %5472
    %5474 = vrot.lane.b32.xlu0 %v5299, 32
    %v5475 = vpop.permute.xlu0 %5474
    %5476 = vrot.lane.b32.xlu0 %v5303, 32
    %v5477 = vpop.permute.xlu0 %5476
    %5478 = vrot.lane.b32.xlu0 %v5306, 32
    %v5479 = vpop.permute.xlu0 %5478
    %5480 = vrot.lane.b32.xlu0 %v5310, 32
    %v5481 = vpop.permute.xlu0 %5480
    %5482 = vrot.lane.b32.xlu0 %v5313, 32
    %v5483 = vpop.permute.xlu0 %5482
    %5484 = vrot.lane.b32.xlu0 %v5317, 32
    %v5485 = vpop.permute.xlu0 %5484
    %5486 = vrot.lane.b32.xlu0 %v5320, 32
    %v5487 = vpop.permute.xlu0 %5486
    %5488 = vrot.lane.b32.xlu0 %v5324, 32
    %v5489 = vpop.permute.xlu0 %5488
    %5490 = vrot.lane.b32.xlu0 %v5327, 32
    %v5491 = vpop.permute.xlu0 %5490
    %5492 = vrot.lane.b32.xlu0 %v5331, 32
    %v5493 = vpop.permute.xlu0 %5492
    %5494 = vrot.lane.b32.xlu0 %v5334, 32
    %v5495 = vpop.permute.xlu0 %5494
    %5496 = vrot.lane.b32.xlu0 %v5338, 32
    %v5497 = vpop.permute.xlu0 %5496
    %5498 = vrot.lane.b32.xlu0 %v5341, 32
    %v5499 = vpop.permute.xlu0 %5498
    %5500 = vrot.lane.b32.xlu0 %v5345, 32
    %v5501 = vpop.permute.xlu0 %5500
    %5502 = vrot.lane.b32.xlu0 %v5348, 32
    %v5503 = vpop.permute.xlu0 %5502
    %5504 = vrot.lane.b32.xlu0 %v5352, 32
    %v5505 = vpop.permute.xlu0 %5504
    %5506 = vrot.lane.b32.xlu0 %v5355, 32
    %v5507 = vpop.permute.xlu0 %5506
    %5508 = vrot.lane.b32.xlu0 %v5359, 32
    %v5509 = vpop.permute.xlu0 %5508
    %5510 = vrot.lane.b32.xlu0 %v5362, 32
    %v5511 = vpop.permute.xlu0 %5510
    %5512 = vrot.lane.b32.xlu0 %v5366, 32
    %v5513 = vpop.permute.xlu0 %5512
    %5514 = vrot.lane.b32.xlu0 %v5369, 32
    %v5515 = vpop.permute.xlu0 %5514
    %5516 = vrot.lane.b32.xlu0 %v5373, 32
    %v5517 = vpop.permute.xlu0 %5516
    %5518 = vrot.lane.b32.xlu0 %v5376, 32
    %v5519 = vpop.permute.xlu0 %5518
    %5520 = vrot.lane.b32.xlu0 %v5380, 32
    %v5521 = vpop.permute.xlu0 %5520
    %5522 = vrot.lane.b32.xlu0 %v5383, 32
    %v5523 = vpop.permute.xlu0 %5522
    %5524 = vrot.lane.b32.xlu0 %v5387, 32
    %v5525 = vpop.permute.xlu0 %5524
    %5526 = vrot.lane.b32.xlu0 %v5390, 32
    %v5527 = vpop.permute.xlu0 %5526
    %5528 = vrot.lane.b32.xlu0 %v5394, 32
    %v5529 = vpop.permute.xlu0 %5528
    %5530 = vrot.lane.b32.xlu0 %v5397, 32
    %v5531 = vpop.permute.xlu0 %5530
    %5532 = vrot.lane.b32.xlu0 %v5401, 32
    %v5533 = vpop.permute.xlu0 %5532
    %5534 = vrot.lane.b32.xlu0 %v5404, 32
    %v5535 = vpop.permute.xlu0 %5534
    %5536 = vrot.lane.b32.xlu0 %v5408, 32
    %v5537 = vpop.permute.xlu0 %5536
    %5538 = vrot.lane.b32.xlu0 %v5411, 32
    %v5539 = vpop.permute.xlu0 %5538
    %5604 = vst.msk [vmem:[#allocation3 + $0x4] sm:$0xf] %vm2878, %v5413
    %5605 = vst.msk [vmem:[#allocation3 + $0x10] sm:$0xf] %vm2878, %v5415
    %5606 = vst.msk [vmem:[#allocation3 + $0x1c] sm:$0xf] %vm2878, %v5417
    %5607 = vst.msk [vmem:[#allocation3 + $0x28] sm:$0xf] %vm2878, %v5419
    %5608 = vst.msk [vmem:[#allocation3 + $0x34] sm:$0xf] %vm2878, %v5421
    %5609 = vst.msk [vmem:[#allocation3 + $0x40] sm:$0xf] %vm2878, %v5423
    %5610 = vst.msk [vmem:[#allocation3 + $0x4c] sm:$0xf] %vm2878, %v5425
    %5611 = vst.msk [vmem:[#allocation3 + $0x58] sm:$0xf] %vm2878, %v5427
    %5612 = vst.msk [vmem:[#allocation3 + $0x64] sm:$0xf] %vm2878, %v5429
    %5613 = vst.msk [vmem:[#allocation3 + $0x70] sm:$0xf] %vm2878, %v5431
    %5614 = vst.msk [vmem:[#allocation3 + $0x7c] sm:$0xf] %vm2878, %v5433
    %5615 = vst.msk [vmem:[#allocation3 + $0x88] sm:$0xf] %vm2878, %v5435
    %5616 = vst.msk [vmem:[#allocation3 + $0x94] sm:$0xf] %vm2878, %v5437
    %5617 = vst.msk [vmem:[#allocation3 + $0xa0] sm:$0xf] %vm2878, %v5439
    %5618 = vst.msk [vmem:[#allocation3 + $0xac] sm:$0xf] %vm2878, %v5441
    %5619 = vst.msk [vmem:[#allocation3 + $0xb8] sm:$0xf] %vm2878, %v5443
    %5620 = vst.msk [vmem:[#allocation3 + $0xc4] sm:$0xf] %vm2878, %v5445
    %5621 = vst.msk [vmem:[#allocation3 + $0xd0] sm:$0xf] %vm2878, %v5447
    %5622 = vst.msk [vmem:[#allocation3 + $0xdc] sm:$0xf] %vm2878, %v5449
    %5623 = vst.msk [vmem:[#allocation3 + $0xe8] sm:$0xf] %vm2878, %v5451
    %5624 = vst.msk [vmem:[#allocation3 + $0xf4] sm:$0xf] %vm2878, %v5453
    %5625 = vst.msk [vmem:[#allocation3 + $0x100] sm:$0xf] %vm2878, %v5455
    %5626 = vst.msk [vmem:[#allocation3 + $0x10c] sm:$0xf] %vm2878, %v5457
    %5627 = vst.msk [vmem:[#allocation3 + $0x118] sm:$0xf] %vm2878, %v5459
    %5628 = vst.msk [vmem:[#allocation3 + $0x124] sm:$0xf] %vm2878, %v5461
    %5629 = vst.msk [vmem:[#allocation3 + $0x130] sm:$0xf] %vm2878, %v5463
    %5630 = vst.msk [vmem:[#allocation3 + $0x13c] sm:$0xf] %vm2878, %v5465
    %5631 = vst.msk [vmem:[#allocation3 + $0x148] sm:$0xf] %vm2878, %v5467
    %5632 = vst.msk [vmem:[#allocation3 + $0x154] sm:$0xf] %vm2878, %v5469
    %5633 = vst.msk [vmem:[#allocation3 + $0x160] sm:$0xf] %vm2878, %v5471
    %5634 = vst.msk [vmem:[#allocation3 + $0x16c] sm:$0xf] %vm2878, %v5473
    %5635 = vst.msk [vmem:[#allocation3 + $0x178] sm:$0xf] %vm2878, %v5475
    %5636 = vst.msk [vmem:[#allocation3 + $0x184] sm:$0xf] %vm2878, %v5477
    %5637 = vst.msk [vmem:[#allocation3 + $0x190] sm:$0xf] %vm2878, %v5479
    %5638 = vst.msk [vmem:[#allocation3 + $0x19c] sm:$0xf] %vm2878, %v5481
    %5639 = vst.msk [vmem:[#allocation3 + $0x1a8] sm:$0xf] %vm2878, %v5483
    %5640 = vst.msk [vmem:[#allocation3 + $0x1b4] sm:$0xf] %vm2878, %v5485
    %5641 = vst.msk [vmem:[#allocation3 + $0x1c0] sm:$0xf] %vm2878, %v5487
    %5642 = vst.msk [vmem:[#allocation3 + $0x1cc] sm:$0xf] %vm2878, %v5489
    %5643 = vst.msk [vmem:[#allocation3 + $0x1d8] sm:$0xf] %vm2878, %v5491
    %5644 = vst.msk [vmem:[#allocation3 + $0x1e4] sm:$0xf] %vm2878, %v5493
    %5645 = vst.msk [vmem:[#allocation3 + $0x1f0] sm:$0xf] %vm2878, %v5495
    %5646 = vst.msk [vmem:[#allocation3 + $0x1fc] sm:$0xf] %vm2878, %v5497
    %5647 = vst.msk [vmem:[#allocation3 + $0x208] sm:$0xf] %vm2878, %v5499
    %5648 = vst.msk [vmem:[#allocation3 + $0x214] sm:$0xf] %vm2878, %v5501
    %5649 = vst.msk [vmem:[#allocation3 + $0x220] sm:$0xf] %vm2878, %v5503
    %5650 = vst.msk [vmem:[#allocation3 + $0x22c] sm:$0xf] %vm2878, %v5505
    %5651 = vst.msk [vmem:[#allocation3 + $0x238] sm:$0xf] %vm2878, %v5507
    %5652 = vst.msk [vmem:[#allocation3 + $0x244] sm:$0xf] %vm2878, %v5509
    %5653 = vst.msk [vmem:[#allocation3 + $0x250] sm:$0xf] %vm2878, %v5511
    %5654 = vst.msk [vmem:[#allocation3 + $0x25c] sm:$0xf] %vm2878, %v5513
    %5655 = vst.msk [vmem:[#allocation3 + $0x268] sm:$0xf] %vm2878, %v5515
    %5656 = vst.msk [vmem:[#allocation3 + $0x274] sm:$0xf] %vm2878, %v5517
    %5657 = vst.msk [vmem:[#allocation3 + $0x280] sm:$0xf] %vm2878, %v5519
    %5658 = vst.msk [vmem:[#allocation3 + $0x28c] sm:$0xf] %vm2878, %v5521
    %5659 = vst.msk [vmem:[#allocation3 + $0x298] sm:$0xf] %vm2878, %v5523
    %5660 = vst.msk [vmem:[#allocation3 + $0x2a4] sm:$0xf] %vm2878, %v5525
    %5661 = vst.msk [vmem:[#allocation3 + $0x2b0] sm:$0xf] %vm2878, %v5527
    %5662 = vst.msk [vmem:[#allocation3 + $0x2bc] sm:$0xf] %vm2878, %v5529
    %5663 = vst.msk [vmem:[#allocation3 + $0x2c8] sm:$0xf] %vm2878, %v5531
    %5664 = vst.msk [vmem:[#allocation3 + $0x2d4] sm:$0xf] %vm2878, %v5533
    %5665 = vst.msk [vmem:[#allocation3 + $0x2e0] sm:$0xf] %vm2878, %v5535
    %5666 = vst.msk [vmem:[#allocation3 + $0x2ec] sm:$0xf] %vm2878, %v5537
    %5667 = vst.msk [vmem:[#allocation3 + $0x2f8] sm:$0xf] %vm2878, %v5539
    %s5668 = scalar_lea.vmem [#allocation2], 24
    %v5669 = vld [vmem:[%s5668] sm:$0xf]
    %v5670 = vld [vmem:[%s5668 + $0x4] sm:$0xf]
    %v5671 = vld [vmem:[%s5668 + $0xc] sm:$0xf]
    %v5672 = vld [vmem:[%s5668 + $0x10] sm:$0xf]
    %v5673 = vld [vmem:[%s5668 + $0x18] sm:$0xf]
    %v5674 = vld [vmem:[%s5668 + $0x1c] sm:$0xf]
    %v5675 = vld [vmem:[%s5668 + $0x24] sm:$0xf]
    %v5676 = vld [vmem:[%s5668 + $0x28] sm:$0xf]
    %v5677 = vld [vmem:[%s5668 + $0x30] sm:$0xf]
    %v5678 = vld [vmem:[%s5668 + $0x34] sm:$0xf]
    %v5679 = vld [vmem:[%s5668 + $0x3c] sm:$0xf]
    %v5680 = vld [vmem:[%s5668 + $0x40] sm:$0xf]
    %v5681 = vld [vmem:[%s5668 + $0x48] sm:$0xf]
    %v5682 = vld [vmem:[%s5668 + $0x4c] sm:$0xf]
    %v5683 = vld [vmem:[%s5668 + $0x54] sm:$0xf]
    %v5684 = vld [vmem:[%s5668 + $0x58] sm:$0xf]
    %v5685 = vld [vmem:[%s5668 + $0x60] sm:$0xf]
    %v5686 = vld [vmem:[%s5668 + $0x64] sm:$0xf]
    %v5687 = vld [vmem:[%s5668 + $0x6c] sm:$0xf]
    %v5688 = vld [vmem:[%s5668 + $0x70] sm:$0xf]
    %v5689 = vld [vmem:[%s5668 + $0x78] sm:$0xf]
    %v5690 = vld [vmem:[%s5668 + $0x7c] sm:$0xf]
    %v5691 = vld [vmem:[%s5668 + $0x84] sm:$0xf]
    %v5692 = vld [vmem:[%s5668 + $0x88] sm:$0xf]
    %v5693 = vld [vmem:[%s5668 + $0x90] sm:$0xf]
    %v5694 = vld [vmem:[%s5668 + $0x94] sm:$0xf]
    %v5695 = vld [vmem:[%s5668 + $0x9c] sm:$0xf]
    %v5696 = vld [vmem:[%s5668 + $0xa0] sm:$0xf]
    %v5697 = vld [vmem:[%s5668 + $0xa8] sm:$0xf]
    %v5698 = vld [vmem:[%s5668 + $0xac] sm:$0xf]
    %v5699 = vld [vmem:[%s5668 + $0xb4] sm:$0xf]
    %v5700 = vld [vmem:[%s5668 + $0xb8] sm:$0xf]
    %v5701 = vld [vmem:[%s5668 + $0xd8] sm:$0xf]
    %v5702 = vld [vmem:[%s5668 + $0xdc] sm:$0xf]
    %v5703 = vld [vmem:[%s5668 + $0xe4] sm:$0xf]
    %v5704 = vld [vmem:[%s5668 + $0xe8] sm:$0xf]
    %v5705 = vld [vmem:[%s5668 + $0xf0] sm:$0xf]
    %v5706 = vld [vmem:[%s5668 + $0xf4] sm:$0xf]
    %v5707 = vld [vmem:[%s5668 + $0xfc] sm:$0xf]
    %v5708 = vld [vmem:[%s5668 + $0x100] sm:$0xf]
    %v5709 = vld [vmem:[%s5668 + $0x108] sm:$0xf]
    %v5710 = vld [vmem:[%s5668 + $0x10c] sm:$0xf]
    %v5711 = vld [vmem:[%s5668 + $0x114] sm:$0xf]
    %v5712 = vld [vmem:[%s5668 + $0x118] sm:$0xf]
    %v5713 = vld [vmem:[%s5668 + $0x120] sm:$0xf]
    %v5714 = vld [vmem:[%s5668 + $0x124] sm:$0xf]
    %v5715 = vld [vmem:[%s5668 + $0x12c] sm:$0xf]
    %v5716 = vld [vmem:[%s5668 + $0x130] sm:$0xf]
    %v5717 = vld [vmem:[%s5668 + $0x138] sm:$0xf]
    %v5718 = vld [vmem:[%s5668 + $0x13c] sm:$0xf]
    %v5719 = vld [vmem:[%s5668 + $0x144] sm:$0xf]
    %v5720 = vld [vmem:[%s5668 + $0x148] sm:$0xf]
    %v5721 = vld [vmem:[%s5668 + $0x150] sm:$0xf]
    %v5722 = vld [vmem:[%s5668 + $0x154] sm:$0xf]
    %v5723 = vld [vmem:[%s5668 + $0x15c] sm:$0xf]
    %v5724 = vld [vmem:[%s5668 + $0x160] sm:$0xf]
    %v5725 = vld [vmem:[%s5668 + $0x168] sm:$0xf]
    %v5726 = vld [vmem:[%s5668 + $0x16c] sm:$0xf]
    %v5727 = vld [vmem:[%s5668 + $0x174] sm:$0xf]
    %v5728 = vld [vmem:[%s5668 + $0x178] sm:$0xf]
    %v5729 = vld [vmem:[%s5668 + $0x180] sm:$0xf]
    %v5730 = vld [vmem:[%s5668 + $0x184] sm:$0xf]
    %v5731 = vld [vmem:[%s5668 + $0x18c] sm:$0xf]
    %v5732 = vld [vmem:[%s5668 + $0x190] sm:$0xf]
    %5797 = vrot.lane.b32.xlu0 %v5669, 64
    %v5798 = vpop.permute.xlu0 %5797
    %5799 = vrot.lane.b32.xlu0 %v5670, 64
    %v5800 = vpop.permute.xlu0 %5799
    %5801 = vrot.lane.b32.xlu0 %v5671, 64
    %v5802 = vpop.permute.xlu0 %5801
    %5803 = vrot.lane.b32.xlu0 %v5672, 64
    %v5804 = vpop.permute.xlu0 %5803
    %5805 = vrot.lane.b32.xlu0 %v5673, 64
    %v5806 = vpop.permute.xlu0 %5805
    %5807 = vrot.lane.b32.xlu0 %v5674, 64
    %v5808 = vpop.permute.xlu0 %5807
    %5809 = vrot.lane.b32.xlu0 %v5675, 64
    %v5810 = vpop.permute.xlu0 %5809
    %5811 = vrot.lane.b32.xlu0 %v5676, 64
    %v5812 = vpop.permute.xlu0 %5811
    %5813 = vrot.lane.b32.xlu0 %v5677, 64
    %v5814 = vpop.permute.xlu0 %5813
    %5815 = vrot.lane.b32.xlu0 %v5678, 64
    %v5816 = vpop.permute.xlu0 %5815
    %5817 = vrot.lane.b32.xlu0 %v5679, 64
    %v5818 = vpop.permute.xlu0 %5817
    %5819 = vrot.lane.b32.xlu0 %v5680, 64
    %v5820 = vpop.permute.xlu0 %5819
    %5821 = vrot.lane.b32.xlu0 %v5681, 64
    %v5822 = vpop.permute.xlu0 %5821
    %5823 = vrot.lane.b32.xlu0 %v5682, 64
    %v5824 = vpop.permute.xlu0 %5823
    %5825 = vrot.lane.b32.xlu0 %v5683, 64
    %v5826 = vpop.permute.xlu0 %5825
    %5827 = vrot.lane.b32.xlu0 %v5684, 64
    %v5828 = vpop.permute.xlu0 %5827
    %5829 = vrot.lane.b32.xlu0 %v5685, 64
    %v5830 = vpop.permute.xlu0 %5829
    %5831 = vrot.lane.b32.xlu0 %v5686, 64
    %v5832 = vpop.permute.xlu0 %5831
    %5833 = vrot.lane.b32.xlu0 %v5687, 64
    %v5834 = vpop.permute.xlu0 %5833
    %5835 = vrot.lane.b32.xlu0 %v5688, 64
    %v5836 = vpop.permute.xlu0 %5835
    %5837 = vrot.lane.b32.xlu0 %v5689, 64
    %v5838 = vpop.permute.xlu0 %5837
    %5839 = vrot.lane.b32.xlu0 %v5690, 64
    %v5840 = vpop.permute.xlu0 %5839
    %5841 = vrot.lane.b32.xlu0 %v5691, 64
    %v5842 = vpop.permute.xlu0 %5841
    %5843 = vrot.lane.b32.xlu0 %v5692, 64
    %v5844 = vpop.permute.xlu0 %5843
    %5845 = vrot.lane.b32.xlu0 %v5693, 64
    %v5846 = vpop.permute.xlu0 %5845
    %5847 = vrot.lane.b32.xlu0 %v5694, 64
    %v5848 = vpop.permute.xlu0 %5847
    %5849 = vrot.lane.b32.xlu0 %v5695, 64
    %v5850 = vpop.permute.xlu0 %5849
    %5851 = vrot.lane.b32.xlu0 %v5696, 64
    %v5852 = vpop.permute.xlu0 %5851
    %5853 = vrot.lane.b32.xlu0 %v5697, 64
    %v5854 = vpop.permute.xlu0 %5853
    %5855 = vrot.lane.b32.xlu0 %v5698, 64
    %v5856 = vpop.permute.xlu0 %5855
    %5857 = vrot.lane.b32.xlu0 %v5699, 64
    %v5858 = vpop.permute.xlu0 %5857
    %5859 = vrot.lane.b32.xlu0 %v5700, 64
    %v5860 = vpop.permute.xlu0 %5859
    %5861 = vrot.lane.b32.xlu0 %v5701, 64
    %v5862 = vpop.permute.xlu0 %5861
    %5863 = vrot.lane.b32.xlu0 %v5702, 64
    %v5864 = vpop.permute.xlu0 %5863
    %5865 = vrot.lane.b32.xlu0 %v5703, 64
    %v5866 = vpop.permute.xlu0 %5865
    %5867 = vrot.lane.b32.xlu0 %v5704, 64
    %v5868 = vpop.permute.xlu0 %5867
    %5869 = vrot.lane.b32.xlu0 %v5705, 64
    %v5870 = vpop.permute.xlu0 %5869
    %5871 = vrot.lane.b32.xlu0 %v5706, 64
    %v5872 = vpop.permute.xlu0 %5871
    %5873 = vrot.lane.b32.xlu0 %v5707, 64
    %v5874 = vpop.permute.xlu0 %5873
    %5875 = vrot.lane.b32.xlu0 %v5708, 64
    %v5876 = vpop.permute.xlu0 %5875
    %5877 = vrot.lane.b32.xlu0 %v5709, 64
    %v5878 = vpop.permute.xlu0 %5877
    %5879 = vrot.lane.b32.xlu0 %v5710, 64
    %v5880 = vpop.permute.xlu0 %5879
    %5881 = vrot.lane.b32.xlu0 %v5711, 64
    %v5882 = vpop.permute.xlu0 %5881
    %5883 = vrot.lane.b32.xlu0 %v5712, 64
    %v5884 = vpop.permute.xlu0 %5883
    %5885 = vrot.lane.b32.xlu0 %v5713, 64
    %v5886 = vpop.permute.xlu0 %5885
    %5887 = vrot.lane.b32.xlu0 %v5714, 64
    %v5888 = vpop.permute.xlu0 %5887
    %5889 = vrot.lane.b32.xlu0 %v5715, 64
    %v5890 = vpop.permute.xlu0 %5889
    %5891 = vrot.lane.b32.xlu0 %v5716, 64
    %v5892 = vpop.permute.xlu0 %5891
    %5893 = vrot.lane.b32.xlu0 %v5717, 64
    %v5894 = vpop.permute.xlu0 %5893
    %5895 = vrot.lane.b32.xlu0 %v5718, 64
    %v5896 = vpop.permute.xlu0 %5895
    %5897 = vrot.lane.b32.xlu0 %v5719, 64
    %v5898 = vpop.permute.xlu0 %5897
    %5899 = vrot.lane.b32.xlu0 %v5720, 64
    %v5900 = vpop.permute.xlu0 %5899
    %5901 = vrot.lane.b32.xlu0 %v5721, 64
    %v5902 = vpop.permute.xlu0 %5901
    %5903 = vrot.lane.b32.xlu0 %v5722, 64
    %v5904 = vpop.permute.xlu0 %5903
    %5905 = vrot.lane.b32.xlu0 %v5723, 64
    %v5906 = vpop.permute.xlu0 %5905
    %5907 = vrot.lane.b32.xlu0 %v5724, 64
    %v5908 = vpop.permute.xlu0 %5907
    %5909 = vrot.lane.b32.xlu0 %v5725, 64
    %v5910 = vpop.permute.xlu0 %5909
    %5911 = vrot.lane.b32.xlu0 %v5726, 64
    %v5912 = vpop.permute.xlu0 %5911
    %5913 = vrot.lane.b32.xlu0 %v5727, 64
    %v5914 = vpop.permute.xlu0 %5913
    %5915 = vrot.lane.b32.xlu0 %v5728, 64
    %v5916 = vpop.permute.xlu0 %5915
    %5917 = vrot.lane.b32.xlu0 %v5729, 64
    %v5918 = vpop.permute.xlu0 %5917
    %5919 = vrot.lane.b32.xlu0 %v5730, 64
    %v5920 = vpop.permute.xlu0 %5919
    %5921 = vrot.lane.b32.xlu0 %v5731, 64
    %v5922 = vpop.permute.xlu0 %5921
    %5923 = vrot.lane.b32.xlu0 %v5732, 64
    %v5924 = vpop.permute.xlu0 %5923
    %5989 = vst.msk [vmem:[#allocation3 + $0x4] sm:$0xf] %vm3554, %v5798
    %5990 = vst.msk [vmem:[#allocation3 + $0x10] sm:$0xf] %vm3554, %v5800
    %5991 = vst.msk [vmem:[#allocation3 + $0x1c] sm:$0xf] %vm3554, %v5802
    %5992 = vst.msk [vmem:[#allocation3 + $0x28] sm:$0xf] %vm3554, %v5804
    %5993 = vst.msk [vmem:[#allocation3 + $0x34] sm:$0xf] %vm3554, %v5806
    %5994 = vst.msk [vmem:[#allocation3 + $0x40] sm:$0xf] %vm3554, %v5808
    %5995 = vst.msk [vmem:[#allocation3 + $0x4c] sm:$0xf] %vm3554, %v5810
    %5996 = vst.msk [vmem:[#allocation3 + $0x58] sm:$0xf] %vm3554, %v5812
    %5997 = vst.msk [vmem:[#allocation3 + $0x64] sm:$0xf] %vm3554, %v5814
    %5998 = vst.msk [vmem:[#allocation3 + $0x70] sm:$0xf] %vm3554, %v5816
    %5999 = vst.msk [vmem:[#allocation3 + $0x7c] sm:$0xf] %vm3554, %v5818
    %6000 = vst.msk [vmem:[#allocation3 + $0x88] sm:$0xf] %vm3554, %v5820
    %6001 = vst.msk [vmem:[#allocation3 + $0x94] sm:$0xf] %vm3554, %v5822
    %6002 = vst.msk [vmem:[#allocation3 + $0xa0] sm:$0xf] %vm3554, %v5824
    %6003 = vst.msk [vmem:[#allocation3 + $0xac] sm:$0xf] %vm3554, %v5826
    %6004 = vst.msk [vmem:[#allocation3 + $0xb8] sm:$0xf] %vm3554, %v5828
    %6005 = vst.msk [vmem:[#allocation3 + $0xc4] sm:$0xf] %vm3554, %v5830
    %6006 = vst.msk [vmem:[#allocation3 + $0xd0] sm:$0xf] %vm3554, %v5832
    %6007 = vst.msk [vmem:[#allocation3 + $0xdc] sm:$0xf] %vm3554, %v5834
    %6008 = vst.msk [vmem:[#allocation3 + $0xe8] sm:$0xf] %vm3554, %v5836
    %6009 = vst.msk [vmem:[#allocation3 + $0xf4] sm:$0xf] %vm3554, %v5838
    %6010 = vst.msk [vmem:[#allocation3 + $0x100] sm:$0xf] %vm3554, %v5840
    %6011 = vst.msk [vmem:[#allocation3 + $0x10c] sm:$0xf] %vm3554, %v5842
    %6012 = vst.msk [vmem:[#allocation3 + $0x118] sm:$0xf] %vm3554, %v5844
    %6013 = vst.msk [vmem:[#allocation3 + $0x124] sm:$0xf] %vm3554, %v5846
    %6014 = vst.msk [vmem:[#allocation3 + $0x130] sm:$0xf] %vm3554, %v5848
    %6015 = vst.msk [vmem:[#allocation3 + $0x13c] sm:$0xf] %vm3554, %v5850
    %6016 = vst.msk [vmem:[#allocation3 + $0x148] sm:$0xf] %vm3554, %v5852
    %6017 = vst.msk [vmem:[#allocation3 + $0x154] sm:$0xf] %vm3554, %v5854
    %6018 = vst.msk [vmem:[#allocation3 + $0x160] sm:$0xf] %vm3554, %v5856
    %6019 = vst.msk [vmem:[#allocation3 + $0x16c] sm:$0xf] %vm3554, %v5858
    %6020 = vst.msk [vmem:[#allocation3 + $0x178] sm:$0xf] %vm3554, %v5860
    %6021 = vst.msk [vmem:[#allocation3 + $0x184] sm:$0xf] %vm3554, %v5862
    %6022 = vst.msk [vmem:[#allocation3 + $0x190] sm:$0xf] %vm3554, %v5864
    %6023 = vst.msk [vmem:[#allocation3 + $0x19c] sm:$0xf] %vm3554, %v5866
    %6024 = vst.msk [vmem:[#allocation3 + $0x1a8] sm:$0xf] %vm3554, %v5868
    %6025 = vst.msk [vmem:[#allocation3 + $0x1b4] sm:$0xf] %vm3554, %v5870
    %6026 = vst.msk [vmem:[#allocation3 + $0x1c0] sm:$0xf] %vm3554, %v5872
    %6027 = vst.msk [vmem:[#allocation3 + $0x1cc] sm:$0xf] %vm3554, %v5874
    %6028 = vst.msk [vmem:[#allocation3 + $0x1d8] sm:$0xf] %vm3554, %v5876
    %6029 = vst.msk [vmem:[#allocation3 + $0x1e4] sm:$0xf] %vm3554, %v5878
    %6030 = vst.msk [vmem:[#allocation3 + $0x1f0] sm:$0xf] %vm3554, %v5880
    %6031 = vst.msk [vmem:[#allocation3 + $0x1fc] sm:$0xf] %vm3554, %v5882
    %6032 = vst.msk [vmem:[#allocation3 + $0x208] sm:$0xf] %vm3554, %v5884
    %6033 = vst.msk [vmem:[#allocation3 + $0x214] sm:$0xf] %vm3554, %v5886
    %6034 = vst.msk [vmem:[#allocation3 + $0x220] sm:$0xf] %vm3554, %v5888
    %6035 = vst.msk [vmem:[#allocation3 + $0x22c] sm:$0xf] %vm3554, %v5890
    %6036 = vst.msk [vmem:[#allocation3 + $0x238] sm:$0xf] %vm3554, %v5892
    %6037 = vst.msk [vmem:[#allocation3 + $0x244] sm:$0xf] %vm3554, %v5894
    %6038 = vst.msk [vmem:[#allocation3 + $0x250] sm:$0xf] %vm3554, %v5896
    %6039 = vst.msk [vmem:[#allocation3 + $0x25c] sm:$0xf] %vm3554, %v5898
    %6040 = vst.msk [vmem:[#allocation3 + $0x268] sm:$0xf] %vm3554, %v5900
    %6041 = vst.msk [vmem:[#allocation3 + $0x274] sm:$0xf] %vm3554, %v5902
    %6042 = vst.msk [vmem:[#allocation3 + $0x280] sm:$0xf] %vm3554, %v5904
    %6043 = vst.msk [vmem:[#allocation3 + $0x28c] sm:$0xf] %vm3554, %v5906
    %6044 = vst.msk [vmem:[#allocation3 + $0x298] sm:$0xf] %vm3554, %v5908
    %6045 = vst.msk [vmem:[#allocation3 + $0x2a4] sm:$0xf] %vm3554, %v5910
    %6046 = vst.msk [vmem:[#allocation3 + $0x2b0] sm:$0xf] %vm3554, %v5912
    %6047 = vst.msk [vmem:[#allocation3 + $0x2bc] sm:$0xf] %vm3554, %v5914
    %6048 = vst.msk [vmem:[#allocation3 + $0x2c8] sm:$0xf] %vm3554, %v5916
    %6049 = vst.msk [vmem:[#allocation3 + $0x2d4] sm:$0xf] %vm3554, %v5918
    %6050 = vst.msk [vmem:[#allocation3 + $0x2e0] sm:$0xf] %vm3554, %v5920
    %6051 = vst.msk [vmem:[#allocation3 + $0x2ec] sm:$0xf] %vm3554, %v5922
    %6052 = vst.msk [vmem:[#allocation3 + $0x2f8] sm:$0xf] %vm3554, %v5924
    %v6053 = vld [vmem:[%s5668] sm:$0xf]
    %v6054 = vld [vmem:[%s5668 + $0x4] sm:$0xf]
    %v6055 = vld [vmem:[%s5668 + $0x8] sm:$0x1]
    %v6056 = vld [vmem:[%s5668 + $0xc] sm:$0xf]
    %v6057 = vld [vmem:[%s5668 + $0x10] sm:$0xf]
    %v6058 = vld [vmem:[%s5668 + $0x14] sm:$0x1]
    %v6059 = vld [vmem:[%s5668 + $0x18] sm:$0xf]
    %v6060 = vld [vmem:[%s5668 + $0x1c] sm:$0xf]
    %v6061 = vld [vmem:[%s5668 + $0x20] sm:$0x1]
    %v6062 = vld [vmem:[%s5668 + $0x24] sm:$0xf]
    %v6063 = vld [vmem:[%s5668 + $0x28] sm:$0xf]
    %v6064 = vld [vmem:[%s5668 + $0x2c] sm:$0x1]
    %v6065 = vld [vmem:[%s5668 + $0x30] sm:$0xf]
    %v6066 = vld [vmem:[%s5668 + $0x34] sm:$0xf]
    %v6067 = vld [vmem:[%s5668 + $0x38] sm:$0x1]
    %v6068 = vld [vmem:[%s5668 + $0x3c] sm:$0xf]
    %v6069 = vld [vmem:[%s5668 + $0x40] sm:$0xf]
    %v6070 = vld [vmem:[%s5668 + $0x44] sm:$0x1]
    %v6071 = vld [vmem:[%s5668 + $0x48] sm:$0xf]
    %v6072 = vld [vmem:[%s5668 + $0x4c] sm:$0xf]
    %v6073 = vld [vmem:[%s5668 + $0x50] sm:$0x1]
    %v6074 = vld [vmem:[%s5668 + $0x54] sm:$0xf]
    %v6075 = vld [vmem:[%s5668 + $0x58] sm:$0xf]
    %v6076 = vld [vmem:[%s5668 + $0x5c] sm:$0x1]
    %v6077 = vld [vmem:[%s5668 + $0x60] sm:$0xf]
    %v6078 = vld [vmem:[%s5668 + $0x64] sm:$0xf]
    %v6079 = vld [vmem:[%s5668 + $0x68] sm:$0x1]
    %v6080 = vld [vmem:[%s5668 + $0x6c] sm:$0xf]
    %v6081 = vld [vmem:[%s5668 + $0x70] sm:$0xf]
    %v6082 = vld [vmem:[%s5668 + $0x74] sm:$0x1]
    %v6083 = vld [vmem:[%s5668 + $0x78] sm:$0xf]
    %v6084 = vld [vmem:[%s5668 + $0x7c] sm:$0xf]
    %v6085 = vld [vmem:[%s5668 + $0x80] sm:$0x1]
    %v6086 = vld [vmem:[%s5668 + $0x84] sm:$0xf]
    %v6087 = vld [vmem:[%s5668 + $0x88] sm:$0xf]
    %v6088 = vld [vmem:[%s5668 + $0x8c] sm:$0x1]
    %v6089 = vld [vmem:[%s5668 + $0x90] sm:$0xf]
    %v6090 = vld [vmem:[%s5668 + $0x94] sm:$0xf]
    %v6091 = vld [vmem:[%s5668 + $0x98] sm:$0x1]
    %v6092 = vld [vmem:[%s5668 + $0x9c] sm:$0xf]
    %v6093 = vld [vmem:[%s5668 + $0xa0] sm:$0xf]
    %v6094 = vld [vmem:[%s5668 + $0xa4] sm:$0x1]
    %v6095 = vld [vmem:[%s5668 + $0xa8] sm:$0xf]
    %v6096 = vld [vmem:[%s5668 + $0xac] sm:$0xf]
    %v6097 = vld [vmem:[%s5668 + $0xb0] sm:$0x1]
    %v6098 = vld [vmem:[%s5668 + $0xb4] sm:$0xf]
    %v6099 = vld [vmem:[%s5668 + $0xb8] sm:$0xf]
    %v6100 = vld [vmem:[%s5668 + $0xbc] sm:$0x1]
    %v6101 = vld [vmem:[%s5668 + $0xd8] sm:$0xf]
    %v6102 = vld [vmem:[%s5668 + $0xdc] sm:$0xf]
    %v6103 = vld [vmem:[%s5668 + $0xe0] sm:$0x1]
    %v6104 = vld [vmem:[%s5668 + $0xe4] sm:$0xf]
    %v6105 = vld [vmem:[%s5668 + $0xe8] sm:$0xf]
    %v6106 = vld [vmem:[%s5668 + $0xec] sm:$0x1]
    %v6107 = vld [vmem:[%s5668 + $0xf0] sm:$0xf]
    %v6108 = vld [vmem:[%s5668 + $0xf4] sm:$0xf]
    %v6109 = vld [vmem:[%s5668 + $0xf8] sm:$0x1]
    %v6110 = vld [vmem:[%s5668 + $0xfc] sm:$0xf]
    %v6111 = vld [vmem:[%s5668 + $0x100] sm:$0xf]
    %v6112 = vld [vmem:[%s5668 + $0x104] sm:$0x1]
    %v6113 = vld [vmem:[%s5668 + $0x108] sm:$0xf]
    %v6114 = vld [vmem:[%s5668 + $0x10c] sm:$0xf]
    %v6115 = vld [vmem:[%s5668 + $0x110] sm:$0x1]
    %v6116 = vld [vmem:[%s5668 + $0x114] sm:$0xf]
    %v6117 = vld [vmem:[%s5668 + $0x118] sm:$0xf]
    %v6118 = vld [vmem:[%s5668 + $0x11c] sm:$0x1]
    %v6119 = vld [vmem:[%s5668 + $0x120] sm:$0xf]
    %v6120 = vld [vmem:[%s5668 + $0x124] sm:$0xf]
    %v6121 = vld [vmem:[%s5668 + $0x128] sm:$0x1]
    %v6122 = vld [vmem:[%s5668 + $0x12c] sm:$0xf]
    %v6123 = vld [vmem:[%s5668 + $0x130] sm:$0xf]
    %v6124 = vld [vmem:[%s5668 + $0x134] sm:$0x1]
    %v6125 = vld [vmem:[%s5668 + $0x138] sm:$0xf]
    %v6126 = vld [vmem:[%s5668 + $0x13c] sm:$0xf]
    %v6127 = vld [vmem:[%s5668 + $0x140] sm:$0x1]
    %v6128 = vld [vmem:[%s5668 + $0x144] sm:$0xf]
    %v6129 = vld [vmem:[%s5668 + $0x148] sm:$0xf]
    %v6130 = vld [vmem:[%s5668 + $0x14c] sm:$0x1]
    %v6131 = vld [vmem:[%s5668 + $0x150] sm:$0xf]
    %v6132 = vld [vmem:[%s5668 + $0x154] sm:$0xf]
    %v6133 = vld [vmem:[%s5668 + $0x158] sm:$0x1]
    %v6134 = vld [vmem:[%s5668 + $0x15c] sm:$0xf]
    %v6135 = vld [vmem:[%s5668 + $0x160] sm:$0xf]
    %v6136 = vld [vmem:[%s5668 + $0x164] sm:$0x1]
    %v6137 = vld [vmem:[%s5668 + $0x168] sm:$0xf]
    %v6138 = vld [vmem:[%s5668 + $0x16c] sm:$0xf]
    %v6139 = vld [vmem:[%s5668 + $0x170] sm:$0x1]
    %v6140 = vld [vmem:[%s5668 + $0x174] sm:$0xf]
    %v6141 = vld [vmem:[%s5668 + $0x178] sm:$0xf]
    %v6142 = vld [vmem:[%s5668 + $0x17c] sm:$0x1]
    %v6143 = vld [vmem:[%s5668 + $0x180] sm:$0xf]
    %v6144 = vld [vmem:[%s5668 + $0x184] sm:$0xf]
    %v6145 = vld [vmem:[%s5668 + $0x188] sm:$0x1]
    %v6146 = vld [vmem:[%s5668 + $0x18c] sm:$0xf]
    %v6147 = vld [vmem:[%s5668 + $0x190] sm:$0xf]
    %v6148 = vld [vmem:[%s5668 + $0x194] sm:$0x1]
    %v6150 = vshrl.u32 %v6053, 16
    %v6152 = vrot.slane %v6150, 4
    %v6153 = vshll.u32 %v6053, 16
    %v6155 = vrot.slane %v6153, 5
    %v6156 = vor.u32 %v6152, %v6155
    %v6157 = vrot.slane %v6156, 4
    %v6159 = vshll.u32 %v6054, 16
    %v6161 = vrot.slane %v6159, 5
    %v6162 = vsel %vm1917, %v6157, %v6161
    %v6163 = vshrl.u32 %v6054, 16
    %v6165 = vrot.slane %v6163, 4
    %v6166 = vor.u32 %v6165, %v6161
    %v6167 = vrot.slane %v6166, 4
    %v6169 = vshll.u32 %v6055, 16
    %v6171 = vrot.slane %v6169, 5
    %v6172 = vsel %vm1917, %v6167, %v6171
    %v6174 = vshrl.u32 %v6056, 16
    %v6176 = vrot.slane %v6174, 4
    %v6177 = vshll.u32 %v6056, 16
    %v6179 = vrot.slane %v6177, 5
    %v6180 = vor.u32 %v6176, %v6179
    %v6181 = vrot.slane %v6180, 4
    %v6183 = vshll.u32 %v6057, 16
    %v6185 = vrot.slane %v6183, 5
    %v6186 = vsel %vm1917, %v6181, %v6185
    %v6187 = vshrl.u32 %v6057, 16
    %v6189 = vrot.slane %v6187, 4
    %v6190 = vor.u32 %v6189, %v6185
    %v6191 = vrot.slane %v6190, 4
    %v6193 = vshll.u32 %v6058, 16
    %v6195 = vrot.slane %v6193, 5
    %v6196 = vsel %vm1917, %v6191, %v6195
    %v6198 = vshrl.u32 %v6059, 16
    %v6200 = vrot.slane %v6198, 4
    %v6201 = vshll.u32 %v6059, 16
    %v6203 = vrot.slane %v6201, 5
    %v6204 = vor.u32 %v6200, %v6203
    %v6205 = vrot.slane %v6204, 4
    %v6207 = vshll.u32 %v6060, 16
    %v6209 = vrot.slane %v6207, 5
    %v6210 = vsel %vm1917, %v6205, %v6209
    %v6211 = vshrl.u32 %v6060, 16
    %v6213 = vrot.slane %v6211, 4
    %v6214 = vor.u32 %v6213, %v6209
    %v6215 = vrot.slane %v6214, 4
    %v6217 = vshll.u32 %v6061, 16
    %v6219 = vrot.slane %v6217, 5
    %v6220 = vsel %vm1917, %v6215, %v6219
    %v6222 = vshrl.u32 %v6062, 16
    %v6224 = vrot.slane %v6222, 4
    %v6225 = vshll.u32 %v6062, 16
    %v6227 = vrot.slane %v6225, 5
    %v6228 = vor.u32 %v6224, %v6227
    %v6229 = vrot.slane %v6228, 4
    %v6231 = vshll.u32 %v6063, 16
    %v6233 = vrot.slane %v6231, 5
    %v6234 = vsel %vm1917, %v6229, %v6233
    %v6235 = vshrl.u32 %v6063, 16
    %v6237 = vrot.slane %v6235, 4
    %v6238 = vor.u32 %v6237, %v6233
    %v6239 = vrot.slane %v6238, 4
    %v6241 = vshll.u32 %v6064, 16
    %v6243 = vrot.slane %v6241, 5
    %v6244 = vsel %vm1917, %v6239, %v6243
    %v6246 = vshrl.u32 %v6065, 16
    %v6248 = vrot.slane %v6246, 4
    %v6249 = vshll.u32 %v6065, 16
    %v6251 = vrot.slane %v6249, 5
    %v6252 = vor.u32 %v6248, %v6251
    %v6253 = vrot.slane %v6252, 4
    %v6255 = vshll.u32 %v6066, 16
    %v6257 = vrot.slane %v6255, 5
    %v6258 = vsel %vm1917, %v6253, %v6257
    %v6259 = vshrl.u32 %v6066, 16
    %v6261 = vrot.slane %v6259, 4
    %v6262 = vor.u32 %v6261, %v6257
    %v6263 = vrot.slane %v6262, 4
    %v6265 = vshll.u32 %v6067, 16
    %v6267 = vrot.slane %v6265, 5
    %v6268 = vsel %vm1917, %v6263, %v6267
    %v6270 = vshrl.u32 %v6068, 16
    %v6272 = vrot.slane %v6270, 4
    %v6273 = vshll.u32 %v6068, 16
    %v6275 = vrot.slane %v6273, 5
    %v6276 = vor.u32 %v6272, %v6275
    %v6277 = vrot.slane %v6276, 4
    %v6279 = vshll.u32 %v6069, 16
    %v6281 = vrot.slane %v6279, 5
    %v6282 = vsel %vm1917, %v6277, %v6281
    %v6283 = vshrl.u32 %v6069, 16
    %v6285 = vrot.slane %v6283, 4
    %v6286 = vor.u32 %v6285, %v6281
    %v6287 = vrot.slane %v6286, 4
    %v6289 = vshll.u32 %v6070, 16
    %v6291 = vrot.slane %v6289, 5
    %v6292 = vsel %vm1917, %v6287, %v6291
    %v6294 = vshrl.u32 %v6071, 16
    %v6296 = vrot.slane %v6294, 4
    %v6297 = vshll.u32 %v6071, 16
    %v6299 = vrot.slane %v6297, 5
    %v6300 = vor.u32 %v6296, %v6299
    %v6301 = vrot.slane %v6300, 4
    %v6303 = vshll.u32 %v6072, 16
    %v6305 = vrot.slane %v6303, 5
    %v6306 = vsel %vm1917, %v6301, %v6305
    %v6307 = vshrl.u32 %v6072, 16
    %v6309 = vrot.slane %v6307, 4
    %v6310 = vor.u32 %v6309, %v6305
    %v6311 = vrot.slane %v6310, 4
    %v6313 = vshll.u32 %v6073, 16
    %v6315 = vrot.slane %v6313, 5
    %v6316 = vsel %vm1917, %v6311, %v6315
    %v6318 = vshrl.u32 %v6074, 16
    %v6320 = vrot.slane %v6318, 4
    %v6321 = vshll.u32 %v6074, 16
    %v6323 = vrot.slane %v6321, 5
    %v6324 = vor.u32 %v6320, %v6323
    %v6325 = vrot.slane %v6324, 4
    %v6327 = vshll.u32 %v6075, 16
    %v6329 = vrot.slane %v6327, 5
    %v6330 = vsel %vm1917, %v6325, %v6329
    %v6331 = vshrl.u32 %v6075, 16
    %v6333 = vrot.slane %v6331, 4
    %v6334 = vor.u32 %v6333, %v6329
    %v6335 = vrot.slane %v6334, 4
    %v6337 = vshll.u32 %v6076, 16
    %v6339 = vrot.slane %v6337, 5
    %v6340 = vsel %vm1917, %v6335, %v6339
    %v6342 = vshrl.u32 %v6077, 16
    %v6344 = vrot.slane %v6342, 4
    %v6345 = vshll.u32 %v6077, 16
    %v6347 = vrot.slane %v6345, 5
    %v6348 = vor.u32 %v6344, %v6347
    %v6349 = vrot.slane %v6348, 4
    %v6351 = vshll.u32 %v6078, 16
    %v6353 = vrot.slane %v6351, 5
    %v6354 = vsel %vm1917, %v6349, %v6353
    %v6355 = vshrl.u32 %v6078, 16
    %v6357 = vrot.slane %v6355, 4
    %v6358 = vor.u32 %v6357, %v6353
    %v6359 = vrot.slane %v6358, 4
    %v6361 = vshll.u32 %v6079, 16
    %v6363 = vrot.slane %v6361, 5
    %v6364 = vsel %vm1917, %v6359, %v6363
    %v6366 = vshrl.u32 %v6080, 16
    %v6368 = vrot.slane %v6366, 4
    %v6369 = vshll.u32 %v6080, 16
    %v6371 = vrot.slane %v6369, 5
    %v6372 = vor.u32 %v6368, %v6371
    %v6373 = vrot.slane %v6372, 4
    %v6375 = vshll.u32 %v6081, 16
    %v6377 = vrot.slane %v6375, 5
    %v6378 = vsel %vm1917, %v6373, %v6377
    %v6379 = vshrl.u32 %v6081, 16
    %v6381 = vrot.slane %v6379, 4
    %v6382 = vor.u32 %v6381, %v6377
    %v6383 = vrot.slane %v6382, 4
    %v6385 = vshll.u32 %v6082, 16
    %v6387 = vrot.slane %v6385, 5
    %v6388 = vsel %vm1917, %v6383, %v6387
    %v6390 = vshrl.u32 %v6083, 16
    %v6392 = vrot.slane %v6390, 4
    %v6393 = vshll.u32 %v6083, 16
    %v6395 = vrot.slane %v6393, 5
    %v6396 = vor.u32 %v6392, %v6395
    %v6397 = vrot.slane %v6396, 4
    %v6399 = vshll.u32 %v6084, 16
    %v6401 = vrot.slane %v6399, 5
    %v6402 = vsel %vm1917, %v6397, %v6401
    %v6403 = vshrl.u32 %v6084, 16
    %v6405 = vrot.slane %v6403, 4
    %v6406 = vor.u32 %v6405, %v6401
    %v6407 = vrot.slane %v6406, 4
    %v6409 = vshll.u32 %v6085, 16
    %v6411 = vrot.slane %v6409, 5
    %v6412 = vsel %vm1917, %v6407, %v6411
    %v6414 = vshrl.u32 %v6086, 16
    %v6416 = vrot.slane %v6414, 4
    %v6417 = vshll.u32 %v6086, 16
    %v6419 = vrot.slane %v6417, 5
    %v6420 = vor.u32 %v6416, %v6419
    %v6421 = vrot.slane %v6420, 4
    %v6423 = vshll.u32 %v6087, 16
    %v6425 = vrot.slane %v6423, 5
    %v6426 = vsel %vm1917, %v6421, %v6425
    %v6427 = vshrl.u32 %v6087, 16
    %v6429 = vrot.slane %v6427, 4
    %v6430 = vor.u32 %v6429, %v6425
    %v6431 = vrot.slane %v6430, 4
    %v6433 = vshll.u32 %v6088, 16
    %v6435 = vrot.slane %v6433, 5
    %v6436 = vsel %vm1917, %v6431, %v6435
    %v6438 = vshrl.u32 %v6089, 16
    %v6440 = vrot.slane %v6438, 4
    %v6441 = vshll.u32 %v6089, 16
    %v6443 = vrot.slane %v6441, 5
    %v6444 = vor.u32 %v6440, %v6443
    %v6445 = vrot.slane %v6444, 4
    %v6447 = vshll.u32 %v6090, 16
    %v6449 = vrot.slane %v6447, 5
    %v6450 = vsel %vm1917, %v6445, %v6449
    %v6451 = vshrl.u32 %v6090, 16
    %v6453 = vrot.slane %v6451, 4
    %v6454 = vor.u32 %v6453, %v6449
    %v6455 = vrot.slane %v6454, 4
    %v6457 = vshll.u32 %v6091, 16
    %v6459 = vrot.slane %v6457, 5
    %v6460 = vsel %vm1917, %v6455, %v6459
    %v6462 = vshrl.u32 %v6092, 16
    %v6464 = vrot.slane %v6462, 4
    %v6465 = vshll.u32 %v6092, 16
    %v6467 = vrot.slane %v6465, 5
    %v6468 = vor.u32 %v6464, %v6467
    %v6469 = vrot.slane %v6468, 4
    %v6471 = vshll.u32 %v6093, 16
    %v6473 = vrot.slane %v6471, 5
    %v6474 = vsel %vm1917, %v6469, %v6473
    %v6475 = vshrl.u32 %v6093, 16
    %v6477 = vrot.slane %v6475, 4
    %v6478 = vor.u32 %v6477, %v6473
    %v6479 = vrot.slane %v6478, 4
    %v6481 = vshll.u32 %v6094, 16
    %v6483 = vrot.slane %v6481, 5
    %v6484 = vsel %vm1917, %v6479, %v6483
    %v6486 = vshrl.u32 %v6095, 16
    %v6488 = vrot.slane %v6486, 4
    %v6489 = vshll.u32 %v6095, 16
    %v6491 = vrot.slane %v6489, 5
    %v6492 = vor.u32 %v6488, %v6491
    %v6493 = vrot.slane %v6492, 4
    %v6495 = vshll.u32 %v6096, 16
    %v6497 = vrot.slane %v6495, 5
    %v6498 = vsel %vm1917, %v6493, %v6497
    %v6499 = vshrl.u32 %v6096, 16
    %v6501 = vrot.slane %v6499, 4
    %v6502 = vor.u32 %v6501, %v6497
    %v6503 = vrot.slane %v6502, 4
    %v6505 = vshll.u32 %v6097, 16
    %v6507 = vrot.slane %v6505, 5
    %v6508 = vsel %vm1917, %v6503, %v6507
    %v6510 = vshrl.u32 %v6098, 16
    %v6512 = vrot.slane %v6510, 4
    %v6513 = vshll.u32 %v6098, 16
    %v6515 = vrot.slane %v6513, 5
    %v6516 = vor.u32 %v6512, %v6515
    %v6517 = vrot.slane %v6516, 4
    %v6519 = vshll.u32 %v6099, 16
    %v6521 = vrot.slane %v6519, 5
    %v6522 = vsel %vm1917, %v6517, %v6521
    %v6523 = vshrl.u32 %v6099, 16
    %v6525 = vrot.slane %v6523, 4
    %v6526 = vor.u32 %v6525, %v6521
    %v6527 = vrot.slane %v6526, 4
    %v6529 = vshll.u32 %v6100, 16
    %v6531 = vrot.slane %v6529, 5
    %v6532 = vsel %vm1917, %v6527, %v6531
    %v6534 = vshrl.u32 %v6101, 16
    %v6536 = vrot.slane %v6534, 4
    %v6537 = vshll.u32 %v6101, 16
    %v6539 = vrot.slane %v6537, 5
    %v6540 = vor.u32 %v6536, %v6539
    %v6541 = vrot.slane %v6540, 4
    %v6543 = vshll.u32 %v6102, 16
    %v6545 = vrot.slane %v6543, 5
    %v6546 = vsel %vm1917, %v6541, %v6545
    %v6547 = vshrl.u32 %v6102, 16
    %v6549 = vrot.slane %v6547, 4
    %v6550 = vor.u32 %v6549, %v6545
    %v6551 = vrot.slane %v6550, 4
    %v6553 = vshll.u32 %v6103, 16
    %v6555 = vrot.slane %v6553, 5
    %v6556 = vsel %vm1917, %v6551, %v6555
    %v6558 = vshrl.u32 %v6104, 16
    %v6560 = vrot.slane %v6558, 4
    %v6561 = vshll.u32 %v6104, 16
    %v6563 = vrot.slane %v6561, 5
    %v6564 = vor.u32 %v6560, %v6563
    %v6565 = vrot.slane %v6564, 4
    %v6567 = vshll.u32 %v6105, 16
    %v6569 = vrot.slane %v6567, 5
    %v6570 = vsel %vm1917, %v6565, %v6569
    %v6571 = vshrl.u32 %v6105, 16
    %v6573 = vrot.slane %v6571, 4
    %v6574 = vor.u32 %v6573, %v6569
    %v6575 = vrot.slane %v6574, 4
    %v6577 = vshll.u32 %v6106, 16
    %v6579 = vrot.slane %v6577, 5
    %v6580 = vsel %vm1917, %v6575, %v6579
    %v6582 = vshrl.u32 %v6107, 16
    %v6584 = vrot.slane %v6582, 4
    %v6585 = vshll.u32 %v6107, 16
    %v6587 = vrot.slane %v6585, 5
    %v6588 = vor.u32 %v6584, %v6587
    %v6589 = vrot.slane %v6588, 4
    %v6591 = vshll.u32 %v6108, 16
    %v6593 = vrot.slane %v6591, 5
    %v6594 = vsel %vm1917, %v6589, %v6593
    %v6595 = vshrl.u32 %v6108, 16
    %v6597 = vrot.slane %v6595, 4
    %v6598 = vor.u32 %v6597, %v6593
    %v6599 = vrot.slane %v6598, 4
    %v6601 = vshll.u32 %v6109, 16
    %v6603 = vrot.slane %v6601, 5
    %v6604 = vsel %vm1917, %v6599, %v6603
    %v6606 = vshrl.u32 %v6110, 16
    %v6608 = vrot.slane %v6606, 4
    %v6609 = vshll.u32 %v6110, 16
    %v6611 = vrot.slane %v6609, 5
    %v6612 = vor.u32 %v6608, %v6611
    %v6613 = vrot.slane %v6612, 4
    %v6615 = vshll.u32 %v6111, 16
    %v6617 = vrot.slane %v6615, 5
    %v6618 = vsel %vm1917, %v6613, %v6617
    %v6619 = vshrl.u32 %v6111, 16
    %v6621 = vrot.slane %v6619, 4
    %v6622 = vor.u32 %v6621, %v6617
    %v6623 = vrot.slane %v6622, 4
    %v6625 = vshll.u32 %v6112, 16
    %v6627 = vrot.slane %v6625, 5
    %v6628 = vsel %vm1917, %v6623, %v6627
    %v6630 = vshrl.u32 %v6113, 16
    %v6632 = vrot.slane %v6630, 4
    %v6633 = vshll.u32 %v6113, 16
    %v6635 = vrot.slane %v6633, 5
    %v6636 = vor.u32 %v6632, %v6635
    %v6637 = vrot.slane %v6636, 4
    %v6639 = vshll.u32 %v6114, 16
    %v6641 = vrot.slane %v6639, 5
    %v6642 = vsel %vm1917, %v6637, %v6641
    %v6643 = vshrl.u32 %v6114, 16
    %v6645 = vrot.slane %v6643, 4
    %v6646 = vor.u32 %v6645, %v6641
    %v6647 = vrot.slane %v6646, 4
    %v6649 = vshll.u32 %v6115, 16
    %v6651 = vrot.slane %v6649, 5
    %v6652 = vsel %vm1917, %v6647, %v6651
    %v6654 = vshrl.u32 %v6116, 16
    %v6656 = vrot.slane %v6654, 4
    %v6657 = vshll.u32 %v6116, 16
    %v6659 = vrot.slane %v6657, 5
    %v6660 = vor.u32 %v6656, %v6659
    %v6661 = vrot.slane %v6660, 4
    %v6663 = vshll.u32 %v6117, 16
    %v6665 = vrot.slane %v6663, 5
    %v6666 = vsel %vm1917, %v6661, %v6665
    %v6667 = vshrl.u32 %v6117, 16
    %v6669 = vrot.slane %v6667, 4
    %v6670 = vor.u32 %v6669, %v6665
    %v6671 = vrot.slane %v6670, 4
    %v6673 = vshll.u32 %v6118, 16
    %v6675 = vrot.slane %v6673, 5
    %v6676 = vsel %vm1917, %v6671, %v6675
    %v6678 = vshrl.u32 %v6119, 16
    %v6680 = vrot.slane %v6678, 4
    %v6681 = vshll.u32 %v6119, 16
    %v6683 = vrot.slane %v6681, 5
    %v6684 = vor.u32 %v6680, %v6683
    %v6685 = vrot.slane %v6684, 4
    %v6687 = vshll.u32 %v6120, 16
    %v6689 = vrot.slane %v6687, 5
    %v6690 = vsel %vm1917, %v6685, %v6689
    %v6691 = vshrl.u32 %v6120, 16
    %v6693 = vrot.slane %v6691, 4
    %v6694 = vor.u32 %v6693, %v6689
    %v6695 = vrot.slane %v6694, 4
    %v6697 = vshll.u32 %v6121, 16
    %v6699 = vrot.slane %v6697, 5
    %v6700 = vsel %vm1917, %v6695, %v6699
    %v6702 = vshrl.u32 %v6122, 16
    %v6704 = vrot.slane %v6702, 4
    %v6705 = vshll.u32 %v6122, 16
    %v6707 = vrot.slane %v6705, 5
    %v6708 = vor.u32 %v6704, %v6707
    %v6709 = vrot.slane %v6708, 4
    %v6711 = vshll.u32 %v6123, 16
    %v6713 = vrot.slane %v6711, 5
    %v6714 = vsel %vm1917, %v6709, %v6713
    %v6715 = vshrl.u32 %v6123, 16
    %v6717 = vrot.slane %v6715, 4
    %v6718 = vor.u32 %v6717, %v6713
    %v6719 = vrot.slane %v6718, 4
    %v6721 = vshll.u32 %v6124, 16
    %v6723 = vrot.slane %v6721, 5
    %v6724 = vsel %vm1917, %v6719, %v6723
    %v6726 = vshrl.u32 %v6125, 16
    %v6728 = vrot.slane %v6726, 4
    %v6729 = vshll.u32 %v6125, 16
    %v6731 = vrot.slane %v6729, 5
    %v6732 = vor.u32 %v6728, %v6731
    %v6733 = vrot.slane %v6732, 4
    %v6735 = vshll.u32 %v6126, 16
    %v6737 = vrot.slane %v6735, 5
    %v6738 = vsel %vm1917, %v6733, %v6737
    %v6739 = vshrl.u32 %v6126, 16
    %v6741 = vrot.slane %v6739, 4
    %v6742 = vor.u32 %v6741, %v6737
    %v6743 = vrot.slane %v6742, 4
    %v6745 = vshll.u32 %v6127, 16
    %v6747 = vrot.slane %v6745, 5
    %v6748 = vsel %vm1917, %v6743, %v6747
    %v6750 = vshrl.u32 %v6128, 16
    %v6752 = vrot.slane %v6750, 4
    %v6753 = vshll.u32 %v6128, 16
    %v6755 = vrot.slane %v6753, 5
    %v6756 = vor.u32 %v6752, %v6755
    %v6757 = vrot.slane %v6756, 4
    %v6759 = vshll.u32 %v6129, 16
    %v6761 = vrot.slane %v6759, 5
    %v6762 = vsel %vm1917, %v6757, %v6761
    %v6763 = vshrl.u32 %v6129, 16
    %v6765 = vrot.slane %v6763, 4
    %v6766 = vor.u32 %v6765, %v6761
    %v6767 = vrot.slane %v6766, 4
    %v6769 = vshll.u32 %v6130, 16
    %v6771 = vrot.slane %v6769, 5
    %v6772 = vsel %vm1917, %v6767, %v6771
    %v6774 = vshrl.u32 %v6131, 16
    %v6776 = vrot.slane %v6774, 4
    %v6777 = vshll.u32 %v6131, 16
    %v6779 = vrot.slane %v6777, 5
    %v6780 = vor.u32 %v6776, %v6779
    %v6781 = vrot.slane %v6780, 4
    %v6783 = vshll.u32 %v6132, 16
    %v6785 = vrot.slane %v6783, 5
    %v6786 = vsel %vm1917, %v6781, %v6785
    %v6787 = vshrl.u32 %v6132, 16
    %v6789 = vrot.slane %v6787, 4
    %v6790 = vor.u32 %v6789, %v6785
    %v6791 = vrot.slane %v6790, 4
    %v6793 = vshll.u32 %v6133, 16
    %v6795 = vrot.slane %v6793, 5
    %v6796 = vsel %vm1917, %v6791, %v6795
    %v6798 = vshrl.u32 %v6134, 16
    %v6800 = vrot.slane %v6798, 4
    %v6801 = vshll.u32 %v6134, 16
    %v6803 = vrot.slane %v6801, 5
    %v6804 = vor.u32 %v6800, %v6803
    %v6805 = vrot.slane %v6804, 4
    %v6807 = vshll.u32 %v6135, 16
    %v6809 = vrot.slane %v6807, 5
    %v6810 = vsel %vm1917, %v6805, %v6809
    %v6811 = vshrl.u32 %v6135, 16
    %v6813 = vrot.slane %v6811, 4
    %v6814 = vor.u32 %v6813, %v6809
    %v6815 = vrot.slane %v6814, 4
    %v6817 = vshll.u32 %v6136, 16
    %v6819 = vrot.slane %v6817, 5
    %v6820 = vsel %vm1917, %v6815, %v6819
    %v6822 = vshrl.u32 %v6137, 16
    %v6824 = vrot.slane %v6822, 4
    %v6825 = vshll.u32 %v6137, 16
    %v6827 = vrot.slane %v6825, 5
    %v6828 = vor.u32 %v6824, %v6827
    %v6829 = vrot.slane %v6828, 4
    %v6831 = vshll.u32 %v6138, 16
    %v6833 = vrot.slane %v6831, 5
    %v6834 = vsel %vm1917, %v6829, %v6833
    %v6835 = vshrl.u32 %v6138, 16
    %v6837 = vrot.slane %v6835, 4
    %v6838 = vor.u32 %v6837, %v6833
    %v6839 = vrot.slane %v6838, 4
    %v6841 = vshll.u32 %v6139, 16
    %v6843 = vrot.slane %v6841, 5
    %v6844 = vsel %vm1917, %v6839, %v6843
    %v6846 = vshrl.u32 %v6140, 16
    %v6848 = vrot.slane %v6846, 4
    %v6849 = vshll.u32 %v6140, 16
    %v6851 = vrot.slane %v6849, 5
    %v6852 = vor.u32 %v6848, %v6851
    %v6853 = vrot.slane %v6852, 4
    %v6855 = vshll.u32 %v6141, 16
    %v6857 = vrot.slane %v6855, 5
    %v6858 = vsel %vm1917, %v6853, %v6857
    %v6859 = vshrl.u32 %v6141, 16
    %v6861 = vrot.slane %v6859, 4
    %v6862 = vor.u32 %v6861, %v6857
    %v6863 = vrot.slane %v6862, 4
    %v6865 = vshll.u32 %v6142, 16
    %v6867 = vrot.slane %v6865, 5
    %v6868 = vsel %vm1917, %v6863, %v6867
    %v6870 = vshrl.u32 %v6143, 16
    %v6872 = vrot.slane %v6870, 4
    %v6873 = vshll.u32 %v6143, 16
    %v6875 = vrot.slane %v6873, 5
    %v6876 = vor.u32 %v6872, %v6875
    %v6877 = vrot.slane %v6876, 4
    %v6879 = vshll.u32 %v6144, 16
    %v6881 = vrot.slane %v6879, 5
    %v6882 = vsel %vm1917, %v6877, %v6881
    %v6883 = vshrl.u32 %v6144, 16
    %v6885 = vrot.slane %v6883, 4
    %v6886 = vor.u32 %v6885, %v6881
    %v6887 = vrot.slane %v6886, 4
    %v6889 = vshll.u32 %v6145, 16
    %v6891 = vrot.slane %v6889, 5
    %v6892 = vsel %vm1917, %v6887, %v6891
    %v6894 = vshrl.u32 %v6146, 16
    %v6896 = vrot.slane %v6894, 4
    %v6897 = vshll.u32 %v6146, 16
    %v6899 = vrot.slane %v6897, 5
    %v6900 = vor.u32 %v6896, %v6899
    %v6901 = vrot.slane %v6900, 4
    %v6903 = vshll.u32 %v6147, 16
    %v6905 = vrot.slane %v6903, 5
    %v6906 = vsel %vm1917, %v6901, %v6905
    %v6907 = vshrl.u32 %v6147, 16
    %v6909 = vrot.slane %v6907, 4
    %v6910 = vor.u32 %v6909, %v6905
    %v6911 = vrot.slane %v6910, 4
    %v6913 = vshll.u32 %v6148, 16
    %v6915 = vrot.slane %v6913, 5
    %v6916 = vsel %vm1917, %v6911, %v6915
    %6917 = vrot.lane.b32.xlu0 %v6162, 96
    %v6918 = vpop.permute.xlu0 %6917
    %6919 = vrot.lane.b32.xlu0 %v6172, 96
    %v6920 = vpop.permute.xlu0 %6919
    %6921 = vrot.lane.b32.xlu0 %v6186, 96
    %v6922 = vpop.permute.xlu0 %6921
    %6923 = vrot.lane.b32.xlu0 %v6196, 96
    %v6924 = vpop.permute.xlu0 %6923
    %6925 = vrot.lane.b32.xlu0 %v6210, 96
    %v6926 = vpop.permute.xlu0 %6925
    %6927 = vrot.lane.b32.xlu0 %v6220, 96
    %v6928 = vpop.permute.xlu0 %6927
    %6929 = vrot.lane.b32.xlu0 %v6234, 96
    %v6930 = vpop.permute.xlu0 %6929
    %6931 = vrot.lane.b32.xlu0 %v6244, 96
    %v6932 = vpop.permute.xlu0 %6931
    %6933 = vrot.lane.b32.xlu0 %v6258, 96
    %v6934 = vpop.permute.xlu0 %6933
    %6935 = vrot.lane.b32.xlu0 %v6268, 96
    %v6936 = vpop.permute.xlu0 %6935
    %6937 = vrot.lane.b32.xlu0 %v6282, 96
    %v6938 = vpop.permute.xlu0 %6937
    %6939 = vrot.lane.b32.xlu0 %v6292, 96
    %v6940 = vpop.permute.xlu0 %6939
    %6941 = vrot.lane.b32.xlu0 %v6306, 96
    %v6942 = vpop.permute.xlu0 %6941
    %6943 = vrot.lane.b32.xlu0 %v6316, 96
    %v6944 = vpop.permute.xlu0 %6943
    %6945 = vrot.lane.b32.xlu0 %v6330, 96
    %v6946 = vpop.permute.xlu0 %6945
    %6947 = vrot.lane.b32.xlu0 %v6340, 96
    %v6948 = vpop.permute.xlu0 %6947
    %6949 = vrot.lane.b32.xlu0 %v6354, 96
    %v6950 = vpop.permute.xlu0 %6949
    %6951 = vrot.lane.b32.xlu0 %v6364, 96
    %v6952 = vpop.permute.xlu0 %6951
    %6953 = vrot.lane.b32.xlu0 %v6378, 96
    %v6954 = vpop.permute.xlu0 %6953
    %6955 = vrot.lane.b32.xlu0 %v6388, 96
    %v6956 = vpop.permute.xlu0 %6955
    %6957 = vrot.lane.b32.xlu0 %v6402, 96
    %v6958 = vpop.permute.xlu0 %6957
    %6959 = vrot.lane.b32.xlu0 %v6412, 96
    %v6960 = vpop.permute.xlu0 %6959
    %6961 = vrot.lane.b32.xlu0 %v6426, 96
    %v6962 = vpop.permute.xlu0 %6961
    %6963 = vrot.lane.b32.xlu0 %v6436, 96
    %v6964 = vpop.permute.xlu0 %6963
    %6965 = vrot.lane.b32.xlu0 %v6450, 96
    %v6966 = vpop.permute.xlu0 %6965
    %6967 = vrot.lane.b32.xlu0 %v6460, 96
    %v6968 = vpop.permute.xlu0 %6967
    %6969 = vrot.lane.b32.xlu0 %v6474, 96
    %v6970 = vpop.permute.xlu0 %6969
    %6971 = vrot.lane.b32.xlu0 %v6484, 96
    %v6972 = vpop.permute.xlu0 %6971
    %6973 = vrot.lane.b32.xlu0 %v6498, 96
    %v6974 = vpop.permute.xlu0 %6973
    %6975 = vrot.lane.b32.xlu0 %v6508, 96
    %v6976 = vpop.permute.xlu0 %6975
    %6977 = vrot.lane.b32.xlu0 %v6522, 96
    %v6978 = vpop.permute.xlu0 %6977
    %6979 = vrot.lane.b32.xlu0 %v6532, 96
    %v6980 = vpop.permute.xlu0 %6979
    %6981 = vrot.lane.b32.xlu0 %v6546, 96
    %v6982 = vpop.permute.xlu0 %6981
    %6983 = vrot.lane.b32.xlu0 %v6556, 96
    %v6984 = vpop.permute.xlu0 %6983
    %6985 = vrot.lane.b32.xlu0 %v6570, 96
    %v6986 = vpop.permute.xlu0 %6985
    %6987 = vrot.lane.b32.xlu0 %v6580, 96
    %v6988 = vpop.permute.xlu0 %6987
    %6989 = vrot.lane.b32.xlu0 %v6594, 96
    %v6990 = vpop.permute.xlu0 %6989
    %6991 = vrot.lane.b32.xlu0 %v6604, 96
    %v6992 = vpop.permute.xlu0 %6991
    %6993 = vrot.lane.b32.xlu0 %v6618, 96
    %v6994 = vpop.permute.xlu0 %6993
    %6995 = vrot.lane.b32.xlu0 %v6628, 96
    %v6996 = vpop.permute.xlu0 %6995
    %6997 = vrot.lane.b32.xlu0 %v6642, 96
    %v6998 = vpop.permute.xlu0 %6997
    %6999 = vrot.lane.b32.xlu0 %v6652, 96
    %v7000 = vpop.permute.xlu0 %6999
    %7001 = vrot.lane.b32.xlu0 %v6666, 96
    %v7002 = vpop.permute.xlu0 %7001
    %7003 = vrot.lane.b32.xlu0 %v6676, 96
    %v7004 = vpop.permute.xlu0 %7003
    %7005 = vrot.lane.b32.xlu0 %v6690, 96
    %v7006 = vpop.permute.xlu0 %7005
    %7007 = vrot.lane.b32.xlu0 %v6700, 96
    %v7008 = vpop.permute.xlu0 %7007
    %7009 = vrot.lane.b32.xlu0 %v6714, 96
    %v7010 = vpop.permute.xlu0 %7009
    %7011 = vrot.lane.b32.xlu0 %v6724, 96
    %v7012 = vpop.permute.xlu0 %7011
    %7013 = vrot.lane.b32.xlu0 %v6738, 96
    %v7014 = vpop.permute.xlu0 %7013
    %7015 = vrot.lane.b32.xlu0 %v6748, 96
    %v7016 = vpop.permute.xlu0 %7015
    %7017 = vrot.lane.b32.xlu0 %v6762, 96
    %v7018 = vpop.permute.xlu0 %7017
    %7019 = vrot.lane.b32.xlu0 %v6772, 96
    %v7020 = vpop.permute.xlu0 %7019
    %7021 = vrot.lane.b32.xlu0 %v6786, 96
    %v7022 = vpop.permute.xlu0 %7021
    %7023 = vrot.lane.b32.xlu0 %v6796, 96
    %v7024 = vpop.permute.xlu0 %7023
    %7025 = vrot.lane.b32.xlu0 %v6810, 96
    %v7026 = vpop.permute.xlu0 %7025
    %7027 = vrot.lane.b32.xlu0 %v6820, 96
    %v7028 = vpop.permute.xlu0 %7027
    %7029 = vrot.lane.b32.xlu0 %v6834, 96
    %v7030 = vpop.permute.xlu0 %7029
    %7031 = vrot.lane.b32.xlu0 %v6844, 96
    %v7032 = vpop.permute.xlu0 %7031
    %7033 = vrot.lane.b32.xlu0 %v6858, 96
    %v7034 = vpop.permute.xlu0 %7033
    %7035 = vrot.lane.b32.xlu0 %v6868, 96
    %v7036 = vpop.permute.xlu0 %7035
    %7037 = vrot.lane.b32.xlu0 %v6882, 96
    %v7038 = vpop.permute.xlu0 %7037
    %7039 = vrot.lane.b32.xlu0 %v6892, 96
    %v7040 = vpop.permute.xlu0 %7039
    %7041 = vrot.lane.b32.xlu0 %v6906, 96
    %v7042 = vpop.permute.xlu0 %7041
    %7043 = vrot.lane.b32.xlu0 %v6916, 96
    %v7044 = vpop.permute.xlu0 %7043
    %7109 = vst.msk [vmem:[#allocation3 + $0x4] sm:$0xf] %vm3939, %v6918
    %7110 = vst.msk [vmem:[#allocation3 + $0x10] sm:$0xf] %vm3939, %v6920
    %7111 = vst.msk [vmem:[#allocation3 + $0x1c] sm:$0xf] %vm3939, %v6922
    %7112 = vst.msk [vmem:[#allocation3 + $0x28] sm:$0xf] %vm3939, %v6924
    %7113 = vst.msk [vmem:[#allocation3 + $0x34] sm:$0xf] %vm3939, %v6926
    %7114 = vst.msk [vmem:[#allocation3 + $0x40] sm:$0xf] %vm3939, %v6928
    %7115 = vst.msk [vmem:[#allocation3 + $0x4c] sm:$0xf] %vm3939, %v6930
    %7116 = vst.msk [vmem:[#allocation3 + $0x58] sm:$0xf] %vm3939, %v6932
    %7117 = vst.msk [vmem:[#allocation3 + $0x64] sm:$0xf] %vm3939, %v6934
    %7118 = vst.msk [vmem:[#allocation3 + $0x70] sm:$0xf] %vm3939, %v6936
    %7119 = vst.msk [vmem:[#allocation3 + $0x7c] sm:$0xf] %vm3939, %v6938
    %7120 = vst.msk [vmem:[#allocation3 + $0x88] sm:$0xf] %vm3939, %v6940
    %7121 = vst.msk [vmem:[#allocation3 + $0x94] sm:$0xf] %vm3939, %v6942
    %7122 = vst.msk [vmem:[#allocation3 + $0xa0] sm:$0xf] %vm3939, %v6944
    %7123 = vst.msk [vmem:[#allocation3 + $0xac] sm:$0xf] %vm3939, %v6946
    %7124 = vst.msk [vmem:[#allocation3 + $0xb8] sm:$0xf] %vm3939, %v6948
    %7125 = vst.msk [vmem:[#allocation3 + $0xc4] sm:$0xf] %vm3939, %v6950
    %7126 = vst.msk [vmem:[#allocation3 + $0xd0] sm:$0xf] %vm3939, %v6952
    %7127 = vst.msk [vmem:[#allocation3 + $0xdc] sm:$0xf] %vm3939, %v6954
    %7128 = vst.msk [vmem:[#allocation3 + $0xe8] sm:$0xf] %vm3939, %v6956
    %7129 = vst.msk [vmem:[#allocation3 + $0xf4] sm:$0xf] %vm3939, %v6958
    %7130 = vst.msk [vmem:[#allocation3 + $0x100] sm:$0xf] %vm3939, %v6960
    %7131 = vst.msk [vmem:[#allocation3 + $0x10c] sm:$0xf] %vm3939, %v6962
    %7132 = vst.msk [vmem:[#allocation3 + $0x118] sm:$0xf] %vm3939, %v6964
    %7133 = vst.msk [vmem:[#allocation3 + $0x124] sm:$0xf] %vm3939, %v6966
    %7134 = vst.msk [vmem:[#allocation3 + $0x130] sm:$0xf] %vm3939, %v6968
    %7135 = vst.msk [vmem:[#allocation3 + $0x13c] sm:$0xf] %vm3939, %v6970
    %7136 = vst.msk [vmem:[#allocation3 + $0x148] sm:$0xf] %vm3939, %v6972
    %7137 = vst.msk [vmem:[#allocation3 + $0x154] sm:$0xf] %vm3939, %v6974
    %7138 = vst.msk [vmem:[#allocation3 + $0x160] sm:$0xf] %vm3939, %v6976
    %7139 = vst.msk [vmem:[#allocation3 + $0x16c] sm:$0xf] %vm3939, %v6978
    %7140 = vst.msk [vmem:[#allocation3 + $0x178] sm:$0xf] %vm3939, %v6980
    %7141 = vst.msk [vmem:[#allocation3 + $0x184] sm:$0xf] %vm3939, %v6982
    %7142 = vst.msk [vmem:[#allocation3 + $0x190] sm:$0xf] %vm3939, %v6984
    %7143 = vst.msk [vmem:[#allocation3 + $0x19c] sm:$0xf] %vm3939, %v6986
    %7144 = vst.msk [vmem:[#allocation3 + $0x1a8] sm:$0xf] %vm3939, %v6988
    %7145 = vst.msk [vmem:[#allocation3 + $0x1b4] sm:$0xf] %vm3939, %v6990
    %7146 = vst.msk [vmem:[#allocation3 + $0x1c0] sm:$0xf] %vm3939, %v6992
    %7147 = vst.msk [vmem:[#allocation3 + $0x1cc] sm:$0xf] %vm3939, %v6994
    %7148 = vst.msk [vmem:[#allocation3 + $0x1d8] sm:$0xf] %vm3939, %v6996
    %7149 = vst.msk [vmem:[#allocation3 + $0x1e4] sm:$0xf] %vm3939, %v6998
    %7150 = vst.msk [vmem:[#allocation3 + $0x1f0] sm:$0xf] %vm3939, %v7000
    %7151 = vst.msk [vmem:[#allocation3 + $0x1fc] sm:$0xf] %vm3939, %v7002
    %7152 = vst.msk [vmem:[#allocation3 + $0x208] sm:$0xf] %vm3939, %v7004
    %7153 = vst.msk [vmem:[#allocation3 + $0x214] sm:$0xf] %vm3939, %v7006
    %7154 = vst.msk [vmem:[#allocation3 + $0x220] sm:$0xf] %vm3939, %v7008
    %7155 = vst.msk [vmem:[#allocation3 + $0x22c] sm:$0xf] %vm3939, %v7010
    %7156 = vst.msk [vmem:[#allocation3 + $0x238] sm:$0xf] %vm3939, %v7012
    %7157 = vst.msk [vmem:[#allocation3 + $0x244] sm:$0xf] %vm3939, %v7014
    %7158 = vst.msk [vmem:[#allocation3 + $0x250] sm:$0xf] %vm3939, %v7016
    %7159 = vst.msk [vmem:[#allocation3 + $0x25c] sm:$0xf] %vm3939, %v7018
    %7160 = vst.msk [vmem:[#allocation3 + $0x268] sm:$0xf] %vm3939, %v7020
    %7161 = vst.msk [vmem:[#allocation3 + $0x274] sm:$0xf] %vm3939, %v7022
    %7162 = vst.msk [vmem:[#allocation3 + $0x280] sm:$0xf] %vm3939, %v7024
    %7163 = vst.msk [vmem:[#allocation3 + $0x28c] sm:$0xf] %vm3939, %v7026
    %7164 = vst.msk [vmem:[#allocation3 + $0x298] sm:$0xf] %vm3939, %v7028
    %7165 = vst.msk [vmem:[#allocation3 + $0x2a4] sm:$0xf] %vm3939, %v7030
    %7166 = vst.msk [vmem:[#allocation3 + $0x2b0] sm:$0xf] %vm3939, %v7032
    %7167 = vst.msk [vmem:[#allocation3 + $0x2bc] sm:$0xf] %vm3939, %v7034
    %7168 = vst.msk [vmem:[#allocation3 + $0x2c8] sm:$0xf] %vm3939, %v7036
    %7169 = vst.msk [vmem:[#allocation3 + $0x2d4] sm:$0xf] %vm3939, %v7038
    %7170 = vst.msk [vmem:[#allocation3 + $0x2e0] sm:$0xf] %vm3939, %v7040
    %7171 = vst.msk [vmem:[#allocation3 + $0x2ec] sm:$0xf] %vm3939, %v7042
    %7172 = vst.msk [vmem:[#allocation3 + $0x2f8] sm:$0xf] %vm3939, %v7044
    %v7173 = vld [vmem:[%s5668] sm:$0xe]
    %v7174 = vld [vmem:[%s5668 + $0x4] sm:$0xf]
    %v7175 = vld [vmem:[%s5668 + $0x8] sm:$0x1]
    %v7176 = vld [vmem:[%s5668 + $0xc] sm:$0xe]
    %v7177 = vld [vmem:[%s5668 + $0x10] sm:$0xf]
    %v7178 = vld [vmem:[%s5668 + $0x14] sm:$0x1]
    %v7179 = vld [vmem:[%s5668 + $0x18] sm:$0xe]
    %v7180 = vld [vmem:[%s5668 + $0x1c] sm:$0xf]
    %v7181 = vld [vmem:[%s5668 + $0x20] sm:$0x1]
    %v7182 = vld [vmem:[%s5668 + $0x24] sm:$0xe]
    %v7183 = vld [vmem:[%s5668 + $0x28] sm:$0xf]
    %v7184 = vld [vmem:[%s5668 + $0x2c] sm:$0x1]
    %v7185 = vld [vmem:[%s5668 + $0x30] sm:$0xe]
    %v7186 = vld [vmem:[%s5668 + $0x34] sm:$0xf]
    %v7187 = vld [vmem:[%s5668 + $0x38] sm:$0x1]
    %v7188 = vld [vmem:[%s5668 + $0x3c] sm:$0xe]
    %v7189 = vld [vmem:[%s5668 + $0x40] sm:$0xf]
    %v7190 = vld [vmem:[%s5668 + $0x44] sm:$0x1]
    %v7191 = vld [vmem:[%s5668 + $0x48] sm:$0xe]
    %v7192 = vld [vmem:[%s5668 + $0x4c] sm:$0xf]
    %v7193 = vld [vmem:[%s5668 + $0x50] sm:$0x1]
    %v7194 = vld [vmem:[%s5668 + $0x54] sm:$0xe]
    %v7195 = vld [vmem:[%s5668 + $0x58] sm:$0xf]
    %v7196 = vld [vmem:[%s5668 + $0x5c] sm:$0x1]
    %v7197 = vld [vmem:[%s5668 + $0x60] sm:$0xe]
    %v7198 = vld [vmem:[%s5668 + $0x64] sm:$0xf]
    %v7199 = vld [vmem:[%s5668 + $0x68] sm:$0x1]
    %v7200 = vld [vmem:[%s5668 + $0x6c] sm:$0xe]
    %v7201 = vld [vmem:[%s5668 + $0x70] sm:$0xf]
    %v7202 = vld [vmem:[%s5668 + $0x74] sm:$0x1]
    %v7203 = vld [vmem:[%s5668 + $0x78] sm:$0xe]
    %v7204 = vld [vmem:[%s5668 + $0x7c] sm:$0xf]
    %v7205 = vld [vmem:[%s5668 + $0x80] sm:$0x1]
    %v7206 = vld [vmem:[%s5668 + $0x84] sm:$0xe]
    %v7207 = vld [vmem:[%s5668 + $0x88] sm:$0xf]
    %v7208 = vld [vmem:[%s5668 + $0x8c] sm:$0x1]
    %v7209 = vld [vmem:[%s5668 + $0x90] sm:$0xe]
    %v7210 = vld [vmem:[%s5668 + $0x94] sm:$0xf]
    %v7211 = vld [vmem:[%s5668 + $0x98] sm:$0x1]
    %v7212 = vld [vmem:[%s5668 + $0x9c] sm:$0xe]
    %v7213 = vld [vmem:[%s5668 + $0xa0] sm:$0xf]
    %v7214 = vld [vmem:[%s5668 + $0xa4] sm:$0x1]
    %v7215 = vld [vmem:[%s5668 + $0xa8] sm:$0xe]
    %v7216 = vld [vmem:[%s5668 + $0xac] sm:$0xf]
    %v7217 = vld [vmem:[%s5668 + $0xb0] sm:$0x1]
    %v7218 = vld [vmem:[%s5668 + $0xb4] sm:$0xe]
    %v7219 = vld [vmem:[%s5668 + $0xb8] sm:$0xf]
    %v7220 = vld [vmem:[%s5668 + $0xbc] sm:$0x1]
    %v7221 = vld [vmem:[%s5668 + $0xd8] sm:$0xe]
    %v7222 = vld [vmem:[%s5668 + $0xdc] sm:$0xf]
    %v7223 = vld [vmem:[%s5668 + $0xe0] sm:$0x1]
    %v7224 = vld [vmem:[%s5668 + $0xe4] sm:$0xe]
    %v7225 = vld [vmem:[%s5668 + $0xe8] sm:$0xf]
    %v7226 = vld [vmem:[%s5668 + $0xec] sm:$0x1]
    %v7227 = vld [vmem:[%s5668 + $0xf0] sm:$0xe]
    %v7228 = vld [vmem:[%s5668 + $0xf4] sm:$0xf]
    %v7229 = vld [vmem:[%s5668 + $0xf8] sm:$0x1]
    %v7230 = vld [vmem:[%s5668 + $0xfc] sm:$0xe]
    %v7231 = vld [vmem:[%s5668 + $0x100] sm:$0xf]
    %v7232 = vld [vmem:[%s5668 + $0x104] sm:$0x1]
    %v7233 = vld [vmem:[%s5668 + $0x108] sm:$0xe]
    %v7234 = vld [vmem:[%s5668 + $0x10c] sm:$0xf]
    %v7235 = vld [vmem:[%s5668 + $0x110] sm:$0x1]
    %v7236 = vld [vmem:[%s5668 + $0x114] sm:$0xe]
    %v7237 = vld [vmem:[%s5668 + $0x118] sm:$0xf]
    %v7238 = vld [vmem:[%s5668 + $0x11c] sm:$0x1]
    %v7239 = vld [vmem:[%s5668 + $0x120] sm:$0xe]
    %v7240 = vld [vmem:[%s5668 + $0x124] sm:$0xf]
    %v7241 = vld [vmem:[%s5668 + $0x128] sm:$0x1]
    %v7242 = vld [vmem:[%s5668 + $0x12c] sm:$0xe]
    %v7243 = vld [vmem:[%s5668 + $0x130] sm:$0xf]
    %v7244 = vld [vmem:[%s5668 + $0x134] sm:$0x1]
    %v7245 = vld [vmem:[%s5668 + $0x138] sm:$0xe]
    %v7246 = vld [vmem:[%s5668 + $0x13c] sm:$0xf]
    %v7247 = vld [vmem:[%s5668 + $0x140] sm:$0x1]
    %v7248 = vld [vmem:[%s5668 + $0x144] sm:$0xe]
    %v7249 = vld [vmem:[%s5668 + $0x148] sm:$0xf]
    %v7250 = vld [vmem:[%s5668 + $0x14c] sm:$0x1]
    %v7251 = vld [vmem:[%s5668 + $0x150] sm:$0xe]
    %v7252 = vld [vmem:[%s5668 + $0x154] sm:$0xf]
    %v7253 = vld [vmem:[%s5668 + $0x158] sm:$0x1]
    %v7254 = vld [vmem:[%s5668 + $0x15c] sm:$0xe]
    %v7255 = vld [vmem:[%s5668 + $0x160] sm:$0xf]
    %v7256 = vld [vmem:[%s5668 + $0x164] sm:$0x1]
    %v7257 = vld [vmem:[%s5668 + $0x168] sm:$0xe]
    %v7258 = vld [vmem:[%s5668 + $0x16c] sm:$0xf]
    %v7259 = vld [vmem:[%s5668 + $0x170] sm:$0x1]
    %v7260 = vld [vmem:[%s5668 + $0x174] sm:$0xe]
    %v7261 = vld [vmem:[%s5668 + $0x178] sm:$0xf]
    %v7262 = vld [vmem:[%s5668 + $0x17c] sm:$0x1]
    %v7263 = vld [vmem:[%s5668 + $0x180] sm:$0xe]
    %v7264 = vld [vmem:[%s5668 + $0x184] sm:$0xf]
    %v7265 = vld [vmem:[%s5668 + $0x188] sm:$0x1]
    %v7266 = vld [vmem:[%s5668 + $0x18c] sm:$0xe]
    %v7267 = vld [vmem:[%s5668 + $0x190] sm:$0xf]
    %v7268 = vld [vmem:[%s5668 + $0x194] sm:$0x1]
    %v7365 = vrot.slane %v7173, 5
    %v7366 = vrot.slane %v7365, 4
    %v7367 = vrot.slane %v7174, 5
    %v7368 = vsel %vm3137, %v7366, %v7367
    %v7369 = vrot.slane %v7367, 4
    %v7370 = vrot.slane %v7175, 5
    %v7371 = vsel %vm3137, %v7369, %v7370
    %v7372 = vrot.slane %v7176, 5
    %v7373 = vrot.slane %v7372, 4
    %v7374 = vrot.slane %v7177, 5
    %v7375 = vsel %vm3137, %v7373, %v7374
    %v7376 = vrot.slane %v7374, 4
    %v7377 = vrot.slane %v7178, 5
    %v7378 = vsel %vm3137, %v7376, %v7377
    %v7379 = vrot.slane %v7179, 5
    %v7380 = vrot.slane %v7379, 4
    %v7381 = vrot.slane %v7180, 5
    %v7382 = vsel %vm3137, %v7380, %v7381
    %v7383 = vrot.slane %v7381, 4
    %v7384 = vrot.slane %v7181, 5
    %v7385 = vsel %vm3137, %v7383, %v7384
    %v7386 = vrot.slane %v7182, 5
    %v7387 = vrot.slane %v7386, 4
    %v7388 = vrot.slane %v7183, 5
    %v7389 = vsel %vm3137, %v7387, %v7388
    %v7390 = vrot.slane %v7388, 4
    %v7391 = vrot.slane %v7184, 5
    %v7392 = vsel %vm3137, %v7390, %v7391
    %v7393 = vrot.slane %v7185, 5
    %v7394 = vrot.slane %v7393, 4
    %v7395 = vrot.slane %v7186, 5
    %v7396 = vsel %vm3137, %v7394, %v7395
    %v7397 = vrot.slane %v7395, 4
    %v7398 = vrot.slane %v7187, 5
    %v7399 = vsel %vm3137, %v7397, %v7398
    %v7400 = vrot.slane %v7188, 5
    %v7401 = vrot.slane %v7400, 4
    %v7402 = vrot.slane %v7189, 5
    %v7403 = vsel %vm3137, %v7401, %v7402
    %v7404 = vrot.slane %v7402, 4
    %v7405 = vrot.slane %v7190, 5
    %v7406 = vsel %vm3137, %v7404, %v7405
    %v7407 = vrot.slane %v7191, 5
    %v7408 = vrot.slane %v7407, 4
    %v7409 = vrot.slane %v7192, 5
    %v7410 = vsel %vm3137, %v7408, %v7409
    %v7411 = vrot.slane %v7409, 4
    %v7412 = vrot.slane %v7193, 5
    %v7413 = vsel %vm3137, %v7411, %v7412
    %v7414 = vrot.slane %v7194, 5
    %v7415 = vrot.slane %v7414, 4
    %v7416 = vrot.slane %v7195, 5
    %v7417 = vsel %vm3137, %v7415, %v7416
    %v7418 = vrot.slane %v7416, 4
    %v7419 = vrot.slane %v7196, 5
    %v7420 = vsel %vm3137, %v7418, %v7419
    %v7421 = vrot.slane %v7197, 5
    %v7422 = vrot.slane %v7421, 4
    %v7423 = vrot.slane %v7198, 5
    %v7424 = vsel %vm3137, %v7422, %v7423
    %v7425 = vrot.slane %v7423, 4
    %v7426 = vrot.slane %v7199, 5
    %v7427 = vsel %vm3137, %v7425, %v7426
    %v7428 = vrot.slane %v7200, 5
    %v7429 = vrot.slane %v7428, 4
    %v7430 = vrot.slane %v7201, 5
    %v7431 = vsel %vm3137, %v7429, %v7430
    %v7432 = vrot.slane %v7430, 4
    %v7433 = vrot.slane %v7202, 5
    %v7434 = vsel %vm3137, %v7432, %v7433
    %v7435 = vrot.slane %v7203, 5
    %v7436 = vrot.slane %v7435, 4
    %v7437 = vrot.slane %v7204, 5
    %v7438 = vsel %vm3137, %v7436, %v7437
    %v7439 = vrot.slane %v7437, 4
    %v7440 = vrot.slane %v7205, 5
    %v7441 = vsel %vm3137, %v7439, %v7440
    %v7442 = vrot.slane %v7206, 5
    %v7443 = vrot.slane %v7442, 4
    %v7444 = vrot.slane %v7207, 5
    %v7445 = vsel %vm3137, %v7443, %v7444
    %v7446 = vrot.slane %v7444, 4
    %v7447 = vrot.slane %v7208, 5
    %v7448 = vsel %vm3137, %v7446, %v7447
    %v7449 = vrot.slane %v7209, 5
    %v7450 = vrot.slane %v7449, 4
    %v7451 = vrot.slane %v7210, 5
    %v7452 = vsel %vm3137, %v7450, %v7451
    %v7453 = vrot.slane %v7451, 4
    %v7454 = vrot.slane %v7211, 5
    %v7455 = vsel %vm3137, %v7453, %v7454
    %v7456 = vrot.slane %v7212, 5
    %v7457 = vrot.slane %v7456, 4
    %v7458 = vrot.slane %v7213, 5
    %v7459 = vsel %vm3137, %v7457, %v7458
    %v7460 = vrot.slane %v7458, 4
    %v7461 = vrot.slane %v7214, 5
    %v7462 = vsel %vm3137, %v7460, %v7461
    %v7463 = vrot.slane %v7215, 5
    %v7464 = vrot.slane %v7463, 4
    %v7465 = vrot.slane %v7216, 5
    %v7466 = vsel %vm3137, %v7464, %v7465
    %v7467 = vrot.slane %v7465, 4
    %v7468 = vrot.slane %v7217, 5
    %v7469 = vsel %vm3137, %v7467, %v7468
    %v7470 = vrot.slane %v7218, 5
    %v7471 = vrot.slane %v7470, 4
    %v7472 = vrot.slane %v7219, 5
    %v7473 = vsel %vm3137, %v7471, %v7472
    %v7474 = vrot.slane %v7472, 4
    %v7475 = vrot.slane %v7220, 5
    %v7476 = vsel %vm3137, %v7474, %v7475
    %v7477 = vrot.slane %v7221, 5
    %v7478 = vrot.slane %v7477, 4
    %v7479 = vrot.slane %v7222, 5
    %v7480 = vsel %vm3137, %v7478, %v7479
    %v7481 = vrot.slane %v7479, 4
    %v7482 = vrot.slane %v7223, 5
    %v7483 = vsel %vm3137, %v7481, %v7482
    %v7484 = vrot.slane %v7224, 5
    %v7485 = vrot.slane %v7484, 4
    %v7486 = vrot.slane %v7225, 5
    %v7487 = vsel %vm3137, %v7485, %v7486
    %v7488 = vrot.slane %v7486, 4
    %v7489 = vrot.slane %v7226, 5
    %v7490 = vsel %vm3137, %v7488, %v7489
    %v7491 = vrot.slane %v7227, 5
    %v7492 = vrot.slane %v7491, 4
    %v7493 = vrot.slane %v7228, 5
    %v7494 = vsel %vm3137, %v7492, %v7493
    %v7495 = vrot.slane %v7493, 4
    %v7496 = vrot.slane %v7229, 5
    %v7497 = vsel %vm3137, %v7495, %v7496
    %v7498 = vrot.slane %v7230, 5
    %v7499 = vrot.slane %v7498, 4
    %v7500 = vrot.slane %v7231, 5
    %v7501 = vsel %vm3137, %v7499, %v7500
    %v7502 = vrot.slane %v7500, 4
    %v7503 = vrot.slane %v7232, 5
    %v7504 = vsel %vm3137, %v7502, %v7503
    %v7505 = vrot.slane %v7233, 5
    %v7506 = vrot.slane %v7505, 4
    %v7507 = vrot.slane %v7234, 5
    %v7508 = vsel %vm3137, %v7506, %v7507
    %v7509 = vrot.slane %v7507, 4
    %v7510 = vrot.slane %v7235, 5
    %v7511 = vsel %vm3137, %v7509, %v7510
    %v7512 = vrot.slane %v7236, 5
    %v7513 = vrot.slane %v7512, 4
    %v7514 = vrot.slane %v7237, 5
    %v7515 = vsel %vm3137, %v7513, %v7514
    %v7516 = vrot.slane %v7514, 4
    %v7517 = vrot.slane %v7238, 5
    %v7518 = vsel %vm3137, %v7516, %v7517
    %v7519 = vrot.slane %v7239, 5
    %v7520 = vrot.slane %v7519, 4
    %v7521 = vrot.slane %v7240, 5
    %v7522 = vsel %vm3137, %v7520, %v7521
    %v7523 = vrot.slane %v7521, 4
    %v7524 = vrot.slane %v7241, 5
    %v7525 = vsel %vm3137, %v7523, %v7524
    %v7526 = vrot.slane %v7242, 5
    %v7527 = vrot.slane %v7526, 4
    %v7528 = vrot.slane %v7243, 5
    %v7529 = vsel %vm3137, %v7527, %v7528
    %v7530 = vrot.slane %v7528, 4
    %v7531 = vrot.slane %v7244, 5
    %v7532 = vsel %vm3137, %v7530, %v7531
    %v7533 = vrot.slane %v7245, 5
    %v7534 = vrot.slane %v7533, 4
    %v7535 = vrot.slane %v7246, 5
    %v7536 = vsel %vm3137, %v7534, %v7535
    %v7537 = vrot.slane %v7535, 4
    %v7538 = vrot.slane %v7247, 5
    %v7539 = vsel %vm3137, %v7537, %v7538
    %v7540 = vrot.slane %v7248, 5
    %v7541 = vrot.slane %v7540, 4
    %v7542 = vrot.slane %v7249, 5
    %v7543 = vsel %vm3137, %v7541, %v7542
    %v7544 = vrot.slane %v7542, 4
    %v7545 = vrot.slane %v7250, 5
    %v7546 = vsel %vm3137, %v7544, %v7545
    %v7547 = vrot.slane %v7251, 5
    %v7548 = vrot.slane %v7547, 4
    %v7549 = vrot.slane %v7252, 5
    %v7550 = vsel %vm3137, %v7548, %v7549
    %v7551 = vrot.slane %v7549, 4
    %v7552 = vrot.slane %v7253, 5
    %v7553 = vsel %vm3137, %v7551, %v7552
    %v7554 = vrot.slane %v7254, 5
    %v7555 = vrot.slane %v7554, 4
    %v7556 = vrot.slane %v7255, 5
    %v7557 = vsel %vm3137, %v7555, %v7556
    %v7558 = vrot.slane %v7556, 4
    %v7559 = vrot.slane %v7256, 5
    %v7560 = vsel %vm3137, %v7558, %v7559
    %v7561 = vrot.slane %v7257, 5
    %v7562 = vrot.slane %v7561, 4
    %v7563 = vrot.slane %v7258, 5
    %v7564 = vsel %vm3137, %v7562, %v7563
    %v7565 = vrot.slane %v7563, 4
    %v7566 = vrot.slane %v7259, 5
    %v7567 = vsel %vm3137, %v7565, %v7566
    %v7568 = vrot.slane %v7260, 5
    %v7569 = vrot.slane %v7568, 4
    %v7570 = vrot.slane %v7261, 5
    %v7571 = vsel %vm3137, %v7569, %v7570
    %v7572 = vrot.slane %v7570, 4
    %v7573 = vrot.slane %v7262, 5
    %v7574 = vsel %vm3137, %v7572, %v7573
    %v7575 = vrot.slane %v7263, 5
    %v7576 = vrot.slane %v7575, 4
    %v7577 = vrot.slane %v7264, 5
    %v7578 = vsel %vm3137, %v7576, %v7577
    %v7579 = vrot.slane %v7577, 4
    %v7580 = vrot.slane %v7265, 5
    %v7581 = vsel %vm3137, %v7579, %v7580
    %v7582 = vrot.slane %v7266, 5
    %v7583 = vrot.slane %v7582, 4
    %v7584 = vrot.slane %v7267, 5
    %v7585 = vsel %vm3137, %v7583, %v7584
    %v7586 = vrot.slane %v7584, 4
    %v7587 = vrot.slane %v7268, 5
    %v7588 = vsel %vm3137, %v7586, %v7587
    %7653 = vst.msk [vmem:[#allocation3 + $0x8] sm:$0xf] %vm28, %v7368
    %7654 = vst.msk [vmem:[#allocation3 + $0x14] sm:$0xf] %vm28, %v7371
    %7655 = vst.msk [vmem:[#allocation3 + $0x20] sm:$0xf] %vm28, %v7375
    %7656 = vst.msk [vmem:[#allocation3 + $0x2c] sm:$0xf] %vm28, %v7378
    %7657 = vst.msk [vmem:[#allocation3 + $0x38] sm:$0xf] %vm28, %v7382
    %7658 = vst.msk [vmem:[#allocation3 + $0x44] sm:$0xf] %vm28, %v7385
    %7659 = vst.msk [vmem:[#allocation3 + $0x50] sm:$0xf] %vm28, %v7389
    %7660 = vst.msk [vmem:[#allocation3 + $0x5c] sm:$0xf] %vm28, %v7392
    %7661 = vst.msk [vmem:[#allocation3 + $0x68] sm:$0xf] %vm28, %v7396
    %7662 = vst.msk [vmem:[#allocation3 + $0x74] sm:$0xf] %vm28, %v7399
    %7663 = vst.msk [vmem:[#allocation3 + $0x80] sm:$0xf] %vm28, %v7403
    %7664 = vst.msk [vmem:[#allocation3 + $0x8c] sm:$0xf] %vm28, %v7406
    %7665 = vst.msk [vmem:[#allocation3 + $0x98] sm:$0xf] %vm28, %v7410
    %7666 = vst.msk [vmem:[#allocation3 + $0xa4] sm:$0xf] %vm28, %v7413
    %7667 = vst.msk [vmem:[#allocation3 + $0xb0] sm:$0xf] %vm28, %v7417
    %7668 = vst.msk [vmem:[#allocation3 + $0xbc] sm:$0xf] %vm28, %v7420
    %7669 = vst.msk [vmem:[#allocation3 + $0xc8] sm:$0xf] %vm28, %v7424
    %7670 = vst.msk [vmem:[#allocation3 + $0xd4] sm:$0xf] %vm28, %v7427
    %7671 = vst.msk [vmem:[#allocation3 + $0xe0] sm:$0xf] %vm28, %v7431
    %7672 = vst.msk [vmem:[#allocation3 + $0xec] sm:$0xf] %vm28, %v7434
    %7673 = vst.msk [vmem:[#allocation3 + $0xf8] sm:$0xf] %vm28, %v7438
    %7674 = vst.msk [vmem:[#allocation3 + $0x104] sm:$0xf] %vm28, %v7441
    %7675 = vst.msk [vmem:[#allocation3 + $0x110] sm:$0xf] %vm28, %v7445
    %7676 = vst.msk [vmem:[#allocation3 + $0x11c] sm:$0xf] %vm28, %v7448
    %7677 = vst.msk [vmem:[#allocation3 + $0x128] sm:$0xf] %vm28, %v7452
    %7678 = vst.msk [vmem:[#allocation3 + $0x134] sm:$0xf] %vm28, %v7455
    %7679 = vst.msk [vmem:[#allocation3 + $0x140] sm:$0xf] %vm28, %v7459
    %7680 = vst.msk [vmem:[#allocation3 + $0x14c] sm:$0xf] %vm28, %v7462
    %7681 = vst.msk [vmem:[#allocation3 + $0x158] sm:$0xf] %vm28, %v7466
    %7682 = vst.msk [vmem:[#allocation3 + $0x164] sm:$0xf] %vm28, %v7469
    %7683 = vst.msk [vmem:[#allocation3 + $0x170] sm:$0xf] %vm28, %v7473
    %7684 = vst.msk [vmem:[#allocation3 + $0x17c] sm:$0xf] %vm28, %v7476
    %7685 = vst.msk [vmem:[#allocation3 + $0x188] sm:$0xf] %vm28, %v7480
    %7686 = vst.msk [vmem:[#allocation3 + $0x194] sm:$0xf] %vm28, %v7483
    %7687 = vst.msk [vmem:[#allocation3 + $0x1a0] sm:$0xf] %vm28, %v7487
    %7688 = vst.msk [vmem:[#allocation3 + $0x1ac] sm:$0xf] %vm28, %v7490
    %7689 = vst.msk [vmem:[#allocation3 + $0x1b8] sm:$0xf] %vm28, %v7494
    %7690 = vst.msk [vmem:[#allocation3 + $0x1c4] sm:$0xf] %vm28, %v7497
    %7691 = vst.msk [vmem:[#allocation3 + $0x1d0] sm:$0xf] %vm28, %v7501
    %7692 = vst.msk [vmem:[#allocation3 + $0x1dc] sm:$0xf] %vm28, %v7504
    %7693 = vst.msk [vmem:[#allocation3 + $0x1e8] sm:$0xf] %vm28, %v7508
    %7694 = vst.msk [vmem:[#allocation3 + $0x1f4] sm:$0xf] %vm28, %v7511
    %7695 = vst.msk [vmem:[#allocation3 + $0x200] sm:$0xf] %vm28, %v7515
    %7696 = vst.msk [vmem:[#allocation3 + $0x20c] sm:$0xf] %vm28, %v7518
    %7697 = vst.msk [vmem:[#allocation3 + $0x218] sm:$0xf] %vm28, %v7522
    %7698 = vst.msk [vmem:[#allocation3 + $0x224] sm:$0xf] %vm28, %v7525
    %7699 = vst.msk [vmem:[#allocation3 + $0x230] sm:$0xf] %vm28, %v7529
    %7700 = vst.msk [vmem:[#allocation3 + $0x23c] sm:$0xf] %vm28, %v7532
    %7701 = vst.msk [vmem:[#allocation3 + $0x248] sm:$0xf] %vm28, %v7536
    %7702 = vst.msk [vmem:[#allocation3 + $0x254] sm:$0xf] %vm28, %v7539
    %7703 = vst.msk [vmem:[#allocation3 + $0x260] sm:$0xf] %vm28, %v7543
    %7704 = vst.msk [vmem:[#allocation3 + $0x26c] sm:$0xf] %vm28, %v7546
    %7705 = vst.msk [vmem:[#allocation3 + $0x278] sm:$0xf] %vm28, %v7550
    %7706 = vst.msk [vmem:[#allocation3 + $0x284] sm:$0xf] %vm28, %v7553
    %7707 = vst.msk [vmem:[#allocation3 + $0x290] sm:$0xf] %vm28, %v7557
    %7708 = vst.msk [vmem:[#allocation3 + $0x29c] sm:$0xf] %vm28, %v7560
    %7709 = vst.msk [vmem:[#allocation3 + $0x2a8] sm:$0xf] %vm28, %v7564
    %7710 = vst.msk [vmem:[#allocation3 + $0x2b4] sm:$0xf] %vm28, %v7567
    %7711 = vst.msk [vmem:[#allocation3 + $0x2c0] sm:$0xf] %vm28, %v7571
    %7712 = vst.msk [vmem:[#allocation3 + $0x2cc] sm:$0xf] %vm28, %v7574
    %7713 = vst.msk [vmem:[#allocation3 + $0x2d8] sm:$0xf] %vm28, %v7578
    %7714 = vst.msk [vmem:[#allocation3 + $0x2e4] sm:$0xf] %vm28, %v7581
    %7715 = vst.msk [vmem:[#allocation3 + $0x2f0] sm:$0xf] %vm28, %v7585
    %7716 = vst.msk [vmem:[#allocation3 + $0x2fc] sm:$0xf] %vm28, %v7588
    %v7717 = vld [vmem:[#allocation3] sm:$0xff]
    %v7718 = vld [vmem:[#allocation3 + $0x8] sm:$0xf]
    %v7719 = vld [vmem:[#allocation3 + $0xc] sm:$0xff]
    %v7720 = vld [vmem:[#allocation3 + $0x14] sm:$0xf]
    %v7721 = vld [vmem:[#allocation3 + $0x18] sm:$0xff]
    %v7722 = vld [vmem:[#allocation3 + $0x20] sm:$0xf]
    %v7723 = vld [vmem:[#allocation3 + $0x24] sm:$0xff]
    %v7724 = vld [vmem:[#allocation3 + $0x2c] sm:$0xf]
    %v7725 = vld [vmem:[#allocation3 + $0x30] sm:$0xff]
    %v7726 = vld [vmem:[#allocation3 + $0x38] sm:$0xf]
    %v7727 = vld [vmem:[#allocation3 + $0x3c] sm:$0xff]
    %v7728 = vld [vmem:[#allocation3 + $0x44] sm:$0xf]
    %v7729 = vld [vmem:[#allocation3 + $0x48] sm:$0xff]
    %v7730 = vld [vmem:[#allocation3 + $0x50] sm:$0xf]
    %v7731 = vld [vmem:[#allocation3 + $0x54] sm:$0xff]
    %v7732 = vld [vmem:[#allocation3 + $0x5c] sm:$0xf]
    %v7733 = vld [vmem:[#allocation3 + $0x60] sm:$0xff]
    %v7734 = vld [vmem:[#allocation3 + $0x68] sm:$0xf]
    %v7735 = vld [vmem:[#allocation3 + $0x6c] sm:$0xff]
    %v7736 = vld [vmem:[#allocation3 + $0x74] sm:$0xf]
    %v7737 = vld [vmem:[#allocation3 + $0x78] sm:$0xff]
    %v7738 = vld [vmem:[#allocation3 + $0x80] sm:$0xf]
    %v7739 = vld [vmem:[#allocation3 + $0x84] sm:$0xff]
    %v7740 = vld [vmem:[#allocation3 + $0x8c] sm:$0xf]
    %v7741 = vld [vmem:[#allocation3 + $0x90] sm:$0xff]
    %v7742 = vld [vmem:[#allocation3 + $0x98] sm:$0xf]
    %v7743 = vld [vmem:[#allocation3 + $0x9c] sm:$0xff]
    %v7744 = vld [vmem:[#allocation3 + $0xa4] sm:$0xf]
    %v7745 = vld [vmem:[#allocation3 + $0xa8] sm:$0xff]
    %v7746 = vld [vmem:[#allocation3 + $0xb0] sm:$0xf]
    %v7747 = vld [vmem:[#allocation3 + $0xb4] sm:$0xff]
    %v7748 = vld [vmem:[#allocation3 + $0xbc] sm:$0xf]
    %v7749 = vld [vmem:[#allocation3 + $0xc0] sm:$0xff]
    %v7750 = vld [vmem:[#allocation3 + $0xc8] sm:$0xf]
    %v7751 = vld [vmem:[#allocation3 + $0xcc] sm:$0xff]
    %v7752 = vld [vmem:[#allocation3 + $0xd4] sm:$0xf]
    %v7753 = vld [vmem:[#allocation3 + $0xd8] sm:$0xff]
    %v7754 = vld [vmem:[#allocation3 + $0xe0] sm:$0xf]
    %v7755 = vld [vmem:[#allocation3 + $0xe4] sm:$0xff]
    %v7756 = vld [vmem:[#allocation3 + $0xec] sm:$0xf]
    %v7757 = vld [vmem:[#allocation3 + $0xf0] sm:$0xff]
    %v7758 = vld [vmem:[#allocation3 + $0xf8] sm:$0xf]
    %v7759 = vld [vmem:[#allocation3 + $0xfc] sm:$0xff]
    %v7760 = vld [vmem:[#allocation3 + $0x104] sm:$0xf]
    %v7761 = vld [vmem:[#allocation3 + $0x108] sm:$0xff]
    %v7762 = vld [vmem:[#allocation3 + $0x110] sm:$0xf]
    %v7763 = vld [vmem:[#allocation3 + $0x114] sm:$0xff]
    %v7764 = vld [vmem:[#allocation3 + $0x11c] sm:$0xf]
    %v7765 = vld [vmem:[#allocation3 + $0x120] sm:$0xff]
    %v7766 = vld [vmem:[#allocation3 + $0x128] sm:$0xf]
    %v7767 = vld [vmem:[#allocation3 + $0x12c] sm:$0xff]
    %v7768 = vld [vmem:[#allocation3 + $0x134] sm:$0xf]
    %v7769 = vld [vmem:[#allocation3 + $0x138] sm:$0xff]
    %v7770 = vld [vmem:[#allocation3 + $0x140] sm:$0xf]
    %v7771 = vld [vmem:[#allocation3 + $0x144] sm:$0xff]
    %v7772 = vld [vmem:[#allocation3 + $0x14c] sm:$0xf]
    %v7773 = vld [vmem:[#allocation3 + $0x150] sm:$0xff]
    %v7774 = vld [vmem:[#allocation3 + $0x158] sm:$0xf]
    %v7775 = vld [vmem:[#allocation3 + $0x15c] sm:$0xff]
    %v7776 = vld [vmem:[#allocation3 + $0x164] sm:$0xf]
    %v7777 = vld [vmem:[#allocation3 + $0x168] sm:$0xff]
    %v7778 = vld [vmem:[#allocation3 + $0x170] sm:$0xf]
    %v7779 = vld [vmem:[#allocation3 + $0x174] sm:$0xff]
    %v7780 = vld [vmem:[#allocation3 + $0x17c] sm:$0xf]
    %v7781 = vld [vmem:[#allocation3 + $0x180] sm:$0xff]
    %v7782 = vld [vmem:[#allocation3 + $0x188] sm:$0xf]
    %v7783 = vld [vmem:[#allocation3 + $0x18c] sm:$0xff]
    %v7784 = vld [vmem:[#allocation3 + $0x194] sm:$0xf]
    %v7785 = vld [vmem:[#allocation3 + $0x198] sm:$0xff]
    %v7786 = vld [vmem:[#allocation3 + $0x1a0] sm:$0xf]
    %v7787 = vld [vmem:[#allocation3 + $0x1a4] sm:$0xff]
    %v7788 = vld [vmem:[#allocation3 + $0x1ac] sm:$0xf]
    %v7789 = vld [vmem:[#allocation3 + $0x1b0] sm:$0xff]
    %v7790 = vld [vmem:[#allocation3 + $0x1b8] sm:$0xf]
    %v7791 = vld [vmem:[#allocation3 + $0x1bc] sm:$0xff]
    %v7792 = vld [vmem:[#allocation3 + $0x1c4] sm:$0xf]
    %v7793 = vld [vmem:[#allocation3 + $0x1c8] sm:$0xff]
    %v7794 = vld [vmem:[#allocation3 + $0x1d0] sm:$0xf]
    %v7795 = vld [vmem:[#allocation3 + $0x1d4] sm:$0xff]
    %v7796 = vld [vmem:[#allocation3 + $0x1dc] sm:$0xf]
    %v7797 = vld [vmem:[#allocation3 + $0x1e0] sm:$0xff]
    %v7798 = vld [vmem:[#allocation3 + $0x1e8] sm:$0xf]
    %v7799 = vld [vmem:[#allocation3 + $0x1ec] sm:$0xff]
    %v7800 = vld [vmem:[#allocation3 + $0x1f4] sm:$0xf]
    %v7801 = vld [vmem:[#allocation3 + $0x1f8] sm:$0xff]
    %v7802 = vld [vmem:[#allocation3 + $0x200] sm:$0xf]
    %v7803 = vld [vmem:[#allocation3 + $0x204] sm:$0xff]
    %v7804 = vld [vmem:[#allocation3 + $0x20c] sm:$0xf]
    %v7805 = vld [vmem:[#allocation3 + $0x210] sm:$0xff]
    %v7806 = vld [vmem:[#allocation3 + $0x218] sm:$0xf]
    %v7807 = vld [vmem:[#allocation3 + $0x21c] sm:$0xff]
    %v7808 = vld [vmem:[#allocation3 + $0x224] sm:$0xf]
    %v7809 = vld [vmem:[#allocation3 + $0x228] sm:$0xff]
    %v7810 = vld [vmem:[#allocation3 + $0x230] sm:$0xf]
    %v7811 = vld [vmem:[#allocation3 + $0x234] sm:$0xff]
    %v7812 = vld [vmem:[#allocation3 + $0x23c] sm:$0xf]
    %v7813 = vld [vmem:[#allocation3 + $0x240] sm:$0xff]
    %v7814 = vld [vmem:[#allocation3 + $0x248] sm:$0xf]
    %v7815 = vld [vmem:[#allocation3 + $0x24c] sm:$0xff]
    %v7816 = vld [vmem:[#allocation3 + $0x254] sm:$0xf]
    %v7817 = vld [vmem:[#allocation3 + $0x258] sm:$0xff]
    %v7818 = vld [vmem:[#allocation3 + $0x260] sm:$0xf]
    %v7819 = vld [vmem:[#allocation3 + $0x264] sm:$0xff]
    %v7820 = vld [vmem:[#allocation3 + $0x26c] sm:$0xf]
    %v7821 = vld [vmem:[#allocation3 + $0x270] sm:$0xff]
    %v7822 = vld [vmem:[#allocation3 + $0x278] sm:$0xf]
    %v7823 = vld [vmem:[#allocation3 + $0x27c] sm:$0xff]
    %v7824 = vld [vmem:[#allocation3 + $0x284] sm:$0xf]
    %v7825 = vld [vmem:[#allocation3 + $0x288] sm:$0xff]
    %v7826 = vld [vmem:[#allocation3 + $0x290] sm:$0xf]
    %v7827 = vld [vmem:[#allocation3 + $0x294] sm:$0xff]
    %v7828 = vld [vmem:[#allocation3 + $0x29c] sm:$0xf]
    %v7829 = vld [vmem:[#allocation3 + $0x2a0] sm:$0xff]
    %v7830 = vld [vmem:[#allocation3 + $0x2a8] sm:$0xf]
    %v7831 = vld [vmem:[#allocation3 + $0x2ac] sm:$0xff]
    %v7832 = vld [vmem:[#allocation3 + $0x2b4] sm:$0xf]
    %v7833 = vld [vmem:[#allocation3 + $0x2b8] sm:$0xff]
    %v7834 = vld [vmem:[#allocation3 + $0x2c0] sm:$0xf]
    %v7835 = vld [vmem:[#allocation3 + $0x2c4] sm:$0xff]
    %v7836 = vld [vmem:[#allocation3 + $0x2cc] sm:$0xf]
    %v7837 = vld [vmem:[#allocation3 + $0x2d0] sm:$0xff]
    %v7838 = vld [vmem:[#allocation3 + $0x2d8] sm:$0xf]
    %v7839 = vld [vmem:[#allocation3 + $0x2dc] sm:$0xff]
    %v7840 = vld [vmem:[#allocation3 + $0x2e4] sm:$0xf]
    %v7841 = vld [vmem:[#allocation3 + $0x2e8] sm:$0xff]
    %v7842 = vld [vmem:[#allocation3 + $0x2f0] sm:$0xf]
    %v7843 = vld [vmem:[#allocation3 + $0x2f4] sm:$0xff]
    %v7844 = vld [vmem:[#allocation3 + $0x2fc] sm:$0xf]
    %v7845 = vld [vmem:[%s3] sm:$0xf]
    %v7846 = vld [vmem:[%s3 + $0x4] sm:$0xf]
    %v7847 = vld [vmem:[%s3 + $0x8] sm:$0xf]
    %v7848 = vld [vmem:[%s3 + $0xc] sm:$0xf]
    %v7849 = vld [vmem:[%s3 + $0x10] sm:$0xf]
    %v7850 = vld [vmem:[%s3 + $0x14] sm:$0xf]
    %v7851 = vld [vmem:[%s3 + $0x18] sm:$0xf]
    %v7852 = vld [vmem:[%s3 + $0x1c] sm:$0xf]
    %v7853 = vld [vmem:[%s3 + $0x20] sm:$0xf]
    %v7854 = vld [vmem:[%s3 + $0x24] sm:$0xf]
    %v7855 = vld [vmem:[%s3 + $0x28] sm:$0xf]
    %v7856 = vld [vmem:[%s3 + $0x2c] sm:$0xf]
    %v7857 = vld [vmem:[%s3 + $0x30] sm:$0xf]
    %v7858 = vld [vmem:[%s3 + $0x34] sm:$0xf]
    %v7859 = vld [vmem:[%s3 + $0x38] sm:$0xf]
    %v7860 = vld [vmem:[%s3 + $0x3c] sm:$0xf]
    %v7861 = vld [vmem:[%s3 + $0x40] sm:$0xf]
    %v7862 = vld [vmem:[%s3 + $0x44] sm:$0xf]
    %v7863 = vld [vmem:[%s3 + $0x48] sm:$0xf]
    %v7864 = vld [vmem:[%s3 + $0x4c] sm:$0xf]
    %v7865 = vld [vmem:[%s3 + $0x50] sm:$0xf]
    %v7866 = vld [vmem:[%s3 + $0x54] sm:$0xf]
    %v7867 = vld [vmem:[%s3 + $0x58] sm:$0xf]
    %v7868 = vld [vmem:[%s3 + $0x5c] sm:$0xf]
    %v7869 = vld [vmem:[%s3 + $0x60] sm:$0xf]
    %v7870 = vld [vmem:[%s3 + $0x64] sm:$0xf]
    %v7871 = vld [vmem:[%s3 + $0x68] sm:$0xf]
    %v7872 = vld [vmem:[%s3 + $0x6c] sm:$0xf]
    %v7873 = vld [vmem:[%s3 + $0x70] sm:$0xf]
    %v7874 = vld [vmem:[%s3 + $0x74] sm:$0xf]
    %v7875 = vld [vmem:[%s3 + $0x78] sm:$0xf]
    %v7876 = vld [vmem:[%s3 + $0x7c] sm:$0xf]
    %v7877 = vld [vmem:[%s3 + $0x80] sm:$0xf]
    %v7878 = vld [vmem:[%s3 + $0x84] sm:$0xf]
    %v7879 = vld [vmem:[%s3 + $0x88] sm:$0xf]
    %v7880 = vld [vmem:[%s3 + $0x8c] sm:$0xf]
    %v7881 = vld [vmem:[%s4] sm:$0x1]
    %v7883 = vlaneseq
    %v7884 = vshrl.u32 %v7883, 7
    %v7885 = vsub.s32 0, %v7884
    %v7886 = vrot.slane %v7881, %v7885
    %v8016 = vunpack.c.l.b16 %v7717
    %v8017 = vunpack.c.h.b16 %v7717
    %v8018 = vunpack.c.l.b16 %v7718
    %v8019 = vunpack.c.l.b16 %v7719
    %v8020 = vunpack.c.h.b16 %v7719
    %v8021 = vunpack.c.l.b16 %v7720
    %v8022 = vunpack.c.l.b16 %v7721
    %v8023 = vunpack.c.h.b16 %v7721
    %v8024 = vunpack.c.l.b16 %v7722
    %v8025 = vunpack.c.l.b16 %v7723
    %v8026 = vunpack.c.h.b16 %v7723
    %v8027 = vunpack.c.l.b16 %v7724
    %v8028 = vunpack.c.l.b16 %v7725
    %v8029 = vunpack.c.h.b16 %v7725
    %v8030 = vunpack.c.l.b16 %v7726
    %v8031 = vunpack.c.l.b16 %v7727
    %v8032 = vunpack.c.h.b16 %v7727
    %v8033 = vunpack.c.l.b16 %v7728
    %v8034 = vunpack.c.l.b16 %v7729
    %v8035 = vunpack.c.h.b16 %v7729
    %v8036 = vunpack.c.l.b16 %v7730
    %v8037 = vunpack.c.l.b16 %v7731
    %v8038 = vunpack.c.h.b16 %v7731
    %v8039 = vunpack.c.l.b16 %v7732
    %v8040 = vunpack.c.l.b16 %v7733
    %v8041 = vunpack.c.h.b16 %v7733
    %v8042 = vunpack.c.l.b16 %v7734
    %v8043 = vunpack.c.l.b16 %v7735
    %v8044 = vunpack.c.h.b16 %v7735
    %v8045 = vunpack.c.l.b16 %v7736
    %v8046 = vunpack.c.l.b16 %v7737
    %v8047 = vunpack.c.h.b16 %v7737
    %v8048 = vunpack.c.l.b16 %v7738
    %v8049 = vunpack.c.l.b16 %v7739
    %v8050 = vunpack.c.h.b16 %v7739
    %v8051 = vunpack.c.l.b16 %v7740
    %v8052 = vunpack.c.l.b16 %v7741
    %v8053 = vunpack.c.h.b16 %v7741
    %v8054 = vunpack.c.l.b16 %v7742
    %v8055 = vunpack.c.l.b16 %v7743
    %v8056 = vunpack.c.h.b16 %v7743
    %v8057 = vunpack.c.l.b16 %v7744
    %v8058 = vunpack.c.l.b16 %v7745
    %v8059 = vunpack.c.h.b16 %v7745
    %v8060 = vunpack.c.l.b16 %v7746
    %v8061 = vunpack.c.l.b16 %v7747
    %v8062 = vunpack.c.h.b16 %v7747
    %v8063 = vunpack.c.l.b16 %v7748
    %v8064 = vunpack.c.l.b16 %v7749
    %v8065 = vunpack.c.h.b16 %v7749
    %v8066 = vunpack.c.l.b16 %v7750
    %v8067 = vunpack.c.l.b16 %v7751
    %v8068 = vunpack.c.h.b16 %v7751
    %v8069 = vunpack.c.l.b16 %v7752
    %v8070 = vunpack.c.l.b16 %v7753
    %v8071 = vunpack.c.h.b16 %v7753
    %v8072 = vunpack.c.l.b16 %v7754
    %v8073 = vunpack.c.l.b16 %v7755
    %v8074 = vunpack.c.h.b16 %v7755
    %v8075 = vunpack.c.l.b16 %v7756
    %v8076 = vunpack.c.l.b16 %v7757
    %v8077 = vunpack.c.h.b16 %v7757
    %v8078 = vunpack.c.l.b16 %v7758
    %v8079 = vunpack.c.l.b16 %v7759
    %v8080 = vunpack.c.h.b16 %v7759
    %v8081 = vunpack.c.l.b16 %v7760
    %v8082 = vunpack.c.l.b16 %v7761
    %v8083 = vunpack.c.h.b16 %v7761
    %v8084 = vunpack.c.l.b16 %v7762
    %v8085 = vunpack.c.l.b16 %v7763
    %v8086 = vunpack.c.h.b16 %v7763
    %v8087 = vunpack.c.l.b16 %v7764
    %v8088 = vunpack.c.l.b16 %v7765
    %v8089 = vunpack.c.h.b16 %v7765
    %v8090 = vunpack.c.l.b16 %v7766
    %v8091 = vunpack.c.l.b16 %v7767
    %v8092 = vunpack.c.h.b16 %v7767
    %v8093 = vunpack.c.l.b16 %v7768
    %v8094 = vunpack.c.l.b16 %v7769
    %v8095 = vunpack.c.h.b16 %v7769
    %v8096 = vunpack.c.l.b16 %v7770
    %v8097 = vunpack.c.l.b16 %v7771
    %v8098 = vunpack.c.h.b16 %v7771
    %v8099 = vunpack.c.l.b16 %v7772
    %v8100 = vunpack.c.l.b16 %v7773
    %v8101 = vunpack.c.h.b16 %v7773
    %v8102 = vunpack.c.l.b16 %v7774
    %v8103 = vunpack.c.l.b16 %v7775
    %v8104 = vunpack.c.h.b16 %v7775
    %v8105 = vunpack.c.l.b16 %v7776
    %v8106 = vunpack.c.l.b16 %v7777
    %v8107 = vunpack.c.h.b16 %v7777
    %v8108 = vunpack.c.l.b16 %v7778
    %v8109 = vunpack.c.l.b16 %v7779
    %v8110 = vunpack.c.h.b16 %v7779
    %v8111 = vunpack.c.l.b16 %v7780
    %v8112 = vunpack.c.l.b16 %v7781
    %v8113 = vunpack.c.h.b16 %v7781
    %v8114 = vunpack.c.l.b16 %v7782
    %v8115 = vunpack.c.l.b16 %v7783
    %v8116 = vunpack.c.h.b16 %v7783
    %v8117 = vunpack.c.l.b16 %v7784
    %v8118 = vunpack.c.l.b16 %v7785
    %v8119 = vunpack.c.h.b16 %v7785
    %v8120 = vunpack.c.l.b16 %v7786
    %v8121 = vunpack.c.l.b16 %v7787
    %v8122 = vunpack.c.h.b16 %v7787
    %v8123 = vunpack.c.l.b16 %v7788
    %v8124 = vunpack.c.l.b16 %v7789
    %v8125 = vunpack.c.h.b16 %v7789
    %v8126 = vunpack.c.l.b16 %v7790
    %v8127 = vunpack.c.l.b16 %v7791
    %v8128 = vunpack.c.h.b16 %v7791
    %v8129 = vunpack.c.l.b16 %v7792
    %v8130 = vunpack.c.l.b16 %v7793
    %v8131 = vunpack.c.h.b16 %v7793
    %v8132 = vunpack.c.l.b16 %v7794
    %v8133 = vunpack.c.l.b16 %v7795
    %v8134 = vunpack.c.h.b16 %v7795
    %v8135 = vunpack.c.l.b16 %v7796
    %v8136 = vunpack.c.l.b16 %v7797
    %v8137 = vunpack.c.h.b16 %v7797
    %v8138 = vunpack.c.l.b16 %v7798
    %v8139 = vunpack.c.l.b16 %v7799
    %v8140 = vunpack.c.h.b16 %v7799
    %v8141 = vunpack.c.l.b16 %v7800
    %v8142 = vunpack.c.l.b16 %v7801
    %v8143 = vunpack.c.h.b16 %v7801
    %v8144 = vunpack.c.l.b16 %v7802
    %v8145 = vunpack.c.l.b16 %v7803
    %v8146 = vunpack.c.h.b16 %v7803
    %v8147 = vunpack.c.l.b16 %v7804
    %v8148 = vunpack.c.l.b16 %v7805
    %v8149 = vunpack.c.h.b16 %v7805
    %v8150 = vunpack.c.l.b16 %v7806
    %v8151 = vunpack.c.l.b16 %v7807
    %v8152 = vunpack.c.h.b16 %v7807
    %v8153 = vunpack.c.l.b16 %v7808
    %v8154 = vunpack.c.l.b16 %v7809
    %v8155 = vunpack.c.h.b16 %v7809
    %v8156 = vunpack.c.l.b16 %v7810
    %v8157 = vunpack.c.l.b16 %v7811
    %v8158 = vunpack.c.h.b16 %v7811
    %v8159 = vunpack.c.l.b16 %v7812
    %v8160 = vunpack.c.l.b16 %v7813
    %v8161 = vunpack.c.h.b16 %v7813
    %v8162 = vunpack.c.l.b16 %v7814
    %v8163 = vunpack.c.l.b16 %v7815
    %v8164 = vunpack.c.h.b16 %v7815
    %v8165 = vunpack.c.l.b16 %v7816
    %v8166 = vunpack.c.l.b16 %v7817
    %v8167 = vunpack.c.h.b16 %v7817
    %v8168 = vunpack.c.l.b16 %v7818
    %v8169 = vunpack.c.l.b16 %v7819
    %v8170 = vunpack.c.h.b16 %v7819
    %v8171 = vunpack.c.l.b16 %v7820
    %v8172 = vunpack.c.l.b16 %v7821
    %v8173 = vunpack.c.h.b16 %v7821
    %v8174 = vunpack.c.l.b16 %v7822
    %v8175 = vunpack.c.l.b16 %v7823
    %v8176 = vunpack.c.h.b16 %v7823
    %v8177 = vunpack.c.l.b16 %v7824
    %v8178 = vunpack.c.l.b16 %v7825
    %v8179 = vunpack.c.h.b16 %v7825
    %v8180 = vunpack.c.l.b16 %v7826
    %v8181 = vunpack.c.l.b16 %v7827
    %v8182 = vunpack.c.h.b16 %v7827
    %v8183 = vunpack.c.l.b16 %v7828
    %v8184 = vunpack.c.l.b16 %v7829
    %v8185 = vunpack.c.h.b16 %v7829
    %v8186 = vunpack.c.l.b16 %v7830
    %v8187 = vunpack.c.l.b16 %v7831
    %v8188 = vunpack.c.h.b16 %v7831
    %v8189 = vunpack.c.l.b16 %v7832
    %v8190 = vunpack.c.l.b16 %v7833
    %v8191 = vunpack.c.h.b16 %v7833
    %v8192 = vunpack.c.l.b16 %v7834
    %v8193 = vunpack.c.l.b16 %v7835
    %v8194 = vunpack.c.h.b16 %v7835
    %v8195 = vunpack.c.l.b16 %v7836
    %v8196 = vunpack.c.l.b16 %v7837
    %v8197 = vunpack.c.h.b16 %v7837
    %v8198 = vunpack.c.l.b16 %v7838
    %v8199 = vunpack.c.l.b16 %v7839
    %v8200 = vunpack.c.h.b16 %v7839
    %v8201 = vunpack.c.l.b16 %v7840
    %v8202 = vunpack.c.l.b16 %v7841
    %v8203 = vunpack.c.h.b16 %v7841
    %v8204 = vunpack.c.l.b16 %v7842
    %v8205 = vunpack.c.l.b16 %v7843
    %v8206 = vunpack.c.h.b16 %v7843
    %v8207 = vunpack.c.l.b16 %v7844
    %v8208 = vpack.c.b16 %v8019, %v8016
    %v8209 = vpack.c.b16 %v8020, %v8017
    %v8210 = vpack.c.b16 %v8021, %v8018
    %v8211 = vpack.c.b16 %v8025, %v8022
    %v8212 = vpack.c.b16 %v8026, %v8023
    %v8213 = vpack.c.b16 %v8027, %v8024
    %v8214 = vpack.c.b16 %v8031, %v8028
    %v8215 = vpack.c.b16 %v8032, %v8029
    %v8216 = vpack.c.b16 %v8033, %v8030
    %v8217 = vpack.c.b16 %v8037, %v8034
    %v8218 = vpack.c.b16 %v8038, %v8035
    %v8219 = vpack.c.b16 %v8039, %v8036
    %v8220 = vpack.c.b16 %v8043, %v8040
    %v8221 = vpack.c.b16 %v8044, %v8041
    %v8222 = vpack.c.b16 %v8045, %v8042
    %v8223 = vpack.c.b16 %v8049, %v8046
    %v8224 = vpack.c.b16 %v8050, %v8047
    %v8225 = vpack.c.b16 %v8051, %v8048
    %v8226 = vpack.c.b16 %v8055, %v8052
    %v8227 = vpack.c.b16 %v8056, %v8053
    %v8228 = vpack.c.b16 %v8057, %v8054
    %v8229 = vpack.c.b16 %v8061, %v8058
    %v8230 = vpack.c.b16 %v8062, %v8059
    %v8231 = vpack.c.b16 %v8063, %v8060
    %v8232 = vpack.c.b16 %v8067, %v8064
    %v8233 = vpack.c.b16 %v8068, %v8065
    %v8234 = vpack.c.b16 %v8069, %v8066
    %v8235 = vpack.c.b16 %v8073, %v8070
    %v8236 = vpack.c.b16 %v8074, %v8071
    %v8237 = vpack.c.b16 %v8075, %v8072
    %v8238 = vpack.c.b16 %v8079, %v8076
    %v8239 = vpack.c.b16 %v8080, %v8077
    %v8240 = vpack.c.b16 %v8081, %v8078
    %v8241 = vpack.c.b16 %v8085, %v8082
    %v8242 = vpack.c.b16 %v8086, %v8083
    %v8243 = vpack.c.b16 %v8087, %v8084
    %v8244 = vpack.c.b16 %v8091, %v8088
    %v8245 = vpack.c.b16 %v8092, %v8089
    %v8246 = vpack.c.b16 %v8093, %v8090
    %v8247 = vpack.c.b16 %v8097, %v8094
    %v8248 = vpack.c.b16 %v8098, %v8095
    %v8249 = vpack.c.b16 %v8099, %v8096
    %v8250 = vpack.c.b16 %v8103, %v8100
    %v8251 = vpack.c.b16 %v8104, %v8101
    %v8252 = vpack.c.b16 %v8105, %v8102
    %v8253 = vpack.c.b16 %v8109, %v8106
    %v8254 = vpack.c.b16 %v8110, %v8107
    %v8255 = vpack.c.b16 %v8111, %v8108
    %v8256 = vpack.c.b16 %v8115, %v8112
    %v8257 = vpack.c.b16 %v8116, %v8113
    %v8258 = vpack.c.b16 %v8117, %v8114
    %v8259 = vpack.c.b16 %v8121, %v8118
    %v8260 = vpack.c.b16 %v8122, %v8119
    %v8261 = vpack.c.b16 %v8123, %v8120
    %v8262 = vpack.c.b16 %v8127, %v8124
    %v8263 = vpack.c.b16 %v8128, %v8125
    %v8264 = vpack.c.b16 %v8129, %v8126
    %v8265 = vpack.c.b16 %v8133, %v8130
    %v8266 = vpack.c.b16 %v8134, %v8131
    %v8267 = vpack.c.b16 %v8135, %v8132
    %v8268 = vpack.c.b16 %v8139, %v8136
    %v8269 = vpack.c.b16 %v8140, %v8137
    %v8270 = vpack.c.b16 %v8141, %v8138
    %v8271 = vpack.c.b16 %v8145, %v8142
    %v8272 = vpack.c.b16 %v8146, %v8143
    %v8273 = vpack.c.b16 %v8147, %v8144
    %v8274 = vpack.c.b16 %v8151, %v8148
    %v8275 = vpack.c.b16 %v8152, %v8149
    %v8276 = vpack.c.b16 %v8153, %v8150
    %v8277 = vpack.c.b16 %v8157, %v8154
    %v8278 = vpack.c.b16 %v8158, %v8155
    %v8279 = vpack.c.b16 %v8159, %v8156
    %v8280 = vpack.c.b16 %v8163, %v8160
    %v8281 = vpack.c.b16 %v8164, %v8161
    %v8282 = vpack.c.b16 %v8165, %v8162
    %v8283 = vpack.c.b16 %v8169, %v8166
    %v8284 = vpack.c.b16 %v8170, %v8167
    %v8285 = vpack.c.b16 %v8171, %v8168
    %v8286 = vpack.c.b16 %v8175, %v8172
    %v8287 = vpack.c.b16 %v8176, %v8173
    %v8288 = vpack.c.b16 %v8177, %v8174
    %v8289 = vpack.c.b16 %v8181, %v8178
    %v8290 = vpack.c.b16 %v8182, %v8179
    %v8291 = vpack.c.b16 %v8183, %v8180
    %v8292 = vpack.c.b16 %v8187, %v8184
    %v8293 = vpack.c.b16 %v8188, %v8185
    %v8294 = vpack.c.b16 %v8189, %v8186
    %v8295 = vpack.c.b16 %v8193, %v8190
    %v8296 = vpack.c.b16 %v8194, %v8191
    %v8297 = vpack.c.b16 %v8195, %v8192
    %v8298 = vpack.c.b16 %v8199, %v8196
    %v8299 = vpack.c.b16 %v8200, %v8197
    %v8300 = vpack.c.b16 %v8201, %v8198
    %v8301 = vpack.c.b16 %v8205, %v8202
    %v8302 = vpack.c.b16 %v8206, %v8203
    %v8303 = vpack.c.b16 %v8207, %v8204
    %v8404 = vunpack.c.l.b16 %v7845
    %v8405 = vunpack.c.l.b16 %v7846
    %v8406 = vunpack.c.l.b16 %v7847
    %v8407 = vunpack.c.l.b16 %v7848
    %v8408 = vunpack.c.l.b16 %v7849
    %v8409 = vunpack.c.l.b16 %v7850
    %v8410 = vunpack.c.l.b16 %v7851
    %v8411 = vunpack.c.l.b16 %v7852
    %v8412 = vunpack.c.l.b16 %v7853
    %v8413 = vunpack.c.l.b16 %v7854
    %v8414 = vunpack.c.l.b16 %v7855
    %v8415 = vunpack.c.l.b16 %v7856
    %v8416 = vunpack.c.l.b16 %v7857
    %v8417 = vunpack.c.l.b16 %v7858
    %v8418 = vunpack.c.l.b16 %v7859
    %v8419 = vunpack.c.l.b16 %v7860
    %v8420 = vunpack.c.l.b16 %v7861
    %v8421 = vunpack.c.l.b16 %v7862
    %v8422 = vunpack.c.l.b16 %v7863
    %v8423 = vunpack.c.l.b16 %v7864
    %v8424 = vunpack.c.l.b16 %v7865
    %v8425 = vunpack.c.l.b16 %v7866
    %v8426 = vunpack.c.l.b16 %v7867
    %v8427 = vunpack.c.l.b16 %v7868
    %v8428 = vunpack.c.l.b16 %v7869
    %v8429 = vunpack.c.l.b16 %v7870
    %v8430 = vunpack.c.l.b16 %v7871
    %v8431 = vunpack.c.l.b16 %v7872
    %v8432 = vunpack.c.l.b16 %v7873
    %v8433 = vunpack.c.l.b16 %v7874
    %v8434 = vunpack.c.l.b16 %v7875
    %v8435 = vunpack.c.l.b16 %v7876
    %v8436 = vunpack.c.l.b16 %v7877
    %v8437 = vunpack.c.l.b16 %v7878
    %v8438 = vunpack.c.l.b16 %v7879
    %v8439 = vunpack.c.l.b16 %v7880
    %v8440 = vpack.c.b16 %v8405, %v8404
    %v8441 = vpack.c.b16 %v8407, %v8406
    %v8442 = vpack.c.b16 %v8409, %v8408
    %v8443 = vpack.c.b16 %v8411, %v8410
    %v8444 = vpack.c.b16 %v8413, %v8412
    %v8445 = vpack.c.b16 %v8415, %v8414
    %v8446 = vpack.c.b16 %v8417, %v8416
    %v8447 = vpack.c.b16 %v8419, %v8418
    %v8448 = vpack.c.b16 %v8421, %v8420
    %v8449 = vpack.c.b16 %v8423, %v8422
    %v8450 = vpack.c.b16 %v8425, %v8424
    %v8451 = vpack.c.b16 %v8427, %v8426
    %v8452 = vpack.c.b16 %v8429, %v8428
    %v8453 = vpack.c.b16 %v8431, %v8430
    %v8454 = vpack.c.b16 %v8433, %v8432
    %v8455 = vpack.c.b16 %v8435, %v8434
    %v8456 = vpack.c.b16 %v8437, %v8436
    %v8457 = vpack.c.b16 %v8439, %v8438
    %vm8476 = vcmask 261120
    %v8478 = vsel %vm8476, %v8210, 0
    %v8481 = vsel %vm8476, %v8213, 0
    %v8484 = vsel %vm8476, %v8216, 0
    %v8487 = vsel %vm8476, %v8219, 0
    %v8490 = vsel %vm8476, %v8222, 0
    %v8493 = vsel %vm8476, %v8225, 0
    %v8496 = vsel %vm8476, %v8228, 0
    %v8499 = vsel %vm8476, %v8231, 0
    %v8502 = vsel %vm8476, %v8234, 0
    %v8505 = vsel %vm8476, %v8237, 0
    %v8508 = vsel %vm8476, %v8240, 0
    %v8511 = vsel %vm8476, %v8243, 0
    %v8514 = vsel %vm8476, %v8246, 0
    %v8517 = vsel %vm8476, %v8249, 0
    %v8520 = vsel %vm8476, %v8252, 0
    %v8523 = vsel %vm8476, %v8255, 0
    %v8526 = vsel %vm8476, %v8258, 0
    %v8529 = vsel %vm8476, %v8261, 0
    %v8532 = vsel %vm8476, %v8264, 0
    %v8535 = vsel %vm8476, %v8267, 0
    %v8538 = vsel %vm8476, %v8270, 0
    %v8541 = vsel %vm8476, %v8273, 0
    %v8544 = vsel %vm8476, %v8276, 0
    %v8547 = vsel %vm8476, %v8279, 0
    %v8550 = vsel %vm8476, %v8282, 0
    %v8553 = vsel %vm8476, %v8285, 0
    %v8556 = vsel %vm8476, %v8288, 0
    %v8559 = vsel %vm8476, %v8291, 0
    %v8562 = vsel %vm8476, %v8294, 0
    %v8565 = vsel %vm8476, %v8297, 0
    %v8568 = vsel %vm8476, %v8300, 0
    %v8571 = vsel %vm8476, %v8303, 0
    %8573 = vmatprep.subr.bf16.mxu0 0
    %8574 = vmatpush1.bf16.msra.mxu0 %v8447
    %8575 = vmatprep.subr.bf16.mxu0 0
    %8576 = vmatpush1.bf16.msra.mxu0 %v8446
    %8577 = vmatprep.subr.bf16.mxu0 0
    %8578 = vmatpush1.bf16.msra.mxu0 %v8445
    %8579 = vmatprep.subr.bf16.mxu0 0
    %8580 = vmatpush1.bf16.msra.mxu0 %v8444
    %8581 = vmatprep.subr.bf16.mxu0 0
    %8582 = vmatpush1.bf16.msra.mxu0 %v8443
    %8583 = vmatprep.subr.bf16.mxu0 0
    %8584 = vmatpush1.bf16.msra.mxu0 %v8442
    %8585 = vmatprep.subr.bf16.mxu0 0
    %8586 = vmatpush1.bf16.msra.mxu0 %v8441
    %8587 = vmatprep.subr.bf16.mxu0 0
    %8588 = vmatpush1.bf16.msra.mxu0 %v8440
    %8589 = vmatprep.subr.bf16.mxu0 0
    %8590 = vmatpush2.bf16.msra.mxu0 %v8455
    %8591 = vmatprep.subr.bf16.mxu0 0
    %8592 = vmatpush2.bf16.msra.mxu0 %v8454
    %8593 = vmatprep.subr.bf16.mxu0 0
    %8594 = vmatpush2.bf16.msra.mxu0 %v8453
    %8595 = vmatprep.subr.bf16.mxu0 0
    %8596 = vmatpush2.bf16.msra.mxu0 %v8452
    %8597 = vmatprep.subr.bf16.mxu0 0
    %8598 = vmatpush2.bf16.msra.mxu0 %v8451
    %8599 = vmatprep.subr.bf16.mxu0 0
    %8600 = vmatpush2.bf16.msra.mxu0 %v8450
    %8601 = vmatprep.subr.bf16.mxu0 0
    %8602 = vmatpush2.bf16.msra.mxu0 %v8449
    %8603 = vmatprep.subr.bf16.mxu0 0
    %8604 = vmatpush2.bf16.msra.mxu0 %v8448
    %8605 = vmatprep.mubr.bf16.mxu0 %v8209
    %8606 = vmatmul.mubr.bf16.gmra.mxu0 %v8208
    %v8607 = vpop.f32.mrf.mxu0
    %v8608 = vadd.f32 %v7886, %v8607
    %v8609 = vpop.f32.mrf.mxu0
    %v8610 = vpop.f32.mrf.mxu0
    %v8611 = vadd.f32 %v7886, %v8610
    %v8612 = vpop.f32.mrf.mxu0
    %8613 = vmatprep.mubr.bf16.mxu0 %v8212
    %8614 = vmatmul.mubr.bf16.gmra.mxu0 %v8211
    %v8615 = vpop.f32.mrf.mxu0
    %v8616 = vadd.f32 %v7886, %v8615
    %v8617 = vpop.f32.mrf.mxu0
    %v8618 = vpop.f32.mrf.mxu0
    %v8619 = vadd.f32 %v7886, %v8618
    %v8620 = vpop.f32.mrf.mxu0
    %8621 = vmatprep.mubr.bf16.mxu0 %v8215
    %8622 = vmatmul.mubr.bf16.gmra.mxu0 %v8214
    %v8623 = vpop.f32.mrf.mxu0
    %v8624 = vadd.f32 %v7886, %v8623
    %v8625 = vpop.f32.mrf.mxu0
    %v8626 = vpop.f32.mrf.mxu0
    %v8627 = vadd.f32 %v7886, %v8626
    %v8628 = vpop.f32.mrf.mxu0
    %8629 = vmatprep.mubr.bf16.mxu0 %v8218
    %8630 = vmatmul.mubr.bf16.gmra.mxu0 %v8217
    %v8631 = vpop.f32.mrf.mxu0
    %v8632 = vadd.f32 %v7886, %v8631
    %v8633 = vpop.f32.mrf.mxu0
    %v8634 = vpop.f32.mrf.mxu0
    %v8635 = vadd.f32 %v7886, %v8634
    %v8636 = vpop.f32.mrf.mxu0
    %8637 = vmatprep.mubr.bf16.mxu0 %v8221
    %8638 = vmatmul.mubr.bf16.gmra.mxu0 %v8220
    %v8639 = vpop.f32.mrf.mxu0
    %v8640 = vadd.f32 %v7886, %v8639
    %v8641 = vpop.f32.mrf.mxu0
    %v8642 = vpop.f32.mrf.mxu0
    %v8643 = vadd.f32 %v7886, %v8642
    %v8644 = vpop.f32.mrf.mxu0
    %8645 = vmatprep.mubr.bf16.mxu0 %v8224
    %8646 = vmatmul.mubr.bf16.gmra.mxu0 %v8223
    %v8647 = vpop.f32.mrf.mxu0
    %v8648 = vadd.f32 %v7886, %v8647
    %v8649 = vpop.f32.mrf.mxu0
    %v8650 = vpop.f32.mrf.mxu0
    %v8651 = vadd.f32 %v7886, %v8650
    %v8652 = vpop.f32.mrf.mxu0
    %8653 = vmatprep.mubr.bf16.mxu0 %v8227
    %8654 = vmatmul.mubr.bf16.gmra.mxu0 %v8226
    %v8655 = vpop.f32.mrf.mxu0
    %v8656 = vadd.f32 %v7886, %v8655
    %v8657 = vpop.f32.mrf.mxu0
    %v8658 = vpop.f32.mrf.mxu0
    %v8659 = vadd.f32 %v7886, %v8658
    %v8660 = vpop.f32.mrf.mxu0
    %8661 = vmatprep.mubr.bf16.mxu0 %v8230
    %8662 = vmatmul.mubr.bf16.gmra.mxu0 %v8229
    %v8663 = vpop.f32.mrf.mxu0
    %v8664 = vadd.f32 %v7886, %v8663
    %v8665 = vpop.f32.mrf.mxu0
    %v8666 = vpop.f32.mrf.mxu0
    %v8667 = vadd.f32 %v7886, %v8666
    %v8668 = vpop.f32.mrf.mxu0
    %8669 = vmatprep.mubr.bf16.mxu0 %v8233
    %8670 = vmatmul.mubr.bf16.gmra.mxu0 %v8232
    %v8671 = vpop.f32.mrf.mxu0
    %v8672 = vadd.f32 %v7886, %v8671
    %v8673 = vpop.f32.mrf.mxu0
    %v8674 = vpop.f32.mrf.mxu0
    %v8675 = vadd.f32 %v7886, %v8674
    %v8676 = vpop.f32.mrf.mxu0
    %8677 = vmatprep.mubr.bf16.mxu0 %v8236
    %8678 = vmatmul.mubr.bf16.gmra.mxu0 %v8235
    %v8679 = vpop.f32.mrf.mxu0
    %v8680 = vadd.f32 %v7886, %v8679
    %v8681 = vpop.f32.mrf.mxu0
    %v8682 = vpop.f32.mrf.mxu0
    %v8683 = vadd.f32 %v7886, %v8682
    %v8684 = vpop.f32.mrf.mxu0
    %8685 = vmatprep.mubr.bf16.mxu0 %v8239
    %8686 = vmatmul.mubr.bf16.gmra.mxu0 %v8238
    %v8687 = vpop.f32.mrf.mxu0
    %v8688 = vadd.f32 %v7886, %v8687
    %v8689 = vpop.f32.mrf.mxu0
    %v8690 = vpop.f32.mrf.mxu0
    %v8691 = vadd.f32 %v7886, %v8690
    %v8692 = vpop.f32.mrf.mxu0
    %8693 = vmatprep.mubr.bf16.mxu0 %v8242
    %8694 = vmatmul.mubr.bf16.gmra.mxu0 %v8241
    %v8695 = vpop.f32.mrf.mxu0
    %v8696 = vadd.f32 %v7886, %v8695
    %v8697 = vpop.f32.mrf.mxu0
    %v8698 = vpop.f32.mrf.mxu0
    %v8699 = vadd.f32 %v7886, %v8698
    %v8700 = vpop.f32.mrf.mxu0
    %8701 = vmatprep.mubr.bf16.mxu0 %v8245
    %8702 = vmatmul.mubr.bf16.gmra.mxu0 %v8244
    %v8703 = vpop.f32.mrf.mxu0
    %v8704 = vadd.f32 %v7886, %v8703
    %v8705 = vpop.f32.mrf.mxu0
    %v8706 = vpop.f32.mrf.mxu0
    %v8707 = vadd.f32 %v7886, %v8706
    %v8708 = vpop.f32.mrf.mxu0
    %8709 = vmatprep.mubr.bf16.mxu0 %v8248
    %8710 = vmatmul.mubr.bf16.gmra.mxu0 %v8247
    %v8711 = vpop.f32.mrf.mxu0
    %v8712 = vadd.f32 %v7886, %v8711
    %v8713 = vpop.f32.mrf.mxu0
    %v8714 = vpop.f32.mrf.mxu0
    %v8715 = vadd.f32 %v7886, %v8714
    %v8716 = vpop.f32.mrf.mxu0
    %8717 = vmatprep.mubr.bf16.mxu0 %v8251
    %8718 = vmatmul.mubr.bf16.gmra.mxu0 %v8250
    %v8719 = vpop.f32.mrf.mxu0
    %v8720 = vadd.f32 %v7886, %v8719
    %v8721 = vpop.f32.mrf.mxu0
    %v8722 = vpop.f32.mrf.mxu0
    %v8723 = vadd.f32 %v7886, %v8722
    %v8724 = vpop.f32.mrf.mxu0
    %8725 = vmatprep.mubr.bf16.mxu0 %v8254
    %8726 = vmatmul.mubr.bf16.gmra.mxu0 %v8253
    %v8727 = vpop.f32.mrf.mxu0
    %v8728 = vadd.f32 %v7886, %v8727
    %v8729 = vpop.f32.mrf.mxu0
    %v8730 = vpop.f32.mrf.mxu0
    %v8731 = vadd.f32 %v7886, %v8730
    %v8732 = vpop.f32.mrf.mxu0
    %8733 = vmatprep.mubr.bf16.mxu0 %v8257
    %8734 = vmatmul.mubr.bf16.gmra.mxu0 %v8256
    %v8735 = vpop.f32.mrf.mxu0
    %v8736 = vadd.f32 %v7886, %v8735
    %v8737 = vpop.f32.mrf.mxu0
    %v8738 = vpop.f32.mrf.mxu0
    %v8739 = vadd.f32 %v7886, %v8738
    %v8740 = vpop.f32.mrf.mxu0
    %8741 = vmatprep.mubr.bf16.mxu0 %v8260
    %8742 = vmatmul.mubr.bf16.gmra.mxu0 %v8259
    %v8743 = vpop.f32.mrf.mxu0
    %v8744 = vadd.f32 %v7886, %v8743
    %v8745 = vpop.f32.mrf.mxu0
    %v8746 = vpop.f32.mrf.mxu0
    %v8747 = vadd.f32 %v7886, %v8746
    %v8748 = vpop.f32.mrf.mxu0
    %8749 = vmatprep.mubr.bf16.mxu0 %v8263
    %8750 = vmatmul.mubr.bf16.gmra.mxu0 %v8262
    %v8751 = vpop.f32.mrf.mxu0
    %v8752 = vadd.f32 %v7886, %v8751
    %v8753 = vpop.f32.mrf.mxu0
    %v8754 = vpop.f32.mrf.mxu0
    %v8755 = vadd.f32 %v7886, %v8754
    %v8756 = vpop.f32.mrf.mxu0
    %8757 = vmatprep.mubr.bf16.mxu0 %v8266
    %8758 = vmatmul.mubr.bf16.gmra.mxu0 %v8265
    %v8759 = vpop.f32.mrf.mxu0
    %v8760 = vadd.f32 %v7886, %v8759
    %v8761 = vpop.f32.mrf.mxu0
    %v8762 = vpop.f32.mrf.mxu0
    %v8763 = vadd.f32 %v7886, %v8762
    %v8764 = vpop.f32.mrf.mxu0
    %8765 = vmatprep.mubr.bf16.mxu0 %v8269
    %8766 = vmatmul.mubr.bf16.gmra.mxu0 %v8268
    %v8767 = vpop.f32.mrf.mxu0
    %v8768 = vadd.f32 %v7886, %v8767
    %v8769 = vpop.f32.mrf.mxu0
    %v8770 = vpop.f32.mrf.mxu0
    %v8771 = vadd.f32 %v7886, %v8770
    %v8772 = vpop.f32.mrf.mxu0
    %8773 = vmatprep.mubr.bf16.mxu0 %v8272
    %8774 = vmatmul.mubr.bf16.gmra.mxu0 %v8271
    %v8775 = vpop.f32.mrf.mxu0
    %v8776 = vadd.f32 %v7886, %v8775
    %v8777 = vpop.f32.mrf.mxu0
    %v8778 = vpop.f32.mrf.mxu0
    %v8779 = vadd.f32 %v7886, %v8778
    %v8780 = vpop.f32.mrf.mxu0
    %8781 = vmatprep.mubr.bf16.mxu0 %v8275
    %8782 = vmatmul.mubr.bf16.gmra.mxu0 %v8274
    %v8783 = vpop.f32.mrf.mxu0
    %v8784 = vadd.f32 %v7886, %v8783
    %v8785 = vpop.f32.mrf.mxu0
    %v8786 = vpop.f32.mrf.mxu0
    %v8787 = vadd.f32 %v7886, %v8786
    %v8788 = vpop.f32.mrf.mxu0
    %8789 = vmatprep.mubr.bf16.mxu0 %v8278
    %8790 = vmatmul.mubr.bf16.gmra.mxu0 %v8277
    %v8791 = vpop.f32.mrf.mxu0
    %v8792 = vadd.f32 %v7886, %v8791
    %v8793 = vpop.f32.mrf.mxu0
    %v8794 = vpop.f32.mrf.mxu0
    %v8795 = vadd.f32 %v7886, %v8794
    %v8796 = vpop.f32.mrf.mxu0
    %8797 = vmatprep.mubr.bf16.mxu0 %v8281
    %8798 = vmatmul.mubr.bf16.gmra.mxu0 %v8280
    %v8799 = vpop.f32.mrf.mxu0
    %v8800 = vadd.f32 %v7886, %v8799
    %v8801 = vpop.f32.mrf.mxu0
    %v8802 = vpop.f32.mrf.mxu0
    %v8803 = vadd.f32 %v7886, %v8802
    %v8804 = vpop.f32.mrf.mxu0
    %8805 = vmatprep.mubr.bf16.mxu0 %v8284
    %8806 = vmatmul.mubr.bf16.gmra.mxu0 %v8283
    %v8807 = vpop.f32.mrf.mxu0
    %v8808 = vadd.f32 %v7886, %v8807
    %v8809 = vpop.f32.mrf.mxu0
    %v8810 = vpop.f32.mrf.mxu0
    %v8811 = vadd.f32 %v7886, %v8810
    %v8812 = vpop.f32.mrf.mxu0
    %8813 = vmatprep.mubr.bf16.mxu0 %v8287
    %8814 = vmatmul.mubr.bf16.gmra.mxu0 %v8286
    %v8815 = vpop.f32.mrf.mxu0
    %v8816 = vadd.f32 %v7886, %v8815
    %v8817 = vpop.f32.mrf.mxu0
    %v8818 = vpop.f32.mrf.mxu0
    %v8819 = vadd.f32 %v7886, %v8818
    %v8820 = vpop.f32.mrf.mxu0
    %8821 = vmatprep.mubr.bf16.mxu0 %v8290
    %8822 = vmatmul.mubr.bf16.gmra.mxu0 %v8289
    %v8823 = vpop.f32.mrf.mxu0
    %v8824 = vadd.f32 %v7886, %v8823
    %v8825 = vpop.f32.mrf.mxu0
    %v8826 = vpop.f32.mrf.mxu0
    %v8827 = vadd.f32 %v7886, %v8826
    %v8828 = vpop.f32.mrf.mxu0
    %8829 = vmatprep.mubr.bf16.mxu0 %v8293
    %8830 = vmatmul.mubr.bf16.gmra.mxu0 %v8292
    %v8831 = vpop.f32.mrf.mxu0
    %v8832 = vadd.f32 %v7886, %v8831
    %v8833 = vpop.f32.mrf.mxu0
    %v8834 = vpop.f32.mrf.mxu0
    %v8835 = vadd.f32 %v7886, %v8834
    %v8836 = vpop.f32.mrf.mxu0
    %8837 = vmatprep.mubr.bf16.mxu0 %v8296
    %8838 = vmatmul.mubr.bf16.gmra.mxu0 %v8295
    %v8839 = vpop.f32.mrf.mxu0
    %v8840 = vadd.f32 %v7886, %v8839
    %v8841 = vpop.f32.mrf.mxu0
    %v8842 = vpop.f32.mrf.mxu0
    %v8843 = vadd.f32 %v7886, %v8842
    %v8844 = vpop.f32.mrf.mxu0
    %8845 = vmatprep.mubr.bf16.mxu0 %v8299
    %8846 = vmatmul.mubr.bf16.gmra.mxu0 %v8298
    %v8847 = vpop.f32.mrf.mxu0
    %v8848 = vadd.f32 %v7886, %v8847
    %v8849 = vpop.f32.mrf.mxu0
    %v8850 = vpop.f32.mrf.mxu0
    %v8851 = vadd.f32 %v7886, %v8850
    %v8852 = vpop.f32.mrf.mxu0
    %8853 = vmatprep.mubr.bf16.mxu0 %v8302
    %8854 = vmatmul.mubr.bf16.gmra.mxu0 %v8301
    %v8855 = vpop.f32.mrf.mxu0
    %v8856 = vadd.f32 %v7886, %v8855
    %v8857 = vpop.f32.mrf.mxu0
    %v8858 = vpop.f32.mrf.mxu0
    %v8859 = vadd.f32 %v7886, %v8858
    %v8860 = vpop.f32.mrf.mxu0
    %8861 = vdwg.mxu0
    %8862 = vmatprep.subr.bf16.mxu0 0
    %8863 = vmatpush1.bf16.msra.mxu0 0
    %8864 = vmatprep.subr.bf16.mxu0 0
    %8865 = vmatpush1.bf16.msra.mxu0 0
    %8866 = vmatprep.subr.bf16.mxu0 0
    %8867 = vmatpush1.bf16.msra.mxu0 0
    %8868 = vmatprep.subr.bf16.mxu0 0
    %8869 = vmatpush1.bf16.msra.mxu0 0
    %8870 = vmatprep.subr.bf16.mxu0 0
    %8871 = vmatpush1.bf16.msra.mxu0 0
    %8872 = vmatprep.subr.bf16.mxu0 0
    %8873 = vmatpush1.bf16.msra.mxu0 0
    %8874 = vmatprep.subr.bf16.mxu0 0
    %8875 = vmatpush1.bf16.msra.mxu0 %v8457
    %8876 = vmatprep.subr.bf16.mxu0 0
    %8877 = vmatpush1.bf16.msra.mxu0 %v8456
    %8878 = vmatprep.subr.bf16.mxu0 0
    %8879 = vmatpush2.bf16.msra.mxu0 0
    %8880 = vmatprep.subr.bf16.mxu0 0
    %8881 = vmatpush2.bf16.msra.mxu0 0
    %8882 = vmatprep.subr.bf16.mxu0 0
    %8883 = vmatpush2.bf16.msra.mxu0 0
    %8884 = vmatprep.subr.bf16.mxu0 0
    %8885 = vmatpush2.bf16.msra.mxu0 0
    %8886 = vmatprep.subr.bf16.mxu0 0
    %8887 = vmatpush2.bf16.msra.mxu0 0
    %8888 = vmatprep.subr.bf16.mxu0 0
    %8889 = vmatpush2.bf16.msra.mxu0 0
    %8890 = vmatprep.subr.bf16.mxu0 0
    %8891 = vmatpush2.bf16.msra.mxu0 0
    %8892 = vmatprep.subr.bf16.mxu0 0
    %8893 = vmatpush2.bf16.msra.mxu0 0
    %8894 = vmatprep.mubr.bf16.mxu0 0
    %8895 = vmatmul.mubr.bf16.gmra.mxu0 %v8478
    %v8896 = vpop.f32.mrf.mxu0
    %v8897 = vadd.f32 %v8608, %v8896
    %v8898 = vpop.f32.mrf.mxu0
    %v8899 = vpop.f32.mrf.mxu0
    %v8900 = vadd.f32 %v8611, %v8899
    %v8901 = vpop.f32.mrf.mxu0
    %8902 = vmatprep.mubr.bf16.mxu0 0
    %8903 = vmatmul.mubr.bf16.gmra.mxu0 %v8481
    %v8904 = vpop.f32.mrf.mxu0
    %v8905 = vadd.f32 %v8616, %v8904
    %v8906 = vpop.f32.mrf.mxu0
    %v8907 = vpop.f32.mrf.mxu0
    %v8908 = vadd.f32 %v8619, %v8907
    %v8909 = vpop.f32.mrf.mxu0
    %8910 = vmatprep.mubr.bf16.mxu0 0
    %8911 = vmatmul.mubr.bf16.gmra.mxu0 %v8484
    %v8912 = vpop.f32.mrf.mxu0
    %v8913 = vadd.f32 %v8624, %v8912
    %v8914 = vpop.f32.mrf.mxu0
    %v8915 = vpop.f32.mrf.mxu0
    %v8916 = vadd.f32 %v8627, %v8915
    %v8917 = vpop.f32.mrf.mxu0
    %8918 = vmatprep.mubr.bf16.mxu0 0
    %8919 = vmatmul.mubr.bf16.gmra.mxu0 %v8487
    %v8920 = vpop.f32.mrf.mxu0
    %v8921 = vadd.f32 %v8632, %v8920
    %v8922 = vpop.f32.mrf.mxu0
    %v8923 = vpop.f32.mrf.mxu0
    %v8924 = vadd.f32 %v8635, %v8923
    %v8925 = vpop.f32.mrf.mxu0
    %8926 = vmatprep.mubr.bf16.mxu0 0
    %8927 = vmatmul.mubr.bf16.gmra.mxu0 %v8490
    %v8928 = vpop.f32.mrf.mxu0
    %v8929 = vadd.f32 %v8640, %v8928
    %v8930 = vpop.f32.mrf.mxu0
    %v8931 = vpop.f32.mrf.mxu0
    %v8932 = vadd.f32 %v8643, %v8931
    %v8933 = vpop.f32.mrf.mxu0
    %8934 = vmatprep.mubr.bf16.mxu0 0
    %8935 = vmatmul.mubr.bf16.gmra.mxu0 %v8493
    %v8936 = vpop.f32.mrf.mxu0
    %v8937 = vadd.f32 %v8648, %v8936
    %v8938 = vpop.f32.mrf.mxu0
    %v8939 = vpop.f32.mrf.mxu0
    %v8940 = vadd.f32 %v8651, %v8939
    %v8941 = vpop.f32.mrf.mxu0
    %8942 = vmatprep.mubr.bf16.mxu0 0
    %8943 = vmatmul.mubr.bf16.gmra.mxu0 %v8496
    %v8944 = vpop.f32.mrf.mxu0
    %v8945 = vadd.f32 %v8656, %v8944
    %v8946 = vpop.f32.mrf.mxu0
    %v8947 = vpop.f32.mrf.mxu0
    %v8948 = vadd.f32 %v8659, %v8947
    %v8949 = vpop.f32.mrf.mxu0
    %8950 = vmatprep.mubr.bf16.mxu0 0
    %8951 = vmatmul.mubr.bf16.gmra.mxu0 %v8499
    %v8952 = vpop.f32.mrf.mxu0
    %v8953 = vadd.f32 %v8664, %v8952
    %v8954 = vpop.f32.mrf.mxu0
    %v8955 = vpop.f32.mrf.mxu0
    %v8956 = vadd.f32 %v8667, %v8955
    %v8957 = vpop.f32.mrf.mxu0
    %8958 = vmatprep.mubr.bf16.mxu0 0
    %8959 = vmatmul.mubr.bf16.gmra.mxu0 %v8502
    %v8960 = vpop.f32.mrf.mxu0
    %v8961 = vadd.f32 %v8672, %v8960
    %v8962 = vpop.f32.mrf.mxu0
    %v8963 = vpop.f32.mrf.mxu0
    %v8964 = vadd.f32 %v8675, %v8963
    %v8965 = vpop.f32.mrf.mxu0
    %8966 = vmatprep.mubr.bf16.mxu0 0
    %8967 = vmatmul.mubr.bf16.gmra.mxu0 %v8505
    %v8968 = vpop.f32.mrf.mxu0
    %v8969 = vadd.f32 %v8680, %v8968
    %v8970 = vpop.f32.mrf.mxu0
    %v8971 = vpop.f32.mrf.mxu0
    %v8972 = vadd.f32 %v8683, %v8971
    %v8973 = vpop.f32.mrf.mxu0
    %8974 = vmatprep.mubr.bf16.mxu0 0
    %8975 = vmatmul.mubr.bf16.gmra.mxu0 %v8508
    %v8976 = vpop.f32.mrf.mxu0
    %v8977 = vadd.f32 %v8688, %v8976
    %v8978 = vpop.f32.mrf.mxu0
    %v8979 = vpop.f32.mrf.mxu0
    %v8980 = vadd.f32 %v8691, %v8979
    %v8981 = vpop.f32.mrf.mxu0
    %8982 = vmatprep.mubr.bf16.mxu0 0
    %8983 = vmatmul.mubr.bf16.gmra.mxu0 %v8511
    %v8984 = vpop.f32.mrf.mxu0
    %v8985 = vadd.f32 %v8696, %v8984
    %v8986 = vpop.f32.mrf.mxu0
    %v8987 = vpop.f32.mrf.mxu0
    %v8988 = vadd.f32 %v8699, %v8987
    %v8989 = vpop.f32.mrf.mxu0
    %8990 = vmatprep.mubr.bf16.mxu0 0
    %8991 = vmatmul.mubr.bf16.gmra.mxu0 %v8514
    %v8992 = vpop.f32.mrf.mxu0
    %v8993 = vadd.f32 %v8704, %v8992
    %v8994 = vpop.f32.mrf.mxu0
    %v8995 = vpop.f32.mrf.mxu0
    %v8996 = vadd.f32 %v8707, %v8995
    %v8997 = vpop.f32.mrf.mxu0
    %8998 = vmatprep.mubr.bf16.mxu0 0
    %8999 = vmatmul.mubr.bf16.gmra.mxu0 %v8517
    %v9000 = vpop.f32.mrf.mxu0
    %v9001 = vadd.f32 %v8712, %v9000
    %v9002 = vpop.f32.mrf.mxu0
    %v9003 = vpop.f32.mrf.mxu0
    %v9004 = vadd.f32 %v8715, %v9003
    %v9005 = vpop.f32.mrf.mxu0
    %9006 = vmatprep.mubr.bf16.mxu0 0
    %9007 = vmatmul.mubr.bf16.gmra.mxu0 %v8520
    %v9008 = vpop.f32.mrf.mxu0
    %v9009 = vadd.f32 %v8720, %v9008
    %v9010 = vpop.f32.mrf.mxu0
    %v9011 = vpop.f32.mrf.mxu0
    %v9012 = vadd.f32 %v8723, %v9011
    %v9013 = vpop.f32.mrf.mxu0
    %9014 = vmatprep.mubr.bf16.mxu0 0
    %9015 = vmatmul.mubr.bf16.gmra.mxu0 %v8523
    %v9016 = vpop.f32.mrf.mxu0
    %v9017 = vadd.f32 %v8728, %v9016
    %v9018 = vpop.f32.mrf.mxu0
    %v9019 = vpop.f32.mrf.mxu0
    %v9020 = vadd.f32 %v8731, %v9019
    %v9021 = vpop.f32.mrf.mxu0
    %9022 = vmatprep.mubr.bf16.mxu0 0
    %9023 = vmatmul.mubr.bf16.gmra.mxu0 %v8526
    %v9024 = vpop.f32.mrf.mxu0
    %v9025 = vadd.f32 %v8736, %v9024
    %v9026 = vpop.f32.mrf.mxu0
    %v9027 = vpop.f32.mrf.mxu0
    %v9028 = vadd.f32 %v8739, %v9027
    %v9029 = vpop.f32.mrf.mxu0
    %9030 = vmatprep.mubr.bf16.mxu0 0
    %9031 = vmatmul.mubr.bf16.gmra.mxu0 %v8529
    %v9032 = vpop.f32.mrf.mxu0
    %v9033 = vadd.f32 %v8744, %v9032
    %v9034 = vpop.f32.mrf.mxu0
    %v9035 = vpop.f32.mrf.mxu0
    %v9036 = vadd.f32 %v8747, %v9035
    %v9037 = vpop.f32.mrf.mxu0
    %9038 = vmatprep.mubr.bf16.mxu0 0
    %9039 = vmatmul.mubr.bf16.gmra.mxu0 %v8532
    %v9040 = vpop.f32.mrf.mxu0
    %v9041 = vadd.f32 %v8752, %v9040
    %v9042 = vpop.f32.mrf.mxu0
    %v9043 = vpop.f32.mrf.mxu0
    %v9044 = vadd.f32 %v8755, %v9043
    %v9045 = vpop.f32.mrf.mxu0
    %9046 = vmatprep.mubr.bf16.mxu0 0
    %9047 = vmatmul.mubr.bf16.gmra.mxu0 %v8535
    %v9048 = vpop.f32.mrf.mxu0
    %v9049 = vadd.f32 %v8760, %v9048
    %v9050 = vpop.f32.mrf.mxu0
    %v9051 = vpop.f32.mrf.mxu0
    %v9052 = vadd.f32 %v8763, %v9051
    %v9053 = vpop.f32.mrf.mxu0
    %9054 = vmatprep.mubr.bf16.mxu0 0
    %9055 = vmatmul.mubr.bf16.gmra.mxu0 %v8538
    %v9056 = vpop.f32.mrf.mxu0
    %v9057 = vadd.f32 %v8768, %v9056
    %v9058 = vpop.f32.mrf.mxu0
    %v9059 = vpop.f32.mrf.mxu0
    %v9060 = vadd.f32 %v8771, %v9059
    %v9061 = vpop.f32.mrf.mxu0
    %9062 = vmatprep.mubr.bf16.mxu0 0
    %9063 = vmatmul.mubr.bf16.gmra.mxu0 %v8541
    %v9064 = vpop.f32.mrf.mxu0
    %v9065 = vadd.f32 %v8776, %v9064
    %v9066 = vpop.f32.mrf.mxu0
    %v9067 = vpop.f32.mrf.mxu0
    %v9068 = vadd.f32 %v8779, %v9067
    %v9069 = vpop.f32.mrf.mxu0
    %9070 = vmatprep.mubr.bf16.mxu0 0
    %9071 = vmatmul.mubr.bf16.gmra.mxu0 %v8544
    %v9072 = vpop.f32.mrf.mxu0
    %v9073 = vadd.f32 %v8784, %v9072
    %v9074 = vpop.f32.mrf.mxu0
    %v9075 = vpop.f32.mrf.mxu0
    %v9076 = vadd.f32 %v8787, %v9075
    %v9077 = vpop.f32.mrf.mxu0
    %9078 = vmatprep.mubr.bf16.mxu0 0
    %9079 = vmatmul.mubr.bf16.gmra.mxu0 %v8547
    %v9080 = vpop.f32.mrf.mxu0
    %v9081 = vadd.f32 %v8792, %v9080
    %v9082 = vpop.f32.mrf.mxu0
    %v9083 = vpop.f32.mrf.mxu0
    %v9084 = vadd.f32 %v8795, %v9083
    %v9085 = vpop.f32.mrf.mxu0
    %9086 = vmatprep.mubr.bf16.mxu0 0
    %9087 = vmatmul.mubr.bf16.gmra.mxu0 %v8550
    %v9088 = vpop.f32.mrf.mxu0
    %v9089 = vadd.f32 %v8800, %v9088
    %v9090 = vpop.f32.mrf.mxu0
    %v9091 = vpop.f32.mrf.mxu0
    %v9092 = vadd.f32 %v8803, %v9091
    %v9093 = vpop.f32.mrf.mxu0
    %9094 = vmatprep.mubr.bf16.mxu0 0
    %9095 = vmatmul.mubr.bf16.gmra.mxu0 %v8553
    %v9096 = vpop.f32.mrf.mxu0
    %v9097 = vadd.f32 %v8808, %v9096
    %v9098 = vpop.f32.mrf.mxu0
    %v9099 = vpop.f32.mrf.mxu0
    %v9100 = vadd.f32 %v8811, %v9099
    %v9101 = vpop.f32.mrf.mxu0
    %9102 = vmatprep.mubr.bf16.mxu0 0
    %9103 = vmatmul.mubr.bf16.gmra.mxu0 %v8556
    %v9104 = vpop.f32.mrf.mxu0
    %v9105 = vadd.f32 %v8816, %v9104
    %v9106 = vpop.f32.mrf.mxu0
    %v9107 = vpop.f32.mrf.mxu0
    %v9108 = vadd.f32 %v8819, %v9107
    %v9109 = vpop.f32.mrf.mxu0
    %9110 = vmatprep.mubr.bf16.mxu0 0
    %9111 = vmatmul.mubr.bf16.gmra.mxu0 %v8559
    %v9112 = vpop.f32.mrf.mxu0
    %v9113 = vadd.f32 %v8824, %v9112
    %v9114 = vpop.f32.mrf.mxu0
    %v9115 = vpop.f32.mrf.mxu0
    %v9116 = vadd.f32 %v8827, %v9115
    %v9117 = vpop.f32.mrf.mxu0
    %9118 = vmatprep.mubr.bf16.mxu0 0
    %9119 = vmatmul.mubr.bf16.gmra.mxu0 %v8562
    %v9120 = vpop.f32.mrf.mxu0
    %v9121 = vadd.f32 %v8832, %v9120
    %v9122 = vpop.f32.mrf.mxu0
    %v9123 = vpop.f32.mrf.mxu0
    %v9124 = vadd.f32 %v8835, %v9123
    %v9125 = vpop.f32.mrf.mxu0
    %9126 = vmatprep.mubr.bf16.mxu0 0
    %9127 = vmatmul.mubr.bf16.gmra.mxu0 %v8565
    %v9128 = vpop.f32.mrf.mxu0
    %v9129 = vadd.f32 %v8840, %v9128
    %v9130 = vpop.f32.mrf.mxu0
    %v9131 = vpop.f32.mrf.mxu0
    %v9132 = vadd.f32 %v8843, %v9131
    %v9133 = vpop.f32.mrf.mxu0
    %9134 = vmatprep.mubr.bf16.mxu0 0
    %9135 = vmatmul.mubr.bf16.gmra.mxu0 %v8568
    %v9136 = vpop.f32.mrf.mxu0
    %v9137 = vadd.f32 %v8848, %v9136
    %v9138 = vpop.f32.mrf.mxu0
    %v9139 = vpop.f32.mrf.mxu0
    %v9140 = vadd.f32 %v8851, %v9139
    %v9141 = vpop.f32.mrf.mxu0
    %9142 = vmatprep.mubr.bf16.mxu0 0
    %9143 = vmatmul.mubr.bf16.gmra.mxu0 %v8571
    %v9144 = vpop.f32.mrf.mxu0
    %v9145 = vadd.f32 %v8856, %v9144
    %v9146 = vpop.f32.mrf.mxu0
    %v9147 = vpop.f32.mrf.mxu0
    %v9148 = vadd.f32 %v8859, %v9147
    %v9149 = vpop.f32.mrf.mxu0
    %9150 = vdwg.mxu0
    %v9151 = vmax.f32 %v8897, 0.0
    %v9152 = vmax.f32 %v8900, 0.0
    %v9153 = vmax.f32 %v8905, 0.0
    %v9154 = vmax.f32 %v8908, 0.0
    %v9155 = vmax.f32 %v8913, 0.0
    %v9156 = vmax.f32 %v8916, 0.0
    %v9157 = vmax.f32 %v8921, 0.0
    %v9158 = vmax.f32 %v8924, 0.0
    %v9159 = vmax.f32 %v8929, 0.0
    %v9160 = vmax.f32 %v8932, 0.0
    %v9161 = vmax.f32 %v8937, 0.0
    %v9162 = vmax.f32 %v8940, 0.0
    %v9163 = vmax.f32 %v8945, 0.0
    %v9164 = vmax.f32 %v8948, 0.0
    %v9165 = vmax.f32 %v8953, 0.0
    %v9166 = vmax.f32 %v8956, 0.0
    %v9167 = vmax.f32 %v8961, 0.0
    %v9168 = vmax.f32 %v8964, 0.0
    %v9169 = vmax.f32 %v8969, 0.0
    %v9170 = vmax.f32 %v8972, 0.0
    %v9171 = vmax.f32 %v8977, 0.0
    %v9172 = vmax.f32 %v8980, 0.0
    %v9173 = vmax.f32 %v8985, 0.0
    %v9174 = vmax.f32 %v8988, 0.0
    %v9175 = vmax.f32 %v8993, 0.0
    %v9176 = vmax.f32 %v8996, 0.0
    %v9177 = vmax.f32 %v9001, 0.0
    %v9178 = vmax.f32 %v9004, 0.0
    %v9179 = vmax.f32 %v9009, 0.0
    %v9180 = vmax.f32 %v9012, 0.0
    %v9181 = vmax.f32 %v9017, 0.0
    %v9182 = vmax.f32 %v9020, 0.0
    %v9183 = vmax.f32 %v9025, 0.0
    %v9184 = vmax.f32 %v9028, 0.0
    %v9185 = vmax.f32 %v9033, 0.0
    %v9186 = vmax.f32 %v9036, 0.0
    %v9187 = vmax.f32 %v9041, 0.0
    %v9188 = vmax.f32 %v9044, 0.0
    %v9189 = vmax.f32 %v9049, 0.0
    %v9190 = vmax.f32 %v9052, 0.0
    %v9191 = vmax.f32 %v9057, 0.0
    %v9192 = vmax.f32 %v9060, 0.0
    %v9193 = vmax.f32 %v9065, 0.0
    %v9194 = vmax.f32 %v9068, 0.0
    %v9195 = vmax.f32 %v9073, 0.0
    %v9196 = vmax.f32 %v9076, 0.0
    %v9197 = vmax.f32 %v9081, 0.0
    %v9198 = vmax.f32 %v9084, 0.0
    %v9199 = vmax.f32 %v9089, 0.0
    %v9200 = vmax.f32 %v9092, 0.0
    %v9201 = vmax.f32 %v9097, 0.0
    %v9202 = vmax.f32 %v9100, 0.0
    %v9203 = vmax.f32 %v9105, 0.0
    %v9204 = vmax.f32 %v9108, 0.0
    %v9205 = vmax.f32 %v9113, 0.0
    %v9206 = vmax.f32 %v9116, 0.0
    %v9207 = vmax.f32 %v9121, 0.0
    %v9208 = vmax.f32 %v9124, 0.0
    %v9209 = vmax.f32 %v9129, 0.0
    %v9210 = vmax.f32 %v9132, 0.0
    %v9211 = vmax.f32 %v9137, 0.0
    %v9212 = vmax.f32 %v9140, 0.0
    %v9213 = vmax.f32 %v9145, 0.0
    %v9214 = vmax.f32 %v9148, 0.0
    %v9215 = vpack.c.bf16 %v9152, %v9151
    %v9216 = vpack.c.bf16 %v9154, %v9153
    %v9217 = vpack.c.bf16 %v9156, %v9155
    %v9218 = vpack.c.bf16 %v9158, %v9157
    %v9219 = vpack.c.bf16 %v9160, %v9159
    %v9220 = vpack.c.bf16 %v9162, %v9161
    %v9221 = vpack.c.bf16 %v9164, %v9163
    %v9222 = vpack.c.bf16 %v9166, %v9165
    %v9223 = vpack.c.bf16 %v9168, %v9167
    %v9224 = vpack.c.bf16 %v9170, %v9169
    %v9225 = vpack.c.bf16 %v9172, %v9171
    %v9226 = vpack.c.bf16 %v9174, %v9173
    %v9227 = vpack.c.bf16 %v9176, %v9175
    %v9228 = vpack.c.bf16 %v9178, %v9177
    %v9229 = vpack.c.bf16 %v9180, %v9179
    %v9230 = vpack.c.bf16 %v9182, %v9181
    %v9231 = vpack.c.bf16 %v9184, %v9183
    %v9232 = vpack.c.bf16 %v9186, %v9185
    %v9233 = vpack.c.bf16 %v9188, %v9187
    %v9234 = vpack.c.bf16 %v9190, %v9189
    %v9235 = vpack.c.bf16 %v9192, %v9191
    %v9236 = vpack.c.bf16 %v9194, %v9193
    %v9237 = vpack.c.bf16 %v9196, %v9195
    %v9238 = vpack.c.bf16 %v9198, %v9197
    %v9239 = vpack.c.bf16 %v9200, %v9199
    %v9240 = vpack.c.bf16 %v9202, %v9201
    %v9241 = vpack.c.bf16 %v9204, %v9203
    %v9242 = vpack.c.bf16 %v9206, %v9205
    %v9243 = vpack.c.bf16 %v9208, %v9207
    %v9244 = vpack.c.bf16 %v9210, %v9209
    %v9245 = vpack.c.bf16 %v9212, %v9211
    %v9246 = vpack.c.bf16 %v9214, %v9213
    %v9247 = vld [vmem:[%s5] sm:$0xf]
    %v9248 = vld [vmem:[%s5 + $0x4] sm:$0xf]
    %v9249 = vld [vmem:[%s5 + $0x8] sm:$0xf]
    %v9250 = vld [vmem:[%s5 + $0xc] sm:$0xf]
    %v9251 = vld [vmem:[%s6] sm:$0x1]
    %v9253 = vlaneseq
    %v9254 = vshrl.u32 %v9253, 7
    %v9255 = vsub.s32 0, %v9254
    %v9256 = vrot.slane %v9251, %v9255
    %v9262 = vunpack.c.l.b16 %v9247
    %v9263 = vunpack.c.l.b16 %v9248
    %v9264 = vunpack.c.l.b16 %v9249
    %v9265 = vunpack.c.l.b16 %v9250
    %v9266 = vpack.c.b16 %v9263, %v9262
    %v9267 = vpack.c.b16 %v9265, %v9264
    %v9271 = vsel %vm8476, %v9215, 0
    %v9274 = vsel %vm8476, %v9216, 0
    %v9277 = vsel %vm8476, %v9217, 0
    %v9280 = vsel %vm8476, %v9218, 0
    %v9283 = vsel %vm8476, %v9219, 0
    %v9286 = vsel %vm8476, %v9220, 0
    %v9289 = vsel %vm8476, %v9221, 0
    %v9292 = vsel %vm8476, %v9222, 0
    %v9295 = vsel %vm8476, %v9223, 0
    %v9298 = vsel %vm8476, %v9224, 0
    %v9301 = vsel %vm8476, %v9225, 0
    %v9304 = vsel %vm8476, %v9226, 0
    %v9307 = vsel %vm8476, %v9227, 0
    %v9310 = vsel %vm8476, %v9228, 0
    %v9313 = vsel %vm8476, %v9229, 0
    %v9316 = vsel %vm8476, %v9230, 0
    %9318 = vmatprep.subr.bf16.mxu0 0
    %9319 = vmatpush1.bf16.msra.mxu0 0
    %9320 = vmatprep.subr.bf16.mxu0 0
    %9321 = vmatpush1.bf16.msra.mxu0 0
    %9322 = vmatprep.subr.bf16.mxu0 0
    %9323 = vmatpush1.bf16.msra.mxu0 0
    %9324 = vmatprep.subr.bf16.mxu0 0
    %9325 = vmatpush1.bf16.msra.mxu0 0
    %9326 = vmatprep.subr.bf16.mxu0 0
    %9327 = vmatpush1.bf16.msra.mxu0 0
    %9328 = vmatprep.subr.bf16.mxu0 0
    %9329 = vmatpush1.bf16.msra.mxu0 0
    %9330 = vmatprep.subr.bf16.mxu0 0
    %9331 = vmatpush1.bf16.msra.mxu0 %v9267
    %9332 = vmatprep.subr.bf16.mxu0 0
    %9333 = vmatpush1.bf16.msra.mxu0 %v9266
    %9334 = vmatprep.subr.bf16.mxu0 0
    %9335 = vmatpush2.bf16.msra.mxu0 0
    %9336 = vmatprep.subr.bf16.mxu0 0
    %9337 = vmatpush2.bf16.msra.mxu0 0
    %9338 = vmatprep.subr.bf16.mxu0 0
    %9339 = vmatpush2.bf16.msra.mxu0 0
    %9340 = vmatprep.subr.bf16.mxu0 0
    %9341 = vmatpush2.bf16.msra.mxu0 0
    %9342 = vmatprep.subr.bf16.mxu0 0
    %9343 = vmatpush2.bf16.msra.mxu0 0
    %9344 = vmatprep.subr.bf16.mxu0 0
    %9345 = vmatpush2.bf16.msra.mxu0 0
    %9346 = vmatprep.subr.bf16.mxu0 0
    %9347 = vmatpush2.bf16.msra.mxu0 0
    %9348 = vmatprep.subr.bf16.mxu0 0
    %9349 = vmatpush2.bf16.msra.mxu0 0
    %9350 = vmatprep.mubr.bf16.mxu0 0
    %9351 = vmatmul.mubr.bf16.gmra.mxu0 %v9271
    %v9352 = vpop.f32.mrf.mxu0
    %v9353 = vadd.f32 %v9256, %v9352
    %v9354 = vpop.f32.mrf.mxu0
    %v9355 = vpop.f32.mrf.mxu0
    %v9356 = vadd.f32 %v9256, %v9355
    %v9357 = vpop.f32.mrf.mxu0
    %9358 = vmatprep.mubr.bf16.mxu0 0
    %9359 = vmatmul.mubr.bf16.gmra.mxu0 %v9274
    %v9360 = vpop.f32.mrf.mxu0
    %v9361 = vadd.f32 %v9256, %v9360
    %v9362 = vpop.f32.mrf.mxu0
    %v9363 = vpop.f32.mrf.mxu0
    %v9364 = vadd.f32 %v9256, %v9363
    %v9365 = vpop.f32.mrf.mxu0
    %9366 = vmatprep.mubr.bf16.mxu0 0
    %9367 = vmatmul.mubr.bf16.gmra.mxu0 %v9277
    %v9368 = vpop.f32.mrf.mxu0
    %v9369 = vadd.f32 %v9256, %v9368
    %v9370 = vpop.f32.mrf.mxu0
    %v9371 = vpop.f32.mrf.mxu0
    %v9372 = vadd.f32 %v9256, %v9371
    %v9373 = vpop.f32.mrf.mxu0
    %9374 = vmatprep.mubr.bf16.mxu0 0
    %9375 = vmatmul.mubr.bf16.gmra.mxu0 %v9280
    %v9376 = vpop.f32.mrf.mxu0
    %v9377 = vadd.f32 %v9256, %v9376
    %v9378 = vpop.f32.mrf.mxu0
    %v9379 = vpop.f32.mrf.mxu0
    %v9380 = vadd.f32 %v9256, %v9379
    %v9381 = vpop.f32.mrf.mxu0
    %9382 = vmatprep.mubr.bf16.mxu0 0
    %9383 = vmatmul.mubr.bf16.gmra.mxu0 %v9283
    %v9384 = vpop.f32.mrf.mxu0
    %v9385 = vadd.f32 %v9256, %v9384
    %v9386 = vpop.f32.mrf.mxu0
    %v9387 = vpop.f32.mrf.mxu0
    %v9388 = vadd.f32 %v9256, %v9387
    %v9389 = vpop.f32.mrf.mxu0
    %9390 = vmatprep.mubr.bf16.mxu0 0
    %9391 = vmatmul.mubr.bf16.gmra.mxu0 %v9286
    %v9392 = vpop.f32.mrf.mxu0
    %v9393 = vadd.f32 %v9256, %v9392
    %v9394 = vpop.f32.mrf.mxu0
    %v9395 = vpop.f32.mrf.mxu0
    %v9396 = vadd.f32 %v9256, %v9395
    %v9397 = vpop.f32.mrf.mxu0
    %9398 = vmatprep.mubr.bf16.mxu0 0
    %9399 = vmatmul.mubr.bf16.gmra.mxu0 %v9289
    %v9400 = vpop.f32.mrf.mxu0
    %v9401 = vadd.f32 %v9256, %v9400
    %v9402 = vpop.f32.mrf.mxu0
    %v9403 = vpop.f32.mrf.mxu0
    %v9404 = vadd.f32 %v9256, %v9403
    %v9405 = vpop.f32.mrf.mxu0
    %9406 = vmatprep.mubr.bf16.mxu0 0
    %9407 = vmatmul.mubr.bf16.gmra.mxu0 %v9292
    %v9408 = vpop.f32.mrf.mxu0
    %v9409 = vadd.f32 %v9256, %v9408
    %v9410 = vpop.f32.mrf.mxu0
    %v9411 = vpop.f32.mrf.mxu0
    %v9412 = vadd.f32 %v9256, %v9411
    %v9413 = vpop.f32.mrf.mxu0
    %9414 = vmatprep.mubr.bf16.mxu0 0
    %9415 = vmatmul.mubr.bf16.gmra.mxu0 %v9295
    %v9416 = vpop.f32.mrf.mxu0
    %v9417 = vadd.f32 %v9256, %v9416
    %v9418 = vpop.f32.mrf.mxu0
    %v9419 = vpop.f32.mrf.mxu0
    %v9420 = vadd.f32 %v9256, %v9419
    %v9421 = vpop.f32.mrf.mxu0
    %9422 = vmatprep.mubr.bf16.mxu0 0
    %9423 = vmatmul.mubr.bf16.gmra.mxu0 %v9298
    %v9424 = vpop.f32.mrf.mxu0
    %v9425 = vadd.f32 %v9256, %v9424
    %v9426 = vpop.f32.mrf.mxu0
    %v9427 = vpop.f32.mrf.mxu0
    %v9428 = vadd.f32 %v9256, %v9427
    %v9429 = vpop.f32.mrf.mxu0
    %9430 = vmatprep.mubr.bf16.mxu0 0
    %9431 = vmatmul.mubr.bf16.gmra.mxu0 %v9301
    %v9432 = vpop.f32.mrf.mxu0
    %v9433 = vadd.f32 %v9256, %v9432
    %v9434 = vpop.f32.mrf.mxu0
    %v9435 = vpop.f32.mrf.mxu0
    %v9436 = vadd.f32 %v9256, %v9435
    %v9437 = vpop.f32.mrf.mxu0
    %9438 = vmatprep.mubr.bf16.mxu0 0
    %9439 = vmatmul.mubr.bf16.gmra.mxu0 %v9304
    %v9440 = vpop.f32.mrf.mxu0
    %v9441 = vadd.f32 %v9256, %v9440
    %v9442 = vpop.f32.mrf.mxu0
    %v9443 = vpop.f32.mrf.mxu0
    %v9444 = vadd.f32 %v9256, %v9443
    %v9445 = vpop.f32.mrf.mxu0
    %9446 = vmatprep.mubr.bf16.mxu0 0
    %9447 = vmatmul.mubr.bf16.gmra.mxu0 %v9307
    %v9448 = vpop.f32.mrf.mxu0
    %v9449 = vadd.f32 %v9256, %v9448
    %v9450 = vpop.f32.mrf.mxu0
    %v9451 = vpop.f32.mrf.mxu0
    %v9452 = vadd.f32 %v9256, %v9451
    %v9453 = vpop.f32.mrf.mxu0
    %9454 = vmatprep.mubr.bf16.mxu0 0
    %9455 = vmatmul.mubr.bf16.gmra.mxu0 %v9310
    %v9456 = vpop.f32.mrf.mxu0
    %v9457 = vadd.f32 %v9256, %v9456
    %v9458 = vpop.f32.mrf.mxu0
    %v9459 = vpop.f32.mrf.mxu0
    %v9460 = vadd.f32 %v9256, %v9459
    %v9461 = vpop.f32.mrf.mxu0
    %9462 = vmatprep.mubr.bf16.mxu0 0
    %9463 = vmatmul.mubr.bf16.gmra.mxu0 %v9313
    %v9464 = vpop.f32.mrf.mxu0
    %v9465 = vadd.f32 %v9256, %v9464
    %v9466 = vpop.f32.mrf.mxu0
    %v9467 = vpop.f32.mrf.mxu0
    %v9468 = vadd.f32 %v9256, %v9467
    %v9469 = vpop.f32.mrf.mxu0
    %9470 = vmatprep.mubr.bf16.mxu0 0
    %9471 = vmatmul.mubr.bf16.gmra.mxu0 %v9316
    %v9472 = vpop.f32.mrf.mxu0
    %v9473 = vadd.f32 %v9256, %v9472
    %v9474 = vpop.f32.mrf.mxu0
    %v9475 = vpop.f32.mrf.mxu0
    %v9476 = vadd.f32 %v9256, %v9475
    %v9477 = vpop.f32.mrf.mxu0
    %9478 = vdwg.mxu0
    %v9479 = vmax.f32 %v9353, 0.0
    %v9480 = vmax.f32 %v9356, 0.0
    %v9481 = vmax.f32 %v9361, 0.0
    %v9482 = vmax.f32 %v9364, 0.0
    %v9483 = vmax.f32 %v9369, 0.0
    %v9484 = vmax.f32 %v9372, 0.0
    %v9485 = vmax.f32 %v9377, 0.0
    %v9486 = vmax.f32 %v9380, 0.0
    %v9487 = vmax.f32 %v9385, 0.0
    %v9488 = vmax.f32 %v9388, 0.0
    %v9489 = vmax.f32 %v9393, 0.0
    %v9490 = vmax.f32 %v9396, 0.0
    %v9491 = vmax.f32 %v9401, 0.0
    %v9492 = vmax.f32 %v9404, 0.0
    %v9493 = vmax.f32 %v9409, 0.0
    %v9494 = vmax.f32 %v9412, 0.0
    %v9495 = vmax.f32 %v9417, 0.0
    %v9496 = vmax.f32 %v9420, 0.0
    %v9497 = vmax.f32 %v9425, 0.0
    %v9498 = vmax.f32 %v9428, 0.0
    %v9499 = vmax.f32 %v9433, 0.0
    %v9500 = vmax.f32 %v9436, 0.0
    %v9501 = vmax.f32 %v9441, 0.0
    %v9502 = vmax.f32 %v9444, 0.0
    %v9503 = vmax.f32 %v9449, 0.0
    %v9504 = vmax.f32 %v9452, 0.0
    %v9505 = vmax.f32 %v9457, 0.0
    %v9506 = vmax.f32 %v9460, 0.0
    %v9507 = vmax.f32 %v9465, 0.0
    %v9508 = vmax.f32 %v9468, 0.0
    %v9509 = vmax.f32 %v9473, 0.0
    %v9510 = vmax.f32 %v9476, 0.0
    %9511 = vxpose.xlu0.b32.start [1/16] %v9479, 128
    %9512 = vxpose.xlu0.b32.cont [2/16] %v9480, 128
    %9513 = vxpose.xlu0.b32.cont [3/16] %v9481, 128
    %9514 = vxpose.xlu0.b32.cont [4/16] %v9482, 128
    %9515 = vxpose.xlu0.b32.cont [5/16] %v9483, 128
    %9516 = vxpose.xlu0.b32.cont [6/16] %v9484, 128
    %9517 = vxpose.xlu0.b32.cont [7/16] %v9485, 128
    %9518 = vxpose.xlu0.b32.cont [8/16] %v9486, 128
    %9519 = vxpose.xlu0.b32.cont [9/16] %v9487, 128
    %9520 = vxpose.xlu0.b32.cont [10/16] %v9488, 128
    %9521 = vxpose.xlu0.b32.cont [11/16] %v9489, 128
    %9522 = vxpose.xlu0.b32.cont [12/16] %v9490, 128
    %9523 = vxpose.xlu0.b32.cont [13/16] %v9491, 128
    %9524 = vxpose.xlu0.b32.cont [14/16] %v9492, 128
    %9525 = vxpose.xlu0.b32.cont [15/16] %v9493, 128
    %9526 = vxpose.xlu0.b32.end [16/16] %v9494, 128
    %v9527 = vpop.trf.xlu0
    %v9528 = vpop.trf.xlu0
    %v9529 = vpop.trf.xlu0
    %v9530 = vpop.trf.xlu0
    %v9531 = vpop.trf.xlu0
    %v9532 = vpop.trf.xlu0
    %v9533 = vpop.trf.xlu0
    %v9534 = vpop.trf.xlu0
    %v9535 = vpop.trf.xlu0
    %v9536 = vpop.trf.xlu0
    %v9537 = vpop.trf.xlu0
    %v9538 = vpop.trf.xlu0
    %v9539 = vpop.trf.xlu0
    %v9540 = vpop.trf.xlu0
    %v9541 = vpop.trf.xlu0
    %v9542 = vpop.trf.xlu0
    %9543 = vxpose.xlu0.b32.start [1/16] %v9495, 128
    %9544 = vxpose.xlu0.b32.cont [2/16] %v9496, 128
    %9545 = vxpose.xlu0.b32.cont [3/16] %v9497, 128
    %9546 = vxpose.xlu0.b32.cont [4/16] %v9498, 128
    %9547 = vxpose.xlu0.b32.cont [5/16] %v9499, 128
    %9548 = vxpose.xlu0.b32.cont [6/16] %v9500, 128
    %9549 = vxpose.xlu0.b32.cont [7/16] %v9501, 128
    %9550 = vxpose.xlu0.b32.cont [8/16] %v9502, 128
    %9551 = vxpose.xlu0.b32.cont [9/16] %v9503, 128
    %9552 = vxpose.xlu0.b32.cont [10/16] %v9504, 128
    %9553 = vxpose.xlu0.b32.cont [11/16] %v9505, 128
    %9554 = vxpose.xlu0.b32.cont [12/16] %v9506, 128
    %9555 = vxpose.xlu0.b32.cont [13/16] %v9507, 128
    %9556 = vxpose.xlu0.b32.cont [14/16] %v9508, 128
    %9557 = vxpose.xlu0.b32.cont [15/16] %v9509, 128
    %9558 = vxpose.xlu0.b32.end [16/16] %v9510, 128
    %v9559 = vpop.trf.xlu0
    %v9560 = vpop.trf.xlu0
    %v9561 = vpop.trf.xlu0
    %v9562 = vpop.trf.xlu0
    %v9563 = vpop.trf.xlu0
    %v9564 = vpop.trf.xlu0
    %v9565 = vpop.trf.xlu0
    %v9566 = vpop.trf.xlu0
    %v9567 = vpop.trf.xlu0
    %v9568 = vpop.trf.xlu0
    %v9569 = vpop.trf.xlu0
    %v9570 = vpop.trf.xlu0
    %v9571 = vpop.trf.xlu0
    %v9572 = vpop.trf.xlu0
    %v9573 = vpop.trf.xlu0
    %v9574 = vpop.trf.xlu0
    %9575 = vst [vmem:[#allocation4] sm:$0xff] %v9527
    %9576 = vst [vmem:[#allocation4 + $0x8] sm:$0xff] %v9559
    %v9577 = vld [vmem:[%s5] sm:$0xf]
    %v9578 = vld [vmem:[%s5 + $0x4] sm:$0xf]
    %v9579 = vld [vmem:[%s5 + $0x8] sm:$0xf]
    %v9580 = vld [vmem:[%s5 + $0xc] sm:$0xf]
    %v9581 = vld [vmem:[%s6] sm:$0x1]
    %v9583 = vlaneseq
    %v9584 = vshrl.u32 %v9583, 7
    %v9585 = vsub.s32 0, %v9584
    %v9586 = vrot.slane %v9581, %v9585
    %v9592 = vunpack.c.l.b16 %v9577
    %v9593 = vunpack.c.l.b16 %v9578
    %v9594 = vunpack.c.l.b16 %v9579
    %v9595 = vunpack.c.l.b16 %v9580
    %v9596 = vpack.c.b16 %v9593, %v9592
    %v9597 = vpack.c.b16 %v9595, %v9594
    %v9601 = vsel %vm8476, %v9231, 0
    %v9604 = vsel %vm8476, %v9232, 0
    %v9607 = vsel %vm8476, %v9233, 0
    %v9610 = vsel %vm8476, %v9234, 0
    %v9613 = vsel %vm8476, %v9235, 0
    %v9616 = vsel %vm8476, %v9236, 0
    %v9619 = vsel %vm8476, %v9237, 0
    %v9622 = vsel %vm8476, %v9238, 0
    %v9625 = vsel %vm8476, %v9239, 0
    %v9628 = vsel %vm8476, %v9240, 0
    %v9631 = vsel %vm8476, %v9241, 0
    %v9634 = vsel %vm8476, %v9242, 0
    %v9637 = vsel %vm8476, %v9243, 0
    %v9640 = vsel %vm8476, %v9244, 0
    %v9643 = vsel %vm8476, %v9245, 0
    %v9646 = vsel %vm8476, %v9246, 0
    %9648 = vmatprep.subr.bf16.mxu0 0
    %9649 = vmatpush1.bf16.msra.mxu0 0
    %9650 = vmatprep.subr.bf16.mxu0 0
    %9651 = vmatpush1.bf16.msra.mxu0 0
    %9652 = vmatprep.subr.bf16.mxu0 0
    %9653 = vmatpush1.bf16.msra.mxu0 0
    %9654 = vmatprep.subr.bf16.mxu0 0
    %9655 = vmatpush1.bf16.msra.mxu0 0
    %9656 = vmatprep.subr.bf16.mxu0 0
    %9657 = vmatpush1.bf16.msra.mxu0 0
    %9658 = vmatprep.subr.bf16.mxu0 0
    %9659 = vmatpush1.bf16.msra.mxu0 0
    %9660 = vmatprep.subr.bf16.mxu0 0
    %9661 = vmatpush1.bf16.msra.mxu0 %v9597
    %9662 = vmatprep.subr.bf16.mxu0 0
    %9663 = vmatpush1.bf16.msra.mxu0 %v9596
    %9664 = vmatprep.subr.bf16.mxu0 0
    %9665 = vmatpush2.bf16.msra.mxu0 0
    %9666 = vmatprep.subr.bf16.mxu0 0
    %9667 = vmatpush2.bf16.msra.mxu0 0
    %9668 = vmatprep.subr.bf16.mxu0 0
    %9669 = vmatpush2.bf16.msra.mxu0 0
    %9670 = vmatprep.subr.bf16.mxu0 0
    %9671 = vmatpush2.bf16.msra.mxu0 0
    %9672 = vmatprep.subr.bf16.mxu0 0
    %9673 = vmatpush2.bf16.msra.mxu0 0
    %9674 = vmatprep.subr.bf16.mxu0 0
    %9675 = vmatpush2.bf16.msra.mxu0 0
    %9676 = vmatprep.subr.bf16.mxu0 0
    %9677 = vmatpush2.bf16.msra.mxu0 0
    %9678 = vmatprep.subr.bf16.mxu0 0
    %9679 = vmatpush2.bf16.msra.mxu0 0
    %9680 = vmatprep.mubr.bf16.mxu0 0
    %9681 = vmatmul.mubr.bf16.gmra.mxu0 %v9601
    %v9682 = vpop.f32.mrf.mxu0
    %v9683 = vadd.f32 %v9586, %v9682
    %v9684 = vpop.f32.mrf.mxu0
    %v9685 = vpop.f32.mrf.mxu0
    %v9686 = vadd.f32 %v9586, %v9685
    %v9687 = vpop.f32.mrf.mxu0
    %9688 = vmatprep.mubr.bf16.mxu0 0
    %9689 = vmatmul.mubr.bf16.gmra.mxu0 %v9604
    %v9690 = vpop.f32.mrf.mxu0
    %v9691 = vadd.f32 %v9586, %v9690
    %v9692 = vpop.f32.mrf.mxu0
    %v9693 = vpop.f32.mrf.mxu0
    %v9694 = vadd.f32 %v9586, %v9693
    %v9695 = vpop.f32.mrf.mxu0
    %9696 = vmatprep.mubr.bf16.mxu0 0
    %9697 = vmatmul.mubr.bf16.gmra.mxu0 %v9607
    %v9698 = vpop.f32.mrf.mxu0
    %v9699 = vadd.f32 %v9586, %v9698
    %v9700 = vpop.f32.mrf.mxu0
    %v9701 = vpop.f32.mrf.mxu0
    %v9702 = vadd.f32 %v9586, %v9701
    %v9703 = vpop.f32.mrf.mxu0
    %9704 = vmatprep.mubr.bf16.mxu0 0
    %9705 = vmatmul.mubr.bf16.gmra.mxu0 %v9610
    %v9706 = vpop.f32.mrf.mxu0
    %v9707 = vadd.f32 %v9586, %v9706
    %v9708 = vpop.f32.mrf.mxu0
    %v9709 = vpop.f32.mrf.mxu0
    %v9710 = vadd.f32 %v9586, %v9709
    %v9711 = vpop.f32.mrf.mxu0
    %9712 = vmatprep.mubr.bf16.mxu0 0
    %9713 = vmatmul.mubr.bf16.gmra.mxu0 %v9613
    %v9714 = vpop.f32.mrf.mxu0
    %v9715 = vadd.f32 %v9586, %v9714
    %v9716 = vpop.f32.mrf.mxu0
    %v9717 = vpop.f32.mrf.mxu0
    %v9718 = vadd.f32 %v9586, %v9717
    %v9719 = vpop.f32.mrf.mxu0
    %9720 = vmatprep.mubr.bf16.mxu0 0
    %9721 = vmatmul.mubr.bf16.gmra.mxu0 %v9616
    %v9722 = vpop.f32.mrf.mxu0
    %v9723 = vadd.f32 %v9586, %v9722
    %v9724 = vpop.f32.mrf.mxu0
    %v9725 = vpop.f32.mrf.mxu0
    %v9726 = vadd.f32 %v9586, %v9725
    %v9727 = vpop.f32.mrf.mxu0
    %9728 = vmatprep.mubr.bf16.mxu0 0
    %9729 = vmatmul.mubr.bf16.gmra.mxu0 %v9619
    %v9730 = vpop.f32.mrf.mxu0
    %v9731 = vadd.f32 %v9586, %v9730
    %v9732 = vpop.f32.mrf.mxu0
    %v9733 = vpop.f32.mrf.mxu0
    %v9734 = vadd.f32 %v9586, %v9733
    %v9735 = vpop.f32.mrf.mxu0
    %9736 = vmatprep.mubr.bf16.mxu0 0
    %9737 = vmatmul.mubr.bf16.gmra.mxu0 %v9622
    %v9738 = vpop.f32.mrf.mxu0
    %v9739 = vadd.f32 %v9586, %v9738
    %v9740 = vpop.f32.mrf.mxu0
    %v9741 = vpop.f32.mrf.mxu0
    %v9742 = vadd.f32 %v9586, %v9741
    %v9743 = vpop.f32.mrf.mxu0
    %9744 = vmatprep.mubr.bf16.mxu0 0
    %9745 = vmatmul.mubr.bf16.gmra.mxu0 %v9625
    %v9746 = vpop.f32.mrf.mxu0
    %v9747 = vadd.f32 %v9586, %v9746
    %v9748 = vpop.f32.mrf.mxu0
    %v9749 = vpop.f32.mrf.mxu0
    %v9750 = vadd.f32 %v9586, %v9749
    %v9751 = vpop.f32.mrf.mxu0
    %9752 = vmatprep.mubr.bf16.mxu0 0
    %9753 = vmatmul.mubr.bf16.gmra.mxu0 %v9628
    %v9754 = vpop.f32.mrf.mxu0
    %v9755 = vadd.f32 %v9586, %v9754
    %v9756 = vpop.f32.mrf.mxu0
    %v9757 = vpop.f32.mrf.mxu0
    %v9758 = vadd.f32 %v9586, %v9757
    %v9759 = vpop.f32.mrf.mxu0
    %9760 = vmatprep.mubr.bf16.mxu0 0
    %9761 = vmatmul.mubr.bf16.gmra.mxu0 %v9631
    %v9762 = vpop.f32.mrf.mxu0
    %v9763 = vadd.f32 %v9586, %v9762
    %v9764 = vpop.f32.mrf.mxu0
    %v9765 = vpop.f32.mrf.mxu0
    %v9766 = vadd.f32 %v9586, %v9765
    %v9767 = vpop.f32.mrf.mxu0
    %9768 = vmatprep.mubr.bf16.mxu0 0
    %9769 = vmatmul.mubr.bf16.gmra.mxu0 %v9634
    %v9770 = vpop.f32.mrf.mxu0
    %v9771 = vadd.f32 %v9586, %v9770
    %v9772 = vpop.f32.mrf.mxu0
    %v9773 = vpop.f32.mrf.mxu0
    %v9774 = vadd.f32 %v9586, %v9773
    %v9775 = vpop.f32.mrf.mxu0
    %9776 = vmatprep.mubr.bf16.mxu0 0
    %9777 = vmatmul.mubr.bf16.gmra.mxu0 %v9637
    %v9778 = vpop.f32.mrf.mxu0
    %v9779 = vadd.f32 %v9586, %v9778
    %v9780 = vpop.f32.mrf.mxu0
    %v9781 = vpop.f32.mrf.mxu0
    %v9782 = vadd.f32 %v9586, %v9781
    %v9783 = vpop.f32.mrf.mxu0
    %9784 = vmatprep.mubr.bf16.mxu0 0
    %9785 = vmatmul.mubr.bf16.gmra.mxu0 %v9640
    %v9786 = vpop.f32.mrf.mxu0
    %v9787 = vadd.f32 %v9586, %v9786
    %v9788 = vpop.f32.mrf.mxu0
    %v9789 = vpop.f32.mrf.mxu0
    %v9790 = vadd.f32 %v9586, %v9789
    %v9791 = vpop.f32.mrf.mxu0
    %9792 = vmatprep.mubr.bf16.mxu0 0
    %9793 = vmatmul.mubr.bf16.gmra.mxu0 %v9643
    %v9794 = vpop.f32.mrf.mxu0
    %v9795 = vadd.f32 %v9586, %v9794
    %v9796 = vpop.f32.mrf.mxu0
    %v9797 = vpop.f32.mrf.mxu0
    %v9798 = vadd.f32 %v9586, %v9797
    %v9799 = vpop.f32.mrf.mxu0
    %9800 = vmatprep.mubr.bf16.mxu0 0
    %9801 = vmatmul.mubr.bf16.gmra.mxu0 %v9646
    %v9802 = vpop.f32.mrf.mxu0
    %v9803 = vadd.f32 %v9586, %v9802
    %v9804 = vpop.f32.mrf.mxu0
    %v9805 = vpop.f32.mrf.mxu0
    %v9806 = vadd.f32 %v9586, %v9805
    %v9807 = vpop.f32.mrf.mxu0
    %9808 = vdwg.mxu0
    %v9809 = vmax.f32 %v9683, 0.0
    %v9810 = vmax.f32 %v9686, 0.0
    %v9811 = vmax.f32 %v9691, 0.0
    %v9812 = vmax.f32 %v9694, 0.0
    %v9813 = vmax.f32 %v9699, 0.0
    %v9814 = vmax.f32 %v9702, 0.0
    %v9815 = vmax.f32 %v9707, 0.0
    %v9816 = vmax.f32 %v9710, 0.0
    %v9817 = vmax.f32 %v9715, 0.0
    %v9818 = vmax.f32 %v9718, 0.0
    %v9819 = vmax.f32 %v9723, 0.0
    %v9820 = vmax.f32 %v9726, 0.0
    %v9821 = vmax.f32 %v9731, 0.0
    %v9822 = vmax.f32 %v9734, 0.0
    %v9823 = vmax.f32 %v9739, 0.0
    %v9824 = vmax.f32 %v9742, 0.0
    %v9825 = vmax.f32 %v9747, 0.0
    %v9826 = vmax.f32 %v9750, 0.0
    %v9827 = vmax.f32 %v9755, 0.0
    %v9828 = vmax.f32 %v9758, 0.0
    %v9829 = vmax.f32 %v9763, 0.0
    %v9830 = vmax.f32 %v9766, 0.0
    %v9831 = vmax.f32 %v9771, 0.0
    %v9832 = vmax.f32 %v9774, 0.0
    %v9833 = vmax.f32 %v9779, 0.0
    %v9834 = vmax.f32 %v9782, 0.0
    %v9835 = vmax.f32 %v9787, 0.0
    %v9836 = vmax.f32 %v9790, 0.0
    %v9837 = vmax.f32 %v9795, 0.0
    %v9838 = vmax.f32 %v9798, 0.0
    %v9839 = vmax.f32 %v9803, 0.0
    %v9840 = vmax.f32 %v9806, 0.0
    %9841 = vxpose.xlu0.b32.start [1/16] %v9809, 128
    %9842 = vxpose.xlu0.b32.cont [2/16] %v9810, 128
    %9843 = vxpose.xlu0.b32.cont [3/16] %v9811, 128
    %9844 = vxpose.xlu0.b32.cont [4/16] %v9812, 128
    %9845 = vxpose.xlu0.b32.cont [5/16] %v9813, 128
    %9846 = vxpose.xlu0.b32.cont [6/16] %v9814, 128
    %9847 = vxpose.xlu0.b32.cont [7/16] %v9815, 128
    %9848 = vxpose.xlu0.b32.cont [8/16] %v9816, 128
    %9849 = vxpose.xlu0.b32.cont [9/16] %v9817, 128
    %9850 = vxpose.xlu0.b32.cont [10/16] %v9818, 128
    %9851 = vxpose.xlu0.b32.cont [11/16] %v9819, 128
    %9852 = vxpose.xlu0.b32.cont [12/16] %v9820, 128
    %9853 = vxpose.xlu0.b32.cont [13/16] %v9821, 128
    %9854 = vxpose.xlu0.b32.cont [14/16] %v9822, 128
    %9855 = vxpose.xlu0.b32.cont [15/16] %v9823, 128
    %9856 = vxpose.xlu0.b32.end [16/16] %v9824, 128
    %v9857 = vpop.trf.xlu0
    %v9858 = vpop.trf.xlu0
    %v9859 = vpop.trf.xlu0
    %v9860 = vpop.trf.xlu0
    %v9861 = vpop.trf.xlu0
    %v9862 = vpop.trf.xlu0
    %v9863 = vpop.trf.xlu0
    %v9864 = vpop.trf.xlu0
    %v9865 = vpop.trf.xlu0
    %v9866 = vpop.trf.xlu0
    %v9867 = vpop.trf.xlu0
    %v9868 = vpop.trf.xlu0
    %v9869 = vpop.trf.xlu0
    %v9870 = vpop.trf.xlu0
    %v9871 = vpop.trf.xlu0
    %v9872 = vpop.trf.xlu0
    %9873 = vxpose.xlu0.b32.start [1/16] %v9825, 128
    %9874 = vxpose.xlu0.b32.cont [2/16] %v9826, 128
    %9875 = vxpose.xlu0.b32.cont [3/16] %v9827, 128
    %9876 = vxpose.xlu0.b32.cont [4/16] %v9828, 128
    %9877 = vxpose.xlu0.b32.cont [5/16] %v9829, 128
    %9878 = vxpose.xlu0.b32.cont [6/16] %v9830, 128
    %9879 = vxpose.xlu0.b32.cont [7/16] %v9831, 128
    %9880 = vxpose.xlu0.b32.cont [8/16] %v9832, 128
    %9881 = vxpose.xlu0.b32.cont [9/16] %v9833, 128
    %9882 = vxpose.xlu0.b32.cont [10/16] %v9834, 128
    %9883 = vxpose.xlu0.b32.cont [11/16] %v9835, 128
    %9884 = vxpose.xlu0.b32.cont [12/16] %v9836, 128
    %9885 = vxpose.xlu0.b32.cont [13/16] %v9837, 128
    %9886 = vxpose.xlu0.b32.cont [14/16] %v9838, 128
    %9887 = vxpose.xlu0.b32.cont [15/16] %v9839, 128
    %9888 = vxpose.xlu0.b32.end [16/16] %v9840, 128
    %v9889 = vpop.trf.xlu0
    %v9890 = vpop.trf.xlu0
    %v9891 = vpop.trf.xlu0
    %v9892 = vpop.trf.xlu0
    %v9893 = vpop.trf.xlu0
    %v9894 = vpop.trf.xlu0
    %v9895 = vpop.trf.xlu0
    %v9896 = vpop.trf.xlu0
    %v9897 = vpop.trf.xlu0
    %v9898 = vpop.trf.xlu0
    %v9899 = vpop.trf.xlu0
    %v9900 = vpop.trf.xlu0
    %v9901 = vpop.trf.xlu0
    %v9902 = vpop.trf.xlu0
    %v9903 = vpop.trf.xlu0
    %v9904 = vpop.trf.xlu0
    %s9905 = scalar_lea.vmem [#allocation4], 16
    %9906 = vst [vmem:[%s9905] sm:$0xff] %v9857
    %9907 = vst [vmem:[%s9905 + $0x8] sm:$0xff] %v9889
    // Predicated region
    $region30: #{tpu_custom_call.1} parent=1 // pred_check
      _
    $region31: #{tpu_custom_call.1} parent=1 // pred_check_branch
      %9909 = sbr.rel (0) target = $region33
    $region32: #{tpu_custom_call.1} parent=1 // pred_region
      %s9911 = ssub.s32 512, 512
      %9912 = vsyncadd [#allocation5], %s9911
      %s9913 = sshll.u32 [#allocation4], 4
      %s9914 = int_to_ptr.vmem [resolvable:$true] %s9913
      %9919 = dma.vmem_to_hbm [thread:$0]  %s9914, 512, %s7, [#allocation5], 256, 256, 16
    $region33: #{tpu_custom_call.1} parent=1 // pred_fallthru
      _
    // Predicated region
    $region34: #{tpu_custom_call.1} parent=1 // pred_check
      _
    $region35: #{tpu_custom_call.1} parent=1 // pred_check_branch
      %9921 = sbr.rel (0) target = $region37
    $region36: #{tpu_custom_call.1} parent=1 // pred_region
      %9922 = dma.done [#allocation5], 512
    $region37: #{tpu_custom_call.1} parent=1 // pred_fallthru
      _
    %9923 = vsyncpa [#allocation5], 1

</llo_original>
